<compile_context>
chip_gen: v6e
topology: v6e:2x2x1
jax: 0.10.0
libtpu: 0.0.40
codegen_flags: <defaults>
</compile_context>

<pallas_src>
import jax
import jax.numpy as jnp
from jax import lax
from jax.experimental import pallas as pl
from jax.experimental.pallas import tpu as pltpu

H = 4  # hidden size of both LSTMs (fixed by the module definition)


def _sigmoid(x):
    return 1.0 / (1.0 + jnp.exp(-x))


def _round_up(n, m):
    return ((n + m - 1) // m) * m


def _lstm_head_kernel(x1_ref, x2_ref,
                      wih1_ref, whh1_ref, b1_ref,
                      wih2_ref, whh2_ref, b2_ref,
                      wfc1a_ref, wfc1b_ref, bfc1_ref,
                      wfc2_ref, bfc2_ref,
                      o_ref):
    tb = o_ref.shape[0]

    def last_hidden(x_ref, wih_ref, whh_ref, b_ref):
        # x_ref: (T, TB, F) time-major; returns h_T of shape (TB, H).
        T = x_ref.shape[0]
        # Hoist the (tiny) per-gate weights/biases out of the recurrence.
        wx = [wih_ref[k] for k in range(4)]   # each (F, H)
        wh = [whh_ref[k] for k in range(4)]   # each (H, H)
        bs = [b_ref[k] for k in range(4)]     # each (1, H), b_ih + b_hh folded

        def step(t, carry):
            h, c = carry
            x_t = x_ref[t]                    # (TB, F)
            pre = [jnp.dot(x_t, wx[k], preferred_element_type=jnp.float32)
                   + jnp.dot(h, wh[k], preferred_element_type=jnp.float32)
                   + bs[k]
                   for k in range(4)]         # gate order [i, f, g, o]
            i = _sigmoid(pre[0])
            f = _sigmoid(pre[1])
            g = jnp.tanh(pre[2])
            o = _sigmoid(pre[3])
            c_new = f * c + i * g
            h_new = o * jnp.tanh(c_new)
            return h_new, c_new

        h0 = jnp.zeros((tb, H), jnp.float32)
        c0 = jnp.zeros((tb, H), jnp.float32)
        h_last, _ = lax.fori_loop(0, T, step, (h0, c0), unroll=True)
        return h_last

    h1 = last_hidden(x1_ref, wih1_ref, whh1_ref, b1_ref)   # (TB, H)
    h2 = last_hidden(x2_ref, whh_ref=whh2_ref, wih_ref=wih2_ref, b_ref=b2_ref)

    # fc1 on the concatenated features without materializing the concat:
    #   concat(h1, h2) @ W1 == h1 @ W1[:H, :] + h2 @ W1[H:, :]
    z = (jnp.dot(h1, wfc1a_ref[...], preferred_element_type=jnp.float32)
         + jnp.dot(h2, wfc1b_ref[...], preferred_element_type=jnp.float32)
         + bfc1_ref[...])
    z = jnp.maximum(z, 0.0)                                 # ReLU
    logits = (jnp.dot(z, wfc2_ref[...], preferred_element_type=jnp.float32)
              + bfc2_ref[...])                              # (TB, 2)

    # softmax over dim 1
    m = jnp.max(logits, axis=1, keepdims=True)
    e = jnp.exp(logits - m)
    o_ref[...] = e / jnp.sum(e, axis=1, keepdims=True)


def _const_spec(arr):
    nd = arr.ndim
    return pl.BlockSpec(arr.shape, lambda i, _nd=nd: (0,) * _nd)


def lstm_model_forward(x1, x2, params, *, batch_tile=512):
    """x1: (B, T1, 4), x2: (B, T2, 2) float32 -> (B, 2) softmax probabilities."""
    B, T1, F1 = x1.shape
    B2, T2, F2 = x2.shape
    assert B == B2

    # ---- wrapper-side parameter repacking (layout plumbing, not compute) ----
    def split_gates(w):  # PyTorch (4H, F) with rows [i;f;g;o] -> (4, F, H)
        return jnp.stack([w[k * H:(k + 1) * H, :].T for k in range(4)])

    def split_bias(b_ih, b_hh):  # fold the two bias vectors -> (4, 1, H)
        b = b_ih + b_hh
        return jnp.stack([b[k * H:(k + 1) * H].reshape(1, H) for k in range(4)])

    wih1 = split_gates(params["w_ih1"])
    whh1 = split_gates(params["w_hh1"])
    b1 = split_bias(params["b_ih1"], params["b_hh1"])
    wih2 = split_gates(params["w_ih2"])
    whh2 = split_gates(params["w_hh2"])
    b2 = split_bias(params["b_ih2"], params["b_hh2"])

    w1t = params["w_fc1"].T                 # (8, 8)  (in, out)
    wfc1a = w1t[:H, :]                      # (4, 8) weight for h1
    wfc1b = w1t[H:, :]                      # (4, 8) weight for h2
    bfc1 = params["b_fc1"].reshape(1, 8)
    wfc2 = params["w_fc2"].T                # (8, 2)
    bfc2 = params["b_fc2"].reshape(1, 2)

    # ---- batch tiling: TB multiple of 8, pad B up, "parallel" grid ----
    tb = min(batch_tile, _round_up(B, 8))
    b_pad = _round_up(B, tb)
    if b_pad != B:
        pad = b_pad - B
        x1 = jnp.pad(x1, ((0, pad), (0, 0), (0, 0)))
        x2 = jnp.pad(x2, ((0, pad), (0, 0), (0, 0)))

    # Time-major so the recurrence indexes the leading ref axis.
    x1_t = jnp.transpose(x1, (1, 0, 2)).astype(jnp.float32)   # (T1, B_pad, F1)
    x2_t = jnp.transpose(x2, (1, 0, 2)).astype(jnp.float32)   # (T2, B_pad, F2)

    grid = (b_pad // tb,)
    param_arrays = (wih1, whh1, b1, wih2, whh2, b2, wfc1a, wfc1b, bfc1, wfc2, bfc2)

    # Advisory cost estimate so XLA schedules around this memory-bound call.
    flops = b_pad * (T1 * 4 * 2 * H * (F1 + H)
                     + T2 * 4 * 2 * H * (F2 + H)
                     + 2 * 8 * 8 + 2 * 8 * 2)
    transc = b_pad * ((T1 + T2) * 5 * H + 2)
    bytes_accessed = 4 * (x1_t.size + x2_t.size + b_pad * 2
                          + grid[0] * sum(p.size for p in param_arrays))

    out = pl.pallas_call(
        _lstm_head_kernel,
        out_shape=jax.ShapeDtypeStruct((b_pad, 2), jnp.float32),
        grid_spec=pltpu.PrefetchScalarGridSpec(
            num_scalar_prefetch=0,
            grid=grid,
            in_specs=[
                pl.BlockSpec((T1, tb, F1), lambda i: (0, i, 0)),
                pl.BlockSpec((T2, tb, F2), lambda i: (0, i, 0)),
            ] + [_const_spec(p) for p in param_arrays],
            out_specs=pl.BlockSpec((tb, 2), lambda i: (i, 0)),
        ),
        compiler_params=pltpu.CompilerParams(
            dimension_semantics=("parallel",)),
        cost_estimate=pl.CostEstimate(
            flops=int(flops),
            transcendentals=int(transc),
            bytes_accessed=int(bytes_accessed)),
    )(x1_t, x2_t, *param_arrays)

    return out[:B]


if __name__ == "__main__":
    key = jax.random.PRNGKey(0)
    keys = jax.random.split(key, 14)

    B, T1, T2 = 2, 8, 8
    F1, F2 = 4, 2

    x1 = jax.random.normal(keys[0], (B, T1, F1), dtype=jnp.float32)
    x2 = jax.random.normal(keys[1], (B, T2, F2), dtype=jnp.float32)

    def uinit(k, shape, fan):
        bound = 1.0 / float(jnp.sqrt(jnp.float32(fan)))
        return jax.random.uniform(k, shape, minval=-bound, maxval=bound,
                                  dtype=jnp.float32)

    params = {
        # LSTM 1 (input 4 -> hidden 4), PyTorch layout, gate order [i, f, g, o]
        "w_ih1": uinit(keys[2], (4 * H, F1), H),
        "w_hh1": uinit(keys[3], (4 * H, H), H),
        "b_ih1": uinit(keys[4], (4 * H,), H),
        "b_hh1": uinit(keys[5], (4 * H,), H),
        # LSTM 2 (input 2 -> hidden 4)
        "w_ih2": uinit(keys[6], (4 * H, F2), H),
        "w_hh2": uinit(keys[7], (4 * H, H), H),
        "b_ih2": uinit(keys[8], (4 * H,), H),
        "b_hh2": uinit(keys[9], (4 * H,), H),
        # fc: Linear(8, 8) -> ReLU -> Linear(8, 2)   (PyTorch (out, in) layout)
        "w_fc1": uinit(keys[10], (8, 8), 8),
        "b_fc1": uinit(keys[11], (8,), 8),
        "w_fc2": uinit(keys[12], (2, 8), 8),
        "b_fc2": uinit(keys[13], (2,), 8),
    }

    out = lstm_model_forward(x1, x2, params)
    out = jax.block_until_ready(out)

    # ---- pure-JAX reference of the same forward pass ----
    def ref_lstm(x, w_ih, w_hh, b_ih, b_hh):
        Bb = x.shape[0]
        h = jnp.zeros((Bb, H), jnp.float32)
        c = jnp.zeros((Bb, H), jnp.float32)
        for t in range(x.shape[1]):
            g = x[:, t, :] @ w_ih.T + b_ih + h @ w_hh.T + b_hh
            i = jax.nn.sigmoid(g[:, 0:H])
            f = jax.nn.sigmoid(g[:, H:2 * H])
            gg = jnp.tanh(g[:, 2 * H:3 * H])
            o = jax.nn.sigmoid(g[:, 3 * H:4 * H])
            c = f * c + i * gg
            h = o * jnp.tanh(c)
        return h

    h1 = ref_lstm(x1, params["w_ih1"], params["w_hh1"], params["b_ih1"], params["b_hh1"])
    h2 = ref_lstm(x2, params["w_ih2"], params["w_hh2"], params["b_ih2"], params["b_hh2"])
    feat = jnp.concatenate([h1, h2], axis=1)
    z = jnp.maximum(feat @ params["w_fc1"].T + params["b_fc1"], 0.0)
    logits = z @ params["w_fc2"].T + params["b_fc2"]
    ref = jax.nn.softmax(logits, axis=1)

    assert out.shape == (B, 2)
    assert jnp.allclose(out, ref, atol=1e-5, rtol=1e-5), (out, ref)
    print("KERNEL_OK")
</pallas_src>

<mosaic_0001>
module attributes {stable_mosaic.version = 11 : i64} {
  func.func @_lstm_head_kernel(%arg0: i32, %arg1: memref<8x8x4xf32, #tpu.memory_space<vmem>>, %arg2: memref<8x8x2xf32, #tpu.memory_space<vmem>>, %arg3: memref<4x4x4xf32, #tpu.memory_space<vmem>>, %arg4: memref<4x4x4xf32, #tpu.memory_space<vmem>>, %arg5: memref<4x1x4xf32, #tpu.memory_space<vmem>>, %arg6: memref<4x2x4xf32, #tpu.memory_space<vmem>>, %arg7: memref<4x4x4xf32, #tpu.memory_space<vmem>>, %arg8: memref<4x1x4xf32, #tpu.memory_space<vmem>>, %arg9: memref<4x8xf32, #tpu.memory_space<vmem>>, %arg10: memref<4x8xf32, #tpu.memory_space<vmem>>, %arg11: memref<1x8xf32, #tpu.memory_space<vmem>>, %arg12: memref<8x2xf32, #tpu.memory_space<vmem>>, %arg13: memref<1x2xf32, #tpu.memory_space<vmem>>, %arg14: memref<8x2xf32, #tpu.memory_space<vmem>>) attributes {dimension_semantics = [#tpu.dimension_semantics<parallel>], iteration_bounds = array<i64: 1>, scalar_prefetch = 0 : i64, scratch_operands = 0 : i64, tpu.core_type = #tpu.core_type<tc>, window_params = [{transform_indices = @transform_0, window_bounds = array<i64: 8, 8, 4>}, {transform_indices = @transform_1, window_bounds = array<i64: 8, 8, 2>}, {pipeline_mode = #tpu.pipeline_mode<synchronous>, transform_indices = @transform_2, window_bounds = array<i64: 4, 4, 4>}, {pipeline_mode = #tpu.pipeline_mode<synchronous>, transform_indices = @transform_3, window_bounds = array<i64: 4, 4, 4>}, {pipeline_mode = #tpu.pipeline_mode<synchronous>, transform_indices = @transform_4, window_bounds = array<i64: 4, 1, 4>}, {pipeline_mode = #tpu.pipeline_mode<synchronous>, transform_indices = @transform_5, window_bounds = array<i64: 4, 2, 4>}, {pipeline_mode = #tpu.pipeline_mode<synchronous>, transform_indices = @transform_6, window_bounds = array<i64: 4, 4, 4>}, {pipeline_mode = #tpu.pipeline_mode<synchronous>, transform_indices = @transform_7, window_bounds = array<i64: 4, 1, 4>}, {pipeline_mode = #tpu.pipeline_mode<synchronous>, transform_indices = @transform_8, window_bounds = array<i64: 4, 8>}, {pipeline_mode = #tpu.pipeline_mode<synchronous>, transform_indices = @transform_9, window_bounds = array<i64: 4, 8>}, {pipeline_mode = #tpu.pipeline_mode<synchronous>, transform_indices = @transform_10, window_bounds = array<i64: 1, 8>}, {pipeline_mode = #tpu.pipeline_mode<synchronous>, transform_indices = @transform_11, window_bounds = array<i64: 8, 2>}, {pipeline_mode = #tpu.pipeline_mode<synchronous>, transform_indices = @transform_12, window_bounds = array<i64: 1, 2>}, {transform_indices = @transform_13, window_bounds = array<i64: 8, 2>}]} {
    %c0 = arith.constant 0 : index
    %c0_0 = arith.constant 0 : index
    %c0_1 = arith.constant 0 : index
    %0 = vector.load %arg3[%c0, %c0_0, %c0_1] : memref<4x4x4xf32, #tpu.memory_space<vmem>>, vector<1x4x4xf32>
    %1 = vector.shape_cast %0 : vector<1x4x4xf32> to vector<4x4xf32>
    %c1 = arith.constant 1 : index
    %c0_2 = arith.constant 0 : index
    %c0_3 = arith.constant 0 : index
    %2 = vector.load %arg3[%c1, %c0_2, %c0_3] : memref<4x4x4xf32, #tpu.memory_space<vmem>>, vector<1x4x4xf32>
    %3 = vector.shape_cast %2 : vector<1x4x4xf32> to vector<4x4xf32>
    %c2 = arith.constant 2 : index
    %c0_4 = arith.constant 0 : index
    %c0_5 = arith.constant 0 : index
    %4 = vector.load %arg3[%c2, %c0_4, %c0_5] : memref<4x4x4xf32, #tpu.memory_space<vmem>>, vector<1x4x4xf32>
    %5 = vector.shape_cast %4 : vector<1x4x4xf32> to vector<4x4xf32>
    %c3 = arith.constant 3 : index
    %c0_6 = arith.constant 0 : index
    %c0_7 = arith.constant 0 : index
    %6 = vector.load %arg3[%c3, %c0_6, %c0_7] : memref<4x4x4xf32, #tpu.memory_space<vmem>>, vector<1x4x4xf32>
    %7 = vector.shape_cast %6 : vector<1x4x4xf32> to vector<4x4xf32>
    %c0_8 = arith.constant 0 : index
    %c0_9 = arith.constant 0 : index
    %c0_10 = arith.constant 0 : index
    %8 = vector.load %arg4[%c0_8, %c0_9, %c0_10] : memref<4x4x4xf32, #tpu.memory_space<vmem>>, vector<1x4x4xf32>
    %9 = vector.shape_cast %8 : vector<1x4x4xf32> to vector<4x4xf32>
    %c1_11 = arith.constant 1 : index
    %c0_12 = arith.constant 0 : index
    %c0_13 = arith.constant 0 : index
    %10 = vector.load %arg4[%c1_11, %c0_12, %c0_13] : memref<4x4x4xf32, #tpu.memory_space<vmem>>, vector<1x4x4xf32>
    %11 = vector.shape_cast %10 : vector<1x4x4xf32> to vector<4x4xf32>
    %c2_14 = arith.constant 2 : index
    %c0_15 = arith.constant 0 : index
    %c0_16 = arith.constant 0 : index
    %12 = vector.load %arg4[%c2_14, %c0_15, %c0_16] : memref<4x4x4xf32, #tpu.memory_space<vmem>>, vector<1x4x4xf32>
    %13 = vector.shape_cast %12 : vector<1x4x4xf32> to vector<4x4xf32>
    %c3_17 = arith.constant 3 : index
    %c0_18 = arith.constant 0 : index
    %c0_19 = arith.constant 0 : index
    %14 = vector.load %arg4[%c3_17, %c0_18, %c0_19] : memref<4x4x4xf32, #tpu.memory_space<vmem>>, vector<1x4x4xf32>
    %15 = vector.shape_cast %14 : vector<1x4x4xf32> to vector<4x4xf32>
    %c0_20 = arith.constant 0 : index
    %c0_21 = arith.constant 0 : index
    %c0_22 = arith.constant 0 : index
    %16 = vector.load %arg5[%c0_20, %c0_21, %c0_22] : memref<4x1x4xf32, #tpu.memory_space<vmem>>, vector<1x1x4xf32>
    %17 = vector.shape_cast %16 : vector<1x1x4xf32> to vector<1x4xf32>
    %c1_23 = arith.constant 1 : index
    %c0_24 = arith.constant 0 : index
    %c0_25 = arith.constant 0 : index
    %18 = vector.load %arg5[%c1_23, %c0_24, %c0_25] : memref<4x1x4xf32, #tpu.memory_space<vmem>>, vector<1x1x4xf32>
    %19 = vector.shape_cast %18 : vector<1x1x4xf32> to vector<1x4xf32>
    %c2_26 = arith.constant 2 : index
    %c0_27 = arith.constant 0 : index
    %c0_28 = arith.constant 0 : index
    %20 = vector.load %arg5[%c2_26, %c0_27, %c0_28] : memref<4x1x4xf32, #tpu.memory_space<vmem>>, vector<1x1x4xf32>
    %21 = vector.shape_cast %20 : vector<1x1x4xf32> to vector<1x4xf32>
    %c3_29 = arith.constant 3 : index
    %c0_30 = arith.constant 0 : index
    %c0_31 = arith.constant 0 : index
    %22 = vector.load %arg5[%c3_29, %c0_30, %c0_31] : memref<4x1x4xf32, #tpu.memory_space<vmem>>, vector<1x1x4xf32>
    %23 = vector.shape_cast %22 : vector<1x1x4xf32> to vector<1x4xf32>
    %cst = arith.constant 0.000000e+00 : f32
    %24 = vector.broadcast %cst : f32 to vector<8x4xf32>
    %cst_32 = arith.constant 0.000000e+00 : f32
    %25 = vector.broadcast %cst_32 : f32 to vector<8x4xf32>
    %c0_i32 = arith.constant 0 : i32
    %26 = arith.index_cast %c0_i32 : i32 to index
    %c0_33 = arith.constant 0 : index
    %c0_34 = arith.constant 0 : index
    %27 = vector.load %arg1[%26, %c0_33, %c0_34] : memref<8x8x4xf32, #tpu.memory_space<vmem>>, vector<1x8x4xf32>
    %28 = vector.shape_cast %27 : vector<1x8x4xf32> to vector<8x4xf32>
    %cst_35 = arith.constant dense<0.000000e+00> : vector<8x4xf32>
    %29 = tpu.matmul %28, %1, %cst_35 {dimension_numbers = #tpu.dot_dimension_numbers<[1], [0], [0], [1], [0, 0, 1, 1], [], []>} : vector<8x4xf32>, vector<4x4xf32>, vector<8x4xf32> -> vector<8x4xf32>
    %cst_36 = arith.constant dense<0.000000e+00> : vector<8x4xf32>
    %30 = tpu.matmul %24, %9, %cst_36 {dimension_numbers = #tpu.dot_dimension_numbers<[1], [0], [0], [1], [0, 0, 1, 1], [], []>} : vector<8x4xf32>, vector<4x4xf32>, vector<8x4xf32> -> vector<8x4xf32>
    %31 = arith.addf %29, %30 : vector<8x4xf32>
    %32 = vector.broadcast %17 : vector<1x4xf32> to vector<8x4xf32>
    %33 = arith.addf %31, %32 : vector<8x4xf32>
    %cst_37 = arith.constant dense<0.000000e+00> : vector<8x4xf32>
    %34 = tpu.matmul %28, %3, %cst_37 {dimension_numbers = #tpu.dot_dimension_numbers<[1], [0], [0], [1], [0, 0, 1, 1], [], []>} : vector<8x4xf32>, vector<4x4xf32>, vector<8x4xf32> -> vector<8x4xf32>
    %cst_38 = arith.constant dense<0.000000e+00> : vector<8x4xf32>
    %35 = tpu.matmul %24, %11, %cst_38 {dimension_numbers = #tpu.dot_dimension_numbers<[1], [0], [0], [1], [0, 0, 1, 1], [], []>} : vector<8x4xf32>, vector<4x4xf32>, vector<8x4xf32> -> vector<8x4xf32>
    %36 = arith.addf %34, %35 : vector<8x4xf32>
    %37 = vector.broadcast %19 : vector<1x4xf32> to vector<8x4xf32>
    %38 = arith.addf %36, %37 : vector<8x4xf32>
    %cst_39 = arith.constant dense<0.000000e+00> : vector<8x4xf32>
    %39 = tpu.matmul %28, %5, %cst_39 {dimension_numbers = #tpu.dot_dimension_numbers<[1], [0], [0], [1], [0, 0, 1, 1], [], []>} : vector<8x4xf32>, vector<4x4xf32>, vector<8x4xf32> -> vector<8x4xf32>
    %cst_40 = arith.constant dense<0.000000e+00> : vector<8x4xf32>
    %40 = tpu.matmul %24, %13, %cst_40 {dimension_numbers = #tpu.dot_dimension_numbers<[1], [0], [0], [1], [0, 0, 1, 1], [], []>} : vector<8x4xf32>, vector<4x4xf32>, vector<8x4xf32> -> vector<8x4xf32>
    %41 = arith.addf %39, %40 : vector<8x4xf32>
    %42 = vector.broadcast %21 : vector<1x4xf32> to vector<8x4xf32>
    %43 = arith.addf %41, %42 : vector<8x4xf32>
    %cst_41 = arith.constant dense<0.000000e+00> : vector<8x4xf32>
    %44 = tpu.matmul %28, %7, %cst_41 {dimension_numbers = #tpu.dot_dimension_numbers<[1], [0], [0], [1], [0, 0, 1, 1], [], []>} : vector<8x4xf32>, vector<4x4xf32>, vector<8x4xf32> -> vector<8x4xf32>
    %cst_42 = arith.constant dense<0.000000e+00> : vector<8x4xf32>
    %45 = tpu.matmul %24, %15, %cst_42 {dimension_numbers = #tpu.dot_dimension_numbers<[1], [0], [0], [1], [0, 0, 1, 1], [], []>} : vector<8x4xf32>, vector<4x4xf32>, vector<8x4xf32> -> vector<8x4xf32>
    %46 = arith.addf %44, %45 : vector<8x4xf32>
    %47 = vector.broadcast %23 : vector<1x4xf32> to vector<8x4xf32>
    %48 = arith.addf %46, %47 : vector<8x4xf32>
    %cst_43 = arith.constant 0.000000e+00 : f32
    %49 = vector.broadcast %cst_43 : f32 to vector<8x4xf32>
    %50 = arith.subf %49, %33 : vector<8x4xf32>
    %51 = math.exp %50 : vector<8x4xf32>
    %cst_44 = arith.constant 1.000000e+00 : f32
    %52 = vector.broadcast %cst_44 : f32 to vector<8x4xf32>
    %53 = arith.addf %52, %51 : vector<8x4xf32>
    %cst_45 = arith.constant 1.000000e+00 : f32
    %54 = vector.broadcast %cst_45 : f32 to vector<8x4xf32>
    %55 = arith.divf %54, %53 : vector<8x4xf32>
    %cst_46 = arith.constant 0.000000e+00 : f32
    %56 = vector.broadcast %cst_46 : f32 to vector<8x4xf32>
    %57 = arith.subf %56, %38 : vector<8x4xf32>
    %58 = math.exp %57 : vector<8x4xf32>
    %cst_47 = arith.constant 1.000000e+00 : f32
    %59 = vector.broadcast %cst_47 : f32 to vector<8x4xf32>
    %60 = arith.addf %59, %58 : vector<8x4xf32>
    %cst_48 = arith.constant 1.000000e+00 : f32
    %61 = vector.broadcast %cst_48 : f32 to vector<8x4xf32>
    %62 = arith.divf %61, %60 : vector<8x4xf32>
    %63 = math.tanh %43 : vector<8x4xf32>
    %cst_49 = arith.constant 0.000000e+00 : f32
    %64 = vector.broadcast %cst_49 : f32 to vector<8x4xf32>
    %65 = arith.subf %64, %48 : vector<8x4xf32>
    %66 = math.exp %65 : vector<8x4xf32>
    %cst_50 = arith.constant 1.000000e+00 : f32
    %67 = vector.broadcast %cst_50 : f32 to vector<8x4xf32>
    %68 = arith.addf %67, %66 : vector<8x4xf32>
    %cst_51 = arith.constant 1.000000e+00 : f32
    %69 = vector.broadcast %cst_51 : f32 to vector<8x4xf32>
    %70 = arith.divf %69, %68 : vector<8x4xf32>
    %71 = arith.mulf %62, %25 : vector<8x4xf32>
    %72 = arith.mulf %55, %63 : vector<8x4xf32>
    %73 = arith.addf %71, %72 : vector<8x4xf32>
    %74 = math.tanh %73 : vector<8x4xf32>
    %75 = arith.mulf %70, %74 : vector<8x4xf32>
    %c1_i32 = arith.constant 1 : i32
    %76 = arith.index_cast %c1_i32 : i32 to index
    %c0_52 = arith.constant 0 : index
    %c0_53 = arith.constant 0 : index
    %77 = vector.load %arg1[%76, %c0_52, %c0_53] : memref<8x8x4xf32, #tpu.memory_space<vmem>>, vector<1x8x4xf32>
    %78 = vector.shape_cast %77 : vector<1x8x4xf32> to vector<8x4xf32>
    %cst_54 = arith.constant dense<0.000000e+00> : vector<8x4xf32>
    %79 = tpu.matmul %78, %1, %cst_54 {dimension_numbers = #tpu.dot_dimension_numbers<[1], [0], [0], [1], [0, 0, 1, 1], [], []>} : vector<8x4xf32>, vector<4x4xf32>, vector<8x4xf32> -> vector<8x4xf32>
    %cst_55 = arith.constant dense<0.000000e+00> : vector<8x4xf32>
    %80 = tpu.matmul %75, %9, %cst_55 {dimension_numbers = #tpu.dot_dimension_numbers<[1], [0], [0], [1], [0, 0, 1, 1], [], []>} : vector<8x4xf32>, vector<4x4xf32>, vector<8x4xf32> -> vector<8x4xf32>
    %81 = arith.addf %79, %80 : vector<8x4xf32>
    %82 = vector.broadcast %17 : vector<1x4xf32> to vector<8x4xf32>
    %83 = arith.addf %81, %82 : vector<8x4xf32>
    %cst_56 = arith.constant dense<0.000000e+00> : vector<8x4xf32>
    %84 = tpu.matmul %78, %3, %cst_56 {dimension_numbers = #tpu.dot_dimension_numbers<[1], [0], [0], [1], [0, 0, 1, 1], [], []>} : vector<8x4xf32>, vector<4x4xf32>, vector<8x4xf32> -> vector<8x4xf32>
    %cst_57 = arith.constant dense<0.000000e+00> : vector<8x4xf32>
    %85 = tpu.matmul %75, %11, %cst_57 {dimension_numbers = #tpu.dot_dimension_numbers<[1], [0], [0], [1], [0, 0, 1, 1], [], []>} : vector<8x4xf32>, vector<4x4xf32>, vector<8x4xf32> -> vector<8x4xf32>
    %86 = arith.addf %84, %85 : vector<8x4xf32>
    %87 = vector.broadcast %19 : vector<1x4xf32> to vector<8x4xf32>
    %88 = arith.addf %86, %87 : vector<8x4xf32>
    %cst_58 = arith.constant dense<0.000000e+00> : vector<8x4xf32>
    %89 = tpu.matmul %78, %5, %cst_58 {dimension_numbers = #tpu.dot_dimension_numbers<[1], [0], [0], [1], [0, 0, 1, 1], [], []>} : vector<8x4xf32>, vector<4x4xf32>, vector<8x4xf32> -> vector<8x4xf32>
    %cst_59 = arith.constant dense<0.000000e+00> : vector<8x4xf32>
    %90 = tpu.matmul %75, %13, %cst_59 {dimension_numbers = #tpu.dot_dimension_numbers<[1], [0], [0], [1], [0, 0, 1, 1], [], []>} : vector<8x4xf32>, vector<4x4xf32>, vector<8x4xf32> -> vector<8x4xf32>
    %91 = arith.addf %89, %90 : vector<8x4xf32>
    %92 = vector.broadcast %21 : vector<1x4xf32> to vector<8x4xf32>
    %93 = arith.addf %91, %92 : vector<8x4xf32>
    %cst_60 = arith.constant dense<0.000000e+00> : vector<8x4xf32>
    %94 = tpu.matmul %78, %7, %cst_60 {dimension_numbers = #tpu.dot_dimension_numbers<[1], [0], [0], [1], [0, 0, 1, 1], [], []>} : vector<8x4xf32>, vector<4x4xf32>, vector<8x4xf32> -> vector<8x4xf32>
    %cst_61 = arith.constant dense<0.000000e+00> : vector<8x4xf32>
    %95 = tpu.matmul %75, %15, %cst_61 {dimension_numbers = #tpu.dot_dimension_numbers<[1], [0], [0], [1], [0, 0, 1, 1], [], []>} : vector<8x4xf32>, vector<4x4xf32>, vector<8x4xf32> -> vector<8x4xf32>
    %96 = arith.addf %94, %95 : vector<8x4xf32>
    %97 = vector.broadcast %23 : vector<1x4xf32> to vector<8x4xf32>
    %98 = arith.addf %96, %97 : vector<8x4xf32>
    %cst_62 = arith.constant 0.000000e+00 : f32
    %99 = vector.broadcast %cst_62 : f32 to vector<8x4xf32>
    %100 = arith.subf %99, %83 : vector<8x4xf32>
    %101 = math.exp %100 : vector<8x4xf32>
    %cst_63 = arith.constant 1.000000e+00 : f32
    %102 = vector.broadcast %cst_63 : f32 to vector<8x4xf32>
    %103 = arith.addf %102, %101 : vector<8x4xf32>
    %cst_64 = arith.constant 1.000000e+00 : f32
    %104 = vector.broadcast %cst_64 : f32 to vector<8x4xf32>
    %105 = arith.divf %104, %103 : vector<8x4xf32>
    %cst_65 = arith.constant 0.000000e+00 : f32
    %106 = vector.broadcast %cst_65 : f32 to vector<8x4xf32>
    %107 = arith.subf %106, %88 : vector<8x4xf32>
    %108 = math.exp %107 : vector<8x4xf32>
    %cst_66 = arith.constant 1.000000e+00 : f32
    %109 = vector.broadcast %cst_66 : f32 to vector<8x4xf32>
    %110 = arith.addf %109, %108 : vector<8x4xf32>
    %cst_67 = arith.constant 1.000000e+00 : f32
    %111 = vector.broadcast %cst_67 : f32 to vector<8x4xf32>
    %112 = arith.divf %111, %110 : vector<8x4xf32>
    %113 = math.tanh %93 : vector<8x4xf32>
    %cst_68 = arith.constant 0.000000e+00 : f32
    %114 = vector.broadcast %cst_68 : f32 to vector<8x4xf32>
    %115 = arith.subf %114, %98 : vector<8x4xf32>
    %116 = math.exp %115 : vector<8x4xf32>
    %cst_69 = arith.constant 1.000000e+00 : f32
    %117 = vector.broadcast %cst_69 : f32 to vector<8x4xf32>
    %118 = arith.addf %117, %116 : vector<8x4xf32>
    %cst_70 = arith.constant 1.000000e+00 : f32
    %119 = vector.broadcast %cst_70 : f32 to vector<8x4xf32>
    %120 = arith.divf %119, %118 : vector<8x4xf32>
    %121 = arith.mulf %112, %73 : vector<8x4xf32>
    %122 = arith.mulf %105, %113 : vector<8x4xf32>
    %123 = arith.addf %121, %122 : vector<8x4xf32>
    %124 = math.tanh %123 : vector<8x4xf32>
    %125 = arith.mulf %120, %124 : vector<8x4xf32>
    %c2_i32 = arith.constant 2 : i32
    %126 = arith.index_cast %c2_i32 : i32 to index
    %c0_71 = arith.constant 0 : index
    %c0_72 = arith.constant 0 : index
    %127 = vector.load %arg1[%126, %c0_71, %c0_72] : memref<8x8x4xf32, #tpu.memory_space<vmem>>, vector<1x8x4xf32>
    %128 = vector.shape_cast %127 : vector<1x8x4xf32> to vector<8x4xf32>
    %cst_73 = arith.constant dense<0.000000e+00> : vector<8x4xf32>
    %129 = tpu.matmul %128, %1, %cst_73 {dimension_numbers = #tpu.dot_dimension_numbers<[1], [0], [0], [1], [0, 0, 1, 1], [], []>} : vector<8x4xf32>, vector<4x4xf32>, vector<8x4xf32> -> vector<8x4xf32>
    %cst_74 = arith.constant dense<0.000000e+00> : vector<8x4xf32>
    %130 = tpu.matmul %125, %9, %cst_74 {dimension_numbers = #tpu.dot_dimension_numbers<[1], [0], [0], [1], [0, 0, 1, 1], [], []>} : vector<8x4xf32>, vector<4x4xf32>, vector<8x4xf32> -> vector<8x4xf32>
    %131 = arith.addf %129, %130 : vector<8x4xf32>
    %132 = vector.broadcast %17 : vector<1x4xf32> to vector<8x4xf32>
    %133 = arith.addf %131, %132 : vector<8x4xf32>
    %cst_75 = arith.constant dense<0.000000e+00> : vector<8x4xf32>
    %134 = tpu.matmul %128, %3, %cst_75 {dimension_numbers = #tpu.dot_dimension_numbers<[1], [0], [0], [1], [0, 0, 1, 1], [], []>} : vector<8x4xf32>, vector<4x4xf32>, vector<8x4xf32> -> vector<8x4xf32>
    %cst_76 = arith.constant dense<0.000000e+00> : vector<8x4xf32>
    %135 = tpu.matmul %125, %11, %cst_76 {dimension_numbers = #tpu.dot_dimension_numbers<[1], [0], [0], [1], [0, 0, 1, 1], [], []>} : vector<8x4xf32>, vector<4x4xf32>, vector<8x4xf32> -> vector<8x4xf32>
    %136 = arith.addf %134, %135 : vector<8x4xf32>
    %137 = vector.broadcast %19 : vector<1x4xf32> to vector<8x4xf32>
    %138 = arith.addf %136, %137 : vector<8x4xf32>
    %cst_77 = arith.constant dense<0.000000e+00> : vector<8x4xf32>
    %139 = tpu.matmul %128, %5, %cst_77 {dimension_numbers = #tpu.dot_dimension_numbers<[1], [0], [0], [1], [0, 0, 1, 1], [], []>} : vector<8x4xf32>, vector<4x4xf32>, vector<8x4xf32> -> vector<8x4xf32>
    %cst_78 = arith.constant dense<0.000000e+00> : vector<8x4xf32>
    %140 = tpu.matmul %125, %13, %cst_78 {dimension_numbers = #tpu.dot_dimension_numbers<[1], [0], [0], [1], [0, 0, 1, 1], [], []>} : vector<8x4xf32>, vector<4x4xf32>, vector<8x4xf32> -> vector<8x4xf32>
    %141 = arith.addf %139, %140 : vector<8x4xf32>
    %142 = vector.broadcast %21 : vector<1x4xf32> to vector<8x4xf32>
    %143 = arith.addf %141, %142 : vector<8x4xf32>
    %cst_79 = arith.constant dense<0.000000e+00> : vector<8x4xf32>
    %144 = tpu.matmul %128, %7, %cst_79 {dimension_numbers = #tpu.dot_dimension_numbers<[1], [0], [0], [1], [0, 0, 1, 1], [], []>} : vector<8x4xf32>, vector<4x4xf32>, vector<8x4xf32> -> vector<8x4xf32>
    %cst_80 = arith.constant dense<0.000000e+00> : vector<8x4xf32>
    %145 = tpu.matmul %125, %15, %cst_80 {dimension_numbers = #tpu.dot_dimension_numbers<[1], [0], [0], [1], [0, 0, 1, 1], [], []>} : vector<8x4xf32>, vector<4x4xf32>, vector<8x4xf32> -> vector<8x4xf32>
    %146 = arith.addf %144, %145 : vector<8x4xf32>
    %147 = vector.broadcast %23 : vector<1x4xf32> to vector<8x4xf32>
    %148 = arith.addf %146, %147 : vector<8x4xf32>
    %cst_81 = arith.constant 0.000000e+00 : f32
    %149 = vector.broadcast %cst_81 : f32 to vector<8x4xf32>
    %150 = arith.subf %149, %133 : vector<8x4xf32>
    %151 = math.exp %150 : vector<8x4xf32>
    %cst_82 = arith.constant 1.000000e+00 : f32
    %152 = vector.broadcast %cst_82 : f32 to vector<8x4xf32>
    %153 = arith.addf %152, %151 : vector<8x4xf32>
    %cst_83 = arith.constant 1.000000e+00 : f32
    %154 = vector.broadcast %cst_83 : f32 to vector<8x4xf32>
    %155 = arith.divf %154, %153 : vector<8x4xf32>
    %cst_84 = arith.constant 0.000000e+00 : f32
    %156 = vector.broadcast %cst_84 : f32 to vector<8x4xf32>
    %157 = arith.subf %156, %138 : vector<8x4xf32>
    %158 = math.exp %157 : vector<8x4xf32>
    %cst_85 = arith.constant 1.000000e+00 : f32
    %159 = vector.broadcast %cst_85 : f32 to vector<8x4xf32>
    %160 = arith.addf %159, %158 : vector<8x4xf32>
    %cst_86 = arith.constant 1.000000e+00 : f32
    %161 = vector.broadcast %cst_86 : f32 to vector<8x4xf32>
    %162 = arith.divf %161, %160 : vector<8x4xf32>
    %163 = math.tanh %143 : vector<8x4xf32>
    %cst_87 = arith.constant 0.000000e+00 : f32
    %164 = vector.broadcast %cst_87 : f32 to vector<8x4xf32>
    %165 = arith.subf %164, %148 : vector<8x4xf32>
    %166 = math.exp %165 : vector<8x4xf32>
    %cst_88 = arith.constant 1.000000e+00 : f32
    %167 = vector.broadcast %cst_88 : f32 to vector<8x4xf32>
    %168 = arith.addf %167, %166 : vector<8x4xf32>
    %cst_89 = arith.constant 1.000000e+00 : f32
    %169 = vector.broadcast %cst_89 : f32 to vector<8x4xf32>
    %170 = arith.divf %169, %168 : vector<8x4xf32>
    %171 = arith.mulf %162, %123 : vector<8x4xf32>
    %172 = arith.mulf %155, %163 : vector<8x4xf32>
    %173 = arith.addf %171, %172 : vector<8x4xf32>
    %174 = math.tanh %173 : vector<8x4xf32>
    %175 = arith.mulf %170, %174 : vector<8x4xf32>
    %c3_i32 = arith.constant 3 : i32
    %176 = arith.index_cast %c3_i32 : i32 to index
    %c0_90 = arith.constant 0 : index
    %c0_91 = arith.constant 0 : index
    %177 = vector.load %arg1[%176, %c0_90, %c0_91] : memref<8x8x4xf32, #tpu.memory_space<vmem>>, vector<1x8x4xf32>
    %178 = vector.shape_cast %177 : vector<1x8x4xf32> to vector<8x4xf32>
    %cst_92 = arith.constant dense<0.000000e+00> : vector<8x4xf32>
    %179 = tpu.matmul %178, %1, %cst_92 {dimension_numbers = #tpu.dot_dimension_numbers<[1], [0], [0], [1], [0, 0, 1, 1], [], []>} : vector<8x4xf32>, vector<4x4xf32>, vector<8x4xf32> -> vector<8x4xf32>
    %cst_93 = arith.constant dense<0.000000e+00> : vector<8x4xf32>
    %180 = tpu.matmul %175, %9, %cst_93 {dimension_numbers = #tpu.dot_dimension_numbers<[1], [0], [0], [1], [0, 0, 1, 1], [], []>} : vector<8x4xf32>, vector<4x4xf32>, vector<8x4xf32> -> vector<8x4xf32>
    %181 = arith.addf %179, %180 : vector<8x4xf32>
    %182 = vector.broadcast %17 : vector<1x4xf32> to vector<8x4xf32>
    %183 = arith.addf %181, %182 : vector<8x4xf32>
    %cst_94 = arith.constant dense<0.000000e+00> : vector<8x4xf32>
    %184 = tpu.matmul %178, %3, %cst_94 {dimension_numbers = #tpu.dot_dimension_numbers<[1], [0], [0], [1], [0, 0, 1, 1], [], []>} : vector<8x4xf32>, vector<4x4xf32>, vector<8x4xf32> -> vector<8x4xf32>
    %cst_95 = arith.constant dense<0.000000e+00> : vector<8x4xf32>
    %185 = tpu.matmul %175, %11, %cst_95 {dimension_numbers = #tpu.dot_dimension_numbers<[1], [0], [0], [1], [0, 0, 1, 1], [], []>} : vector<8x4xf32>, vector<4x4xf32>, vector<8x4xf32> -> vector<8x4xf32>
    %186 = arith.addf %184, %185 : vector<8x4xf32>
    %187 = vector.broadcast %19 : vector<1x4xf32> to vector<8x4xf32>
    %188 = arith.addf %186, %187 : vector<8x4xf32>
    %cst_96 = arith.constant dense<0.000000e+00> : vector<8x4xf32>
    %189 = tpu.matmul %178, %5, %cst_96 {dimension_numbers = #tpu.dot_dimension_numbers<[1], [0], [0], [1], [0, 0, 1, 1], [], []>} : vector<8x4xf32>, vector<4x4xf32>, vector<8x4xf32> -> vector<8x4xf32>
    %cst_97 = arith.constant dense<0.000000e+00> : vector<8x4xf32>
    %190 = tpu.matmul %175, %13, %cst_97 {dimension_numbers = #tpu.dot_dimension_numbers<[1], [0], [0], [1], [0, 0, 1, 1], [], []>} : vector<8x4xf32>, vector<4x4xf32>, vector<8x4xf32> -> vector<8x4xf32>
    %191 = arith.addf %189, %190 : vector<8x4xf32>
    %192 = vector.broadcast %21 : vector<1x4xf32> to vector<8x4xf32>
    %193 = arith.addf %191, %192 : vector<8x4xf32>
    %cst_98 = arith.constant dense<0.000000e+00> : vector<8x4xf32>
    %194 = tpu.matmul %178, %7, %cst_98 {dimension_numbers = #tpu.dot_dimension_numbers<[1], [0], [0], [1], [0, 0, 1, 1], [], []>} : vector<8x4xf32>, vector<4x4xf32>, vector<8x4xf32> -> vector<8x4xf32>
    %cst_99 = arith.constant dense<0.000000e+00> : vector<8x4xf32>
    %195 = tpu.matmul %175, %15, %cst_99 {dimension_numbers = #tpu.dot_dimension_numbers<[1], [0], [0], [1], [0, 0, 1, 1], [], []>} : vector<8x4xf32>, vector<4x4xf32>, vector<8x4xf32> -> vector<8x4xf32>
    %196 = arith.addf %194, %195 : vector<8x4xf32>
    %197 = vector.broadcast %23 : vector<1x4xf32> to vector<8x4xf32>
    %198 = arith.addf %196, %197 : vector<8x4xf32>
    %cst_100 = arith.constant 0.000000e+00 : f32
    %199 = vector.broadcast %cst_100 : f32 to vector<8x4xf32>
    %200 = arith.subf %199, %183 : vector<8x4xf32>
    %201 = math.exp %200 : vector<8x4xf32>
    %cst_101 = arith.constant 1.000000e+00 : f32
    %202 = vector.broadcast %cst_101 : f32 to vector<8x4xf32>
    %203 = arith.addf %202, %201 : vector<8x4xf32>
    %cst_102 = arith.constant 1.000000e+00 : f32
    %204 = vector.broadcast %cst_102 : f32 to vector<8x4xf32>
    %205 = arith.divf %204, %203 : vector<8x4xf32>
    %cst_103 = arith.constant 0.000000e+00 : f32
    %206 = vector.broadcast %cst_103 : f32 to vector<8x4xf32>
    %207 = arith.subf %206, %188 : vector<8x4xf32>
    %208 = math.exp %207 : vector<8x4xf32>
    %cst_104 = arith.constant 1.000000e+00 : f32
    %209 = vector.broadcast %cst_104 : f32 to vector<8x4xf32>
    %210 = arith.addf %209, %208 : vector<8x4xf32>
    %cst_105 = arith.constant 1.000000e+00 : f32
    %211 = vector.broadcast %cst_105 : f32 to vector<8x4xf32>
    %212 = arith.divf %211, %210 : vector<8x4xf32>
    %213 = math.tanh %193 : vector<8x4xf32>
    %cst_106 = arith.constant 0.000000e+00 : f32
    %214 = vector.broadcast %cst_106 : f32 to vector<8x4xf32>
    %215 = arith.subf %214, %198 : vector<8x4xf32>
    %216 = math.exp %215 : vector<8x4xf32>
    %cst_107 = arith.constant 1.000000e+00 : f32
    %217 = vector.broadcast %cst_107 : f32 to vector<8x4xf32>
    %218 = arith.addf %217, %216 : vector<8x4xf32>
    %cst_108 = arith.constant 1.000000e+00 : f32
    %219 = vector.broadcast %cst_108 : f32 to vector<8x4xf32>
    %220 = arith.divf %219, %218 : vector<8x4xf32>
    %221 = arith.mulf %212, %173 : vector<8x4xf32>
    %222 = arith.mulf %205, %213 : vector<8x4xf32>
    %223 = arith.addf %221, %222 : vector<8x4xf32>
    %224 = math.tanh %223 : vector<8x4xf32>
    %225 = arith.mulf %220, %224 : vector<8x4xf32>
    %c4_i32 = arith.constant 4 : i32
    %226 = arith.index_cast %c4_i32 : i32 to index
    %c0_109 = arith.constant 0 : index
    %c0_110 = arith.constant 0 : index
    %227 = vector.load %arg1[%226, %c0_109, %c0_110] : memref<8x8x4xf32, #tpu.memory_space<vmem>>, vector<1x8x4xf32>
    %228 = vector.shape_cast %227 : vector<1x8x4xf32> to vector<8x4xf32>
    %cst_111 = arith.constant dense<0.000000e+00> : vector<8x4xf32>
    %229 = tpu.matmul %228, %1, %cst_111 {dimension_numbers = #tpu.dot_dimension_numbers<[1], [0], [0], [1], [0, 0, 1, 1], [], []>} : vector<8x4xf32>, vector<4x4xf32>, vector<8x4xf32> -> vector<8x4xf32>
    %cst_112 = arith.constant dense<0.000000e+00> : vector<8x4xf32>
    %230 = tpu.matmul %225, %9, %cst_112 {dimension_numbers = #tpu.dot_dimension_numbers<[1], [0], [0], [1], [0, 0, 1, 1], [], []>} : vector<8x4xf32>, vector<4x4xf32>, vector<8x4xf32> -> vector<8x4xf32>
    %231 = arith.addf %229, %230 : vector<8x4xf32>
    %232 = vector.broadcast %17 : vector<1x4xf32> to vector<8x4xf32>
    %233 = arith.addf %231, %232 : vector<8x4xf32>
    %cst_113 = arith.constant dense<0.000000e+00> : vector<8x4xf32>
    %234 = tpu.matmul %228, %3, %cst_113 {dimension_numbers = #tpu.dot_dimension_numbers<[1], [0], [0], [1], [0, 0, 1, 1], [], []>} : vector<8x4xf32>, vector<4x4xf32>, vector<8x4xf32> -> vector<8x4xf32>
    %cst_114 = arith.constant dense<0.000000e+00> : vector<8x4xf32>
    %235 = tpu.matmul %225, %11, %cst_114 {dimension_numbers = #tpu.dot_dimension_numbers<[1], [0], [0], [1], [0, 0, 1, 1], [], []>} : vector<8x4xf32>, vector<4x4xf32>, vector<8x4xf32> -> vector<8x4xf32>
    %236 = arith.addf %234, %235 : vector<8x4xf32>
    %237 = vector.broadcast %19 : vector<1x4xf32> to vector<8x4xf32>
    %238 = arith.addf %236, %237 : vector<8x4xf32>
    %cst_115 = arith.constant dense<0.000000e+00> : vector<8x4xf32>
    %239 = tpu.matmul %228, %5, %cst_115 {dimension_numbers = #tpu.dot_dimension_numbers<[1], [0], [0], [1], [0, 0, 1, 1], [], []>} : vector<8x4xf32>, vector<4x4xf32>, vector<8x4xf32> -> vector<8x4xf32>
    %cst_116 = arith.constant dense<0.000000e+00> : vector<8x4xf32>
    %240 = tpu.matmul %225, %13, %cst_116 {dimension_numbers = #tpu.dot_dimension_numbers<[1], [0], [0], [1], [0, 0, 1, 1], [], []>} : vector<8x4xf32>, vector<4x4xf32>, vector<8x4xf32> -> vector<8x4xf32>
    %241 = arith.addf %239, %240 : vector<8x4xf32>
    %242 = vector.broadcast %21 : vector<1x4xf32> to vector<8x4xf32>
    %243 = arith.addf %241, %242 : vector<8x4xf32>
    %cst_117 = arith.constant dense<0.000000e+00> : vector<8x4xf32>
    %244 = tpu.matmul %228, %7, %cst_117 {dimension_numbers = #tpu.dot_dimension_numbers<[1], [0], [0], [1], [0, 0, 1, 1], [], []>} : vector<8x4xf32>, vector<4x4xf32>, vector<8x4xf32> -> vector<8x4xf32>
    %cst_118 = arith.constant dense<0.000000e+00> : vector<8x4xf32>
    %245 = tpu.matmul %225, %15, %cst_118 {dimension_numbers = #tpu.dot_dimension_numbers<[1], [0], [0], [1], [0, 0, 1, 1], [], []>} : vector<8x4xf32>, vector<4x4xf32>, vector<8x4xf32> -> vector<8x4xf32>
    %246 = arith.addf %244, %245 : vector<8x4xf32>
    %247 = vector.broadcast %23 : vector<1x4xf32> to vector<8x4xf32>
    %248 = arith.addf %246, %247 : vector<8x4xf32>
    %cst_119 = arith.constant 0.000000e+00 : f32
    %249 = vector.broadcast %cst_119 : f32 to vector<8x4xf32>
    %250 = arith.subf %249, %233 : vector<8x4xf32>
    %251 = math.exp %250 : vector<8x4xf32>
    %cst_120 = arith.constant 1.000000e+00 : f32
    %252 = vector.broadcast %cst_120 : f32 to vector<8x4xf32>
    %253 = arith.addf %252, %251 : vector<8x4xf32>
    %cst_121 = arith.constant 1.000000e+00 : f32
    %254 = vector.broadcast %cst_121 : f32 to vector<8x4xf32>
    %255 = arith.divf %254, %253 : vector<8x4xf32>
    %cst_122 = arith.constant 0.000000e+00 : f32
    %256 = vector.broadcast %cst_122 : f32 to vector<8x4xf32>
    %257 = arith.subf %256, %238 : vector<8x4xf32>
    %258 = math.exp %257 : vector<8x4xf32>
    %cst_123 = arith.constant 1.000000e+00 : f32
    %259 = vector.broadcast %cst_123 : f32 to vector<8x4xf32>
    %260 = arith.addf %259, %258 : vector<8x4xf32>
    %cst_124 = arith.constant 1.000000e+00 : f32
    %261 = vector.broadcast %cst_124 : f32 to vector<8x4xf32>
    %262 = arith.divf %261, %260 : vector<8x4xf32>
    %263 = math.tanh %243 : vector<8x4xf32>
    %cst_125 = arith.constant 0.000000e+00 : f32
    %264 = vector.broadcast %cst_125 : f32 to vector<8x4xf32>
    %265 = arith.subf %264, %248 : vector<8x4xf32>
    %266 = math.exp %265 : vector<8x4xf32>
    %cst_126 = arith.constant 1.000000e+00 : f32
    %267 = vector.broadcast %cst_126 : f32 to vector<8x4xf32>
    %268 = arith.addf %267, %266 : vector<8x4xf32>
    %cst_127 = arith.constant 1.000000e+00 : f32
    %269 = vector.broadcast %cst_127 : f32 to vector<8x4xf32>
    %270 = arith.divf %269, %268 : vector<8x4xf32>
    %271 = arith.mulf %262, %223 : vector<8x4xf32>
    %272 = arith.mulf %255, %263 : vector<8x4xf32>
    %273 = arith.addf %271, %272 : vector<8x4xf32>
    %274 = math.tanh %273 : vector<8x4xf32>
    %275 = arith.mulf %270, %274 : vector<8x4xf32>
    %c5_i32 = arith.constant 5 : i32
    %276 = arith.index_cast %c5_i32 : i32 to index
    %c0_128 = arith.constant 0 : index
    %c0_129 = arith.constant 0 : index
    %277 = vector.load %arg1[%276, %c0_128, %c0_129] : memref<8x8x4xf32, #tpu.memory_space<vmem>>, vector<1x8x4xf32>
    %278 = vector.shape_cast %277 : vector<1x8x4xf32> to vector<8x4xf32>
    %cst_130 = arith.constant dense<0.000000e+00> : vector<8x4xf32>
    %279 = tpu.matmul %278, %1, %cst_130 {dimension_numbers = #tpu.dot_dimension_numbers<[1], [0], [0], [1], [0, 0, 1, 1], [], []>} : vector<8x4xf32>, vector<4x4xf32>, vector<8x4xf32> -> vector<8x4xf32>
    %cst_131 = arith.constant dense<0.000000e+00> : vector<8x4xf32>
    %280 = tpu.matmul %275, %9, %cst_131 {dimension_numbers = #tpu.dot_dimension_numbers<[1], [0], [0], [1], [0, 0, 1, 1], [], []>} : vector<8x4xf32>, vector<4x4xf32>, vector<8x4xf32> -> vector<8x4xf32>
    %281 = arith.addf %279, %280 : vector<8x4xf32>
    %282 = vector.broadcast %17 : vector<1x4xf32> to vector<8x4xf32>
    %283 = arith.addf %281, %282 : vector<8x4xf32>
    %cst_132 = arith.constant dense<0.000000e+00> : vector<8x4xf32>
    %284 = tpu.matmul %278, %3, %cst_132 {dimension_numbers = #tpu.dot_dimension_numbers<[1], [0], [0], [1], [0, 0, 1, 1], [], []>} : vector<8x4xf32>, vector<4x4xf32>, vector<8x4xf32> -> vector<8x4xf32>
    %cst_133 = arith.constant dense<0.000000e+00> : vector<8x4xf32>
    %285 = tpu.matmul %275, %11, %cst_133 {dimension_numbers = #tpu.dot_dimension_numbers<[1], [0], [0], [1], [0, 0, 1, 1], [], []>} : vector<8x4xf32>, vector<4x4xf32>, vector<8x4xf32> -> vector<8x4xf32>
    %286 = arith.addf %284, %285 : vector<8x4xf32>
    %287 = vector.broadcast %19 : vector<1x4xf32> to vector<8x4xf32>
    %288 = arith.addf %286, %287 : vector<8x4xf32>
    %cst_134 = arith.constant dense<0.000000e+00> : vector<8x4xf32>
    %289 = tpu.matmul %278, %5, %cst_134 {dimension_numbers = #tpu.dot_dimension_numbers<[1], [0], [0], [1], [0, 0, 1, 1], [], []>} : vector<8x4xf32>, vector<4x4xf32>, vector<8x4xf32> -> vector<8x4xf32>
    %cst_135 = arith.constant dense<0.000000e+00> : vector<8x4xf32>
    %290 = tpu.matmul %275, %13, %cst_135 {dimension_numbers = #tpu.dot_dimension_numbers<[1], [0], [0], [1], [0, 0, 1, 1], [], []>} : vector<8x4xf32>, vector<4x4xf32>, vector<8x4xf32> -> vector<8x4xf32>
    %291 = arith.addf %289, %290 : vector<8x4xf32>
    %292 = vector.broadcast %21 : vector<1x4xf32> to vector<8x4xf32>
    %293 = arith.addf %291, %292 : vector<8x4xf32>
    %cst_136 = arith.constant dense<0.000000e+00> : vector<8x4xf32>
    %294 = tpu.matmul %278, %7, %cst_136 {dimension_numbers = #tpu.dot_dimension_numbers<[1], [0], [0], [1], [0, 0, 1, 1], [], []>} : vector<8x4xf32>, vector<4x4xf32>, vector<8x4xf32> -> vector<8x4xf32>
    %cst_137 = arith.constant dense<0.000000e+00> : vector<8x4xf32>
    %295 = tpu.matmul %275, %15, %cst_137 {dimension_numbers = #tpu.dot_dimension_numbers<[1], [0], [0], [1], [0, 0, 1, 1], [], []>} : vector<8x4xf32>, vector<4x4xf32>, vector<8x4xf32> -> vector<8x4xf32>
    %296 = arith.addf %294, %295 : vector<8x4xf32>
    %297 = vector.broadcast %23 : vector<1x4xf32> to vector<8x4xf32>
    %298 = arith.addf %296, %297 : vector<8x4xf32>
    %cst_138 = arith.constant 0.000000e+00 : f32
    %299 = vector.broadcast %cst_138 : f32 to vector<8x4xf32>
    %300 = arith.subf %299, %283 : vector<8x4xf32>
    %301 = math.exp %300 : vector<8x4xf32>
    %cst_139 = arith.constant 1.000000e+00 : f32
    %302 = vector.broadcast %cst_139 : f32 to vector<8x4xf32>
    %303 = arith.addf %302, %301 : vector<8x4xf32>
    %cst_140 = arith.constant 1.000000e+00 : f32
    %304 = vector.broadcast %cst_140 : f32 to vector<8x4xf32>
    %305 = arith.divf %304, %303 : vector<8x4xf32>
    %cst_141 = arith.constant 0.000000e+00 : f32
    %306 = vector.broadcast %cst_141 : f32 to vector<8x4xf32>
    %307 = arith.subf %306, %288 : vector<8x4xf32>
    %308 = math.exp %307 : vector<8x4xf32>
    %cst_142 = arith.constant 1.000000e+00 : f32
    %309 = vector.broadcast %cst_142 : f32 to vector<8x4xf32>
    %310 = arith.addf %309, %308 : vector<8x4xf32>
    %cst_143 = arith.constant 1.000000e+00 : f32
    %311 = vector.broadcast %cst_143 : f32 to vector<8x4xf32>
    %312 = arith.divf %311, %310 : vector<8x4xf32>
    %313 = math.tanh %293 : vector<8x4xf32>
    %cst_144 = arith.constant 0.000000e+00 : f32
    %314 = vector.broadcast %cst_144 : f32 to vector<8x4xf32>
    %315 = arith.subf %314, %298 : vector<8x4xf32>
    %316 = math.exp %315 : vector<8x4xf32>
    %cst_145 = arith.constant 1.000000e+00 : f32
    %317 = vector.broadcast %cst_145 : f32 to vector<8x4xf32>
    %318 = arith.addf %317, %316 : vector<8x4xf32>
    %cst_146 = arith.constant 1.000000e+00 : f32
    %319 = vector.broadcast %cst_146 : f32 to vector<8x4xf32>
    %320 = arith.divf %319, %318 : vector<8x4xf32>
    %321 = arith.mulf %312, %273 : vector<8x4xf32>
    %322 = arith.mulf %305, %313 : vector<8x4xf32>
    %323 = arith.addf %321, %322 : vector<8x4xf32>
    %324 = math.tanh %323 : vector<8x4xf32>
    %325 = arith.mulf %320, %324 : vector<8x4xf32>
    %c6_i32 = arith.constant 6 : i32
    %326 = arith.index_cast %c6_i32 : i32 to index
    %c0_147 = arith.constant 0 : index
    %c0_148 = arith.constant 0 : index
    %327 = vector.load %arg1[%326, %c0_147, %c0_148] : memref<8x8x4xf32, #tpu.memory_space<vmem>>, vector<1x8x4xf32>
    %328 = vector.shape_cast %327 : vector<1x8x4xf32> to vector<8x4xf32>
    %cst_149 = arith.constant dense<0.000000e+00> : vector<8x4xf32>
    %329 = tpu.matmul %328, %1, %cst_149 {dimension_numbers = #tpu.dot_dimension_numbers<[1], [0], [0], [1], [0, 0, 1, 1], [], []>} : vector<8x4xf32>, vector<4x4xf32>, vector<8x4xf32> -> vector<8x4xf32>
    %cst_150 = arith.constant dense<0.000000e+00> : vector<8x4xf32>
    %330 = tpu.matmul %325, %9, %cst_150 {dimension_numbers = #tpu.dot_dimension_numbers<[1], [0], [0], [1], [0, 0, 1, 1], [], []>} : vector<8x4xf32>, vector<4x4xf32>, vector<8x4xf32> -> vector<8x4xf32>
    %331 = arith.addf %329, %330 : vector<8x4xf32>
    %332 = vector.broadcast %17 : vector<1x4xf32> to vector<8x4xf32>
    %333 = arith.addf %331, %332 : vector<8x4xf32>
    %cst_151 = arith.constant dense<0.000000e+00> : vector<8x4xf32>
    %334 = tpu.matmul %328, %3, %cst_151 {dimension_numbers = #tpu.dot_dimension_numbers<[1], [0], [0], [1], [0, 0, 1, 1], [], []>} : vector<8x4xf32>, vector<4x4xf32>, vector<8x4xf32> -> vector<8x4xf32>
    %cst_152 = arith.constant dense<0.000000e+00> : vector<8x4xf32>
    %335 = tpu.matmul %325, %11, %cst_152 {dimension_numbers = #tpu.dot_dimension_numbers<[1], [0], [0], [1], [0, 0, 1, 1], [], []>} : vector<8x4xf32>, vector<4x4xf32>, vector<8x4xf32> -> vector<8x4xf32>
    %336 = arith.addf %334, %335 : vector<8x4xf32>
    %337 = vector.broadcast %19 : vector<1x4xf32> to vector<8x4xf32>
    %338 = arith.addf %336, %337 : vector<8x4xf32>
    %cst_153 = arith.constant dense<0.000000e+00> : vector<8x4xf32>
    %339 = tpu.matmul %328, %5, %cst_153 {dimension_numbers = #tpu.dot_dimension_numbers<[1], [0], [0], [1], [0, 0, 1, 1], [], []>} : vector<8x4xf32>, vector<4x4xf32>, vector<8x4xf32> -> vector<8x4xf32>
    %cst_154 = arith.constant dense<0.000000e+00> : vector<8x4xf32>
    %340 = tpu.matmul %325, %13, %cst_154 {dimension_numbers = #tpu.dot_dimension_numbers<[1], [0], [0], [1], [0, 0, 1, 1], [], []>} : vector<8x4xf32>, vector<4x4xf32>, vector<8x4xf32> -> vector<8x4xf32>
    %341 = arith.addf %339, %340 : vector<8x4xf32>
    %342 = vector.broadcast %21 : vector<1x4xf32> to vector<8x4xf32>
    %343 = arith.addf %341, %342 : vector<8x4xf32>
    %cst_155 = arith.constant dense<0.000000e+00> : vector<8x4xf32>
    %344 = tpu.matmul %328, %7, %cst_155 {dimension_numbers = #tpu.dot_dimension_numbers<[1], [0], [0], [1], [0, 0, 1, 1], [], []>} : vector<8x4xf32>, vector<4x4xf32>, vector<8x4xf32> -> vector<8x4xf32>
    %cst_156 = arith.constant dense<0.000000e+00> : vector<8x4xf32>
    %345 = tpu.matmul %325, %15, %cst_156 {dimension_numbers = #tpu.dot_dimension_numbers<[1], [0], [0], [1], [0, 0, 1, 1], [], []>} : vector<8x4xf32>, vector<4x4xf32>, vector<8x4xf32> -> vector<8x4xf32>
    %346 = arith.addf %344, %345 : vector<8x4xf32>
    %347 = vector.broadcast %23 : vector<1x4xf32> to vector<8x4xf32>
    %348 = arith.addf %346, %347 : vector<8x4xf32>
    %cst_157 = arith.constant 0.000000e+00 : f32
    %349 = vector.broadcast %cst_157 : f32 to vector<8x4xf32>
    %350 = arith.subf %349, %333 : vector<8x4xf32>
    %351 = math.exp %350 : vector<8x4xf32>
    %cst_158 = arith.constant 1.000000e+00 : f32
    %352 = vector.broadcast %cst_158 : f32 to vector<8x4xf32>
    %353 = arith.addf %352, %351 : vector<8x4xf32>
    %cst_159 = arith.constant 1.000000e+00 : f32
    %354 = vector.broadcast %cst_159 : f32 to vector<8x4xf32>
    %355 = arith.divf %354, %353 : vector<8x4xf32>
    %cst_160 = arith.constant 0.000000e+00 : f32
    %356 = vector.broadcast %cst_160 : f32 to vector<8x4xf32>
    %357 = arith.subf %356, %338 : vector<8x4xf32>
    %358 = math.exp %357 : vector<8x4xf32>
    %cst_161 = arith.constant 1.000000e+00 : f32
    %359 = vector.broadcast %cst_161 : f32 to vector<8x4xf32>
    %360 = arith.addf %359, %358 : vector<8x4xf32>
    %cst_162 = arith.constant 1.000000e+00 : f32
    %361 = vector.broadcast %cst_162 : f32 to vector<8x4xf32>
    %362 = arith.divf %361, %360 : vector<8x4xf32>
    %363 = math.tanh %343 : vector<8x4xf32>
    %cst_163 = arith.constant 0.000000e+00 : f32
    %364 = vector.broadcast %cst_163 : f32 to vector<8x4xf32>
    %365 = arith.subf %364, %348 : vector<8x4xf32>
    %366 = math.exp %365 : vector<8x4xf32>
    %cst_164 = arith.constant 1.000000e+00 : f32
    %367 = vector.broadcast %cst_164 : f32 to vector<8x4xf32>
    %368 = arith.addf %367, %366 : vector<8x4xf32>
    %cst_165 = arith.constant 1.000000e+00 : f32
    %369 = vector.broadcast %cst_165 : f32 to vector<8x4xf32>
    %370 = arith.divf %369, %368 : vector<8x4xf32>
    %371 = arith.mulf %362, %323 : vector<8x4xf32>
    %372 = arith.mulf %355, %363 : vector<8x4xf32>
    %373 = arith.addf %371, %372 : vector<8x4xf32>
    %374 = math.tanh %373 : vector<8x4xf32>
    %375 = arith.mulf %370, %374 : vector<8x4xf32>
    %c7_i32 = arith.constant 7 : i32
    %376 = arith.index_cast %c7_i32 : i32 to index
    %c0_166 = arith.constant 0 : index
    %c0_167 = arith.constant 0 : index
    %377 = vector.load %arg1[%376, %c0_166, %c0_167] : memref<8x8x4xf32, #tpu.memory_space<vmem>>, vector<1x8x4xf32>
    %378 = vector.shape_cast %377 : vector<1x8x4xf32> to vector<8x4xf32>
    %cst_168 = arith.constant dense<0.000000e+00> : vector<8x4xf32>
    %379 = tpu.matmul %378, %1, %cst_168 {dimension_numbers = #tpu.dot_dimension_numbers<[1], [0], [0], [1], [0, 0, 1, 1], [], []>} : vector<8x4xf32>, vector<4x4xf32>, vector<8x4xf32> -> vector<8x4xf32>
    %cst_169 = arith.constant dense<0.000000e+00> : vector<8x4xf32>
    %380 = tpu.matmul %375, %9, %cst_169 {dimension_numbers = #tpu.dot_dimension_numbers<[1], [0], [0], [1], [0, 0, 1, 1], [], []>} : vector<8x4xf32>, vector<4x4xf32>, vector<8x4xf32> -> vector<8x4xf32>
    %381 = arith.addf %379, %380 : vector<8x4xf32>
    %382 = vector.broadcast %17 : vector<1x4xf32> to vector<8x4xf32>
    %383 = arith.addf %381, %382 : vector<8x4xf32>
    %cst_170 = arith.constant dense<0.000000e+00> : vector<8x4xf32>
    %384 = tpu.matmul %378, %3, %cst_170 {dimension_numbers = #tpu.dot_dimension_numbers<[1], [0], [0], [1], [0, 0, 1, 1], [], []>} : vector<8x4xf32>, vector<4x4xf32>, vector<8x4xf32> -> vector<8x4xf32>
    %cst_171 = arith.constant dense<0.000000e+00> : vector<8x4xf32>
    %385 = tpu.matmul %375, %11, %cst_171 {dimension_numbers = #tpu.dot_dimension_numbers<[1], [0], [0], [1], [0, 0, 1, 1], [], []>} : vector<8x4xf32>, vector<4x4xf32>, vector<8x4xf32> -> vector<8x4xf32>
    %386 = arith.addf %384, %385 : vector<8x4xf32>
    %387 = vector.broadcast %19 : vector<1x4xf32> to vector<8x4xf32>
    %388 = arith.addf %386, %387 : vector<8x4xf32>
    %cst_172 = arith.constant dense<0.000000e+00> : vector<8x4xf32>
    %389 = tpu.matmul %378, %5, %cst_172 {dimension_numbers = #tpu.dot_dimension_numbers<[1], [0], [0], [1], [0, 0, 1, 1], [], []>} : vector<8x4xf32>, vector<4x4xf32>, vector<8x4xf32> -> vector<8x4xf32>
    %cst_173 = arith.constant dense<0.000000e+00> : vector<8x4xf32>
    %390 = tpu.matmul %375, %13, %cst_173 {dimension_numbers = #tpu.dot_dimension_numbers<[1], [0], [0], [1], [0, 0, 1, 1], [], []>} : vector<8x4xf32>, vector<4x4xf32>, vector<8x4xf32> -> vector<8x4xf32>
    %391 = arith.addf %389, %390 : vector<8x4xf32>
    %392 = vector.broadcast %21 : vector<1x4xf32> to vector<8x4xf32>
    %393 = arith.addf %391, %392 : vector<8x4xf32>
    %cst_174 = arith.constant dense<0.000000e+00> : vector<8x4xf32>
    %394 = tpu.matmul %378, %7, %cst_174 {dimension_numbers = #tpu.dot_dimension_numbers<[1], [0], [0], [1], [0, 0, 1, 1], [], []>} : vector<8x4xf32>, vector<4x4xf32>, vector<8x4xf32> -> vector<8x4xf32>
    %cst_175 = arith.constant dense<0.000000e+00> : vector<8x4xf32>
    %395 = tpu.matmul %375, %15, %cst_175 {dimension_numbers = #tpu.dot_dimension_numbers<[1], [0], [0], [1], [0, 0, 1, 1], [], []>} : vector<8x4xf32>, vector<4x4xf32>, vector<8x4xf32> -> vector<8x4xf32>
    %396 = arith.addf %394, %395 : vector<8x4xf32>
    %397 = vector.broadcast %23 : vector<1x4xf32> to vector<8x4xf32>
    %398 = arith.addf %396, %397 : vector<8x4xf32>
    %cst_176 = arith.constant 0.000000e+00 : f32
    %399 = vector.broadcast %cst_176 : f32 to vector<8x4xf32>
    %400 = arith.subf %399, %383 : vector<8x4xf32>
    %401 = math.exp %400 : vector<8x4xf32>
    %cst_177 = arith.constant 1.000000e+00 : f32
    %402 = vector.broadcast %cst_177 : f32 to vector<8x4xf32>
    %403 = arith.addf %402, %401 : vector<8x4xf32>
    %cst_178 = arith.constant 1.000000e+00 : f32
    %404 = vector.broadcast %cst_178 : f32 to vector<8x4xf32>
    %405 = arith.divf %404, %403 : vector<8x4xf32>
    %cst_179 = arith.constant 0.000000e+00 : f32
    %406 = vector.broadcast %cst_179 : f32 to vector<8x4xf32>
    %407 = arith.subf %406, %388 : vector<8x4xf32>
    %408 = math.exp %407 : vector<8x4xf32>
    %cst_180 = arith.constant 1.000000e+00 : f32
    %409 = vector.broadcast %cst_180 : f32 to vector<8x4xf32>
    %410 = arith.addf %409, %408 : vector<8x4xf32>
    %cst_181 = arith.constant 1.000000e+00 : f32
    %411 = vector.broadcast %cst_181 : f32 to vector<8x4xf32>
    %412 = arith.divf %411, %410 : vector<8x4xf32>
    %413 = math.tanh %393 : vector<8x4xf32>
    %cst_182 = arith.constant 0.000000e+00 : f32
    %414 = vector.broadcast %cst_182 : f32 to vector<8x4xf32>
    %415 = arith.subf %414, %398 : vector<8x4xf32>
    %416 = math.exp %415 : vector<8x4xf32>
    %cst_183 = arith.constant 1.000000e+00 : f32
    %417 = vector.broadcast %cst_183 : f32 to vector<8x4xf32>
    %418 = arith.addf %417, %416 : vector<8x4xf32>
    %cst_184 = arith.constant 1.000000e+00 : f32
    %419 = vector.broadcast %cst_184 : f32 to vector<8x4xf32>
    %420 = arith.divf %419, %418 : vector<8x4xf32>
    %421 = arith.mulf %412, %373 : vector<8x4xf32>
    %422 = arith.mulf %405, %413 : vector<8x4xf32>
    %423 = arith.addf %421, %422 : vector<8x4xf32>
    %424 = math.tanh %423 : vector<8x4xf32>
    %425 = arith.mulf %420, %424 : vector<8x4xf32>
    %c8_i32 = arith.constant 8 : i32
    %c0_185 = arith.constant 0 : index
    %c0_186 = arith.constant 0 : index
    %c0_187 = arith.constant 0 : index
    %426 = vector.load %arg6[%c0_185, %c0_186, %c0_187] : memref<4x2x4xf32, #tpu.memory_space<vmem>>, vector<1x2x4xf32>
    %427 = vector.shape_cast %426 : vector<1x2x4xf32> to vector<2x4xf32>
    %c1_188 = arith.constant 1 : index
    %c0_189 = arith.constant 0 : index
    %c0_190 = arith.constant 0 : index
    %428 = vector.load %arg6[%c1_188, %c0_189, %c0_190] : memref<4x2x4xf32, #tpu.memory_space<vmem>>, vector<1x2x4xf32>
    %429 = vector.shape_cast %428 : vector<1x2x4xf32> to vector<2x4xf32>
    %c2_191 = arith.constant 2 : index
    %c0_192 = arith.constant 0 : index
    %c0_193 = arith.constant 0 : index
    %430 = vector.load %arg6[%c2_191, %c0_192, %c0_193] : memref<4x2x4xf32, #tpu.memory_space<vmem>>, vector<1x2x4xf32>
    %431 = vector.shape_cast %430 : vector<1x2x4xf32> to vector<2x4xf32>
    %c3_194 = arith.constant 3 : index
    %c0_195 = arith.constant 0 : index
    %c0_196 = arith.constant 0 : index
    %432 = vector.load %arg6[%c3_194, %c0_195, %c0_196] : memref<4x2x4xf32, #tpu.memory_space<vmem>>, vector<1x2x4xf32>
    %433 = vector.shape_cast %432 : vector<1x2x4xf32> to vector<2x4xf32>
    %c0_197 = arith.constant 0 : index
    %c0_198 = arith.constant 0 : index
    %c0_199 = arith.constant 0 : index
    %434 = vector.load %arg7[%c0_197, %c0_198, %c0_199] : memref<4x4x4xf32, #tpu.memory_space<vmem>>, vector<1x4x4xf32>
    %435 = vector.shape_cast %434 : vector<1x4x4xf32> to vector<4x4xf32>
    %c1_200 = arith.constant 1 : index
    %c0_201 = arith.constant 0 : index
    %c0_202 = arith.constant 0 : index
    %436 = vector.load %arg7[%c1_200, %c0_201, %c0_202] : memref<4x4x4xf32, #tpu.memory_space<vmem>>, vector<1x4x4xf32>
    %437 = vector.shape_cast %436 : vector<1x4x4xf32> to vector<4x4xf32>
    %c2_203 = arith.constant 2 : index
    %c0_204 = arith.constant 0 : index
    %c0_205 = arith.constant 0 : index
    %438 = vector.load %arg7[%c2_203, %c0_204, %c0_205] : memref<4x4x4xf32, #tpu.memory_space<vmem>>, vector<1x4x4xf32>
    %439 = vector.shape_cast %438 : vector<1x4x4xf32> to vector<4x4xf32>
    %c3_206 = arith.constant 3 : index
    %c0_207 = arith.constant 0 : index
    %c0_208 = arith.constant 0 : index
    %440 = vector.load %arg7[%c3_206, %c0_207, %c0_208] : memref<4x4x4xf32, #tpu.memory_space<vmem>>, vector<1x4x4xf32>
    %441 = vector.shape_cast %440 : vector<1x4x4xf32> to vector<4x4xf32>
    %c0_209 = arith.constant 0 : index
    %c0_210 = arith.constant 0 : index
    %c0_211 = arith.constant 0 : index
    %442 = vector.load %arg8[%c0_209, %c0_210, %c0_211] : memref<4x1x4xf32, #tpu.memory_space<vmem>>, vector<1x1x4xf32>
    %443 = vector.shape_cast %442 : vector<1x1x4xf32> to vector<1x4xf32>
    %c1_212 = arith.constant 1 : index
    %c0_213 = arith.constant 0 : index
    %c0_214 = arith.constant 0 : index
    %444 = vector.load %arg8[%c1_212, %c0_213, %c0_214] : memref<4x1x4xf32, #tpu.memory_space<vmem>>, vector<1x1x4xf32>
    %445 = vector.shape_cast %444 : vector<1x1x4xf32> to vector<1x4xf32>
    %c2_215 = arith.constant 2 : index
    %c0_216 = arith.constant 0 : index
    %c0_217 = arith.constant 0 : index
    %446 = vector.load %arg8[%c2_215, %c0_216, %c0_217] : memref<4x1x4xf32, #tpu.memory_space<vmem>>, vector<1x1x4xf32>
    %447 = vector.shape_cast %446 : vector<1x1x4xf32> to vector<1x4xf32>
    %c3_218 = arith.constant 3 : index
    %c0_219 = arith.constant 0 : index
    %c0_220 = arith.constant 0 : index
    %448 = vector.load %arg8[%c3_218, %c0_219, %c0_220] : memref<4x1x4xf32, #tpu.memory_space<vmem>>, vector<1x1x4xf32>
    %449 = vector.shape_cast %448 : vector<1x1x4xf32> to vector<1x4xf32>
    %cst_221 = arith.constant 0.000000e+00 : f32
    %450 = vector.broadcast %cst_221 : f32 to vector<8x4xf32>
    %cst_222 = arith.constant 0.000000e+00 : f32
    %451 = vector.broadcast %cst_222 : f32 to vector<8x4xf32>
    %c0_i32_223 = arith.constant 0 : i32
    %452 = arith.index_cast %c0_i32_223 : i32 to index
    %c0_224 = arith.constant 0 : index
    %c0_225 = arith.constant 0 : index
    %453 = vector.load %arg2[%452, %c0_224, %c0_225] : memref<8x8x2xf32, #tpu.memory_space<vmem>>, vector<1x8x2xf32>
    %454 = vector.shape_cast %453 : vector<1x8x2xf32> to vector<8x2xf32>
    %cst_226 = arith.constant dense<0.000000e+00> : vector<8x4xf32>
    %455 = tpu.matmul %454, %427, %cst_226 {dimension_numbers = #tpu.dot_dimension_numbers<[1], [0], [0], [1], [0, 0, 1, 1], [], []>} : vector<8x2xf32>, vector<2x4xf32>, vector<8x4xf32> -> vector<8x4xf32>
    %cst_227 = arith.constant dense<0.000000e+00> : vector<8x4xf32>
    %456 = tpu.matmul %450, %435, %cst_227 {dimension_numbers = #tpu.dot_dimension_numbers<[1], [0], [0], [1], [0, 0, 1, 1], [], []>} : vector<8x4xf32>, vector<4x4xf32>, vector<8x4xf32> -> vector<8x4xf32>
    %457 = arith.addf %455, %456 : vector<8x4xf32>
    %458 = vector.broadcast %443 : vector<1x4xf32> to vector<8x4xf32>
    %459 = arith.addf %457, %458 : vector<8x4xf32>
    %cst_228 = arith.constant dense<0.000000e+00> : vector<8x4xf32>
    %460 = tpu.matmul %454, %429, %cst_228 {dimension_numbers = #tpu.dot_dimension_numbers<[1], [0], [0], [1], [0, 0, 1, 1], [], []>} : vector<8x2xf32>, vector<2x4xf32>, vector<8x4xf32> -> vector<8x4xf32>
    %cst_229 = arith.constant dense<0.000000e+00> : vector<8x4xf32>
    %461 = tpu.matmul %450, %437, %cst_229 {dimension_numbers = #tpu.dot_dimension_numbers<[1], [0], [0], [1], [0, 0, 1, 1], [], []>} : vector<8x4xf32>, vector<4x4xf32>, vector<8x4xf32> -> vector<8x4xf32>
    %462 = arith.addf %460, %461 : vector<8x4xf32>
    %463 = vector.broadcast %445 : vector<1x4xf32> to vector<8x4xf32>
    %464 = arith.addf %462, %463 : vector<8x4xf32>
    %cst_230 = arith.constant dense<0.000000e+00> : vector<8x4xf32>
    %465 = tpu.matmul %454, %431, %cst_230 {dimension_numbers = #tpu.dot_dimension_numbers<[1], [0], [0], [1], [0, 0, 1, 1], [], []>} : vector<8x2xf32>, vector<2x4xf32>, vector<8x4xf32> -> vector<8x4xf32>
    %cst_231 = arith.constant dense<0.000000e+00> : vector<8x4xf32>
    %466 = tpu.matmul %450, %439, %cst_231 {dimension_numbers = #tpu.dot_dimension_numbers<[1], [0], [0], [1], [0, 0, 1, 1], [], []>} : vector<8x4xf32>, vector<4x4xf32>, vector<8x4xf32> -> vector<8x4xf32>
    %467 = arith.addf %465, %466 : vector<8x4xf32>
    %468 = vector.broadcast %447 : vector<1x4xf32> to vector<8x4xf32>
    %469 = arith.addf %467, %468 : vector<8x4xf32>
    %cst_232 = arith.constant dense<0.000000e+00> : vector<8x4xf32>
    %470 = tpu.matmul %454, %433, %cst_232 {dimension_numbers = #tpu.dot_dimension_numbers<[1], [0], [0], [1], [0, 0, 1, 1], [], []>} : vector<8x2xf32>, vector<2x4xf32>, vector<8x4xf32> -> vector<8x4xf32>
    %cst_233 = arith.constant dense<0.000000e+00> : vector<8x4xf32>
    %471 = tpu.matmul %450, %441, %cst_233 {dimension_numbers = #tpu.dot_dimension_numbers<[1], [0], [0], [1], [0, 0, 1, 1], [], []>} : vector<8x4xf32>, vector<4x4xf32>, vector<8x4xf32> -> vector<8x4xf32>
    %472 = arith.addf %470, %471 : vector<8x4xf32>
    %473 = vector.broadcast %449 : vector<1x4xf32> to vector<8x4xf32>
    %474 = arith.addf %472, %473 : vector<8x4xf32>
    %cst_234 = arith.constant 0.000000e+00 : f32
    %475 = vector.broadcast %cst_234 : f32 to vector<8x4xf32>
    %476 = arith.subf %475, %459 : vector<8x4xf32>
    %477 = math.exp %476 : vector<8x4xf32>
    %cst_235 = arith.constant 1.000000e+00 : f32
    %478 = vector.broadcast %cst_235 : f32 to vector<8x4xf32>
    %479 = arith.addf %478, %477 : vector<8x4xf32>
    %cst_236 = arith.constant 1.000000e+00 : f32
    %480 = vector.broadcast %cst_236 : f32 to vector<8x4xf32>
    %481 = arith.divf %480, %479 : vector<8x4xf32>
    %cst_237 = arith.constant 0.000000e+00 : f32
    %482 = vector.broadcast %cst_237 : f32 to vector<8x4xf32>
    %483 = arith.subf %482, %464 : vector<8x4xf32>
    %484 = math.exp %483 : vector<8x4xf32>
    %cst_238 = arith.constant 1.000000e+00 : f32
    %485 = vector.broadcast %cst_238 : f32 to vector<8x4xf32>
    %486 = arith.addf %485, %484 : vector<8x4xf32>
    %cst_239 = arith.constant 1.000000e+00 : f32
    %487 = vector.broadcast %cst_239 : f32 to vector<8x4xf32>
    %488 = arith.divf %487, %486 : vector<8x4xf32>
    %489 = math.tanh %469 : vector<8x4xf32>
    %cst_240 = arith.constant 0.000000e+00 : f32
    %490 = vector.broadcast %cst_240 : f32 to vector<8x4xf32>
    %491 = arith.subf %490, %474 : vector<8x4xf32>
    %492 = math.exp %491 : vector<8x4xf32>
    %cst_241 = arith.constant 1.000000e+00 : f32
    %493 = vector.broadcast %cst_241 : f32 to vector<8x4xf32>
    %494 = arith.addf %493, %492 : vector<8x4xf32>
    %cst_242 = arith.constant 1.000000e+00 : f32
    %495 = vector.broadcast %cst_242 : f32 to vector<8x4xf32>
    %496 = arith.divf %495, %494 : vector<8x4xf32>
    %497 = arith.mulf %488, %451 : vector<8x4xf32>
    %498 = arith.mulf %481, %489 : vector<8x4xf32>
    %499 = arith.addf %497, %498 : vector<8x4xf32>
    %500 = math.tanh %499 : vector<8x4xf32>
    %501 = arith.mulf %496, %500 : vector<8x4xf32>
    %c1_i32_243 = arith.constant 1 : i32
    %502 = arith.index_cast %c1_i32_243 : i32 to index
    %c0_244 = arith.constant 0 : index
    %c0_245 = arith.constant 0 : index
    %503 = vector.load %arg2[%502, %c0_244, %c0_245] : memref<8x8x2xf32, #tpu.memory_space<vmem>>, vector<1x8x2xf32>
    %504 = vector.shape_cast %503 : vector<1x8x2xf32> to vector<8x2xf32>
    %cst_246 = arith.constant dense<0.000000e+00> : vector<8x4xf32>
    %505 = tpu.matmul %504, %427, %cst_246 {dimension_numbers = #tpu.dot_dimension_numbers<[1], [0], [0], [1], [0, 0, 1, 1], [], []>} : vector<8x2xf32>, vector<2x4xf32>, vector<8x4xf32> -> vector<8x4xf32>
    %cst_247 = arith.constant dense<0.000000e+00> : vector<8x4xf32>
    %506 = tpu.matmul %501, %435, %cst_247 {dimension_numbers = #tpu.dot_dimension_numbers<[1], [0], [0], [1], [0, 0, 1, 1], [], []>} : vector<8x4xf32>, vector<4x4xf32>, vector<8x4xf32> -> vector<8x4xf32>
    %507 = arith.addf %505, %506 : vector<8x4xf32>
    %508 = vector.broadcast %443 : vector<1x4xf32> to vector<8x4xf32>
    %509 = arith.addf %507, %508 : vector<8x4xf32>
    %cst_248 = arith.constant dense<0.000000e+00> : vector<8x4xf32>
    %510 = tpu.matmul %504, %429, %cst_248 {dimension_numbers = #tpu.dot_dimension_numbers<[1], [0], [0], [1], [0, 0, 1, 1], [], []>} : vector<8x2xf32>, vector<2x4xf32>, vector<8x4xf32> -> vector<8x4xf32>
    %cst_249 = arith.constant dense<0.000000e+00> : vector<8x4xf32>
    %511 = tpu.matmul %501, %437, %cst_249 {dimension_numbers = #tpu.dot_dimension_numbers<[1], [0], [0], [1], [0, 0, 1, 1], [], []>} : vector<8x4xf32>, vector<4x4xf32>, vector<8x4xf32> -> vector<8x4xf32>
    %512 = arith.addf %510, %511 : vector<8x4xf32>
    %513 = vector.broadcast %445 : vector<1x4xf32> to vector<8x4xf32>
    %514 = arith.addf %512, %513 : vector<8x4xf32>
    %cst_250 = arith.constant dense<0.000000e+00> : vector<8x4xf32>
    %515 = tpu.matmul %504, %431, %cst_250 {dimension_numbers = #tpu.dot_dimension_numbers<[1], [0], [0], [1], [0, 0, 1, 1], [], []>} : vector<8x2xf32>, vector<2x4xf32>, vector<8x4xf32> -> vector<8x4xf32>
    %cst_251 = arith.constant dense<0.000000e+00> : vector<8x4xf32>
    %516 = tpu.matmul %501, %439, %cst_251 {dimension_numbers = #tpu.dot_dimension_numbers<[1], [0], [0], [1], [0, 0, 1, 1], [], []>} : vector<8x4xf32>, vector<4x4xf32>, vector<8x4xf32> -> vector<8x4xf32>
    %517 = arith.addf %515, %516 : vector<8x4xf32>
    %518 = vector.broadcast %447 : vector<1x4xf32> to vector<8x4xf32>
    %519 = arith.addf %517, %518 : vector<8x4xf32>
    %cst_252 = arith.constant dense<0.000000e+00> : vector<8x4xf32>
    %520 = tpu.matmul %504, %433, %cst_252 {dimension_numbers = #tpu.dot_dimension_numbers<[1], [0], [0], [1], [0, 0, 1, 1], [], []>} : vector<8x2xf32>, vector<2x4xf32>, vector<8x4xf32> -> vector<8x4xf32>
    %cst_253 = arith.constant dense<0.000000e+00> : vector<8x4xf32>
    %521 = tpu.matmul %501, %441, %cst_253 {dimension_numbers = #tpu.dot_dimension_numbers<[1], [0], [0], [1], [0, 0, 1, 1], [], []>} : vector<8x4xf32>, vector<4x4xf32>, vector<8x4xf32> -> vector<8x4xf32>
    %522 = arith.addf %520, %521 : vector<8x4xf32>
    %523 = vector.broadcast %449 : vector<1x4xf32> to vector<8x4xf32>
    %524 = arith.addf %522, %523 : vector<8x4xf32>
    %cst_254 = arith.constant 0.000000e+00 : f32
    %525 = vector.broadcast %cst_254 : f32 to vector<8x4xf32>
    %526 = arith.subf %525, %509 : vector<8x4xf32>
    %527 = math.exp %526 : vector<8x4xf32>
    %cst_255 = arith.constant 1.000000e+00 : f32
    %528 = vector.broadcast %cst_255 : f32 to vector<8x4xf32>
    %529 = arith.addf %528, %527 : vector<8x4xf32>
    %cst_256 = arith.constant 1.000000e+00 : f32
    %530 = vector.broadcast %cst_256 : f32 to vector<8x4xf32>
    %531 = arith.divf %530, %529 : vector<8x4xf32>
    %cst_257 = arith.constant 0.000000e+00 : f32
    %532 = vector.broadcast %cst_257 : f32 to vector<8x4xf32>
    %533 = arith.subf %532, %514 : vector<8x4xf32>
    %534 = math.exp %533 : vector<8x4xf32>
    %cst_258 = arith.constant 1.000000e+00 : f32
    %535 = vector.broadcast %cst_258 : f32 to vector<8x4xf32>
    %536 = arith.addf %535, %534 : vector<8x4xf32>
    %cst_259 = arith.constant 1.000000e+00 : f32
    %537 = vector.broadcast %cst_259 : f32 to vector<8x4xf32>
    %538 = arith.divf %537, %536 : vector<8x4xf32>
    %539 = math.tanh %519 : vector<8x4xf32>
    %cst_260 = arith.constant 0.000000e+00 : f32
    %540 = vector.broadcast %cst_260 : f32 to vector<8x4xf32>
    %541 = arith.subf %540, %524 : vector<8x4xf32>
    %542 = math.exp %541 : vector<8x4xf32>
    %cst_261 = arith.constant 1.000000e+00 : f32
    %543 = vector.broadcast %cst_261 : f32 to vector<8x4xf32>
    %544 = arith.addf %543, %542 : vector<8x4xf32>
    %cst_262 = arith.constant 1.000000e+00 : f32
    %545 = vector.broadcast %cst_262 : f32 to vector<8x4xf32>
    %546 = arith.divf %545, %544 : vector<8x4xf32>
    %547 = arith.mulf %538, %499 : vector<8x4xf32>
    %548 = arith.mulf %531, %539 : vector<8x4xf32>
    %549 = arith.addf %547, %548 : vector<8x4xf32>
    %550 = math.tanh %549 : vector<8x4xf32>
    %551 = arith.mulf %546, %550 : vector<8x4xf32>
    %c2_i32_263 = arith.constant 2 : i32
    %552 = arith.index_cast %c2_i32_263 : i32 to index
    %c0_264 = arith.constant 0 : index
    %c0_265 = arith.constant 0 : index
    %553 = vector.load %arg2[%552, %c0_264, %c0_265] : memref<8x8x2xf32, #tpu.memory_space<vmem>>, vector<1x8x2xf32>
    %554 = vector.shape_cast %553 : vector<1x8x2xf32> to vector<8x2xf32>
    %cst_266 = arith.constant dense<0.000000e+00> : vector<8x4xf32>
    %555 = tpu.matmul %554, %427, %cst_266 {dimension_numbers = #tpu.dot_dimension_numbers<[1], [0], [0], [1], [0, 0, 1, 1], [], []>} : vector<8x2xf32>, vector<2x4xf32>, vector<8x4xf32> -> vector<8x4xf32>
    %cst_267 = arith.constant dense<0.000000e+00> : vector<8x4xf32>
    %556 = tpu.matmul %551, %435, %cst_267 {dimension_numbers = #tpu.dot_dimension_numbers<[1], [0], [0], [1], [0, 0, 1, 1], [], []>} : vector<8x4xf32>, vector<4x4xf32>, vector<8x4xf32> -> vector<8x4xf32>
    %557 = arith.addf %555, %556 : vector<8x4xf32>
    %558 = vector.broadcast %443 : vector<1x4xf32> to vector<8x4xf32>
    %559 = arith.addf %557, %558 : vector<8x4xf32>
    %cst_268 = arith.constant dense<0.000000e+00> : vector<8x4xf32>
    %560 = tpu.matmul %554, %429, %cst_268 {dimension_numbers = #tpu.dot_dimension_numbers<[1], [0], [0], [1], [0, 0, 1, 1], [], []>} : vector<8x2xf32>, vector<2x4xf32>, vector<8x4xf32> -> vector<8x4xf32>
    %cst_269 = arith.constant dense<0.000000e+00> : vector<8x4xf32>
    %561 = tpu.matmul %551, %437, %cst_269 {dimension_numbers = #tpu.dot_dimension_numbers<[1], [0], [0], [1], [0, 0, 1, 1], [], []>} : vector<8x4xf32>, vector<4x4xf32>, vector<8x4xf32> -> vector<8x4xf32>
    %562 = arith.addf %560, %561 : vector<8x4xf32>
    %563 = vector.broadcast %445 : vector<1x4xf32> to vector<8x4xf32>
    %564 = arith.addf %562, %563 : vector<8x4xf32>
    %cst_270 = arith.constant dense<0.000000e+00> : vector<8x4xf32>
    %565 = tpu.matmul %554, %431, %cst_270 {dimension_numbers = #tpu.dot_dimension_numbers<[1], [0], [0], [1], [0, 0, 1, 1], [], []>} : vector<8x2xf32>, vector<2x4xf32>, vector<8x4xf32> -> vector<8x4xf32>
    %cst_271 = arith.constant dense<0.000000e+00> : vector<8x4xf32>
    %566 = tpu.matmul %551, %439, %cst_271 {dimension_numbers = #tpu.dot_dimension_numbers<[1], [0], [0], [1], [0, 0, 1, 1], [], []>} : vector<8x4xf32>, vector<4x4xf32>, vector<8x4xf32> -> vector<8x4xf32>
    %567 = arith.addf %565, %566 : vector<8x4xf32>
    %568 = vector.broadcast %447 : vector<1x4xf32> to vector<8x4xf32>
    %569 = arith.addf %567, %568 : vector<8x4xf32>
    %cst_272 = arith.constant dense<0.000000e+00> : vector<8x4xf32>
    %570 = tpu.matmul %554, %433, %cst_272 {dimension_numbers = #tpu.dot_dimension_numbers<[1], [0], [0], [1], [0, 0, 1, 1], [], []>} : vector<8x2xf32>, vector<2x4xf32>, vector<8x4xf32> -> vector<8x4xf32>
    %cst_273 = arith.constant dense<0.000000e+00> : vector<8x4xf32>
    %571 = tpu.matmul %551, %441, %cst_273 {dimension_numbers = #tpu.dot_dimension_numbers<[1], [0], [0], [1], [0, 0, 1, 1], [], []>} : vector<8x4xf32>, vector<4x4xf32>, vector<8x4xf32> -> vector<8x4xf32>
    %572 = arith.addf %570, %571 : vector<8x4xf32>
    %573 = vector.broadcast %449 : vector<1x4xf32> to vector<8x4xf32>
    %574 = arith.addf %572, %573 : vector<8x4xf32>
    %cst_274 = arith.constant 0.000000e+00 : f32
    %575 = vector.broadcast %cst_274 : f32 to vector<8x4xf32>
    %576 = arith.subf %575, %559 : vector<8x4xf32>
    %577 = math.exp %576 : vector<8x4xf32>
    %cst_275 = arith.constant 1.000000e+00 : f32
    %578 = vector.broadcast %cst_275 : f32 to vector<8x4xf32>
    %579 = arith.addf %578, %577 : vector<8x4xf32>
    %cst_276 = arith.constant 1.000000e+00 : f32
    %580 = vector.broadcast %cst_276 : f32 to vector<8x4xf32>
    %581 = arith.divf %580, %579 : vector<8x4xf32>
    %cst_277 = arith.constant 0.000000e+00 : f32
    %582 = vector.broadcast %cst_277 : f32 to vector<8x4xf32>
    %583 = arith.subf %582, %564 : vector<8x4xf32>
    %584 = math.exp %583 : vector<8x4xf32>
    %cst_278 = arith.constant 1.000000e+00 : f32
    %585 = vector.broadcast %cst_278 : f32 to vector<8x4xf32>
    %586 = arith.addf %585, %584 : vector<8x4xf32>
    %cst_279 = arith.constant 1.000000e+00 : f32
    %587 = vector.broadcast %cst_279 : f32 to vector<8x4xf32>
    %588 = arith.divf %587, %586 : vector<8x4xf32>
    %589 = math.tanh %569 : vector<8x4xf32>
    %cst_280 = arith.constant 0.000000e+00 : f32
    %590 = vector.broadcast %cst_280 : f32 to vector<8x4xf32>
    %591 = arith.subf %590, %574 : vector<8x4xf32>
    %592 = math.exp %591 : vector<8x4xf32>
    %cst_281 = arith.constant 1.000000e+00 : f32
    %593 = vector.broadcast %cst_281 : f32 to vector<8x4xf32>
    %594 = arith.addf %593, %592 : vector<8x4xf32>
    %cst_282 = arith.constant 1.000000e+00 : f32
    %595 = vector.broadcast %cst_282 : f32 to vector<8x4xf32>
    %596 = arith.divf %595, %594 : vector<8x4xf32>
    %597 = arith.mulf %588, %549 : vector<8x4xf32>
    %598 = arith.mulf %581, %589 : vector<8x4xf32>
    %599 = arith.addf %597, %598 : vector<8x4xf32>
    %600 = math.tanh %599 : vector<8x4xf32>
    %601 = arith.mulf %596, %600 : vector<8x4xf32>
    %c3_i32_283 = arith.constant 3 : i32
    %602 = arith.index_cast %c3_i32_283 : i32 to index
    %c0_284 = arith.constant 0 : index
    %c0_285 = arith.constant 0 : index
    %603 = vector.load %arg2[%602, %c0_284, %c0_285] : memref<8x8x2xf32, #tpu.memory_space<vmem>>, vector<1x8x2xf32>
    %604 = vector.shape_cast %603 : vector<1x8x2xf32> to vector<8x2xf32>
    %cst_286 = arith.constant dense<0.000000e+00> : vector<8x4xf32>
    %605 = tpu.matmul %604, %427, %cst_286 {dimension_numbers = #tpu.dot_dimension_numbers<[1], [0], [0], [1], [0, 0, 1, 1], [], []>} : vector<8x2xf32>, vector<2x4xf32>, vector<8x4xf32> -> vector<8x4xf32>
    %cst_287 = arith.constant dense<0.000000e+00> : vector<8x4xf32>
    %606 = tpu.matmul %601, %435, %cst_287 {dimension_numbers = #tpu.dot_dimension_numbers<[1], [0], [0], [1], [0, 0, 1, 1], [], []>} : vector<8x4xf32>, vector<4x4xf32>, vector<8x4xf32> -> vector<8x4xf32>
    %607 = arith.addf %605, %606 : vector<8x4xf32>
    %608 = vector.broadcast %443 : vector<1x4xf32> to vector<8x4xf32>
    %609 = arith.addf %607, %608 : vector<8x4xf32>
    %cst_288 = arith.constant dense<0.000000e+00> : vector<8x4xf32>
    %610 = tpu.matmul %604, %429, %cst_288 {dimension_numbers = #tpu.dot_dimension_numbers<[1], [0], [0], [1], [0, 0, 1, 1], [], []>} : vector<8x2xf32>, vector<2x4xf32>, vector<8x4xf32> -> vector<8x4xf32>
    %cst_289 = arith.constant dense<0.000000e+00> : vector<8x4xf32>
    %611 = tpu.matmul %601, %437, %cst_289 {dimension_numbers = #tpu.dot_dimension_numbers<[1], [0], [0], [1], [0, 0, 1, 1], [], []>} : vector<8x4xf32>, vector<4x4xf32>, vector<8x4xf32> -> vector<8x4xf32>
    %612 = arith.addf %610, %611 : vector<8x4xf32>
    %613 = vector.broadcast %445 : vector<1x4xf32> to vector<8x4xf32>
    %614 = arith.addf %612, %613 : vector<8x4xf32>
    %cst_290 = arith.constant dense<0.000000e+00> : vector<8x4xf32>
    %615 = tpu.matmul %604, %431, %cst_290 {dimension_numbers = #tpu.dot_dimension_numbers<[1], [0], [0], [1], [0, 0, 1, 1], [], []>} : vector<8x2xf32>, vector<2x4xf32>, vector<8x4xf32> -> vector<8x4xf32>
    %cst_291 = arith.constant dense<0.000000e+00> : vector<8x4xf32>
    %616 = tpu.matmul %601, %439, %cst_291 {dimension_numbers = #tpu.dot_dimension_numbers<[1], [0], [0], [1], [0, 0, 1, 1], [], []>} : vector<8x4xf32>, vector<4x4xf32>, vector<8x4xf32> -> vector<8x4xf32>
    %617 = arith.addf %615, %616 : vector<8x4xf32>
    %618 = vector.broadcast %447 : vector<1x4xf32> to vector<8x4xf32>
    %619 = arith.addf %617, %618 : vector<8x4xf32>
    %cst_292 = arith.constant dense<0.000000e+00> : vector<8x4xf32>
    %620 = tpu.matmul %604, %433, %cst_292 {dimension_numbers = #tpu.dot_dimension_numbers<[1], [0], [0], [1], [0, 0, 1, 1], [], []>} : vector<8x2xf32>, vector<2x4xf32>, vector<8x4xf32> -> vector<8x4xf32>
    %cst_293 = arith.constant dense<0.000000e+00> : vector<8x4xf32>
    %621 = tpu.matmul %601, %441, %cst_293 {dimension_numbers = #tpu.dot_dimension_numbers<[1], [0], [0], [1], [0, 0, 1, 1], [], []>} : vector<8x4xf32>, vector<4x4xf32>, vector<8x4xf32> -> vector<8x4xf32>
    %622 = arith.addf %620, %621 : vector<8x4xf32>
    %623 = vector.broadcast %449 : vector<1x4xf32> to vector<8x4xf32>
    %624 = arith.addf %622, %623 : vector<8x4xf32>
    %cst_294 = arith.constant 0.000000e+00 : f32
    %625 = vector.broadcast %cst_294 : f32 to vector<8x4xf32>
    %626 = arith.subf %625, %609 : vector<8x4xf32>
    %627 = math.exp %626 : vector<8x4xf32>
    %cst_295 = arith.constant 1.000000e+00 : f32
    %628 = vector.broadcast %cst_295 : f32 to vector<8x4xf32>
    %629 = arith.addf %628, %627 : vector<8x4xf32>
    %cst_296 = arith.constant 1.000000e+00 : f32
    %630 = vector.broadcast %cst_296 : f32 to vector<8x4xf32>
    %631 = arith.divf %630, %629 : vector<8x4xf32>
    %cst_297 = arith.constant 0.000000e+00 : f32
    %632 = vector.broadcast %cst_297 : f32 to vector<8x4xf32>
    %633 = arith.subf %632, %614 : vector<8x4xf32>
    %634 = math.exp %633 : vector<8x4xf32>
    %cst_298 = arith.constant 1.000000e+00 : f32
    %635 = vector.broadcast %cst_298 : f32 to vector<8x4xf32>
    %636 = arith.addf %635, %634 : vector<8x4xf32>
    %cst_299 = arith.constant 1.000000e+00 : f32
    %637 = vector.broadcast %cst_299 : f32 to vector<8x4xf32>
    %638 = arith.divf %637, %636 : vector<8x4xf32>
    %639 = math.tanh %619 : vector<8x4xf32>
    %cst_300 = arith.constant 0.000000e+00 : f32
    %640 = vector.broadcast %cst_300 : f32 to vector<8x4xf32>
    %641 = arith.subf %640, %624 : vector<8x4xf32>
    %642 = math.exp %641 : vector<8x4xf32>
    %cst_301 = arith.constant 1.000000e+00 : f32
    %643 = vector.broadcast %cst_301 : f32 to vector<8x4xf32>
    %644 = arith.addf %643, %642 : vector<8x4xf32>
    %cst_302 = arith.constant 1.000000e+00 : f32
    %645 = vector.broadcast %cst_302 : f32 to vector<8x4xf32>
    %646 = arith.divf %645, %644 : vector<8x4xf32>
    %647 = arith.mulf %638, %599 : vector<8x4xf32>
    %648 = arith.mulf %631, %639 : vector<8x4xf32>
    %649 = arith.addf %647, %648 : vector<8x4xf32>
    %650 = math.tanh %649 : vector<8x4xf32>
    %651 = arith.mulf %646, %650 : vector<8x4xf32>
    %c4_i32_303 = arith.constant 4 : i32
    %652 = arith.index_cast %c4_i32_303 : i32 to index
    %c0_304 = arith.constant 0 : index
    %c0_305 = arith.constant 0 : index
    %653 = vector.load %arg2[%652, %c0_304, %c0_305] : memref<8x8x2xf32, #tpu.memory_space<vmem>>, vector<1x8x2xf32>
    %654 = vector.shape_cast %653 : vector<1x8x2xf32> to vector<8x2xf32>
    %cst_306 = arith.constant dense<0.000000e+00> : vector<8x4xf32>
    %655 = tpu.matmul %654, %427, %cst_306 {dimension_numbers = #tpu.dot_dimension_numbers<[1], [0], [0], [1], [0, 0, 1, 1], [], []>} : vector<8x2xf32>, vector<2x4xf32>, vector<8x4xf32> -> vector<8x4xf32>
    %cst_307 = arith.constant dense<0.000000e+00> : vector<8x4xf32>
    %656 = tpu.matmul %651, %435, %cst_307 {dimension_numbers = #tpu.dot_dimension_numbers<[1], [0], [0], [1], [0, 0, 1, 1], [], []>} : vector<8x4xf32>, vector<4x4xf32>, vector<8x4xf32> -> vector<8x4xf32>
    %657 = arith.addf %655, %656 : vector<8x4xf32>
    %658 = vector.broadcast %443 : vector<1x4xf32> to vector<8x4xf32>
    %659 = arith.addf %657, %658 : vector<8x4xf32>
    %cst_308 = arith.constant dense<0.000000e+00> : vector<8x4xf32>
    %660 = tpu.matmul %654, %429, %cst_308 {dimension_numbers = #tpu.dot_dimension_numbers<[1], [0], [0], [1], [0, 0, 1, 1], [], []>} : vector<8x2xf32>, vector<2x4xf32>, vector<8x4xf32> -> vector<8x4xf32>
    %cst_309 = arith.constant dense<0.000000e+00> : vector<8x4xf32>
    %661 = tpu.matmul %651, %437, %cst_309 {dimension_numbers = #tpu.dot_dimension_numbers<[1], [0], [0], [1], [0, 0, 1, 1], [], []>} : vector<8x4xf32>, vector<4x4xf32>, vector<8x4xf32> -> vector<8x4xf32>
    %662 = arith.addf %660, %661 : vector<8x4xf32>
    %663 = vector.broadcast %445 : vector<1x4xf32> to vector<8x4xf32>
    %664 = arith.addf %662, %663 : vector<8x4xf32>
    %cst_310 = arith.constant dense<0.000000e+00> : vector<8x4xf32>
    %665 = tpu.matmul %654, %431, %cst_310 {dimension_numbers = #tpu.dot_dimension_numbers<[1], [0], [0], [1], [0, 0, 1, 1], [], []>} : vector<8x2xf32>, vector<2x4xf32>, vector<8x4xf32> -> vector<8x4xf32>
    %cst_311 = arith.constant dense<0.000000e+00> : vector<8x4xf32>
    %666 = tpu.matmul %651, %439, %cst_311 {dimension_numbers = #tpu.dot_dimension_numbers<[1], [0], [0], [1], [0, 0, 1, 1], [], []>} : vector<8x4xf32>, vector<4x4xf32>, vector<8x4xf32> -> vector<8x4xf32>
    %667 = arith.addf %665, %666 : vector<8x4xf32>
    %668 = vector.broadcast %447 : vector<1x4xf32> to vector<8x4xf32>
    %669 = arith.addf %667, %668 : vector<8x4xf32>
    %cst_312 = arith.constant dense<0.000000e+00> : vector<8x4xf32>
    %670 = tpu.matmul %654, %433, %cst_312 {dimension_numbers = #tpu.dot_dimension_numbers<[1], [0], [0], [1], [0, 0, 1, 1], [], []>} : vector<8x2xf32>, vector<2x4xf32>, vector<8x4xf32> -> vector<8x4xf32>
    %cst_313 = arith.constant dense<0.000000e+00> : vector<8x4xf32>
    %671 = tpu.matmul %651, %441, %cst_313 {dimension_numbers = #tpu.dot_dimension_numbers<[1], [0], [0], [1], [0, 0, 1, 1], [], []>} : vector<8x4xf32>, vector<4x4xf32>, vector<8x4xf32> -> vector<8x4xf32>
    %672 = arith.addf %670, %671 : vector<8x4xf32>
    %673 = vector.broadcast %449 : vector<1x4xf32> to vector<8x4xf32>
    %674 = arith.addf %672, %673 : vector<8x4xf32>
    %cst_314 = arith.constant 0.000000e+00 : f32
    %675 = vector.broadcast %cst_314 : f32 to vector<8x4xf32>
    %676 = arith.subf %675, %659 : vector<8x4xf32>
    %677 = math.exp %676 : vector<8x4xf32>
    %cst_315 = arith.constant 1.000000e+00 : f32
    %678 = vector.broadcast %cst_315 : f32 to vector<8x4xf32>
    %679 = arith.addf %678, %677 : vector<8x4xf32>
    %cst_316 = arith.constant 1.000000e+00 : f32
    %680 = vector.broadcast %cst_316 : f32 to vector<8x4xf32>
    %681 = arith.divf %680, %679 : vector<8x4xf32>
    %cst_317 = arith.constant 0.000000e+00 : f32
    %682 = vector.broadcast %cst_317 : f32 to vector<8x4xf32>
    %683 = arith.subf %682, %664 : vector<8x4xf32>
    %684 = math.exp %683 : vector<8x4xf32>
    %cst_318 = arith.constant 1.000000e+00 : f32
    %685 = vector.broadcast %cst_318 : f32 to vector<8x4xf32>
    %686 = arith.addf %685, %684 : vector<8x4xf32>
    %cst_319 = arith.constant 1.000000e+00 : f32
    %687 = vector.broadcast %cst_319 : f32 to vector<8x4xf32>
    %688 = arith.divf %687, %686 : vector<8x4xf32>
    %689 = math.tanh %669 : vector<8x4xf32>
    %cst_320 = arith.constant 0.000000e+00 : f32
    %690 = vector.broadcast %cst_320 : f32 to vector<8x4xf32>
    %691 = arith.subf %690, %674 : vector<8x4xf32>
    %692 = math.exp %691 : vector<8x4xf32>
    %cst_321 = arith.constant 1.000000e+00 : f32
    %693 = vector.broadcast %cst_321 : f32 to vector<8x4xf32>
    %694 = arith.addf %693, %692 : vector<8x4xf32>
    %cst_322 = arith.constant 1.000000e+00 : f32
    %695 = vector.broadcast %cst_322 : f32 to vector<8x4xf32>
    %696 = arith.divf %695, %694 : vector<8x4xf32>
    %697 = arith.mulf %688, %649 : vector<8x4xf32>
    %698 = arith.mulf %681, %689 : vector<8x4xf32>
    %699 = arith.addf %697, %698 : vector<8x4xf32>
    %700 = math.tanh %699 : vector<8x4xf32>
    %701 = arith.mulf %696, %700 : vector<8x4xf32>
    %c5_i32_323 = arith.constant 5 : i32
    %702 = arith.index_cast %c5_i32_323 : i32 to index
    %c0_324 = arith.constant 0 : index
    %c0_325 = arith.constant 0 : index
    %703 = vector.load %arg2[%702, %c0_324, %c0_325] : memref<8x8x2xf32, #tpu.memory_space<vmem>>, vector<1x8x2xf32>
    %704 = vector.shape_cast %703 : vector<1x8x2xf32> to vector<8x2xf32>
    %cst_326 = arith.constant dense<0.000000e+00> : vector<8x4xf32>
    %705 = tpu.matmul %704, %427, %cst_326 {dimension_numbers = #tpu.dot_dimension_numbers<[1], [0], [0], [1], [0, 0, 1, 1], [], []>} : vector<8x2xf32>, vector<2x4xf32>, vector<8x4xf32> -> vector<8x4xf32>
    %cst_327 = arith.constant dense<0.000000e+00> : vector<8x4xf32>
    %706 = tpu.matmul %701, %435, %cst_327 {dimension_numbers = #tpu.dot_dimension_numbers<[1], [0], [0], [1], [0, 0, 1, 1], [], []>} : vector<8x4xf32>, vector<4x4xf32>, vector<8x4xf32> -> vector<8x4xf32>
    %707 = arith.addf %705, %706 : vector<8x4xf32>
    %708 = vector.broadcast %443 : vector<1x4xf32> to vector<8x4xf32>
    %709 = arith.addf %707, %708 : vector<8x4xf32>
    %cst_328 = arith.constant dense<0.000000e+00> : vector<8x4xf32>
    %710 = tpu.matmul %704, %429, %cst_328 {dimension_numbers = #tpu.dot_dimension_numbers<[1], [0], [0], [1], [0, 0, 1, 1], [], []>} : vector<8x2xf32>, vector<2x4xf32>, vector<8x4xf32> -> vector<8x4xf32>
    %cst_329 = arith.constant dense<0.000000e+00> : vector<8x4xf32>
    %711 = tpu.matmul %701, %437, %cst_329 {dimension_numbers = #tpu.dot_dimension_numbers<[1], [0], [0], [1], [0, 0, 1, 1], [], []>} : vector<8x4xf32>, vector<4x4xf32>, vector<8x4xf32> -> vector<8x4xf32>
    %712 = arith.addf %710, %711 : vector<8x4xf32>
    %713 = vector.broadcast %445 : vector<1x4xf32> to vector<8x4xf32>
    %714 = arith.addf %712, %713 : vector<8x4xf32>
    %cst_330 = arith.constant dense<0.000000e+00> : vector<8x4xf32>
    %715 = tpu.matmul %704, %431, %cst_330 {dimension_numbers = #tpu.dot_dimension_numbers<[1], [0], [0], [1], [0, 0, 1, 1], [], []>} : vector<8x2xf32>, vector<2x4xf32>, vector<8x4xf32> -> vector<8x4xf32>
    %cst_331 = arith.constant dense<0.000000e+00> : vector<8x4xf32>
    %716 = tpu.matmul %701, %439, %cst_331 {dimension_numbers = #tpu.dot_dimension_numbers<[1], [0], [0], [1], [0, 0, 1, 1], [], []>} : vector<8x4xf32>, vector<4x4xf32>, vector<8x4xf32> -> vector<8x4xf32>
    %717 = arith.addf %715, %716 : vector<8x4xf32>
    %718 = vector.broadcast %447 : vector<1x4xf32> to vector<8x4xf32>
    %719 = arith.addf %717, %718 : vector<8x4xf32>
    %cst_332 = arith.constant dense<0.000000e+00> : vector<8x4xf32>
    %720 = tpu.matmul %704, %433, %cst_332 {dimension_numbers = #tpu.dot_dimension_numbers<[1], [0], [0], [1], [0, 0, 1, 1], [], []>} : vector<8x2xf32>, vector<2x4xf32>, vector<8x4xf32> -> vector<8x4xf32>
    %cst_333 = arith.constant dense<0.000000e+00> : vector<8x4xf32>
    %721 = tpu.matmul %701, %441, %cst_333 {dimension_numbers = #tpu.dot_dimension_numbers<[1], [0], [0], [1], [0, 0, 1, 1], [], []>} : vector<8x4xf32>, vector<4x4xf32>, vector<8x4xf32> -> vector<8x4xf32>
    %722 = arith.addf %720, %721 : vector<8x4xf32>
    %723 = vector.broadcast %449 : vector<1x4xf32> to vector<8x4xf32>
    %724 = arith.addf %722, %723 : vector<8x4xf32>
    %cst_334 = arith.constant 0.000000e+00 : f32
    %725 = vector.broadcast %cst_334 : f32 to vector<8x4xf32>
    %726 = arith.subf %725, %709 : vector<8x4xf32>
    %727 = math.exp %726 : vector<8x4xf32>
    %cst_335 = arith.constant 1.000000e+00 : f32
    %728 = vector.broadcast %cst_335 : f32 to vector<8x4xf32>
    %729 = arith.addf %728, %727 : vector<8x4xf32>
    %cst_336 = arith.constant 1.000000e+00 : f32
    %730 = vector.broadcast %cst_336 : f32 to vector<8x4xf32>
    %731 = arith.divf %730, %729 : vector<8x4xf32>
    %cst_337 = arith.constant 0.000000e+00 : f32
    %732 = vector.broadcast %cst_337 : f32 to vector<8x4xf32>
    %733 = arith.subf %732, %714 : vector<8x4xf32>
    %734 = math.exp %733 : vector<8x4xf32>
    %cst_338 = arith.constant 1.000000e+00 : f32
    %735 = vector.broadcast %cst_338 : f32 to vector<8x4xf32>
    %736 = arith.addf %735, %734 : vector<8x4xf32>
    %cst_339 = arith.constant 1.000000e+00 : f32
    %737 = vector.broadcast %cst_339 : f32 to vector<8x4xf32>
    %738 = arith.divf %737, %736 : vector<8x4xf32>
    %739 = math.tanh %719 : vector<8x4xf32>
    %cst_340 = arith.constant 0.000000e+00 : f32
    %740 = vector.broadcast %cst_340 : f32 to vector<8x4xf32>
    %741 = arith.subf %740, %724 : vector<8x4xf32>
    %742 = math.exp %741 : vector<8x4xf32>
    %cst_341 = arith.constant 1.000000e+00 : f32
    %743 = vector.broadcast %cst_341 : f32 to vector<8x4xf32>
    %744 = arith.addf %743, %742 : vector<8x4xf32>
    %cst_342 = arith.constant 1.000000e+00 : f32
    %745 = vector.broadcast %cst_342 : f32 to vector<8x4xf32>
    %746 = arith.divf %745, %744 : vector<8x4xf32>
    %747 = arith.mulf %738, %699 : vector<8x4xf32>
    %748 = arith.mulf %731, %739 : vector<8x4xf32>
    %749 = arith.addf %747, %748 : vector<8x4xf32>
    %750 = math.tanh %749 : vector<8x4xf32>
    %751 = arith.mulf %746, %750 : vector<8x4xf32>
    %c6_i32_343 = arith.constant 6 : i32
    %752 = arith.index_cast %c6_i32_343 : i32 to index
    %c0_344 = arith.constant 0 : index
    %c0_345 = arith.constant 0 : index
    %753 = vector.load %arg2[%752, %c0_344, %c0_345] : memref<8x8x2xf32, #tpu.memory_space<vmem>>, vector<1x8x2xf32>
    %754 = vector.shape_cast %753 : vector<1x8x2xf32> to vector<8x2xf32>
    %cst_346 = arith.constant dense<0.000000e+00> : vector<8x4xf32>
    %755 = tpu.matmul %754, %427, %cst_346 {dimension_numbers = #tpu.dot_dimension_numbers<[1], [0], [0], [1], [0, 0, 1, 1], [], []>} : vector<8x2xf32>, vector<2x4xf32>, vector<8x4xf32> -> vector<8x4xf32>
    %cst_347 = arith.constant dense<0.000000e+00> : vector<8x4xf32>
    %756 = tpu.matmul %751, %435, %cst_347 {dimension_numbers = #tpu.dot_dimension_numbers<[1], [0], [0], [1], [0, 0, 1, 1], [], []>} : vector<8x4xf32>, vector<4x4xf32>, vector<8x4xf32> -> vector<8x4xf32>
    %757 = arith.addf %755, %756 : vector<8x4xf32>
    %758 = vector.broadcast %443 : vector<1x4xf32> to vector<8x4xf32>
    %759 = arith.addf %757, %758 : vector<8x4xf32>
    %cst_348 = arith.constant dense<0.000000e+00> : vector<8x4xf32>
    %760 = tpu.matmul %754, %429, %cst_348 {dimension_numbers = #tpu.dot_dimension_numbers<[1], [0], [0], [1], [0, 0, 1, 1], [], []>} : vector<8x2xf32>, vector<2x4xf32>, vector<8x4xf32> -> vector<8x4xf32>
    %cst_349 = arith.constant dense<0.000000e+00> : vector<8x4xf32>
    %761 = tpu.matmul %751, %437, %cst_349 {dimension_numbers = #tpu.dot_dimension_numbers<[1], [0], [0], [1], [0, 0, 1, 1], [], []>} : vector<8x4xf32>, vector<4x4xf32>, vector<8x4xf32> -> vector<8x4xf32>
    %762 = arith.addf %760, %761 : vector<8x4xf32>
    %763 = vector.broadcast %445 : vector<1x4xf32> to vector<8x4xf32>
    %764 = arith.addf %762, %763 : vector<8x4xf32>
    %cst_350 = arith.constant dense<0.000000e+00> : vector<8x4xf32>
    %765 = tpu.matmul %754, %431, %cst_350 {dimension_numbers = #tpu.dot_dimension_numbers<[1], [0], [0], [1], [0, 0, 1, 1], [], []>} : vector<8x2xf32>, vector<2x4xf32>, vector<8x4xf32> -> vector<8x4xf32>
    %cst_351 = arith.constant dense<0.000000e+00> : vector<8x4xf32>
    %766 = tpu.matmul %751, %439, %cst_351 {dimension_numbers = #tpu.dot_dimension_numbers<[1], [0], [0], [1], [0, 0, 1, 1], [], []>} : vector<8x4xf32>, vector<4x4xf32>, vector<8x4xf32> -> vector<8x4xf32>
    %767 = arith.addf %765, %766 : vector<8x4xf32>
    %768 = vector.broadcast %447 : vector<1x4xf32> to vector<8x4xf32>
    %769 = arith.addf %767, %768 : vector<8x4xf32>
    %cst_352 = arith.constant dense<0.000000e+00> : vector<8x4xf32>
    %770 = tpu.matmul %754, %433, %cst_352 {dimension_numbers = #tpu.dot_dimension_numbers<[1], [0], [0], [1], [0, 0, 1, 1], [], []>} : vector<8x2xf32>, vector<2x4xf32>, vector<8x4xf32> -> vector<8x4xf32>
    %cst_353 = arith.constant dense<0.000000e+00> : vector<8x4xf32>
    %771 = tpu.matmul %751, %441, %cst_353 {dimension_numbers = #tpu.dot_dimension_numbers<[1], [0], [0], [1], [0, 0, 1, 1], [], []>} : vector<8x4xf32>, vector<4x4xf32>, vector<8x4xf32> -> vector<8x4xf32>
    %772 = arith.addf %770, %771 : vector<8x4xf32>
    %773 = vector.broadcast %449 : vector<1x4xf32> to vector<8x4xf32>
    %774 = arith.addf %772, %773 : vector<8x4xf32>
    %cst_354 = arith.constant 0.000000e+00 : f32
    %775 = vector.broadcast %cst_354 : f32 to vector<8x4xf32>
    %776 = arith.subf %775, %759 : vector<8x4xf32>
    %777 = math.exp %776 : vector<8x4xf32>
    %cst_355 = arith.constant 1.000000e+00 : f32
    %778 = vector.broadcast %cst_355 : f32 to vector<8x4xf32>
    %779 = arith.addf %778, %777 : vector<8x4xf32>
    %cst_356 = arith.constant 1.000000e+00 : f32
    %780 = vector.broadcast %cst_356 : f32 to vector<8x4xf32>
    %781 = arith.divf %780, %779 : vector<8x4xf32>
    %cst_357 = arith.constant 0.000000e+00 : f32
    %782 = vector.broadcast %cst_357 : f32 to vector<8x4xf32>
    %783 = arith.subf %782, %764 : vector<8x4xf32>
    %784 = math.exp %783 : vector<8x4xf32>
    %cst_358 = arith.constant 1.000000e+00 : f32
    %785 = vector.broadcast %cst_358 : f32 to vector<8x4xf32>
    %786 = arith.addf %785, %784 : vector<8x4xf32>
    %cst_359 = arith.constant 1.000000e+00 : f32
    %787 = vector.broadcast %cst_359 : f32 to vector<8x4xf32>
    %788 = arith.divf %787, %786 : vector<8x4xf32>
    %789 = math.tanh %769 : vector<8x4xf32>
    %cst_360 = arith.constant 0.000000e+00 : f32
    %790 = vector.broadcast %cst_360 : f32 to vector<8x4xf32>
    %791 = arith.subf %790, %774 : vector<8x4xf32>
    %792 = math.exp %791 : vector<8x4xf32>
    %cst_361 = arith.constant 1.000000e+00 : f32
    %793 = vector.broadcast %cst_361 : f32 to vector<8x4xf32>
    %794 = arith.addf %793, %792 : vector<8x4xf32>
    %cst_362 = arith.constant 1.000000e+00 : f32
    %795 = vector.broadcast %cst_362 : f32 to vector<8x4xf32>
    %796 = arith.divf %795, %794 : vector<8x4xf32>
    %797 = arith.mulf %788, %749 : vector<8x4xf32>
    %798 = arith.mulf %781, %789 : vector<8x4xf32>
    %799 = arith.addf %797, %798 : vector<8x4xf32>
    %800 = math.tanh %799 : vector<8x4xf32>
    %801 = arith.mulf %796, %800 : vector<8x4xf32>
    %c7_i32_363 = arith.constant 7 : i32
    %802 = arith.index_cast %c7_i32_363 : i32 to index
    %c0_364 = arith.constant 0 : index
    %c0_365 = arith.constant 0 : index
    %803 = vector.load %arg2[%802, %c0_364, %c0_365] : memref<8x8x2xf32, #tpu.memory_space<vmem>>, vector<1x8x2xf32>
    %804 = vector.shape_cast %803 : vector<1x8x2xf32> to vector<8x2xf32>
    %cst_366 = arith.constant dense<0.000000e+00> : vector<8x4xf32>
    %805 = tpu.matmul %804, %427, %cst_366 {dimension_numbers = #tpu.dot_dimension_numbers<[1], [0], [0], [1], [0, 0, 1, 1], [], []>} : vector<8x2xf32>, vector<2x4xf32>, vector<8x4xf32> -> vector<8x4xf32>
    %cst_367 = arith.constant dense<0.000000e+00> : vector<8x4xf32>
    %806 = tpu.matmul %801, %435, %cst_367 {dimension_numbers = #tpu.dot_dimension_numbers<[1], [0], [0], [1], [0, 0, 1, 1], [], []>} : vector<8x4xf32>, vector<4x4xf32>, vector<8x4xf32> -> vector<8x4xf32>
    %807 = arith.addf %805, %806 : vector<8x4xf32>
    %808 = vector.broadcast %443 : vector<1x4xf32> to vector<8x4xf32>
    %809 = arith.addf %807, %808 : vector<8x4xf32>
    %cst_368 = arith.constant dense<0.000000e+00> : vector<8x4xf32>
    %810 = tpu.matmul %804, %429, %cst_368 {dimension_numbers = #tpu.dot_dimension_numbers<[1], [0], [0], [1], [0, 0, 1, 1], [], []>} : vector<8x2xf32>, vector<2x4xf32>, vector<8x4xf32> -> vector<8x4xf32>
    %cst_369 = arith.constant dense<0.000000e+00> : vector<8x4xf32>
    %811 = tpu.matmul %801, %437, %cst_369 {dimension_numbers = #tpu.dot_dimension_numbers<[1], [0], [0], [1], [0, 0, 1, 1], [], []>} : vector<8x4xf32>, vector<4x4xf32>, vector<8x4xf32> -> vector<8x4xf32>
    %812 = arith.addf %810, %811 : vector<8x4xf32>
    %813 = vector.broadcast %445 : vector<1x4xf32> to vector<8x4xf32>
    %814 = arith.addf %812, %813 : vector<8x4xf32>
    %cst_370 = arith.constant dense<0.000000e+00> : vector<8x4xf32>
    %815 = tpu.matmul %804, %431, %cst_370 {dimension_numbers = #tpu.dot_dimension_numbers<[1], [0], [0], [1], [0, 0, 1, 1], [], []>} : vector<8x2xf32>, vector<2x4xf32>, vector<8x4xf32> -> vector<8x4xf32>
    %cst_371 = arith.constant dense<0.000000e+00> : vector<8x4xf32>
    %816 = tpu.matmul %801, %439, %cst_371 {dimension_numbers = #tpu.dot_dimension_numbers<[1], [0], [0], [1], [0, 0, 1, 1], [], []>} : vector<8x4xf32>, vector<4x4xf32>, vector<8x4xf32> -> vector<8x4xf32>
    %817 = arith.addf %815, %816 : vector<8x4xf32>
    %818 = vector.broadcast %447 : vector<1x4xf32> to vector<8x4xf32>
    %819 = arith.addf %817, %818 : vector<8x4xf32>
    %cst_372 = arith.constant dense<0.000000e+00> : vector<8x4xf32>
    %820 = tpu.matmul %804, %433, %cst_372 {dimension_numbers = #tpu.dot_dimension_numbers<[1], [0], [0], [1], [0, 0, 1, 1], [], []>} : vector<8x2xf32>, vector<2x4xf32>, vector<8x4xf32> -> vector<8x4xf32>
    %cst_373 = arith.constant dense<0.000000e+00> : vector<8x4xf32>
    %821 = tpu.matmul %801, %441, %cst_373 {dimension_numbers = #tpu.dot_dimension_numbers<[1], [0], [0], [1], [0, 0, 1, 1], [], []>} : vector<8x4xf32>, vector<4x4xf32>, vector<8x4xf32> -> vector<8x4xf32>
    %822 = arith.addf %820, %821 : vector<8x4xf32>
    %823 = vector.broadcast %449 : vector<1x4xf32> to vector<8x4xf32>
    %824 = arith.addf %822, %823 : vector<8x4xf32>
    %cst_374 = arith.constant 0.000000e+00 : f32
    %825 = vector.broadcast %cst_374 : f32 to vector<8x4xf32>
    %826 = arith.subf %825, %809 : vector<8x4xf32>
    %827 = math.exp %826 : vector<8x4xf32>
    %cst_375 = arith.constant 1.000000e+00 : f32
    %828 = vector.broadcast %cst_375 : f32 to vector<8x4xf32>
    %829 = arith.addf %828, %827 : vector<8x4xf32>
    %cst_376 = arith.constant 1.000000e+00 : f32
    %830 = vector.broadcast %cst_376 : f32 to vector<8x4xf32>
    %831 = arith.divf %830, %829 : vector<8x4xf32>
    %cst_377 = arith.constant 0.000000e+00 : f32
    %832 = vector.broadcast %cst_377 : f32 to vector<8x4xf32>
    %833 = arith.subf %832, %814 : vector<8x4xf32>
    %834 = math.exp %833 : vector<8x4xf32>
    %cst_378 = arith.constant 1.000000e+00 : f32
    %835 = vector.broadcast %cst_378 : f32 to vector<8x4xf32>
    %836 = arith.addf %835, %834 : vector<8x4xf32>
    %cst_379 = arith.constant 1.000000e+00 : f32
    %837 = vector.broadcast %cst_379 : f32 to vector<8x4xf32>
    %838 = arith.divf %837, %836 : vector<8x4xf32>
    %839 = math.tanh %819 : vector<8x4xf32>
    %cst_380 = arith.constant 0.000000e+00 : f32
    %840 = vector.broadcast %cst_380 : f32 to vector<8x4xf32>
    %841 = arith.subf %840, %824 : vector<8x4xf32>
    %842 = math.exp %841 : vector<8x4xf32>
    %cst_381 = arith.constant 1.000000e+00 : f32
    %843 = vector.broadcast %cst_381 : f32 to vector<8x4xf32>
    %844 = arith.addf %843, %842 : vector<8x4xf32>
    %cst_382 = arith.constant 1.000000e+00 : f32
    %845 = vector.broadcast %cst_382 : f32 to vector<8x4xf32>
    %846 = arith.divf %845, %844 : vector<8x4xf32>
    %847 = arith.mulf %838, %799 : vector<8x4xf32>
    %848 = arith.mulf %831, %839 : vector<8x4xf32>
    %849 = arith.addf %847, %848 : vector<8x4xf32>
    %850 = math.tanh %849 : vector<8x4xf32>
    %851 = arith.mulf %846, %850 : vector<8x4xf32>
    %c8_i32_383 = arith.constant 8 : i32
    %c0_384 = arith.constant 0 : index
    %c0_385 = arith.constant 0 : index
    %852 = vector.load %arg9[%c0_384, %c0_385] : memref<4x8xf32, #tpu.memory_space<vmem>>, vector<4x8xf32>
    %cst_386 = arith.constant dense<0.000000e+00> : vector<8x8xf32>
    %853 = tpu.matmul %425, %852, %cst_386 {dimension_numbers = #tpu.dot_dimension_numbers<[1], [0], [0], [1], [0, 0, 1, 1], [], []>} : vector<8x4xf32>, vector<4x8xf32>, vector<8x8xf32> -> vector<8x8xf32>
    %c0_387 = arith.constant 0 : index
    %c0_388 = arith.constant 0 : index
    %854 = vector.load %arg10[%c0_387, %c0_388] : memref<4x8xf32, #tpu.memory_space<vmem>>, vector<4x8xf32>
    %cst_389 = arith.constant dense<0.000000e+00> : vector<8x8xf32>
    %855 = tpu.matmul %851, %854, %cst_389 {dimension_numbers = #tpu.dot_dimension_numbers<[1], [0], [0], [1], [0, 0, 1, 1], [], []>} : vector<8x4xf32>, vector<4x8xf32>, vector<8x8xf32> -> vector<8x8xf32>
    %856 = arith.addf %853, %855 : vector<8x8xf32>
    %c0_390 = arith.constant 0 : index
    %c0_391 = arith.constant 0 : index
    %857 = vector.load %arg11[%c0_390, %c0_391] : memref<1x8xf32, #tpu.memory_space<vmem>>, vector<1x8xf32>
    %858 = vector.broadcast %857 : vector<1x8xf32> to vector<8x8xf32>
    %859 = arith.addf %856, %858 : vector<8x8xf32>
    %cst_392 = arith.constant 0.000000e+00 : f32
    %860 = vector.broadcast %cst_392 : f32 to vector<8x8xf32>
    %861 = arith.maximumf %859, %860 : vector<8x8xf32>
    %c0_393 = arith.constant 0 : index
    %c0_394 = arith.constant 0 : index
    %862 = vector.load %arg12[%c0_393, %c0_394] : memref<8x2xf32, #tpu.memory_space<vmem>>, vector<8x2xf32>
    %cst_395 = arith.constant dense<0.000000e+00> : vector<8x2xf32>
    %863 = tpu.matmul %861, %862, %cst_395 {dimension_numbers = #tpu.dot_dimension_numbers<[1], [0], [0], [1], [0, 0, 1, 1], [], []>} : vector<8x8xf32>, vector<8x2xf32>, vector<8x2xf32> -> vector<8x2xf32>
    %c0_396 = arith.constant 0 : index
    %c0_397 = arith.constant 0 : index
    %864 = vector.load %arg13[%c0_396, %c0_397] : memref<1x2xf32, #tpu.memory_space<vmem>>, vector<1x2xf32>
    %865 = vector.broadcast %864 : vector<1x2xf32> to vector<8x2xf32>
    %866 = arith.addf %863, %865 : vector<8x2xf32>
    %cst_398 = arith.constant dense<0xFF800000> : vector<8xf32>
    %867 = vector.multi_reduction <maximumf>, %866, %cst_398 [1] : vector<8x2xf32> to vector<8xf32>
    %868 = vector.shape_cast %867 : vector<8xf32> to vector<8x1xf32>
    %869 = vector.broadcast %868 : vector<8x1xf32> to vector<8x2xf32>
    %870 = arith.subf %866, %869 : vector<8x2xf32>
    %871 = math.exp %870 : vector<8x2xf32>
    %cst_399 = arith.constant dense<0.000000e+00> : vector<8xf32>
    %872 = vector.multi_reduction <add>, %871, %cst_399 [1] : vector<8x2xf32> to vector<8xf32>
    %873 = vector.shape_cast %872 : vector<8xf32> to vector<8x1xf32>
    %874 = vector.broadcast %873 : vector<8x1xf32> to vector<8x2xf32>
    %875 = arith.divf %871, %874 : vector<8x2xf32>
    %c0_400 = arith.constant 0 : index
    %c0_401 = arith.constant 0 : index
    %876 = vector.load %arg14[%c0_400, %c0_401] : memref<8x2xf32, #tpu.memory_space<vmem>>, vector<8x2xf32>
    tpu.vector_store %arg14[%c0_400, %c0_401], %875 {strides = array<i32>} : memref<8x2xf32, #tpu.memory_space<vmem>>, vector<8x2xf32>,
    return
  }
  func.func @transform_0(%arg0: i32) -> (i32, i32, i32) {
    %c0_i32 = arith.constant 0 : i32
    %c0_i32_0 = arith.constant 0 : i32
    %c0_i32_1 = arith.constant 0 : i32
    return %c0_i32, %arg0, %c0_i32_0 : i32, i32, i32
  }
  func.func @transform_1(%arg0: i32) -> (i32, i32, i32) {
    %c0_i32 = arith.constant 0 : i32
    %c0_i32_0 = arith.constant 0 : i32
    %c0_i32_1 = arith.constant 0 : i32
    return %c0_i32, %arg0, %c0_i32_0 : i32, i32, i32
  }
  func.func @transform_2(%arg0: i32) -> (i32, i32, i32) {
    %c0_i32 = arith.constant 0 : i32
    %c0_i32_0 = arith.constant 0 : i32
    %c0_i32_1 = arith.constant 0 : i32
    %c0_i32_2 = arith.constant 0 : i32
    return %c0_i32, %c0_i32_0, %c0_i32_1 : i32, i32, i32
  }
  func.func @transform_3(%arg0: i32) -> (i32, i32, i32) {
    %c0_i32 = arith.constant 0 : i32
    %c0_i32_0 = arith.constant 0 : i32
    %c0_i32_1 = arith.constant 0 : i32
    %c0_i32_2 = arith.constant 0 : i32
    return %c0_i32, %c0_i32_0, %c0_i32_1 : i32, i32, i32
  }
  func.func @transform_4(%arg0: i32) -> (i32, i32, i32) {
    %c0_i32 = arith.constant 0 : i32
    %c0_i32_0 = arith.constant 0 : i32
    %c0_i32_1 = arith.constant 0 : i32
    %c0_i32_2 = arith.constant 0 : i32
    return %c0_i32, %c0_i32_0, %c0_i32_1 : i32, i32, i32
  }
  func.func @transform_5(%arg0: i32) -> (i32, i32, i32) {
    %c0_i32 = arith.constant 0 : i32
    %c0_i32_0 = arith.constant 0 : i32
    %c0_i32_1 = arith.constant 0 : i32
    %c0_i32_2 = arith.constant 0 : i32
    return %c0_i32, %c0_i32_0, %c0_i32_1 : i32, i32, i32
  }
  func.func @transform_6(%arg0: i32) -> (i32, i32, i32) {
    %c0_i32 = arith.constant 0 : i32
    %c0_i32_0 = arith.constant 0 : i32
    %c0_i32_1 = arith.constant 0 : i32
    %c0_i32_2 = arith.constant 0 : i32
    return %c0_i32, %c0_i32_0, %c0_i32_1 : i32, i32, i32
  }
  func.func @transform_7(%arg0: i32) -> (i32, i32, i32) {
    %c0_i32 = arith.constant 0 : i32
    %c0_i32_0 = arith.constant 0 : i32
    %c0_i32_1 = arith.constant 0 : i32
    %c0_i32_2 = arith.constant 0 : i32
    return %c0_i32, %c0_i32_0, %c0_i32_1 : i32, i32, i32
  }
  func.func @transform_8(%arg0: i32) -> (i32, i32) {
    %c0_i32 = arith.constant 0 : i32
    %c0_i32_0 = arith.constant 0 : i32
    %c0_i32_1 = arith.constant 0 : i32
    return %c0_i32, %c0_i32_0 : i32, i32
  }
  func.func @transform_9(%arg0: i32) -> (i32, i32) {
    %c0_i32 = arith.constant 0 : i32
    %c0_i32_0 = arith.constant 0 : i32
    %c0_i32_1 = arith.constant 0 : i32
    return %c0_i32, %c0_i32_0 : i32, i32
  }
  func.func @transform_10(%arg0: i32) -> (i32, i32) {
    %c0_i32 = arith.constant 0 : i32
    %c0_i32_0 = arith.constant 0 : i32
    %c0_i32_1 = arith.constant 0 : i32
    return %c0_i32, %c0_i32_0 : i32, i32
  }
  func.func @transform_11(%arg0: i32) -> (i32, i32) {
    %c0_i32 = arith.constant 0 : i32
    %c0_i32_0 = arith.constant 0 : i32
    %c0_i32_1 = arith.constant 0 : i32
    return %c0_i32, %c0_i32_0 : i32, i32
  }
  func.func @transform_12(%arg0: i32) -> (i32, i32) {
    %c0_i32 = arith.constant 0 : i32
    %c0_i32_0 = arith.constant 0 : i32
    %c0_i32_1 = arith.constant 0 : i32
    return %c0_i32, %c0_i32_0 : i32, i32
  }
  func.func @transform_13(%arg0: i32) -> (i32, i32) {
    %c0_i32 = arith.constant 0 : i32
    %c0_i32_0 = arith.constant 0 : i32
    return %arg0, %c0_i32 : i32, i32
  }
}

</mosaic_0001>

<llo_original>
// kernel: tpu_custom_call.1
$region0: #{tpu_custom_call.1}
  #allocation0 [shape = 'u32[]', space=smem, size = 0x4, offset = 0x4, fixed_abs, tag = 'smem constant byte address 0x4 - core index']
  #allocation1 [shape = 'u32[144,128]{1,0:T(1,128)}', space=vmem, size = 0x12000, scoped, tag = 'internal scratch']
  %s0 = inlined_call_operand.vmem [shape: f32[8,8,4], index: 0, kind: input, shape index: {}]
  %s1 = inlined_call_operand.vmem [shape: f32[8,8,2], index: 1, kind: input, shape index: {}]
  %s2 = inlined_call_operand.vmem [shape: f32[4,4,4], index: 2, kind: input, shape index: {}]
  %s3 = inlined_call_operand.vmem [shape: f32[4,4,4], index: 3, kind: input, shape index: {}]
  %s4 = inlined_call_operand.vmem [shape: f32[4,1,4], index: 4, kind: input, shape index: {}]
  %s5 = inlined_call_operand.vmem [shape: f32[4,2,4], index: 5, kind: input, shape index: {}]
  %s6 = inlined_call_operand.vmem [shape: f32[4,4,4], index: 6, kind: input, shape index: {}]
  %s7 = inlined_call_operand.vmem [shape: f32[4,1,4], index: 7, kind: input, shape index: {}]
  %s8 = inlined_call_operand.vmem [shape: f32[4,8], index: 8, kind: input, shape index: {}]
  %s9 = inlined_call_operand.vmem [shape: f32[4,8], index: 9, kind: input, shape index: {}]
  %s10 = inlined_call_operand.vmem [shape: f32[1,8], index: 10, kind: input, shape index: {}]
  %s11 = inlined_call_operand.vmem [shape: f32[8,2], index: 11, kind: input, shape index: {}]
  %s12 = inlined_call_operand.vmem [shape: f32[1,2], index: 12, kind: input, shape index: {}]
  %s13 = inlined_call_operand.vmem [shape: f32[8,2], index: 13, kind: output, shape index: {}]
  %s14 = sld [smem:[#allocation0]]
  $region62: #{tpu_custom_call.1} parent=0
    _
  %s16 = ssub.s32 1, %s14
  %s17 = scalar_select 0, %s16, %s14
  // Predicated region
  $region2: #{tpu_custom_call.1} parent=0 // pred_check
    _
  $region3: #{tpu_custom_call.1} parent=0 // pred_check_branch
    %19 = sbr.rel (0) target = $region5
  $region4: #{tpu_custom_call.1} parent=0 // pred_region
    _
  $region5: #{tpu_custom_call.1} parent=0 // pred_fallthru
    _
  // Predicated region
  $region6: #{tpu_custom_call.1} parent=0 // pred_check
    _
  $region7: #{tpu_custom_call.1} parent=0 // pred_check_branch
    %21 = sbr.rel (0) target = $region9
  $region8: #{tpu_custom_call.1} parent=0 // pred_region
    _
  $region9: #{tpu_custom_call.1} parent=0 // pred_fallthru
    _
  // Predicated region
  $region10: #{tpu_custom_call.1} parent=0 // pred_check
    _
  $region11: #{tpu_custom_call.1} parent=0 // pred_check_branch
    %23 = sbr.rel (0) target = $region13
  $region12: #{tpu_custom_call.1} parent=0 // pred_region
    _
  $region13: #{tpu_custom_call.1} parent=0 // pred_fallthru
    _
  // Predicated region
  $region14: #{tpu_custom_call.1} parent=0 // pred_check
    _
  $region15: #{tpu_custom_call.1} parent=0 // pred_check_branch
    %25 = sbr.rel (0) target = $region17
  $region16: #{tpu_custom_call.1} parent=0 // pred_region
    _
  $region17: #{tpu_custom_call.1} parent=0 // pred_fallthru
    _
  // Predicated region
  $region18: #{tpu_custom_call.1} parent=0 // pred_check
    _
  $region19: #{tpu_custom_call.1} parent=0 // pred_check_branch
    %27 = sbr.rel (0) target = $region21
  $region20: #{tpu_custom_call.1} parent=0 // pred_region
    _
  $region21: #{tpu_custom_call.1} parent=0 // pred_fallthru
    _
  // Predicated region
  $region22: #{tpu_custom_call.1} parent=0 // pred_check
    _
  $region23: #{tpu_custom_call.1} parent=0 // pred_check_branch
    %29 = sbr.rel (0) target = $region25
  $region24: #{tpu_custom_call.1} parent=0 // pred_region
    _
  $region25: #{tpu_custom_call.1} parent=0 // pred_fallthru
    _
  // Predicated region
  $region26: #{tpu_custom_call.1} parent=0 // pred_check
    _
  $region27: #{tpu_custom_call.1} parent=0 // pred_check_branch
    %31 = sbr.rel (0) target = $region29
  $region28: #{tpu_custom_call.1} parent=0 // pred_region
    _
  $region29: #{tpu_custom_call.1} parent=0 // pred_fallthru
    _
  // Predicated region
  $region30: #{tpu_custom_call.1} parent=0 // pred_check
    _
  $region31: #{tpu_custom_call.1} parent=0 // pred_check_branch
    %33 = sbr.rel (0) target = $region33
  $region32: #{tpu_custom_call.1} parent=0 // pred_region
    _
  $region33: #{tpu_custom_call.1} parent=0 // pred_fallthru
    _
  // Predicated region
  $region34: #{tpu_custom_call.1} parent=0 // pred_check
    _
  $region35: #{tpu_custom_call.1} parent=0 // pred_check_branch
    %35 = sbr.rel (0) target = $region37
  $region36: #{tpu_custom_call.1} parent=0 // pred_region
    _
  $region37: #{tpu_custom_call.1} parent=0 // pred_fallthru
    _
  // Predicated region
  $region38: #{tpu_custom_call.1} parent=0 // pred_check
    _
  $region39: #{tpu_custom_call.1} parent=0 // pred_check_branch
    %37 = sbr.rel (0) target = $region41
  $region40: #{tpu_custom_call.1} parent=0 // pred_region
    _
  $region41: #{tpu_custom_call.1} parent=0 // pred_fallthru
    _
  // Predicated region
  $region42: #{tpu_custom_call.1} parent=0 // pred_check
    _
  $region43: #{tpu_custom_call.1} parent=0 // pred_check_branch
    %39 = sbr.rel (0) target = $region45
  $region44: #{tpu_custom_call.1} parent=0 // pred_region
    _
  $region45: #{tpu_custom_call.1} parent=0 // pred_fallthru
    _
  // Predicated region
  $region46: #{tpu_custom_call.1} parent=0 // pred_check
    _
  $region47: #{tpu_custom_call.1} parent=0 // pred_check_branch
    %41 = sbr.rel (0) target = $region49
  $region48: #{tpu_custom_call.1} parent=0 // pred_region
    _
  $region49: #{tpu_custom_call.1} parent=0 // pred_fallthru
    _
  // Predicated region
  $region50: #{tpu_custom_call.1} parent=0 // pred_check
    _
  $region51: #{tpu_custom_call.1} parent=0 // pred_check_branch
    %43 = sbr.rel (0) target = $region53
  $region52: #{tpu_custom_call.1} parent=0 // pred_region
    _
  $region53: #{tpu_custom_call.1} parent=0 // pred_fallthru
    _
  %v44 = vld [vmem:[%s2] sm:$0xf]
  %s45 = scalar_lea.vmem %s2, 4
  %v46 = vld [vmem:[%s45] sm:$0xf]
  %s47 = scalar_lea.vmem %s2, 8
  %v48 = vld [vmem:[%s47] sm:$0xf]
  %s49 = scalar_lea.vmem %s2, 12
  %v50 = vld [vmem:[%s49] sm:$0xf]
  %v51 = vld [vmem:[%s3] sm:$0xf]
  %s52 = scalar_lea.vmem %s3, 4
  %v53 = vld [vmem:[%s52] sm:$0xf]
  %s54 = scalar_lea.vmem %s3, 8
  %v55 = vld [vmem:[%s54] sm:$0xf]
  %s56 = scalar_lea.vmem %s3, 12
  %v57 = vld [vmem:[%s56] sm:$0xf]
  %v58 = vld [vmem:[%s4] sm:$0x1]
  %s59 = scalar_lea.vmem %s4, 1
  %v60 = vld [vmem:[%s59] sm:$0x1]
  %s61 = scalar_lea.vmem %s4, 2
  %v62 = vld [vmem:[%s61] sm:$0x1]
  %s63 = scalar_lea.vmem %s4, 3
  %v64 = vld [vmem:[%s63] sm:$0x1]
  %v65 = vld [vmem:[%s0] sm:$0xff]
  %vm66 = vcmask 31744
  %v68 = vsel %vm66, 0.0, 0
  %vm70 = vcmask 1043456
  %v72 = vsel %vm70, %v51, 0
  %74 = vmatprep.subr.mxu0 0.0
  %75 = vmatpush1.msra.mxu0 0.0
  %76 = vmatprep.subr.mxu0 0.0
  %77 = vmatpush1.msra.mxu0 0.0
  %78 = vmatprep.subr.mxu0 0.0
  %79 = vmatpush1.msra.mxu0 0.0
  %80 = vmatprep.subr.mxu0 0.0
  %81 = vmatpush1.msra.mxu0 0.0
  %82 = vmatprep.subr.mxu0 0.0
  %83 = vmatpush1.msra.mxu0 0.0
  %84 = vmatprep.subr.mxu0 0.0
  %85 = vmatpush1.msra.mxu0 0.0
  %86 = vmatprep.subr.mxu0 0.0
  %87 = vmatpush1.msra.mxu0 0.0
  %88 = vmatprep.subr.mxu0 0.0
  %89 = vmatpush1.msra.mxu0 0.0
  %90 = vmatprep.subr.mxu0 0.0
  %91 = vmatpush1.msra.mxu0 0.0
  %92 = vmatprep.subr.mxu0 0.0
  %93 = vmatpush1.msra.mxu0 0.0
  %94 = vmatprep.subr.mxu0 0.0
  %95 = vmatpush1.msra.mxu0 0.0
  %96 = vmatprep.subr.mxu0 0.0
  %97 = vmatpush1.msra.mxu0 0.0
  %98 = vmatprep.subr.mxu0 0.0
  %99 = vmatpush1.msra.mxu0 0.0
  %100 = vmatprep.subr.mxu0 0.0
  %101 = vmatpush1.msra.mxu0 0.0
  %102 = vmatprep.subr.mxu0 0.0
  %103 = vmatpush1.msra.mxu0 0.0
  %104 = vmatprep.subr.mxu0 0.0
  %105 = vmatpush1.msra.mxu0 %v72
  %106 = vmatprep.subr.mxu0 0.0
  %107 = vmatpush2.msra.mxu0 0.0
  %108 = vmatprep.subr.mxu0 0.0
  %109 = vmatpush2.msra.mxu0 0.0
  %110 = vmatprep.subr.mxu0 0.0
  %111 = vmatpush2.msra.mxu0 0.0
  %112 = vmatprep.subr.mxu0 0.0
  %113 = vmatpush2.msra.mxu0 0.0
  %114 = vmatprep.subr.mxu0 0.0
  %115 = vmatpush2.msra.mxu0 0.0
  %116 = vmatprep.subr.mxu0 0.0
  %117 = vmatpush2.msra.mxu0 0.0
  %118 = vmatprep.subr.mxu0 0.0
  %119 = vmatpush2.msra.mxu0 0.0
  %120 = vmatprep.subr.mxu0 0.0
  %121 = vmatpush2.msra.mxu0 0.0
  %122 = vmatprep.subr.mxu0 0.0
  %123 = vmatpush2.msra.mxu0 0.0
  %124 = vmatprep.subr.mxu0 0.0
  %125 = vmatpush2.msra.mxu0 0.0
  %126 = vmatprep.subr.mxu0 0.0
  %127 = vmatpush2.msra.mxu0 0.0
  %128 = vmatprep.subr.mxu0 0.0
  %129 = vmatpush2.msra.mxu0 0.0
  %130 = vmatprep.subr.mxu0 0.0
  %131 = vmatpush2.msra.mxu0 0.0
  %132 = vmatprep.subr.mxu0 0.0
  %133 = vmatpush2.msra.mxu0 0.0
  %134 = vmatprep.subr.mxu0 0.0
  %135 = vmatpush2.msra.mxu0 0.0
  %136 = vmatprep.subr.mxu0 0.0
  %137 = vmatpush2.msra.mxu0 0.0
  %138 = vmatprep.mubr.f32.mxu0 0.0
  %139 = vmatmul.mubr.f32.gmra.mxu0 %v68
  %v140 = vpop.f32.mrf.mxu0
  %v141 = vadd.f32 0.0, %v140
  %v142 = vpop.f32.mrf.mxu0
  %143 = vdwg.mxu0
  %v145 = vsel %vm66, %v65, 0
  %v148 = vsel %vm70, %v44, 0
  %150 = vmatprep.subr.mxu0 0.0
  %151 = vmatpush1.msra.mxu0 0.0
  %152 = vmatprep.subr.mxu0 0.0
  %153 = vmatpush1.msra.mxu0 0.0
  %154 = vmatprep.subr.mxu0 0.0
  %155 = vmatpush1.msra.mxu0 0.0
  %156 = vmatprep.subr.mxu0 0.0
  %157 = vmatpush1.msra.mxu0 0.0
  %158 = vmatprep.subr.mxu0 0.0
  %159 = vmatpush1.msra.mxu0 0.0
  %160 = vmatprep.subr.mxu0 0.0
  %161 = vmatpush1.msra.mxu0 0.0
  %162 = vmatprep.subr.mxu0 0.0
  %163 = vmatpush1.msra.mxu0 0.0
  %164 = vmatprep.subr.mxu0 0.0
  %165 = vmatpush1.msra.mxu0 0.0
  %166 = vmatprep.subr.mxu0 0.0
  %167 = vmatpush1.msra.mxu0 0.0
  %168 = vmatprep.subr.mxu0 0.0
  %169 = vmatpush1.msra.mxu0 0.0
  %170 = vmatprep.subr.mxu0 0.0
  %171 = vmatpush1.msra.mxu0 0.0
  %172 = vmatprep.subr.mxu0 0.0
  %173 = vmatpush1.msra.mxu0 0.0
  %174 = vmatprep.subr.mxu0 0.0
  %175 = vmatpush1.msra.mxu0 0.0
  %176 = vmatprep.subr.mxu0 0.0
  %177 = vmatpush1.msra.mxu0 0.0
  %178 = vmatprep.subr.mxu0 0.0
  %179 = vmatpush1.msra.mxu0 0.0
  %180 = vmatprep.subr.mxu0 0.0
  %181 = vmatpush1.msra.mxu0 %v148
  %182 = vmatprep.subr.mxu0 0.0
  %183 = vmatpush2.msra.mxu0 0.0
  %184 = vmatprep.subr.mxu0 0.0
  %185 = vmatpush2.msra.mxu0 0.0
  %186 = vmatprep.subr.mxu0 0.0
  %187 = vmatpush2.msra.mxu0 0.0
  %188 = vmatprep.subr.mxu0 0.0
  %189 = vmatpush2.msra.mxu0 0.0
  %190 = vmatprep.subr.mxu0 0.0
  %191 = vmatpush2.msra.mxu0 0.0
  %192 = vmatprep.subr.mxu0 0.0
  %193 = vmatpush2.msra.mxu0 0.0
  %194 = vmatprep.subr.mxu0 0.0
  %195 = vmatpush2.msra.mxu0 0.0
  %196 = vmatprep.subr.mxu0 0.0
  %197 = vmatpush2.msra.mxu0 0.0
  %198 = vmatprep.subr.mxu0 0.0
  %199 = vmatpush2.msra.mxu0 0.0
  %200 = vmatprep.subr.mxu0 0.0
  %201 = vmatpush2.msra.mxu0 0.0
  %202 = vmatprep.subr.mxu0 0.0
  %203 = vmatpush2.msra.mxu0 0.0
  %204 = vmatprep.subr.mxu0 0.0
  %205 = vmatpush2.msra.mxu0 0.0
  %206 = vmatprep.subr.mxu0 0.0
  %207 = vmatpush2.msra.mxu0 0.0
  %208 = vmatprep.subr.mxu0 0.0
  %209 = vmatpush2.msra.mxu0 0.0
  %210 = vmatprep.subr.mxu0 0.0
  %211 = vmatpush2.msra.mxu0 0.0
  %212 = vmatprep.subr.mxu0 0.0
  %213 = vmatpush2.msra.mxu0 0.0
  %214 = vmatprep.mubr.f32.mxu0 0.0
  %215 = vmatmul.mubr.f32.gmra.mxu0 %v145
  %v216 = vpop.f32.mrf.mxu0
  %v217 = vadd.f32 %v141, %v216
  %v218 = vpop.f32.mrf.mxu0
  %219 = vdwg.mxu0
  %v221 = vlaneseq
  %v222 = vshrl.u32 %v221, 7
  %v223 = vsub.s32 0, %v222
  %v224 = vrot.slane %v58, %v223
  %v226 = vadd.f32 %v217, %v224
  %v228 = vsel %vm70, %v53, 0
  %230 = vmatprep.subr.mxu0 0.0
  %231 = vmatpush1.msra.mxu0 0.0
  %232 = vmatprep.subr.mxu0 0.0
  %233 = vmatpush1.msra.mxu0 0.0
  %234 = vmatprep.subr.mxu0 0.0
  %235 = vmatpush1.msra.mxu0 0.0
  %236 = vmatprep.subr.mxu0 0.0
  %237 = vmatpush1.msra.mxu0 0.0
  %238 = vmatprep.subr.mxu0 0.0
  %239 = vmatpush1.msra.mxu0 0.0
  %240 = vmatprep.subr.mxu0 0.0
  %241 = vmatpush1.msra.mxu0 0.0
  %242 = vmatprep.subr.mxu0 0.0
  %243 = vmatpush1.msra.mxu0 0.0
  %244 = vmatprep.subr.mxu0 0.0
  %245 = vmatpush1.msra.mxu0 0.0
  %246 = vmatprep.subr.mxu0 0.0
  %247 = vmatpush1.msra.mxu0 0.0
  %248 = vmatprep.subr.mxu0 0.0
  %249 = vmatpush1.msra.mxu0 0.0
  %250 = vmatprep.subr.mxu0 0.0
  %251 = vmatpush1.msra.mxu0 0.0
  %252 = vmatprep.subr.mxu0 0.0
  %253 = vmatpush1.msra.mxu0 0.0
  %254 = vmatprep.subr.mxu0 0.0
  %255 = vmatpush1.msra.mxu0 0.0
  %256 = vmatprep.subr.mxu0 0.0
  %257 = vmatpush1.msra.mxu0 0.0
  %258 = vmatprep.subr.mxu0 0.0
  %259 = vmatpush1.msra.mxu0 0.0
  %260 = vmatprep.subr.mxu0 0.0
  %261 = vmatpush1.msra.mxu0 %v228
  %262 = vmatprep.subr.mxu0 0.0
  %263 = vmatpush2.msra.mxu0 0.0
  %264 = vmatprep.subr.mxu0 0.0
  %265 = vmatpush2.msra.mxu0 0.0
  %266 = vmatprep.subr.mxu0 0.0
  %267 = vmatpush2.msra.mxu0 0.0
  %268 = vmatprep.subr.mxu0 0.0
  %269 = vmatpush2.msra.mxu0 0.0
  %270 = vmatprep.subr.mxu0 0.0
  %271 = vmatpush2.msra.mxu0 0.0
  %272 = vmatprep.subr.mxu0 0.0
  %273 = vmatpush2.msra.mxu0 0.0
  %274 = vmatprep.subr.mxu0 0.0
  %275 = vmatpush2.msra.mxu0 0.0
  %276 = vmatprep.subr.mxu0 0.0
  %277 = vmatpush2.msra.mxu0 0.0
  %278 = vmatprep.subr.mxu0 0.0
  %279 = vmatpush2.msra.mxu0 0.0
  %280 = vmatprep.subr.mxu0 0.0
  %281 = vmatpush2.msra.mxu0 0.0
  %282 = vmatprep.subr.mxu0 0.0
  %283 = vmatpush2.msra.mxu0 0.0
  %284 = vmatprep.subr.mxu0 0.0
  %285 = vmatpush2.msra.mxu0 0.0
  %286 = vmatprep.subr.mxu0 0.0
  %287 = vmatpush2.msra.mxu0 0.0
  %288 = vmatprep.subr.mxu0 0.0
  %289 = vmatpush2.msra.mxu0 0.0
  %290 = vmatprep.subr.mxu0 0.0
  %291 = vmatpush2.msra.mxu0 0.0
  %292 = vmatprep.subr.mxu0 0.0
  %293 = vmatpush2.msra.mxu0 0.0
  %294 = vmatprep.mubr.f32.mxu0 0.0
  %295 = vmatmul.mubr.f32.gmra.mxu0 %v68
  %v296 = vpop.f32.mrf.mxu0
  %v297 = vadd.f32 0.0, %v296
  %v298 = vpop.f32.mrf.mxu0
  %299 = vdwg.mxu0
  %v301 = vsel %vm70, %v46, 0
  %303 = vmatprep.subr.mxu0 0.0
  %304 = vmatpush1.msra.mxu0 0.0
  %305 = vmatprep.subr.mxu0 0.0
  %306 = vmatpush1.msra.mxu0 0.0
  %307 = vmatprep.subr.mxu0 0.0
  %308 = vmatpush1.msra.mxu0 0.0
  %309 = vmatprep.subr.mxu0 0.0
  %310 = vmatpush1.msra.mxu0 0.0
  %311 = vmatprep.subr.mxu0 0.0
  %312 = vmatpush1.msra.mxu0 0.0
  %313 = vmatprep.subr.mxu0 0.0
  %314 = vmatpush1.msra.mxu0 0.0
  %315 = vmatprep.subr.mxu0 0.0
  %316 = vmatpush1.msra.mxu0 0.0
  %317 = vmatprep.subr.mxu0 0.0
  %318 = vmatpush1.msra.mxu0 0.0
  %319 = vmatprep.subr.mxu0 0.0
  %320 = vmatpush1.msra.mxu0 0.0
  %321 = vmatprep.subr.mxu0 0.0
  %322 = vmatpush1.msra.mxu0 0.0
  %323 = vmatprep.subr.mxu0 0.0
  %324 = vmatpush1.msra.mxu0 0.0
  %325 = vmatprep.subr.mxu0 0.0
  %326 = vmatpush1.msra.mxu0 0.0
  %327 = vmatprep.subr.mxu0 0.0
  %328 = vmatpush1.msra.mxu0 0.0
  %329 = vmatprep.subr.mxu0 0.0
  %330 = vmatpush1.msra.mxu0 0.0
  %331 = vmatprep.subr.mxu0 0.0
  %332 = vmatpush1.msra.mxu0 0.0
  %333 = vmatprep.subr.mxu0 0.0
  %334 = vmatpush1.msra.mxu0 %v301
  %335 = vmatprep.subr.mxu0 0.0
  %336 = vmatpush2.msra.mxu0 0.0
  %337 = vmatprep.subr.mxu0 0.0
  %338 = vmatpush2.msra.mxu0 0.0
  %339 = vmatprep.subr.mxu0 0.0
  %340 = vmatpush2.msra.mxu0 0.0
  %341 = vmatprep.subr.mxu0 0.0
  %342 = vmatpush2.msra.mxu0 0.0
  %343 = vmatprep.subr.mxu0 0.0
  %344 = vmatpush2.msra.mxu0 0.0
  %345 = vmatprep.subr.mxu0 0.0
  %346 = vmatpush2.msra.mxu0 0.0
  %347 = vmatprep.subr.mxu0 0.0
  %348 = vmatpush2.msra.mxu0 0.0
  %349 = vmatprep.subr.mxu0 0.0
  %350 = vmatpush2.msra.mxu0 0.0
  %351 = vmatprep.subr.mxu0 0.0
  %352 = vmatpush2.msra.mxu0 0.0
  %353 = vmatprep.subr.mxu0 0.0
  %354 = vmatpush2.msra.mxu0 0.0
  %355 = vmatprep.subr.mxu0 0.0
  %356 = vmatpush2.msra.mxu0 0.0
  %357 = vmatprep.subr.mxu0 0.0
  %358 = vmatpush2.msra.mxu0 0.0
  %359 = vmatprep.subr.mxu0 0.0
  %360 = vmatpush2.msra.mxu0 0.0
  %361 = vmatprep.subr.mxu0 0.0
  %362 = vmatpush2.msra.mxu0 0.0
  %363 = vmatprep.subr.mxu0 0.0
  %364 = vmatpush2.msra.mxu0 0.0
  %365 = vmatprep.subr.mxu0 0.0
  %366 = vmatpush2.msra.mxu0 0.0
  %367 = vmatprep.mubr.f32.mxu0 0.0
  %368 = vmatmul.mubr.f32.gmra.mxu0 %v145
  %v369 = vpop.f32.mrf.mxu0
  %v370 = vadd.f32 %v297, %v369
  %v371 = vpop.f32.mrf.mxu0
  %372 = vdwg.mxu0
  %v374 = vlaneseq
  %v375 = vshrl.u32 %v374, 7
  %v376 = vsub.s32 0, %v375
  %v377 = vrot.slane %v60, %v376
  %v379 = vadd.f32 %v370, %v377
  %v381 = vsel %vm70, %v55, 0
  %383 = vmatprep.subr.mxu0 0.0
  %384 = vmatpush1.msra.mxu0 0.0
  %385 = vmatprep.subr.mxu0 0.0
  %386 = vmatpush1.msra.mxu0 0.0
  %387 = vmatprep.subr.mxu0 0.0
  %388 = vmatpush1.msra.mxu0 0.0
  %389 = vmatprep.subr.mxu0 0.0
  %390 = vmatpush1.msra.mxu0 0.0
  %391 = vmatprep.subr.mxu0 0.0
  %392 = vmatpush1.msra.mxu0 0.0
  %393 = vmatprep.subr.mxu0 0.0
  %394 = vmatpush1.msra.mxu0 0.0
  %395 = vmatprep.subr.mxu0 0.0
  %396 = vmatpush1.msra.mxu0 0.0
  %397 = vmatprep.subr.mxu0 0.0
  %398 = vmatpush1.msra.mxu0 0.0
  %399 = vmatprep.subr.mxu0 0.0
  %400 = vmatpush1.msra.mxu0 0.0
  %401 = vmatprep.subr.mxu0 0.0
  %402 = vmatpush1.msra.mxu0 0.0
  %403 = vmatprep.subr.mxu0 0.0
  %404 = vmatpush1.msra.mxu0 0.0
  %405 = vmatprep.subr.mxu0 0.0
  %406 = vmatpush1.msra.mxu0 0.0
  %407 = vmatprep.subr.mxu0 0.0
  %408 = vmatpush1.msra.mxu0 0.0
  %409 = vmatprep.subr.mxu0 0.0
  %410 = vmatpush1.msra.mxu0 0.0
  %411 = vmatprep.subr.mxu0 0.0
  %412 = vmatpush1.msra.mxu0 0.0
  %413 = vmatprep.subr.mxu0 0.0
  %414 = vmatpush1.msra.mxu0 %v381
  %415 = vmatprep.subr.mxu0 0.0
  %416 = vmatpush2.msra.mxu0 0.0
  %417 = vmatprep.subr.mxu0 0.0
  %418 = vmatpush2.msra.mxu0 0.0
  %419 = vmatprep.subr.mxu0 0.0
  %420 = vmatpush2.msra.mxu0 0.0
  %421 = vmatprep.subr.mxu0 0.0
  %422 = vmatpush2.msra.mxu0 0.0
  %423 = vmatprep.subr.mxu0 0.0
  %424 = vmatpush2.msra.mxu0 0.0
  %425 = vmatprep.subr.mxu0 0.0
  %426 = vmatpush2.msra.mxu0 0.0
  %427 = vmatprep.subr.mxu0 0.0
  %428 = vmatpush2.msra.mxu0 0.0
  %429 = vmatprep.subr.mxu0 0.0
  %430 = vmatpush2.msra.mxu0 0.0
  %431 = vmatprep.subr.mxu0 0.0
  %432 = vmatpush2.msra.mxu0 0.0
  %433 = vmatprep.subr.mxu0 0.0
  %434 = vmatpush2.msra.mxu0 0.0
  %435 = vmatprep.subr.mxu0 0.0
  %436 = vmatpush2.msra.mxu0 0.0
  %437 = vmatprep.subr.mxu0 0.0
  %438 = vmatpush2.msra.mxu0 0.0
  %439 = vmatprep.subr.mxu0 0.0
  %440 = vmatpush2.msra.mxu0 0.0
  %441 = vmatprep.subr.mxu0 0.0
  %442 = vmatpush2.msra.mxu0 0.0
  %443 = vmatprep.subr.mxu0 0.0
  %444 = vmatpush2.msra.mxu0 0.0
  %445 = vmatprep.subr.mxu0 0.0
  %446 = vmatpush2.msra.mxu0 0.0
  %447 = vmatprep.mubr.f32.mxu0 0.0
  %448 = vmatmul.mubr.f32.gmra.mxu0 %v68
  %v449 = vpop.f32.mrf.mxu0
  %v450 = vadd.f32 0.0, %v449
  %v451 = vpop.f32.mrf.mxu0
  %452 = vdwg.mxu0
  %v454 = vsel %vm70, %v48, 0
  %456 = vmatprep.subr.mxu0 0.0
  %457 = vmatpush1.msra.mxu0 0.0
  %458 = vmatprep.subr.mxu0 0.0
  %459 = vmatpush1.msra.mxu0 0.0
  %460 = vmatprep.subr.mxu0 0.0
  %461 = vmatpush1.msra.mxu0 0.0
  %462 = vmatprep.subr.mxu0 0.0
  %463 = vmatpush1.msra.mxu0 0.0
  %464 = vmatprep.subr.mxu0 0.0
  %465 = vmatpush1.msra.mxu0 0.0
  %466 = vmatprep.subr.mxu0 0.0
  %467 = vmatpush1.msra.mxu0 0.0
  %468 = vmatprep.subr.mxu0 0.0
  %469 = vmatpush1.msra.mxu0 0.0
  %470 = vmatprep.subr.mxu0 0.0
  %471 = vmatpush1.msra.mxu0 0.0
  %472 = vmatprep.subr.mxu0 0.0
  %473 = vmatpush1.msra.mxu0 0.0
  %474 = vmatprep.subr.mxu0 0.0
  %475 = vmatpush1.msra.mxu0 0.0
  %476 = vmatprep.subr.mxu0 0.0
  %477 = vmatpush1.msra.mxu0 0.0
  %478 = vmatprep.subr.mxu0 0.0
  %479 = vmatpush1.msra.mxu0 0.0
  %480 = vmatprep.subr.mxu0 0.0
  %481 = vmatpush1.msra.mxu0 0.0
  %482 = vmatprep.subr.mxu0 0.0
  %483 = vmatpush1.msra.mxu0 0.0
  %484 = vmatprep.subr.mxu0 0.0
  %485 = vmatpush1.msra.mxu0 0.0
  %486 = vmatprep.subr.mxu0 0.0
  %487 = vmatpush1.msra.mxu0 %v454
  %488 = vmatprep.subr.mxu0 0.0
  %489 = vmatpush2.msra.mxu0 0.0
  %490 = vmatprep.subr.mxu0 0.0
  %491 = vmatpush2.msra.mxu0 0.0
  %492 = vmatprep.subr.mxu0 0.0
  %493 = vmatpush2.msra.mxu0 0.0
  %494 = vmatprep.subr.mxu0 0.0
  %495 = vmatpush2.msra.mxu0 0.0
  %496 = vmatprep.subr.mxu0 0.0
  %497 = vmatpush2.msra.mxu0 0.0
  %498 = vmatprep.subr.mxu0 0.0
  %499 = vmatpush2.msra.mxu0 0.0
  %500 = vmatprep.subr.mxu0 0.0
  %501 = vmatpush2.msra.mxu0 0.0
  %502 = vmatprep.subr.mxu0 0.0
  %503 = vmatpush2.msra.mxu0 0.0
  %504 = vmatprep.subr.mxu0 0.0
  %505 = vmatpush2.msra.mxu0 0.0
  %506 = vmatprep.subr.mxu0 0.0
  %507 = vmatpush2.msra.mxu0 0.0
  %508 = vmatprep.subr.mxu0 0.0
  %509 = vmatpush2.msra.mxu0 0.0
  %510 = vmatprep.subr.mxu0 0.0
  %511 = vmatpush2.msra.mxu0 0.0
  %512 = vmatprep.subr.mxu0 0.0
  %513 = vmatpush2.msra.mxu0 0.0
  %514 = vmatprep.subr.mxu0 0.0
  %515 = vmatpush2.msra.mxu0 0.0
  %516 = vmatprep.subr.mxu0 0.0
  %517 = vmatpush2.msra.mxu0 0.0
  %518 = vmatprep.subr.mxu0 0.0
  %519 = vmatpush2.msra.mxu0 0.0
  %520 = vmatprep.mubr.f32.mxu0 0.0
  %521 = vmatmul.mubr.f32.gmra.mxu0 %v145
  %v522 = vpop.f32.mrf.mxu0
  %v523 = vadd.f32 %v450, %v522
  %v524 = vpop.f32.mrf.mxu0
  %525 = vdwg.mxu0
  %v527 = vlaneseq
  %v528 = vshrl.u32 %v527, 7
  %v529 = vsub.s32 0, %v528
  %v530 = vrot.slane %v62, %v529
  %v532 = vadd.f32 %v523, %v530
  %v534 = vsel %vm70, %v57, 0
  %536 = vmatprep.subr.mxu0 0.0
  %537 = vmatpush1.msra.mxu0 0.0
  %538 = vmatprep.subr.mxu0 0.0
  %539 = vmatpush1.msra.mxu0 0.0
  %540 = vmatprep.subr.mxu0 0.0
  %541 = vmatpush1.msra.mxu0 0.0
  %542 = vmatprep.subr.mxu0 0.0
  %543 = vmatpush1.msra.mxu0 0.0
  %544 = vmatprep.subr.mxu0 0.0
  %545 = vmatpush1.msra.mxu0 0.0
  %546 = vmatprep.subr.mxu0 0.0
  %547 = vmatpush1.msra.mxu0 0.0
  %548 = vmatprep.subr.mxu0 0.0
  %549 = vmatpush1.msra.mxu0 0.0
  %550 = vmatprep.subr.mxu0 0.0
  %551 = vmatpush1.msra.mxu0 0.0
  %552 = vmatprep.subr.mxu0 0.0
  %553 = vmatpush1.msra.mxu0 0.0
  %554 = vmatprep.subr.mxu0 0.0
  %555 = vmatpush1.msra.mxu0 0.0
  %556 = vmatprep.subr.mxu0 0.0
  %557 = vmatpush1.msra.mxu0 0.0
  %558 = vmatprep.subr.mxu0 0.0
  %559 = vmatpush1.msra.mxu0 0.0
  %560 = vmatprep.subr.mxu0 0.0
  %561 = vmatpush1.msra.mxu0 0.0
  %562 = vmatprep.subr.mxu0 0.0
  %563 = vmatpush1.msra.mxu0 0.0
  %564 = vmatprep.subr.mxu0 0.0
  %565 = vmatpush1.msra.mxu0 0.0
  %566 = vmatprep.subr.mxu0 0.0
  %567 = vmatpush1.msra.mxu0 %v534
  %568 = vmatprep.subr.mxu0 0.0
  %569 = vmatpush2.msra.mxu0 0.0
  %570 = vmatprep.subr.mxu0 0.0
  %571 = vmatpush2.msra.mxu0 0.0
  %572 = vmatprep.subr.mxu0 0.0
  %573 = vmatpush2.msra.mxu0 0.0
  %574 = vmatprep.subr.mxu0 0.0
  %575 = vmatpush2.msra.mxu0 0.0
  %576 = vmatprep.subr.mxu0 0.0
  %577 = vmatpush2.msra.mxu0 0.0
  %578 = vmatprep.subr.mxu0 0.0
  %579 = vmatpush2.msra.mxu0 0.0
  %580 = vmatprep.subr.mxu0 0.0
  %581 = vmatpush2.msra.mxu0 0.0
  %582 = vmatprep.subr.mxu0 0.0
  %583 = vmatpush2.msra.mxu0 0.0
  %584 = vmatprep.subr.mxu0 0.0
  %585 = vmatpush2.msra.mxu0 0.0
  %586 = vmatprep.subr.mxu0 0.0
  %587 = vmatpush2.msra.mxu0 0.0
  %588 = vmatprep.subr.mxu0 0.0
  %589 = vmatpush2.msra.mxu0 0.0
  %590 = vmatprep.subr.mxu0 0.0
  %591 = vmatpush2.msra.mxu0 0.0
  %592 = vmatprep.subr.mxu0 0.0
  %593 = vmatpush2.msra.mxu0 0.0
  %594 = vmatprep.subr.mxu0 0.0
  %595 = vmatpush2.msra.mxu0 0.0
  %596 = vmatprep.subr.mxu0 0.0
  %597 = vmatpush2.msra.mxu0 0.0
  %598 = vmatprep.subr.mxu0 0.0
  %599 = vmatpush2.msra.mxu0 0.0
  %600 = vmatprep.mubr.f32.mxu0 0.0
  %601 = vmatmul.mubr.f32.gmra.mxu0 %v68
  %v602 = vpop.f32.mrf.mxu0
  %v603 = vadd.f32 0.0, %v602
  %v604 = vpop.f32.mrf.mxu0
  %605 = vdwg.mxu0
  %v607 = vsel %vm70, %v50, 0
  %609 = vmatprep.subr.mxu0 0.0
  %610 = vmatpush1.msra.mxu0 0.0
  %611 = vmatprep.subr.mxu0 0.0
  %612 = vmatpush1.msra.mxu0 0.0
  %613 = vmatprep.subr.mxu0 0.0
  %614 = vmatpush1.msra.mxu0 0.0
  %615 = vmatprep.subr.mxu0 0.0
  %616 = vmatpush1.msra.mxu0 0.0
  %617 = vmatprep.subr.mxu0 0.0
  %618 = vmatpush1.msra.mxu0 0.0
  %619 = vmatprep.subr.mxu0 0.0
  %620 = vmatpush1.msra.mxu0 0.0
  %621 = vmatprep.subr.mxu0 0.0
  %622 = vmatpush1.msra.mxu0 0.0
  %623 = vmatprep.subr.mxu0 0.0
  %624 = vmatpush1.msra.mxu0 0.0
  %625 = vmatprep.subr.mxu0 0.0
  %626 = vmatpush1.msra.mxu0 0.0
  %627 = vmatprep.subr.mxu0 0.0
  %628 = vmatpush1.msra.mxu0 0.0
  %629 = vmatprep.subr.mxu0 0.0
  %630 = vmatpush1.msra.mxu0 0.0
  %631 = vmatprep.subr.mxu0 0.0
  %632 = vmatpush1.msra.mxu0 0.0
  %633 = vmatprep.subr.mxu0 0.0
  %634 = vmatpush1.msra.mxu0 0.0
  %635 = vmatprep.subr.mxu0 0.0
  %636 = vmatpush1.msra.mxu0 0.0
  %637 = vmatprep.subr.mxu0 0.0
  %638 = vmatpush1.msra.mxu0 0.0
  %639 = vmatprep.subr.mxu0 0.0
  %640 = vmatpush1.msra.mxu0 %v607
  %641 = vmatprep.subr.mxu0 0.0
  %642 = vmatpush2.msra.mxu0 0.0
  %643 = vmatprep.subr.mxu0 0.0
  %644 = vmatpush2.msra.mxu0 0.0
  %645 = vmatprep.subr.mxu0 0.0
  %646 = vmatpush2.msra.mxu0 0.0
  %647 = vmatprep.subr.mxu0 0.0
  %648 = vmatpush2.msra.mxu0 0.0
  %649 = vmatprep.subr.mxu0 0.0
  %650 = vmatpush2.msra.mxu0 0.0
  %651 = vmatprep.subr.mxu0 0.0
  %652 = vmatpush2.msra.mxu0 0.0
  %653 = vmatprep.subr.mxu0 0.0
  %654 = vmatpush2.msra.mxu0 0.0
  %655 = vmatprep.subr.mxu0 0.0
  %656 = vmatpush2.msra.mxu0 0.0
  %657 = vmatprep.subr.mxu0 0.0
  %658 = vmatpush2.msra.mxu0 0.0
  %659 = vmatprep.subr.mxu0 0.0
  %660 = vmatpush2.msra.mxu0 0.0
  %661 = vmatprep.subr.mxu0 0.0
  %662 = vmatpush2.msra.mxu0 0.0
  %663 = vmatprep.subr.mxu0 0.0
  %664 = vmatpush2.msra.mxu0 0.0
  %665 = vmatprep.subr.mxu0 0.0
  %666 = vmatpush2.msra.mxu0 0.0
  %667 = vmatprep.subr.mxu0 0.0
  %668 = vmatpush2.msra.mxu0 0.0
  %669 = vmatprep.subr.mxu0 0.0
  %670 = vmatpush2.msra.mxu0 0.0
  %671 = vmatprep.subr.mxu0 0.0
  %672 = vmatpush2.msra.mxu0 0.0
  %673 = vmatprep.mubr.f32.mxu0 0.0
  %674 = vmatmul.mubr.f32.gmra.mxu0 %v145
  %v675 = vpop.f32.mrf.mxu0
  %v676 = vadd.f32 %v603, %v675
  %v677 = vpop.f32.mrf.mxu0
  %678 = vdwg.mxu0
  %v680 = vlaneseq
  %v681 = vshrl.u32 %v680, 7
  %v682 = vsub.s32 0, %v681
  %v683 = vrot.slane %v64, %v682
  %v685 = vadd.f32 %v676, %v683
  %v686 = vsub.f32 0.0, %v226
  %v687 = vmul.f32 %v686, 1.442695
  %v688 = vpow.pop %v687
  %v689 = vadd.f32 %v688, 1.0
  %v690 = vrcp.pop %v689
  %v691 = vmul.f32 1.0, %v690
  %v692 = vsub.f32 0.0, %v379
  %v693 = vmul.f32 %v692, 1.442695
  %v694 = vpow.pop %v693
  %v695 = vadd.f32 %v694, 1.0
  %v696 = vrcp.pop %v695
  %v697 = vmul.f32 1.0, %v696
  %v698 = vtanh.pop %v532
  %v699 = vsub.f32 0.0, %v685
  %v700 = vmul.f32 %v699, 1.442695
  %v701 = vpow.pop %v700
  %v702 = vadd.f32 %v701, 1.0
  %v703 = vrcp.pop %v702
  %v704 = vmul.f32 1.0, %v703
  %v705 = vmul.f32 %v697, 0.0
  %v706 = vmul.f32 %v691, %v698
  %v707 = vadd.f32 %v705, %v706
  %v708 = vtanh.pop %v707
  %v709 = vmul.f32 %v704, %v708
  %s710 = scalar_lea.vmem %s0, 8
  %v711 = vld [vmem:[%s710] sm:$0xff]
  %v713 = vsel %vm66, %v709, 0
  %715 = vmatprep.subr.mxu0 0.0
  %716 = vmatpush1.msra.mxu0 0.0
  %717 = vmatprep.subr.mxu0 0.0
  %718 = vmatpush1.msra.mxu0 0.0
  %719 = vmatprep.subr.mxu0 0.0
  %720 = vmatpush1.msra.mxu0 0.0
  %721 = vmatprep.subr.mxu0 0.0
  %722 = vmatpush1.msra.mxu0 0.0
  %723 = vmatprep.subr.mxu0 0.0
  %724 = vmatpush1.msra.mxu0 0.0
  %725 = vmatprep.subr.mxu0 0.0
  %726 = vmatpush1.msra.mxu0 0.0
  %727 = vmatprep.subr.mxu0 0.0
  %728 = vmatpush1.msra.mxu0 0.0
  %729 = vmatprep.subr.mxu0 0.0
  %730 = vmatpush1.msra.mxu0 0.0
  %731 = vmatprep.subr.mxu0 0.0
  %732 = vmatpush1.msra.mxu0 0.0
  %733 = vmatprep.subr.mxu0 0.0
  %734 = vmatpush1.msra.mxu0 0.0
  %735 = vmatprep.subr.mxu0 0.0
  %736 = vmatpush1.msra.mxu0 0.0
  %737 = vmatprep.subr.mxu0 0.0
  %738 = vmatpush1.msra.mxu0 0.0
  %739 = vmatprep.subr.mxu0 0.0
  %740 = vmatpush1.msra.mxu0 0.0
  %741 = vmatprep.subr.mxu0 0.0
  %742 = vmatpush1.msra.mxu0 0.0
  %743 = vmatprep.subr.mxu0 0.0
  %744 = vmatpush1.msra.mxu0 0.0
  %745 = vmatprep.subr.mxu0 0.0
  %746 = vmatpush1.msra.mxu0 %v72
  %747 = vmatprep.subr.mxu0 0.0
  %748 = vmatpush2.msra.mxu0 0.0
  %749 = vmatprep.subr.mxu0 0.0
  %750 = vmatpush2.msra.mxu0 0.0
  %751 = vmatprep.subr.mxu0 0.0
  %752 = vmatpush2.msra.mxu0 0.0
  %753 = vmatprep.subr.mxu0 0.0
  %754 = vmatpush2.msra.mxu0 0.0
  %755 = vmatprep.subr.mxu0 0.0
  %756 = vmatpush2.msra.mxu0 0.0
  %757 = vmatprep.subr.mxu0 0.0
  %758 = vmatpush2.msra.mxu0 0.0
  %759 = vmatprep.subr.mxu0 0.0
  %760 = vmatpush2.msra.mxu0 0.0
  %761 = vmatprep.subr.mxu0 0.0
  %762 = vmatpush2.msra.mxu0 0.0
  %763 = vmatprep.subr.mxu0 0.0
  %764 = vmatpush2.msra.mxu0 0.0
  %765 = vmatprep.subr.mxu0 0.0
  %766 = vmatpush2.msra.mxu0 0.0
  %767 = vmatprep.subr.mxu0 0.0
  %768 = vmatpush2.msra.mxu0 0.0
  %769 = vmatprep.subr.mxu0 0.0
  %770 = vmatpush2.msra.mxu0 0.0
  %771 = vmatprep.subr.mxu0 0.0
  %772 = vmatpush2.msra.mxu0 0.0
  %773 = vmatprep.subr.mxu0 0.0
  %774 = vmatpush2.msra.mxu0 0.0
  %775 = vmatprep.subr.mxu0 0.0
  %776 = vmatpush2.msra.mxu0 0.0
  %777 = vmatprep.subr.mxu0 0.0
  %778 = vmatpush2.msra.mxu0 0.0
  %779 = vmatprep.mubr.f32.mxu0 0.0
  %780 = vmatmul.mubr.f32.gmra.mxu0 %v713
  %v781 = vpop.f32.mrf.mxu0
  %v782 = vadd.f32 0.0, %v781
  %v783 = vpop.f32.mrf.mxu0
  %784 = vdwg.mxu0
  %v786 = vsel %vm66, %v711, 0
  %788 = vmatprep.subr.mxu0 0.0
  %789 = vmatpush1.msra.mxu0 0.0
  %790 = vmatprep.subr.mxu0 0.0
  %791 = vmatpush1.msra.mxu0 0.0
  %792 = vmatprep.subr.mxu0 0.0
  %793 = vmatpush1.msra.mxu0 0.0
  %794 = vmatprep.subr.mxu0 0.0
  %795 = vmatpush1.msra.mxu0 0.0
  %796 = vmatprep.subr.mxu0 0.0
  %797 = vmatpush1.msra.mxu0 0.0
  %798 = vmatprep.subr.mxu0 0.0
  %799 = vmatpush1.msra.mxu0 0.0
  %800 = vmatprep.subr.mxu0 0.0
  %801 = vmatpush1.msra.mxu0 0.0
  %802 = vmatprep.subr.mxu0 0.0
  %803 = vmatpush1.msra.mxu0 0.0
  %804 = vmatprep.subr.mxu0 0.0
  %805 = vmatpush1.msra.mxu0 0.0
  %806 = vmatprep.subr.mxu0 0.0
  %807 = vmatpush1.msra.mxu0 0.0
  %808 = vmatprep.subr.mxu0 0.0
  %809 = vmatpush1.msra.mxu0 0.0
  %810 = vmatprep.subr.mxu0 0.0
  %811 = vmatpush1.msra.mxu0 0.0
  %812 = vmatprep.subr.mxu0 0.0
  %813 = vmatpush1.msra.mxu0 0.0
  %814 = vmatprep.subr.mxu0 0.0
  %815 = vmatpush1.msra.mxu0 0.0
  %816 = vmatprep.subr.mxu0 0.0
  %817 = vmatpush1.msra.mxu0 0.0
  %818 = vmatprep.subr.mxu0 0.0
  %819 = vmatpush1.msra.mxu0 %v148
  %820 = vmatprep.subr.mxu0 0.0
  %821 = vmatpush2.msra.mxu0 0.0
  %822 = vmatprep.subr.mxu0 0.0
  %823 = vmatpush2.msra.mxu0 0.0
  %824 = vmatprep.subr.mxu0 0.0
  %825 = vmatpush2.msra.mxu0 0.0
  %826 = vmatprep.subr.mxu0 0.0
  %827 = vmatpush2.msra.mxu0 0.0
  %828 = vmatprep.subr.mxu0 0.0
  %829 = vmatpush2.msra.mxu0 0.0
  %830 = vmatprep.subr.mxu0 0.0
  %831 = vmatpush2.msra.mxu0 0.0
  %832 = vmatprep.subr.mxu0 0.0
  %833 = vmatpush2.msra.mxu0 0.0
  %834 = vmatprep.subr.mxu0 0.0
  %835 = vmatpush2.msra.mxu0 0.0
  %836 = vmatprep.subr.mxu0 0.0
  %837 = vmatpush2.msra.mxu0 0.0
  %838 = vmatprep.subr.mxu0 0.0
  %839 = vmatpush2.msra.mxu0 0.0
  %840 = vmatprep.subr.mxu0 0.0
  %841 = vmatpush2.msra.mxu0 0.0
  %842 = vmatprep.subr.mxu0 0.0
  %843 = vmatpush2.msra.mxu0 0.0
  %844 = vmatprep.subr.mxu0 0.0
  %845 = vmatpush2.msra.mxu0 0.0
  %846 = vmatprep.subr.mxu0 0.0
  %847 = vmatpush2.msra.mxu0 0.0
  %848 = vmatprep.subr.mxu0 0.0
  %849 = vmatpush2.msra.mxu0 0.0
  %850 = vmatprep.subr.mxu0 0.0
  %851 = vmatpush2.msra.mxu0 0.0
  %852 = vmatprep.mubr.f32.mxu0 0.0
  %853 = vmatmul.mubr.f32.gmra.mxu0 %v786
  %v854 = vpop.f32.mrf.mxu0
  %v855 = vadd.f32 %v782, %v854
  %v856 = vpop.f32.mrf.mxu0
  %857 = vdwg.mxu0
  %v858 = vadd.f32 %v855, %v224
  %859 = vmatprep.subr.mxu0 0.0
  %860 = vmatpush1.msra.mxu0 0.0
  %861 = vmatprep.subr.mxu0 0.0
  %862 = vmatpush1.msra.mxu0 0.0
  %863 = vmatprep.subr.mxu0 0.0
  %864 = vmatpush1.msra.mxu0 0.0
  %865 = vmatprep.subr.mxu0 0.0
  %866 = vmatpush1.msra.mxu0 0.0
  %867 = vmatprep.subr.mxu0 0.0
  %868 = vmatpush1.msra.mxu0 0.0
  %869 = vmatprep.subr.mxu0 0.0
  %870 = vmatpush1.msra.mxu0 0.0
  %871 = vmatprep.subr.mxu0 0.0
  %872 = vmatpush1.msra.mxu0 0.0
  %873 = vmatprep.subr.mxu0 0.0
  %874 = vmatpush1.msra.mxu0 0.0
  %875 = vmatprep.subr.mxu0 0.0
  %876 = vmatpush1.msra.mxu0 0.0
  %877 = vmatprep.subr.mxu0 0.0
  %878 = vmatpush1.msra.mxu0 0.0
  %879 = vmatprep.subr.mxu0 0.0
  %880 = vmatpush1.msra.mxu0 0.0
  %881 = vmatprep.subr.mxu0 0.0
  %882 = vmatpush1.msra.mxu0 0.0
  %883 = vmatprep.subr.mxu0 0.0
  %884 = vmatpush1.msra.mxu0 0.0
  %885 = vmatprep.subr.mxu0 0.0
  %886 = vmatpush1.msra.mxu0 0.0
  %887 = vmatprep.subr.mxu0 0.0
  %888 = vmatpush1.msra.mxu0 0.0
  %889 = vmatprep.subr.mxu0 0.0
  %890 = vmatpush1.msra.mxu0 %v228
  %891 = vmatprep.subr.mxu0 0.0
  %892 = vmatpush2.msra.mxu0 0.0
  %893 = vmatprep.subr.mxu0 0.0
  %894 = vmatpush2.msra.mxu0 0.0
  %895 = vmatprep.subr.mxu0 0.0
  %896 = vmatpush2.msra.mxu0 0.0
  %897 = vmatprep.subr.mxu0 0.0
  %898 = vmatpush2.msra.mxu0 0.0
  %899 = vmatprep.subr.mxu0 0.0
  %900 = vmatpush2.msra.mxu0 0.0
  %901 = vmatprep.subr.mxu0 0.0
  %902 = vmatpush2.msra.mxu0 0.0
  %903 = vmatprep.subr.mxu0 0.0
  %904 = vmatpush2.msra.mxu0 0.0
  %905 = vmatprep.subr.mxu0 0.0
  %906 = vmatpush2.msra.mxu0 0.0
  %907 = vmatprep.subr.mxu0 0.0
  %908 = vmatpush2.msra.mxu0 0.0
  %909 = vmatprep.subr.mxu0 0.0
  %910 = vmatpush2.msra.mxu0 0.0
  %911 = vmatprep.subr.mxu0 0.0
  %912 = vmatpush2.msra.mxu0 0.0
  %913 = vmatprep.subr.mxu0 0.0
  %914 = vmatpush2.msra.mxu0 0.0
  %915 = vmatprep.subr.mxu0 0.0
  %916 = vmatpush2.msra.mxu0 0.0
  %917 = vmatprep.subr.mxu0 0.0
  %918 = vmatpush2.msra.mxu0 0.0
  %919 = vmatprep.subr.mxu0 0.0
  %920 = vmatpush2.msra.mxu0 0.0
  %921 = vmatprep.subr.mxu0 0.0
  %922 = vmatpush2.msra.mxu0 0.0
  %923 = vmatprep.mubr.f32.mxu0 0.0
  %924 = vmatmul.mubr.f32.gmra.mxu0 %v713
  %v925 = vpop.f32.mrf.mxu0
  %v926 = vadd.f32 0.0, %v925
  %v927 = vpop.f32.mrf.mxu0
  %928 = vdwg.mxu0
  %929 = vmatprep.subr.mxu0 0.0
  %930 = vmatpush1.msra.mxu0 0.0
  %931 = vmatprep.subr.mxu0 0.0
  %932 = vmatpush1.msra.mxu0 0.0
  %933 = vmatprep.subr.mxu0 0.0
  %934 = vmatpush1.msra.mxu0 0.0
  %935 = vmatprep.subr.mxu0 0.0
  %936 = vmatpush1.msra.mxu0 0.0
  %937 = vmatprep.subr.mxu0 0.0
  %938 = vmatpush1.msra.mxu0 0.0
  %939 = vmatprep.subr.mxu0 0.0
  %940 = vmatpush1.msra.mxu0 0.0
  %941 = vmatprep.subr.mxu0 0.0
  %942 = vmatpush1.msra.mxu0 0.0
  %943 = vmatprep.subr.mxu0 0.0
  %944 = vmatpush1.msra.mxu0 0.0
  %945 = vmatprep.subr.mxu0 0.0
  %946 = vmatpush1.msra.mxu0 0.0
  %947 = vmatprep.subr.mxu0 0.0
  %948 = vmatpush1.msra.mxu0 0.0
  %949 = vmatprep.subr.mxu0 0.0
  %950 = vmatpush1.msra.mxu0 0.0
  %951 = vmatprep.subr.mxu0 0.0
  %952 = vmatpush1.msra.mxu0 0.0
  %953 = vmatprep.subr.mxu0 0.0
  %954 = vmatpush1.msra.mxu0 0.0
  %955 = vmatprep.subr.mxu0 0.0
  %956 = vmatpush1.msra.mxu0 0.0
  %957 = vmatprep.subr.mxu0 0.0
  %958 = vmatpush1.msra.mxu0 0.0
  %959 = vmatprep.subr.mxu0 0.0
  %960 = vmatpush1.msra.mxu0 %v301
  %961 = vmatprep.subr.mxu0 0.0
  %962 = vmatpush2.msra.mxu0 0.0
  %963 = vmatprep.subr.mxu0 0.0
  %964 = vmatpush2.msra.mxu0 0.0
  %965 = vmatprep.subr.mxu0 0.0
  %966 = vmatpush2.msra.mxu0 0.0
  %967 = vmatprep.subr.mxu0 0.0
  %968 = vmatpush2.msra.mxu0 0.0
  %969 = vmatprep.subr.mxu0 0.0
  %970 = vmatpush2.msra.mxu0 0.0
  %971 = vmatprep.subr.mxu0 0.0
  %972 = vmatpush2.msra.mxu0 0.0
  %973 = vmatprep.subr.mxu0 0.0
  %974 = vmatpush2.msra.mxu0 0.0
  %975 = vmatprep.subr.mxu0 0.0
  %976 = vmatpush2.msra.mxu0 0.0
  %977 = vmatprep.subr.mxu0 0.0
  %978 = vmatpush2.msra.mxu0 0.0
  %979 = vmatprep.subr.mxu0 0.0
  %980 = vmatpush2.msra.mxu0 0.0
  %981 = vmatprep.subr.mxu0 0.0
  %982 = vmatpush2.msra.mxu0 0.0
  %983 = vmatprep.subr.mxu0 0.0
  %984 = vmatpush2.msra.mxu0 0.0
  %985 = vmatprep.subr.mxu0 0.0
  %986 = vmatpush2.msra.mxu0 0.0
  %987 = vmatprep.subr.mxu0 0.0
  %988 = vmatpush2.msra.mxu0 0.0
  %989 = vmatprep.subr.mxu0 0.0
  %990 = vmatpush2.msra.mxu0 0.0
  %991 = vmatprep.subr.mxu0 0.0
  %992 = vmatpush2.msra.mxu0 0.0
  %993 = vmatprep.mubr.f32.mxu0 0.0
  %994 = vmatmul.mubr.f32.gmra.mxu0 %v786
  %v995 = vpop.f32.mrf.mxu0
  %v996 = vadd.f32 %v926, %v995
  %v997 = vpop.f32.mrf.mxu0
  %998 = vdwg.mxu0
  %v999 = vadd.f32 %v996, %v377
  %1000 = vmatprep.subr.mxu0 0.0
  %1001 = vmatpush1.msra.mxu0 0.0
  %1002 = vmatprep.subr.mxu0 0.0
  %1003 = vmatpush1.msra.mxu0 0.0
  %1004 = vmatprep.subr.mxu0 0.0
  %1005 = vmatpush1.msra.mxu0 0.0
  %1006 = vmatprep.subr.mxu0 0.0
  %1007 = vmatpush1.msra.mxu0 0.0
  %1008 = vmatprep.subr.mxu0 0.0
  %1009 = vmatpush1.msra.mxu0 0.0
  %1010 = vmatprep.subr.mxu0 0.0
  %1011 = vmatpush1.msra.mxu0 0.0
  %1012 = vmatprep.subr.mxu0 0.0
  %1013 = vmatpush1.msra.mxu0 0.0
  %1014 = vmatprep.subr.mxu0 0.0
  %1015 = vmatpush1.msra.mxu0 0.0
  %1016 = vmatprep.subr.mxu0 0.0
  %1017 = vmatpush1.msra.mxu0 0.0
  %1018 = vmatprep.subr.mxu0 0.0
  %1019 = vmatpush1.msra.mxu0 0.0
  %1020 = vmatprep.subr.mxu0 0.0
  %1021 = vmatpush1.msra.mxu0 0.0
  %1022 = vmatprep.subr.mxu0 0.0
  %1023 = vmatpush1.msra.mxu0 0.0
  %1024 = vmatprep.subr.mxu0 0.0
  %1025 = vmatpush1.msra.mxu0 0.0
  %1026 = vmatprep.subr.mxu0 0.0
  %1027 = vmatpush1.msra.mxu0 0.0
  %1028 = vmatprep.subr.mxu0 0.0
  %1029 = vmatpush1.msra.mxu0 0.0
  %1030 = vmatprep.subr.mxu0 0.0
  %1031 = vmatpush1.msra.mxu0 %v381
  %1032 = vmatprep.subr.mxu0 0.0
  %1033 = vmatpush2.msra.mxu0 0.0
  %1034 = vmatprep.subr.mxu0 0.0
  %1035 = vmatpush2.msra.mxu0 0.0
  %1036 = vmatprep.subr.mxu0 0.0
  %1037 = vmatpush2.msra.mxu0 0.0
  %1038 = vmatprep.subr.mxu0 0.0
  %1039 = vmatpush2.msra.mxu0 0.0
  %1040 = vmatprep.subr.mxu0 0.0
  %1041 = vmatpush2.msra.mxu0 0.0
  %1042 = vmatprep.subr.mxu0 0.0
  %1043 = vmatpush2.msra.mxu0 0.0
  %1044 = vmatprep.subr.mxu0 0.0
  %1045 = vmatpush2.msra.mxu0 0.0
  %1046 = vmatprep.subr.mxu0 0.0
  %1047 = vmatpush2.msra.mxu0 0.0
  %1048 = vmatprep.subr.mxu0 0.0
  %1049 = vmatpush2.msra.mxu0 0.0
  %1050 = vmatprep.subr.mxu0 0.0
  %1051 = vmatpush2.msra.mxu0 0.0
  %1052 = vmatprep.subr.mxu0 0.0
  %1053 = vmatpush2.msra.mxu0 0.0
  %1054 = vmatprep.subr.mxu0 0.0
  %1055 = vmatpush2.msra.mxu0 0.0
  %1056 = vmatprep.subr.mxu0 0.0
  %1057 = vmatpush2.msra.mxu0 0.0
  %1058 = vmatprep.subr.mxu0 0.0
  %1059 = vmatpush2.msra.mxu0 0.0
  %1060 = vmatprep.subr.mxu0 0.0
  %1061 = vmatpush2.msra.mxu0 0.0
  %1062 = vmatprep.subr.mxu0 0.0
  %1063 = vmatpush2.msra.mxu0 0.0
  %1064 = vmatprep.mubr.f32.mxu0 0.0
  %1065 = vmatmul.mubr.f32.gmra.mxu0 %v713
  %v1066 = vpop.f32.mrf.mxu0
  %v1067 = vadd.f32 0.0, %v1066
  %v1068 = vpop.f32.mrf.mxu0
  %1069 = vdwg.mxu0
  %1070 = vmatprep.subr.mxu0 0.0
  %1071 = vmatpush1.msra.mxu0 0.0
  %1072 = vmatprep.subr.mxu0 0.0
  %1073 = vmatpush1.msra.mxu0 0.0
  %1074 = vmatprep.subr.mxu0 0.0
  %1075 = vmatpush1.msra.mxu0 0.0
  %1076 = vmatprep.subr.mxu0 0.0
  %1077 = vmatpush1.msra.mxu0 0.0
  %1078 = vmatprep.subr.mxu0 0.0
  %1079 = vmatpush1.msra.mxu0 0.0
  %1080 = vmatprep.subr.mxu0 0.0
  %1081 = vmatpush1.msra.mxu0 0.0
  %1082 = vmatprep.subr.mxu0 0.0
  %1083 = vmatpush1.msra.mxu0 0.0
  %1084 = vmatprep.subr.mxu0 0.0
  %1085 = vmatpush1.msra.mxu0 0.0
  %1086 = vmatprep.subr.mxu0 0.0
  %1087 = vmatpush1.msra.mxu0 0.0
  %1088 = vmatprep.subr.mxu0 0.0
  %1089 = vmatpush1.msra.mxu0 0.0
  %1090 = vmatprep.subr.mxu0 0.0
  %1091 = vmatpush1.msra.mxu0 0.0
  %1092 = vmatprep.subr.mxu0 0.0
  %1093 = vmatpush1.msra.mxu0 0.0
  %1094 = vmatprep.subr.mxu0 0.0
  %1095 = vmatpush1.msra.mxu0 0.0
  %1096 = vmatprep.subr.mxu0 0.0
  %1097 = vmatpush1.msra.mxu0 0.0
  %1098 = vmatprep.subr.mxu0 0.0
  %1099 = vmatpush1.msra.mxu0 0.0
  %1100 = vmatprep.subr.mxu0 0.0
  %1101 = vmatpush1.msra.mxu0 %v454
  %1102 = vmatprep.subr.mxu0 0.0
  %1103 = vmatpush2.msra.mxu0 0.0
  %1104 = vmatprep.subr.mxu0 0.0
  %1105 = vmatpush2.msra.mxu0 0.0
  %1106 = vmatprep.subr.mxu0 0.0
  %1107 = vmatpush2.msra.mxu0 0.0
  %1108 = vmatprep.subr.mxu0 0.0
  %1109 = vmatpush2.msra.mxu0 0.0
  %1110 = vmatprep.subr.mxu0 0.0
  %1111 = vmatpush2.msra.mxu0 0.0
  %1112 = vmatprep.subr.mxu0 0.0
  %1113 = vmatpush2.msra.mxu0 0.0
  %1114 = vmatprep.subr.mxu0 0.0
  %1115 = vmatpush2.msra.mxu0 0.0
  %1116 = vmatprep.subr.mxu0 0.0
  %1117 = vmatpush2.msra.mxu0 0.0
  %1118 = vmatprep.subr.mxu0 0.0
  %1119 = vmatpush2.msra.mxu0 0.0
  %1120 = vmatprep.subr.mxu0 0.0
  %1121 = vmatpush2.msra.mxu0 0.0
  %1122 = vmatprep.subr.mxu0 0.0
  %1123 = vmatpush2.msra.mxu0 0.0
  %1124 = vmatprep.subr.mxu0 0.0
  %1125 = vmatpush2.msra.mxu0 0.0
  %1126 = vmatprep.subr.mxu0 0.0
  %1127 = vmatpush2.msra.mxu0 0.0
  %1128 = vmatprep.subr.mxu0 0.0
  %1129 = vmatpush2.msra.mxu0 0.0
  %1130 = vmatprep.subr.mxu0 0.0
  %1131 = vmatpush2.msra.mxu0 0.0
  %1132 = vmatprep.subr.mxu0 0.0
  %1133 = vmatpush2.msra.mxu0 0.0
  %1134 = vmatprep.mubr.f32.mxu0 0.0
  %1135 = vmatmul.mubr.f32.gmra.mxu0 %v786
  %v1136 = vpop.f32.mrf.mxu0
  %v1137 = vadd.f32 %v1067, %v1136
  %v1138 = vpop.f32.mrf.mxu0
  %1139 = vdwg.mxu0
  %v1140 = vadd.f32 %v1137, %v530
  %1141 = vmatprep.subr.mxu0 0.0
  %1142 = vmatpush1.msra.mxu0 0.0
  %1143 = vmatprep.subr.mxu0 0.0
  %1144 = vmatpush1.msra.mxu0 0.0
  %1145 = vmatprep.subr.mxu0 0.0
  %1146 = vmatpush1.msra.mxu0 0.0
  %1147 = vmatprep.subr.mxu0 0.0
  %1148 = vmatpush1.msra.mxu0 0.0
  %1149 = vmatprep.subr.mxu0 0.0
  %1150 = vmatpush1.msra.mxu0 0.0
  %1151 = vmatprep.subr.mxu0 0.0
  %1152 = vmatpush1.msra.mxu0 0.0
  %1153 = vmatprep.subr.mxu0 0.0
  %1154 = vmatpush1.msra.mxu0 0.0
  %1155 = vmatprep.subr.mxu0 0.0
  %1156 = vmatpush1.msra.mxu0 0.0
  %1157 = vmatprep.subr.mxu0 0.0
  %1158 = vmatpush1.msra.mxu0 0.0
  %1159 = vmatprep.subr.mxu0 0.0
  %1160 = vmatpush1.msra.mxu0 0.0
  %1161 = vmatprep.subr.mxu0 0.0
  %1162 = vmatpush1.msra.mxu0 0.0
  %1163 = vmatprep.subr.mxu0 0.0
  %1164 = vmatpush1.msra.mxu0 0.0
  %1165 = vmatprep.subr.mxu0 0.0
  %1166 = vmatpush1.msra.mxu0 0.0
  %1167 = vmatprep.subr.mxu0 0.0
  %1168 = vmatpush1.msra.mxu0 0.0
  %1169 = vmatprep.subr.mxu0 0.0
  %1170 = vmatpush1.msra.mxu0 0.0
  %1171 = vmatprep.subr.mxu0 0.0
  %1172 = vmatpush1.msra.mxu0 %v534
  %1173 = vmatprep.subr.mxu0 0.0
  %1174 = vmatpush2.msra.mxu0 0.0
  %1175 = vmatprep.subr.mxu0 0.0
  %1176 = vmatpush2.msra.mxu0 0.0
  %1177 = vmatprep.subr.mxu0 0.0
  %1178 = vmatpush2.msra.mxu0 0.0
  %1179 = vmatprep.subr.mxu0 0.0
  %1180 = vmatpush2.msra.mxu0 0.0
  %1181 = vmatprep.subr.mxu0 0.0
  %1182 = vmatpush2.msra.mxu0 0.0
  %1183 = vmatprep.subr.mxu0 0.0
  %1184 = vmatpush2.msra.mxu0 0.0
  %1185 = vmatprep.subr.mxu0 0.0
  %1186 = vmatpush2.msra.mxu0 0.0
  %1187 = vmatprep.subr.mxu0 0.0
  %1188 = vmatpush2.msra.mxu0 0.0
  %1189 = vmatprep.subr.mxu0 0.0
  %1190 = vmatpush2.msra.mxu0 0.0
  %1191 = vmatprep.subr.mxu0 0.0
  %1192 = vmatpush2.msra.mxu0 0.0
  %1193 = vmatprep.subr.mxu0 0.0
  %1194 = vmatpush2.msra.mxu0 0.0
  %1195 = vmatprep.subr.mxu0 0.0
  %1196 = vmatpush2.msra.mxu0 0.0
  %1197 = vmatprep.subr.mxu0 0.0
  %1198 = vmatpush2.msra.mxu0 0.0
  %1199 = vmatprep.subr.mxu0 0.0
  %1200 = vmatpush2.msra.mxu0 0.0
  %1201 = vmatprep.subr.mxu0 0.0
  %1202 = vmatpush2.msra.mxu0 0.0
  %1203 = vmatprep.subr.mxu0 0.0
  %1204 = vmatpush2.msra.mxu0 0.0
  %1205 = vmatprep.mubr.f32.mxu0 0.0
  %1206 = vmatmul.mubr.f32.gmra.mxu0 %v713
  %v1207 = vpop.f32.mrf.mxu0
  %v1208 = vadd.f32 0.0, %v1207
  %v1209 = vpop.f32.mrf.mxu0
  %1210 = vdwg.mxu0
  %1211 = vmatprep.subr.mxu0 0.0
  %1212 = vmatpush1.msra.mxu0 0.0
  %1213 = vmatprep.subr.mxu0 0.0
  %1214 = vmatpush1.msra.mxu0 0.0
  %1215 = vmatprep.subr.mxu0 0.0
  %1216 = vmatpush1.msra.mxu0 0.0
  %1217 = vmatprep.subr.mxu0 0.0
  %1218 = vmatpush1.msra.mxu0 0.0
  %1219 = vmatprep.subr.mxu0 0.0
  %1220 = vmatpush1.msra.mxu0 0.0
  %1221 = vmatprep.subr.mxu0 0.0
  %1222 = vmatpush1.msra.mxu0 0.0
  %1223 = vmatprep.subr.mxu0 0.0
  %1224 = vmatpush1.msra.mxu0 0.0
  %1225 = vmatprep.subr.mxu0 0.0
  %1226 = vmatpush1.msra.mxu0 0.0
  %1227 = vmatprep.subr.mxu0 0.0
  %1228 = vmatpush1.msra.mxu0 0.0
  %1229 = vmatprep.subr.mxu0 0.0
  %1230 = vmatpush1.msra.mxu0 0.0
  %1231 = vmatprep.subr.mxu0 0.0
  %1232 = vmatpush1.msra.mxu0 0.0
  %1233 = vmatprep.subr.mxu0 0.0
  %1234 = vmatpush1.msra.mxu0 0.0
  %1235 = vmatprep.subr.mxu0 0.0
  %1236 = vmatpush1.msra.mxu0 0.0
  %1237 = vmatprep.subr.mxu0 0.0
  %1238 = vmatpush1.msra.mxu0 0.0
  %1239 = vmatprep.subr.mxu0 0.0
  %1240 = vmatpush1.msra.mxu0 0.0
  %1241 = vmatprep.subr.mxu0 0.0
  %1242 = vmatpush1.msra.mxu0 %v607
  %1243 = vmatprep.subr.mxu0 0.0
  %1244 = vmatpush2.msra.mxu0 0.0
  %1245 = vmatprep.subr.mxu0 0.0
  %1246 = vmatpush2.msra.mxu0 0.0
  %1247 = vmatprep.subr.mxu0 0.0
  %1248 = vmatpush2.msra.mxu0 0.0
  %1249 = vmatprep.subr.mxu0 0.0
  %1250 = vmatpush2.msra.mxu0 0.0
  %1251 = vmatprep.subr.mxu0 0.0
  %1252 = vmatpush2.msra.mxu0 0.0
  %1253 = vmatprep.subr.mxu0 0.0
  %1254 = vmatpush2.msra.mxu0 0.0
  %1255 = vmatprep.subr.mxu0 0.0
  %1256 = vmatpush2.msra.mxu0 0.0
  %1257 = vmatprep.subr.mxu0 0.0
  %1258 = vmatpush2.msra.mxu0 0.0
  %1259 = vmatprep.subr.mxu0 0.0
  %1260 = vmatpush2.msra.mxu0 0.0
  %1261 = vmatprep.subr.mxu0 0.0
  %1262 = vmatpush2.msra.mxu0 0.0
  %1263 = vmatprep.subr.mxu0 0.0
  %1264 = vmatpush2.msra.mxu0 0.0
  %1265 = vmatprep.subr.mxu0 0.0
  %1266 = vmatpush2.msra.mxu0 0.0
  %1267 = vmatprep.subr.mxu0 0.0
  %1268 = vmatpush2.msra.mxu0 0.0
  %1269 = vmatprep.subr.mxu0 0.0
  %1270 = vmatpush2.msra.mxu0 0.0
  %1271 = vmatprep.subr.mxu0 0.0
  %1272 = vmatpush2.msra.mxu0 0.0
  %1273 = vmatprep.subr.mxu0 0.0
  %1274 = vmatpush2.msra.mxu0 0.0
  %1275 = vmatprep.mubr.f32.mxu0 0.0
  %1276 = vmatmul.mubr.f32.gmra.mxu0 %v786
  %v1277 = vpop.f32.mrf.mxu0
  %v1278 = vadd.f32 %v1208, %v1277
  %v1279 = vpop.f32.mrf.mxu0
  %1280 = vdwg.mxu0
  %v1281 = vadd.f32 %v1278, %v683
  %v1282 = vsub.f32 0.0, %v858
  %v1283 = vmul.f32 %v1282, 1.442695
  %v1284 = vpow.pop %v1283
  %v1285 = vadd.f32 %v1284, 1.0
  %v1286 = vrcp.pop %v1285
  %v1287 = vmul.f32 1.0, %v1286
  %v1288 = vsub.f32 0.0, %v999
  %v1289 = vmul.f32 %v1288, 1.442695
  %v1290 = vpow.pop %v1289
  %v1291 = vadd.f32 %v1290, 1.0
  %v1292 = vrcp.pop %v1291
  %v1293 = vmul.f32 1.0, %v1292
  %v1294 = vtanh.pop %v1140
  %v1295 = vsub.f32 0.0, %v1281
  %v1296 = vmul.f32 %v1295, 1.442695
  %v1297 = vpow.pop %v1296
  %v1298 = vadd.f32 %v1297, 1.0
  %v1299 = vrcp.pop %v1298
  %v1300 = vmul.f32 1.0, %v1299
  %v1301 = vmul.f32 %v1293, %v707
  %v1302 = vmul.f32 %v1287, %v1294
  %v1303 = vadd.f32 %v1301, %v1302
  %v1304 = vtanh.pop %v1303
  %v1305 = vmul.f32 %v1300, %v1304
  %s1306 = scalar_lea.vmem %s0, 16
  %v1307 = vld [vmem:[%s1306] sm:$0xff]
  %v1309 = vsel %vm66, %v1305, 0
  %1311 = vmatprep.subr.mxu0 0.0
  %1312 = vmatpush1.msra.mxu0 0.0
  %1313 = vmatprep.subr.mxu0 0.0
  %1314 = vmatpush1.msra.mxu0 0.0
  %1315 = vmatprep.subr.mxu0 0.0
  %1316 = vmatpush1.msra.mxu0 0.0
  %1317 = vmatprep.subr.mxu0 0.0
  %1318 = vmatpush1.msra.mxu0 0.0
  %1319 = vmatprep.subr.mxu0 0.0
  %1320 = vmatpush1.msra.mxu0 0.0
  %1321 = vmatprep.subr.mxu0 0.0
  %1322 = vmatpush1.msra.mxu0 0.0
  %1323 = vmatprep.subr.mxu0 0.0
  %1324 = vmatpush1.msra.mxu0 0.0
  %1325 = vmatprep.subr.mxu0 0.0
  %1326 = vmatpush1.msra.mxu0 0.0
  %1327 = vmatprep.subr.mxu0 0.0
  %1328 = vmatpush1.msra.mxu0 0.0
  %1329 = vmatprep.subr.mxu0 0.0
  %1330 = vmatpush1.msra.mxu0 0.0
  %1331 = vmatprep.subr.mxu0 0.0
  %1332 = vmatpush1.msra.mxu0 0.0
  %1333 = vmatprep.subr.mxu0 0.0
  %1334 = vmatpush1.msra.mxu0 0.0
  %1335 = vmatprep.subr.mxu0 0.0
  %1336 = vmatpush1.msra.mxu0 0.0
  %1337 = vmatprep.subr.mxu0 0.0
  %1338 = vmatpush1.msra.mxu0 0.0
  %1339 = vmatprep.subr.mxu0 0.0
  %1340 = vmatpush1.msra.mxu0 0.0
  %1341 = vmatprep.subr.mxu0 0.0
  %1342 = vmatpush1.msra.mxu0 %v72
  %1343 = vmatprep.subr.mxu0 0.0
  %1344 = vmatpush2.msra.mxu0 0.0
  %1345 = vmatprep.subr.mxu0 0.0
  %1346 = vmatpush2.msra.mxu0 0.0
  %1347 = vmatprep.subr.mxu0 0.0
  %1348 = vmatpush2.msra.mxu0 0.0
  %1349 = vmatprep.subr.mxu0 0.0
  %1350 = vmatpush2.msra.mxu0 0.0
  %1351 = vmatprep.subr.mxu0 0.0
  %1352 = vmatpush2.msra.mxu0 0.0
  %1353 = vmatprep.subr.mxu0 0.0
  %1354 = vmatpush2.msra.mxu0 0.0
  %1355 = vmatprep.subr.mxu0 0.0
  %1356 = vmatpush2.msra.mxu0 0.0
  %1357 = vmatprep.subr.mxu0 0.0
  %1358 = vmatpush2.msra.mxu0 0.0
  %1359 = vmatprep.subr.mxu0 0.0
  %1360 = vmatpush2.msra.mxu0 0.0
  %1361 = vmatprep.subr.mxu0 0.0
  %1362 = vmatpush2.msra.mxu0 0.0
  %1363 = vmatprep.subr.mxu0 0.0
  %1364 = vmatpush2.msra.mxu0 0.0
  %1365 = vmatprep.subr.mxu0 0.0
  %1366 = vmatpush2.msra.mxu0 0.0
  %1367 = vmatprep.subr.mxu0 0.0
  %1368 = vmatpush2.msra.mxu0 0.0
  %1369 = vmatprep.subr.mxu0 0.0
  %1370 = vmatpush2.msra.mxu0 0.0
  %1371 = vmatprep.subr.mxu0 0.0
  %1372 = vmatpush2.msra.mxu0 0.0
  %1373 = vmatprep.subr.mxu0 0.0
  %1374 = vmatpush2.msra.mxu0 0.0
  %1375 = vmatprep.mubr.f32.mxu0 0.0
  %1376 = vmatmul.mubr.f32.gmra.mxu0 %v1309
  %v1377 = vpop.f32.mrf.mxu0
  %v1378 = vadd.f32 0.0, %v1377
  %v1379 = vpop.f32.mrf.mxu0
  %1380 = vdwg.mxu0
  %v1382 = vsel %vm66, %v1307, 0
  %1384 = vmatprep.subr.mxu0 0.0
  %1385 = vmatpush1.msra.mxu0 0.0
  %1386 = vmatprep.subr.mxu0 0.0
  %1387 = vmatpush1.msra.mxu0 0.0
  %1388 = vmatprep.subr.mxu0 0.0
  %1389 = vmatpush1.msra.mxu0 0.0
  %1390 = vmatprep.subr.mxu0 0.0
  %1391 = vmatpush1.msra.mxu0 0.0
  %1392 = vmatprep.subr.mxu0 0.0
  %1393 = vmatpush1.msra.mxu0 0.0
  %1394 = vmatprep.subr.mxu0 0.0
  %1395 = vmatpush1.msra.mxu0 0.0
  %1396 = vmatprep.subr.mxu0 0.0
  %1397 = vmatpush1.msra.mxu0 0.0
  %1398 = vmatprep.subr.mxu0 0.0
  %1399 = vmatpush1.msra.mxu0 0.0
  %1400 = vmatprep.subr.mxu0 0.0
  %1401 = vmatpush1.msra.mxu0 0.0
  %1402 = vmatprep.subr.mxu0 0.0
  %1403 = vmatpush1.msra.mxu0 0.0
  %1404 = vmatprep.subr.mxu0 0.0
  %1405 = vmatpush1.msra.mxu0 0.0
  %1406 = vmatprep.subr.mxu0 0.0
  %1407 = vmatpush1.msra.mxu0 0.0
  %1408 = vmatprep.subr.mxu0 0.0
  %1409 = vmatpush1.msra.mxu0 0.0
  %1410 = vmatprep.subr.mxu0 0.0
  %1411 = vmatpush1.msra.mxu0 0.0
  %1412 = vmatprep.subr.mxu0 0.0
  %1413 = vmatpush1.msra.mxu0 0.0
  %1414 = vmatprep.subr.mxu0 0.0
  %1415 = vmatpush1.msra.mxu0 %v148
  %1416 = vmatprep.subr.mxu0 0.0
  %1417 = vmatpush2.msra.mxu0 0.0
  %1418 = vmatprep.subr.mxu0 0.0
  %1419 = vmatpush2.msra.mxu0 0.0
  %1420 = vmatprep.subr.mxu0 0.0
  %1421 = vmatpush2.msra.mxu0 0.0
  %1422 = vmatprep.subr.mxu0 0.0
  %1423 = vmatpush2.msra.mxu0 0.0
  %1424 = vmatprep.subr.mxu0 0.0
  %1425 = vmatpush2.msra.mxu0 0.0
  %1426 = vmatprep.subr.mxu0 0.0
  %1427 = vmatpush2.msra.mxu0 0.0
  %1428 = vmatprep.subr.mxu0 0.0
  %1429 = vmatpush2.msra.mxu0 0.0
  %1430 = vmatprep.subr.mxu0 0.0
  %1431 = vmatpush2.msra.mxu0 0.0
  %1432 = vmatprep.subr.mxu0 0.0
  %1433 = vmatpush2.msra.mxu0 0.0
  %1434 = vmatprep.subr.mxu0 0.0
  %1435 = vmatpush2.msra.mxu0 0.0
  %1436 = vmatprep.subr.mxu0 0.0
  %1437 = vmatpush2.msra.mxu0 0.0
  %1438 = vmatprep.subr.mxu0 0.0
  %1439 = vmatpush2.msra.mxu0 0.0
  %1440 = vmatprep.subr.mxu0 0.0
  %1441 = vmatpush2.msra.mxu0 0.0
  %1442 = vmatprep.subr.mxu0 0.0
  %1443 = vmatpush2.msra.mxu0 0.0
  %1444 = vmatprep.subr.mxu0 0.0
  %1445 = vmatpush2.msra.mxu0 0.0
  %1446 = vmatprep.subr.mxu0 0.0
  %1447 = vmatpush2.msra.mxu0 0.0
  %1448 = vmatprep.mubr.f32.mxu0 0.0
  %1449 = vmatmul.mubr.f32.gmra.mxu0 %v1382
  %v1450 = vpop.f32.mrf.mxu0
  %v1451 = vadd.f32 %v1378, %v1450
  %v1452 = vpop.f32.mrf.mxu0
  %1453 = vdwg.mxu0
  %v1454 = vadd.f32 %v1451, %v224
  %1455 = vmatprep.subr.mxu0 0.0
  %1456 = vmatpush1.msra.mxu0 0.0
  %1457 = vmatprep.subr.mxu0 0.0
  %1458 = vmatpush1.msra.mxu0 0.0
  %1459 = vmatprep.subr.mxu0 0.0
  %1460 = vmatpush1.msra.mxu0 0.0
  %1461 = vmatprep.subr.mxu0 0.0
  %1462 = vmatpush1.msra.mxu0 0.0
  %1463 = vmatprep.subr.mxu0 0.0
  %1464 = vmatpush1.msra.mxu0 0.0
  %1465 = vmatprep.subr.mxu0 0.0
  %1466 = vmatpush1.msra.mxu0 0.0
  %1467 = vmatprep.subr.mxu0 0.0
  %1468 = vmatpush1.msra.mxu0 0.0
  %1469 = vmatprep.subr.mxu0 0.0
  %1470 = vmatpush1.msra.mxu0 0.0
  %1471 = vmatprep.subr.mxu0 0.0
  %1472 = vmatpush1.msra.mxu0 0.0
  %1473 = vmatprep.subr.mxu0 0.0
  %1474 = vmatpush1.msra.mxu0 0.0
  %1475 = vmatprep.subr.mxu0 0.0
  %1476 = vmatpush1.msra.mxu0 0.0
  %1477 = vmatprep.subr.mxu0 0.0
  %1478 = vmatpush1.msra.mxu0 0.0
  %1479 = vmatprep.subr.mxu0 0.0
  %1480 = vmatpush1.msra.mxu0 0.0
  %1481 = vmatprep.subr.mxu0 0.0
  %1482 = vmatpush1.msra.mxu0 0.0
  %1483 = vmatprep.subr.mxu0 0.0
  %1484 = vmatpush1.msra.mxu0 0.0
  %1485 = vmatprep.subr.mxu0 0.0
  %1486 = vmatpush1.msra.mxu0 %v228
  %1487 = vmatprep.subr.mxu0 0.0
  %1488 = vmatpush2.msra.mxu0 0.0
  %1489 = vmatprep.subr.mxu0 0.0
  %1490 = vmatpush2.msra.mxu0 0.0
  %1491 = vmatprep.subr.mxu0 0.0
  %1492 = vmatpush2.msra.mxu0 0.0
  %1493 = vmatprep.subr.mxu0 0.0
  %1494 = vmatpush2.msra.mxu0 0.0
  %1495 = vmatprep.subr.mxu0 0.0
  %1496 = vmatpush2.msra.mxu0 0.0
  %1497 = vmatprep.subr.mxu0 0.0
  %1498 = vmatpush2.msra.mxu0 0.0
  %1499 = vmatprep.subr.mxu0 0.0
  %1500 = vmatpush2.msra.mxu0 0.0
  %1501 = vmatprep.subr.mxu0 0.0
  %1502 = vmatpush2.msra.mxu0 0.0
  %1503 = vmatprep.subr.mxu0 0.0
  %1504 = vmatpush2.msra.mxu0 0.0
  %1505 = vmatprep.subr.mxu0 0.0
  %1506 = vmatpush2.msra.mxu0 0.0
  %1507 = vmatprep.subr.mxu0 0.0
  %1508 = vmatpush2.msra.mxu0 0.0
  %1509 = vmatprep.subr.mxu0 0.0
  %1510 = vmatpush2.msra.mxu0 0.0
  %1511 = vmatprep.subr.mxu0 0.0
  %1512 = vmatpush2.msra.mxu0 0.0
  %1513 = vmatprep.subr.mxu0 0.0
  %1514 = vmatpush2.msra.mxu0 0.0
  %1515 = vmatprep.subr.mxu0 0.0
  %1516 = vmatpush2.msra.mxu0 0.0
  %1517 = vmatprep.subr.mxu0 0.0
  %1518 = vmatpush2.msra.mxu0 0.0
  %1519 = vmatprep.mubr.f32.mxu0 0.0
  %1520 = vmatmul.mubr.f32.gmra.mxu0 %v1309
  %v1521 = vpop.f32.mrf.mxu0
  %v1522 = vadd.f32 0.0, %v1521
  %v1523 = vpop.f32.mrf.mxu0
  %1524 = vdwg.mxu0
  %1525 = vmatprep.subr.mxu0 0.0
  %1526 = vmatpush1.msra.mxu0 0.0
  %1527 = vmatprep.subr.mxu0 0.0
  %1528 = vmatpush1.msra.mxu0 0.0
  %1529 = vmatprep.subr.mxu0 0.0
  %1530 = vmatpush1.msra.mxu0 0.0
  %1531 = vmatprep.subr.mxu0 0.0
  %1532 = vmatpush1.msra.mxu0 0.0
  %1533 = vmatprep.subr.mxu0 0.0
  %1534 = vmatpush1.msra.mxu0 0.0
  %1535 = vmatprep.subr.mxu0 0.0
  %1536 = vmatpush1.msra.mxu0 0.0
  %1537 = vmatprep.subr.mxu0 0.0
  %1538 = vmatpush1.msra.mxu0 0.0
  %1539 = vmatprep.subr.mxu0 0.0
  %1540 = vmatpush1.msra.mxu0 0.0
  %1541 = vmatprep.subr.mxu0 0.0
  %1542 = vmatpush1.msra.mxu0 0.0
  %1543 = vmatprep.subr.mxu0 0.0
  %1544 = vmatpush1.msra.mxu0 0.0
  %1545 = vmatprep.subr.mxu0 0.0
  %1546 = vmatpush1.msra.mxu0 0.0
  %1547 = vmatprep.subr.mxu0 0.0
  %1548 = vmatpush1.msra.mxu0 0.0
  %1549 = vmatprep.subr.mxu0 0.0
  %1550 = vmatpush1.msra.mxu0 0.0
  %1551 = vmatprep.subr.mxu0 0.0
  %1552 = vmatpush1.msra.mxu0 0.0
  %1553 = vmatprep.subr.mxu0 0.0
  %1554 = vmatpush1.msra.mxu0 0.0
  %1555 = vmatprep.subr.mxu0 0.0
  %1556 = vmatpush1.msra.mxu0 %v301
  %1557 = vmatprep.subr.mxu0 0.0
  %1558 = vmatpush2.msra.mxu0 0.0
  %1559 = vmatprep.subr.mxu0 0.0
  %1560 = vmatpush2.msra.mxu0 0.0
  %1561 = vmatprep.subr.mxu0 0.0
  %1562 = vmatpush2.msra.mxu0 0.0
  %1563 = vmatprep.subr.mxu0 0.0
  %1564 = vmatpush2.msra.mxu0 0.0
  %1565 = vmatprep.subr.mxu0 0.0
  %1566 = vmatpush2.msra.mxu0 0.0
  %1567 = vmatprep.subr.mxu0 0.0
  %1568 = vmatpush2.msra.mxu0 0.0
  %1569 = vmatprep.subr.mxu0 0.0
  %1570 = vmatpush2.msra.mxu0 0.0
  %1571 = vmatprep.subr.mxu0 0.0
  %1572 = vmatpush2.msra.mxu0 0.0
  %1573 = vmatprep.subr.mxu0 0.0
  %1574 = vmatpush2.msra.mxu0 0.0
  %1575 = vmatprep.subr.mxu0 0.0
  %1576 = vmatpush2.msra.mxu0 0.0
  %1577 = vmatprep.subr.mxu0 0.0
  %1578 = vmatpush2.msra.mxu0 0.0
  %1579 = vmatprep.subr.mxu0 0.0
  %1580 = vmatpush2.msra.mxu0 0.0
  %1581 = vmatprep.subr.mxu0 0.0
  %1582 = vmatpush2.msra.mxu0 0.0
  %1583 = vmatprep.subr.mxu0 0.0
  %1584 = vmatpush2.msra.mxu0 0.0
  %1585 = vmatprep.subr.mxu0 0.0
  %1586 = vmatpush2.msra.mxu0 0.0
  %1587 = vmatprep.subr.mxu0 0.0
  %1588 = vmatpush2.msra.mxu0 0.0
  %1589 = vmatprep.mubr.f32.mxu0 0.0
  %1590 = vmatmul.mubr.f32.gmra.mxu0 %v1382
  %v1591 = vpop.f32.mrf.mxu0
  %v1592 = vadd.f32 %v1522, %v1591
  %v1593 = vpop.f32.mrf.mxu0
  %1594 = vdwg.mxu0
  %v1595 = vadd.f32 %v1592, %v377
  %1596 = vmatprep.subr.mxu0 0.0
  %1597 = vmatpush1.msra.mxu0 0.0
  %1598 = vmatprep.subr.mxu0 0.0
  %1599 = vmatpush1.msra.mxu0 0.0
  %1600 = vmatprep.subr.mxu0 0.0
  %1601 = vmatpush1.msra.mxu0 0.0
  %1602 = vmatprep.subr.mxu0 0.0
  %1603 = vmatpush1.msra.mxu0 0.0
  %1604 = vmatprep.subr.mxu0 0.0
  %1605 = vmatpush1.msra.mxu0 0.0
  %1606 = vmatprep.subr.mxu0 0.0
  %1607 = vmatpush1.msra.mxu0 0.0
  %1608 = vmatprep.subr.mxu0 0.0
  %1609 = vmatpush1.msra.mxu0 0.0
  %1610 = vmatprep.subr.mxu0 0.0
  %1611 = vmatpush1.msra.mxu0 0.0
  %1612 = vmatprep.subr.mxu0 0.0
  %1613 = vmatpush1.msra.mxu0 0.0
  %1614 = vmatprep.subr.mxu0 0.0
  %1615 = vmatpush1.msra.mxu0 0.0
  %1616 = vmatprep.subr.mxu0 0.0
  %1617 = vmatpush1.msra.mxu0 0.0
  %1618 = vmatprep.subr.mxu0 0.0
  %1619 = vmatpush1.msra.mxu0 0.0
  %1620 = vmatprep.subr.mxu0 0.0
  %1621 = vmatpush1.msra.mxu0 0.0
  %1622 = vmatprep.subr.mxu0 0.0
  %1623 = vmatpush1.msra.mxu0 0.0
  %1624 = vmatprep.subr.mxu0 0.0
  %1625 = vmatpush1.msra.mxu0 0.0
  %1626 = vmatprep.subr.mxu0 0.0
  %1627 = vmatpush1.msra.mxu0 %v381
  %1628 = vmatprep.subr.mxu0 0.0
  %1629 = vmatpush2.msra.mxu0 0.0
  %1630 = vmatprep.subr.mxu0 0.0
  %1631 = vmatpush2.msra.mxu0 0.0
  %1632 = vmatprep.subr.mxu0 0.0
  %1633 = vmatpush2.msra.mxu0 0.0
  %1634 = vmatprep.subr.mxu0 0.0
  %1635 = vmatpush2.msra.mxu0 0.0
  %1636 = vmatprep.subr.mxu0 0.0
  %1637 = vmatpush2.msra.mxu0 0.0
  %1638 = vmatprep.subr.mxu0 0.0
  %1639 = vmatpush2.msra.mxu0 0.0
  %1640 = vmatprep.subr.mxu0 0.0
  %1641 = vmatpush2.msra.mxu0 0.0
  %1642 = vmatprep.subr.mxu0 0.0
  %1643 = vmatpush2.msra.mxu0 0.0
  %1644 = vmatprep.subr.mxu0 0.0
  %1645 = vmatpush2.msra.mxu0 0.0
  %1646 = vmatprep.subr.mxu0 0.0
  %1647 = vmatpush2.msra.mxu0 0.0
  %1648 = vmatprep.subr.mxu0 0.0
  %1649 = vmatpush2.msra.mxu0 0.0
  %1650 = vmatprep.subr.mxu0 0.0
  %1651 = vmatpush2.msra.mxu0 0.0
  %1652 = vmatprep.subr.mxu0 0.0
  %1653 = vmatpush2.msra.mxu0 0.0
  %1654 = vmatprep.subr.mxu0 0.0
  %1655 = vmatpush2.msra.mxu0 0.0
  %1656 = vmatprep.subr.mxu0 0.0
  %1657 = vmatpush2.msra.mxu0 0.0
  %1658 = vmatprep.subr.mxu0 0.0
  %1659 = vmatpush2.msra.mxu0 0.0
  %1660 = vmatprep.mubr.f32.mxu0 0.0
  %1661 = vmatmul.mubr.f32.gmra.mxu0 %v1309
  %v1662 = vpop.f32.mrf.mxu0
  %v1663 = vadd.f32 0.0, %v1662
  %v1664 = vpop.f32.mrf.mxu0
  %1665 = vdwg.mxu0
  %1666 = vmatprep.subr.mxu0 0.0
  %1667 = vmatpush1.msra.mxu0 0.0
  %1668 = vmatprep.subr.mxu0 0.0
  %1669 = vmatpush1.msra.mxu0 0.0
  %1670 = vmatprep.subr.mxu0 0.0
  %1671 = vmatpush1.msra.mxu0 0.0
  %1672 = vmatprep.subr.mxu0 0.0
  %1673 = vmatpush1.msra.mxu0 0.0
  %1674 = vmatprep.subr.mxu0 0.0
  %1675 = vmatpush1.msra.mxu0 0.0
  %1676 = vmatprep.subr.mxu0 0.0
  %1677 = vmatpush1.msra.mxu0 0.0
  %1678 = vmatprep.subr.mxu0 0.0
  %1679 = vmatpush1.msra.mxu0 0.0
  %1680 = vmatprep.subr.mxu0 0.0
  %1681 = vmatpush1.msra.mxu0 0.0
  %1682 = vmatprep.subr.mxu0 0.0
  %1683 = vmatpush1.msra.mxu0 0.0
  %1684 = vmatprep.subr.mxu0 0.0
  %1685 = vmatpush1.msra.mxu0 0.0
  %1686 = vmatprep.subr.mxu0 0.0
  %1687 = vmatpush1.msra.mxu0 0.0
  %1688 = vmatprep.subr.mxu0 0.0
  %1689 = vmatpush1.msra.mxu0 0.0
  %1690 = vmatprep.subr.mxu0 0.0
  %1691 = vmatpush1.msra.mxu0 0.0
  %1692 = vmatprep.subr.mxu0 0.0
  %1693 = vmatpush1.msra.mxu0 0.0
  %1694 = vmatprep.subr.mxu0 0.0
  %1695 = vmatpush1.msra.mxu0 0.0
  %1696 = vmatprep.subr.mxu0 0.0
  %1697 = vmatpush1.msra.mxu0 %v454
  %1698 = vmatprep.subr.mxu0 0.0
  %1699 = vmatpush2.msra.mxu0 0.0
  %1700 = vmatprep.subr.mxu0 0.0
  %1701 = vmatpush2.msra.mxu0 0.0
  %1702 = vmatprep.subr.mxu0 0.0
  %1703 = vmatpush2.msra.mxu0 0.0
  %1704 = vmatprep.subr.mxu0 0.0
  %1705 = vmatpush2.msra.mxu0 0.0
  %1706 = vmatprep.subr.mxu0 0.0
  %1707 = vmatpush2.msra.mxu0 0.0
  %1708 = vmatprep.subr.mxu0 0.0
  %1709 = vmatpush2.msra.mxu0 0.0
  %1710 = vmatprep.subr.mxu0 0.0
  %1711 = vmatpush2.msra.mxu0 0.0
  %1712 = vmatprep.subr.mxu0 0.0
  %1713 = vmatpush2.msra.mxu0 0.0
  %1714 = vmatprep.subr.mxu0 0.0
  %1715 = vmatpush2.msra.mxu0 0.0
  %1716 = vmatprep.subr.mxu0 0.0
  %1717 = vmatpush2.msra.mxu0 0.0
  %1718 = vmatprep.subr.mxu0 0.0
  %1719 = vmatpush2.msra.mxu0 0.0
  %1720 = vmatprep.subr.mxu0 0.0
  %1721 = vmatpush2.msra.mxu0 0.0
  %1722 = vmatprep.subr.mxu0 0.0
  %1723 = vmatpush2.msra.mxu0 0.0
  %1724 = vmatprep.subr.mxu0 0.0
  %1725 = vmatpush2.msra.mxu0 0.0
  %1726 = vmatprep.subr.mxu0 0.0
  %1727 = vmatpush2.msra.mxu0 0.0
  %1728 = vmatprep.subr.mxu0 0.0
  %1729 = vmatpush2.msra.mxu0 0.0
  %1730 = vmatprep.mubr.f32.mxu0 0.0
  %1731 = vmatmul.mubr.f32.gmra.mxu0 %v1382
  %v1732 = vpop.f32.mrf.mxu0
  %v1733 = vadd.f32 %v1663, %v1732
  %v1734 = vpop.f32.mrf.mxu0
  %1735 = vdwg.mxu0
  %v1736 = vadd.f32 %v1733, %v530
  %1737 = vmatprep.subr.mxu0 0.0
  %1738 = vmatpush1.msra.mxu0 0.0
  %1739 = vmatprep.subr.mxu0 0.0
  %1740 = vmatpush1.msra.mxu0 0.0
  %1741 = vmatprep.subr.mxu0 0.0
  %1742 = vmatpush1.msra.mxu0 0.0
  %1743 = vmatprep.subr.mxu0 0.0
  %1744 = vmatpush1.msra.mxu0 0.0
  %1745 = vmatprep.subr.mxu0 0.0
  %1746 = vmatpush1.msra.mxu0 0.0
  %1747 = vmatprep.subr.mxu0 0.0
  %1748 = vmatpush1.msra.mxu0 0.0
  %1749 = vmatprep.subr.mxu0 0.0
  %1750 = vmatpush1.msra.mxu0 0.0
  %1751 = vmatprep.subr.mxu0 0.0
  %1752 = vmatpush1.msra.mxu0 0.0
  %1753 = vmatprep.subr.mxu0 0.0
  %1754 = vmatpush1.msra.mxu0 0.0
  %1755 = vmatprep.subr.mxu0 0.0
  %1756 = vmatpush1.msra.mxu0 0.0
  %1757 = vmatprep.subr.mxu0 0.0
  %1758 = vmatpush1.msra.mxu0 0.0
  %1759 = vmatprep.subr.mxu0 0.0
  %1760 = vmatpush1.msra.mxu0 0.0
  %1761 = vmatprep.subr.mxu0 0.0
  %1762 = vmatpush1.msra.mxu0 0.0
  %1763 = vmatprep.subr.mxu0 0.0
  %1764 = vmatpush1.msra.mxu0 0.0
  %1765 = vmatprep.subr.mxu0 0.0
  %1766 = vmatpush1.msra.mxu0 0.0
  %1767 = vmatprep.subr.mxu0 0.0
  %1768 = vmatpush1.msra.mxu0 %v534
  %1769 = vmatprep.subr.mxu0 0.0
  %1770 = vmatpush2.msra.mxu0 0.0
  %1771 = vmatprep.subr.mxu0 0.0
  %1772 = vmatpush2.msra.mxu0 0.0
  %1773 = vmatprep.subr.mxu0 0.0
  %1774 = vmatpush2.msra.mxu0 0.0
  %1775 = vmatprep.subr.mxu0 0.0
  %1776 = vmatpush2.msra.mxu0 0.0
  %1777 = vmatprep.subr.mxu0 0.0
  %1778 = vmatpush2.msra.mxu0 0.0
  %1779 = vmatprep.subr.mxu0 0.0
  %1780 = vmatpush2.msra.mxu0 0.0
  %1781 = vmatprep.subr.mxu0 0.0
  %1782 = vmatpush2.msra.mxu0 0.0
  %1783 = vmatprep.subr.mxu0 0.0
  %1784 = vmatpush2.msra.mxu0 0.0
  %1785 = vmatprep.subr.mxu0 0.0
  %1786 = vmatpush2.msra.mxu0 0.0
  %1787 = vmatprep.subr.mxu0 0.0
  %1788 = vmatpush2.msra.mxu0 0.0
  %1789 = vmatprep.subr.mxu0 0.0
  %1790 = vmatpush2.msra.mxu0 0.0
  %1791 = vmatprep.subr.mxu0 0.0
  %1792 = vmatpush2.msra.mxu0 0.0
  %1793 = vmatprep.subr.mxu0 0.0
  %1794 = vmatpush2.msra.mxu0 0.0
  %1795 = vmatprep.subr.mxu0 0.0
  %1796 = vmatpush2.msra.mxu0 0.0
  %1797 = vmatprep.subr.mxu0 0.0
  %1798 = vmatpush2.msra.mxu0 0.0
  %1799 = vmatprep.subr.mxu0 0.0
  %1800 = vmatpush2.msra.mxu0 0.0
  %1801 = vmatprep.mubr.f32.mxu0 0.0
  %1802 = vmatmul.mubr.f32.gmra.mxu0 %v1309
  %v1803 = vpop.f32.mrf.mxu0
  %v1804 = vadd.f32 0.0, %v1803
  %v1805 = vpop.f32.mrf.mxu0
  %1806 = vdwg.mxu0
  %1807 = vmatprep.subr.mxu0 0.0
  %1808 = vmatpush1.msra.mxu0 0.0
  %1809 = vmatprep.subr.mxu0 0.0
  %1810 = vmatpush1.msra.mxu0 0.0
  %1811 = vmatprep.subr.mxu0 0.0
  %1812 = vmatpush1.msra.mxu0 0.0
  %1813 = vmatprep.subr.mxu0 0.0
  %1814 = vmatpush1.msra.mxu0 0.0
  %1815 = vmatprep.subr.mxu0 0.0
  %1816 = vmatpush1.msra.mxu0 0.0
  %1817 = vmatprep.subr.mxu0 0.0
  %1818 = vmatpush1.msra.mxu0 0.0
  %1819 = vmatprep.subr.mxu0 0.0
  %1820 = vmatpush1.msra.mxu0 0.0
  %1821 = vmatprep.subr.mxu0 0.0
  %1822 = vmatpush1.msra.mxu0 0.0
  %1823 = vmatprep.subr.mxu0 0.0
  %1824 = vmatpush1.msra.mxu0 0.0
  %1825 = vmatprep.subr.mxu0 0.0
  %1826 = vmatpush1.msra.mxu0 0.0
  %1827 = vmatprep.subr.mxu0 0.0
  %1828 = vmatpush1.msra.mxu0 0.0
  %1829 = vmatprep.subr.mxu0 0.0
  %1830 = vmatpush1.msra.mxu0 0.0
  %1831 = vmatprep.subr.mxu0 0.0
  %1832 = vmatpush1.msra.mxu0 0.0
  %1833 = vmatprep.subr.mxu0 0.0
  %1834 = vmatpush1.msra.mxu0 0.0
  %1835 = vmatprep.subr.mxu0 0.0
  %1836 = vmatpush1.msra.mxu0 0.0
  %1837 = vmatprep.subr.mxu0 0.0
  %1838 = vmatpush1.msra.mxu0 %v607
  %1839 = vmatprep.subr.mxu0 0.0
  %1840 = vmatpush2.msra.mxu0 0.0
  %1841 = vmatprep.subr.mxu0 0.0
  %1842 = vmatpush2.msra.mxu0 0.0
  %1843 = vmatprep.subr.mxu0 0.0
  %1844 = vmatpush2.msra.mxu0 0.0
  %1845 = vmatprep.subr.mxu0 0.0
  %1846 = vmatpush2.msra.mxu0 0.0
  %1847 = vmatprep.subr.mxu0 0.0
  %1848 = vmatpush2.msra.mxu0 0.0
  %1849 = vmatprep.subr.mxu0 0.0
  %1850 = vmatpush2.msra.mxu0 0.0
  %1851 = vmatprep.subr.mxu0 0.0
  %1852 = vmatpush2.msra.mxu0 0.0
  %1853 = vmatprep.subr.mxu0 0.0
  %1854 = vmatpush2.msra.mxu0 0.0
  %1855 = vmatprep.subr.mxu0 0.0
  %1856 = vmatpush2.msra.mxu0 0.0
  %1857 = vmatprep.subr.mxu0 0.0
  %1858 = vmatpush2.msra.mxu0 0.0
  %1859 = vmatprep.subr.mxu0 0.0
  %1860 = vmatpush2.msra.mxu0 0.0
  %1861 = vmatprep.subr.mxu0 0.0
  %1862 = vmatpush2.msra.mxu0 0.0
  %1863 = vmatprep.subr.mxu0 0.0
  %1864 = vmatpush2.msra.mxu0 0.0
  %1865 = vmatprep.subr.mxu0 0.0
  %1866 = vmatpush2.msra.mxu0 0.0
  %1867 = vmatprep.subr.mxu0 0.0
  %1868 = vmatpush2.msra.mxu0 0.0
  %1869 = vmatprep.subr.mxu0 0.0
  %1870 = vmatpush2.msra.mxu0 0.0
  %1871 = vmatprep.mubr.f32.mxu0 0.0
  %1872 = vmatmul.mubr.f32.gmra.mxu0 %v1382
  %v1873 = vpop.f32.mrf.mxu0
  %v1874 = vadd.f32 %v1804, %v1873
  %v1875 = vpop.f32.mrf.mxu0
  %1876 = vdwg.mxu0
  %v1877 = vadd.f32 %v1874, %v683
  %v1878 = vsub.f32 0.0, %v1454
  %v1879 = vmul.f32 %v1878, 1.442695
  %v1880 = vpow.pop %v1879
  %v1881 = vadd.f32 %v1880, 1.0
  %v1882 = vrcp.pop %v1881
  %v1883 = vmul.f32 1.0, %v1882
  %v1884 = vsub.f32 0.0, %v1595
  %v1885 = vmul.f32 %v1884, 1.442695
  %v1886 = vpow.pop %v1885
  %v1887 = vadd.f32 %v1886, 1.0
  %v1888 = vrcp.pop %v1887
  %v1889 = vmul.f32 1.0, %v1888
  %v1890 = vtanh.pop %v1736
  %v1891 = vsub.f32 0.0, %v1877
  %v1892 = vmul.f32 %v1891, 1.442695
  %v1893 = vpow.pop %v1892
  %v1894 = vadd.f32 %v1893, 1.0
  %v1895 = vrcp.pop %v1894
  %v1896 = vmul.f32 1.0, %v1895
  %v1897 = vmul.f32 %v1889, %v1303
  %v1898 = vmul.f32 %v1883, %v1890
  %v1899 = vadd.f32 %v1897, %v1898
  %v1900 = vtanh.pop %v1899
  %v1901 = vmul.f32 %v1896, %v1900
  %s1902 = scalar_lea.vmem %s0, 24
  %v1903 = vld [vmem:[%s1902] sm:$0xff]
  %v1905 = vsel %vm66, %v1901, 0
  %1907 = vmatprep.subr.mxu0 0.0
  %1908 = vmatpush1.msra.mxu0 0.0
  %1909 = vmatprep.subr.mxu0 0.0
  %1910 = vmatpush1.msra.mxu0 0.0
  %1911 = vmatprep.subr.mxu0 0.0
  %1912 = vmatpush1.msra.mxu0 0.0
  %1913 = vmatprep.subr.mxu0 0.0
  %1914 = vmatpush1.msra.mxu0 0.0
  %1915 = vmatprep.subr.mxu0 0.0
  %1916 = vmatpush1.msra.mxu0 0.0
  %1917 = vmatprep.subr.mxu0 0.0
  %1918 = vmatpush1.msra.mxu0 0.0
  %1919 = vmatprep.subr.mxu0 0.0
  %1920 = vmatpush1.msra.mxu0 0.0
  %1921 = vmatprep.subr.mxu0 0.0
  %1922 = vmatpush1.msra.mxu0 0.0
  %1923 = vmatprep.subr.mxu0 0.0
  %1924 = vmatpush1.msra.mxu0 0.0
  %1925 = vmatprep.subr.mxu0 0.0
  %1926 = vmatpush1.msra.mxu0 0.0
  %1927 = vmatprep.subr.mxu0 0.0
  %1928 = vmatpush1.msra.mxu0 0.0
  %1929 = vmatprep.subr.mxu0 0.0
  %1930 = vmatpush1.msra.mxu0 0.0
  %1931 = vmatprep.subr.mxu0 0.0
  %1932 = vmatpush1.msra.mxu0 0.0
  %1933 = vmatprep.subr.mxu0 0.0
  %1934 = vmatpush1.msra.mxu0 0.0
  %1935 = vmatprep.subr.mxu0 0.0
  %1936 = vmatpush1.msra.mxu0 0.0
  %1937 = vmatprep.subr.mxu0 0.0
  %1938 = vmatpush1.msra.mxu0 %v72
  %1939 = vmatprep.subr.mxu0 0.0
  %1940 = vmatpush2.msra.mxu0 0.0
  %1941 = vmatprep.subr.mxu0 0.0
  %1942 = vmatpush2.msra.mxu0 0.0
  %1943 = vmatprep.subr.mxu0 0.0
  %1944 = vmatpush2.msra.mxu0 0.0
  %1945 = vmatprep.subr.mxu0 0.0
  %1946 = vmatpush2.msra.mxu0 0.0
  %1947 = vmatprep.subr.mxu0 0.0
  %1948 = vmatpush2.msra.mxu0 0.0
  %1949 = vmatprep.subr.mxu0 0.0
  %1950 = vmatpush2.msra.mxu0 0.0
  %1951 = vmatprep.subr.mxu0 0.0
  %1952 = vmatpush2.msra.mxu0 0.0
  %1953 = vmatprep.subr.mxu0 0.0
  %1954 = vmatpush2.msra.mxu0 0.0
  %1955 = vmatprep.subr.mxu0 0.0
  %1956 = vmatpush2.msra.mxu0 0.0
  %1957 = vmatprep.subr.mxu0 0.0
  %1958 = vmatpush2.msra.mxu0 0.0
  %1959 = vmatprep.subr.mxu0 0.0
  %1960 = vmatpush2.msra.mxu0 0.0
  %1961 = vmatprep.subr.mxu0 0.0
  %1962 = vmatpush2.msra.mxu0 0.0
  %1963 = vmatprep.subr.mxu0 0.0
  %1964 = vmatpush2.msra.mxu0 0.0
  %1965 = vmatprep.subr.mxu0 0.0
  %1966 = vmatpush2.msra.mxu0 0.0
  %1967 = vmatprep.subr.mxu0 0.0
  %1968 = vmatpush2.msra.mxu0 0.0
  %1969 = vmatprep.subr.mxu0 0.0
  %1970 = vmatpush2.msra.mxu0 0.0
  %1971 = vmatprep.mubr.f32.mxu0 0.0
  %1972 = vmatmul.mubr.f32.gmra.mxu0 %v1905
  %v1973 = vpop.f32.mrf.mxu0
  %v1974 = vadd.f32 0.0, %v1973
  %v1975 = vpop.f32.mrf.mxu0
  %1976 = vdwg.mxu0
  %v1978 = vsel %vm66, %v1903, 0
  %1980 = vmatprep.subr.mxu0 0.0
  %1981 = vmatpush1.msra.mxu0 0.0
  %1982 = vmatprep.subr.mxu0 0.0
  %1983 = vmatpush1.msra.mxu0 0.0
  %1984 = vmatprep.subr.mxu0 0.0
  %1985 = vmatpush1.msra.mxu0 0.0
  %1986 = vmatprep.subr.mxu0 0.0
  %1987 = vmatpush1.msra.mxu0 0.0
  %1988 = vmatprep.subr.mxu0 0.0
  %1989 = vmatpush1.msra.mxu0 0.0
  %1990 = vmatprep.subr.mxu0 0.0
  %1991 = vmatpush1.msra.mxu0 0.0
  %1992 = vmatprep.subr.mxu0 0.0
  %1993 = vmatpush1.msra.mxu0 0.0
  %1994 = vmatprep.subr.mxu0 0.0
  %1995 = vmatpush1.msra.mxu0 0.0
  %1996 = vmatprep.subr.mxu0 0.0
  %1997 = vmatpush1.msra.mxu0 0.0
  %1998 = vmatprep.subr.mxu0 0.0
  %1999 = vmatpush1.msra.mxu0 0.0
  %2000 = vmatprep.subr.mxu0 0.0
  %2001 = vmatpush1.msra.mxu0 0.0
  %2002 = vmatprep.subr.mxu0 0.0
  %2003 = vmatpush1.msra.mxu0 0.0
  %2004 = vmatprep.subr.mxu0 0.0
  %2005 = vmatpush1.msra.mxu0 0.0
  %2006 = vmatprep.subr.mxu0 0.0
  %2007 = vmatpush1.msra.mxu0 0.0
  %2008 = vmatprep.subr.mxu0 0.0
  %2009 = vmatpush1.msra.mxu0 0.0
  %2010 = vmatprep.subr.mxu0 0.0
  %2011 = vmatpush1.msra.mxu0 %v148
  %2012 = vmatprep.subr.mxu0 0.0
  %2013 = vmatpush2.msra.mxu0 0.0
  %2014 = vmatprep.subr.mxu0 0.0
  %2015 = vmatpush2.msra.mxu0 0.0
  %2016 = vmatprep.subr.mxu0 0.0
  %2017 = vmatpush2.msra.mxu0 0.0
  %2018 = vmatprep.subr.mxu0 0.0
  %2019 = vmatpush2.msra.mxu0 0.0
  %2020 = vmatprep.subr.mxu0 0.0
  %2021 = vmatpush2.msra.mxu0 0.0
  %2022 = vmatprep.subr.mxu0 0.0
  %2023 = vmatpush2.msra.mxu0 0.0
  %2024 = vmatprep.subr.mxu0 0.0
  %2025 = vmatpush2.msra.mxu0 0.0
  %2026 = vmatprep.subr.mxu0 0.0
  %2027 = vmatpush2.msra.mxu0 0.0
  %2028 = vmatprep.subr.mxu0 0.0
  %2029 = vmatpush2.msra.mxu0 0.0
  %2030 = vmatprep.subr.mxu0 0.0
  %2031 = vmatpush2.msra.mxu0 0.0
  %2032 = vmatprep.subr.mxu0 0.0
  %2033 = vmatpush2.msra.mxu0 0.0
  %2034 = vmatprep.subr.mxu0 0.0
  %2035 = vmatpush2.msra.mxu0 0.0
  %2036 = vmatprep.subr.mxu0 0.0
  %2037 = vmatpush2.msra.mxu0 0.0
  %2038 = vmatprep.subr.mxu0 0.0
  %2039 = vmatpush2.msra.mxu0 0.0
  %2040 = vmatprep.subr.mxu0 0.0
  %2041 = vmatpush2.msra.mxu0 0.0
  %2042 = vmatprep.subr.mxu0 0.0
  %2043 = vmatpush2.msra.mxu0 0.0
  %2044 = vmatprep.mubr.f32.mxu0 0.0
  %2045 = vmatmul.mubr.f32.gmra.mxu0 %v1978
  %v2046 = vpop.f32.mrf.mxu0
  %v2047 = vadd.f32 %v1974, %v2046
  %v2048 = vpop.f32.mrf.mxu0
  %2049 = vdwg.mxu0
  %v2050 = vadd.f32 %v2047, %v224
  %2051 = vmatprep.subr.mxu0 0.0
  %2052 = vmatpush1.msra.mxu0 0.0
  %2053 = vmatprep.subr.mxu0 0.0
  %2054 = vmatpush1.msra.mxu0 0.0
  %2055 = vmatprep.subr.mxu0 0.0
  %2056 = vmatpush1.msra.mxu0 0.0
  %2057 = vmatprep.subr.mxu0 0.0
  %2058 = vmatpush1.msra.mxu0 0.0
  %2059 = vmatprep.subr.mxu0 0.0
  %2060 = vmatpush1.msra.mxu0 0.0
  %2061 = vmatprep.subr.mxu0 0.0
  %2062 = vmatpush1.msra.mxu0 0.0
  %2063 = vmatprep.subr.mxu0 0.0
  %2064 = vmatpush1.msra.mxu0 0.0
  %2065 = vmatprep.subr.mxu0 0.0
  %2066 = vmatpush1.msra.mxu0 0.0
  %2067 = vmatprep.subr.mxu0 0.0
  %2068 = vmatpush1.msra.mxu0 0.0
  %2069 = vmatprep.subr.mxu0 0.0
  %2070 = vmatpush1.msra.mxu0 0.0
  %2071 = vmatprep.subr.mxu0 0.0
  %2072 = vmatpush1.msra.mxu0 0.0
  %2073 = vmatprep.subr.mxu0 0.0
  %2074 = vmatpush1.msra.mxu0 0.0
  %2075 = vmatprep.subr.mxu0 0.0
  %2076 = vmatpush1.msra.mxu0 0.0
  %2077 = vmatprep.subr.mxu0 0.0
  %2078 = vmatpush1.msra.mxu0 0.0
  %2079 = vmatprep.subr.mxu0 0.0
  %2080 = vmatpush1.msra.mxu0 0.0
  %2081 = vmatprep.subr.mxu0 0.0
  %2082 = vmatpush1.msra.mxu0 %v228
  %2083 = vmatprep.subr.mxu0 0.0
  %2084 = vmatpush2.msra.mxu0 0.0
  %2085 = vmatprep.subr.mxu0 0.0
  %2086 = vmatpush2.msra.mxu0 0.0
  %2087 = vmatprep.subr.mxu0 0.0
  %2088 = vmatpush2.msra.mxu0 0.0
  %2089 = vmatprep.subr.mxu0 0.0
  %2090 = vmatpush2.msra.mxu0 0.0
  %2091 = vmatprep.subr.mxu0 0.0
  %2092 = vmatpush2.msra.mxu0 0.0
  %2093 = vmatprep.subr.mxu0 0.0
  %2094 = vmatpush2.msra.mxu0 0.0
  %2095 = vmatprep.subr.mxu0 0.0
  %2096 = vmatpush2.msra.mxu0 0.0
  %2097 = vmatprep.subr.mxu0 0.0
  %2098 = vmatpush2.msra.mxu0 0.0
  %2099 = vmatprep.subr.mxu0 0.0
  %2100 = vmatpush2.msra.mxu0 0.0
  %2101 = vmatprep.subr.mxu0 0.0
  %2102 = vmatpush2.msra.mxu0 0.0
  %2103 = vmatprep.subr.mxu0 0.0
  %2104 = vmatpush2.msra.mxu0 0.0
  %2105 = vmatprep.subr.mxu0 0.0
  %2106 = vmatpush2.msra.mxu0 0.0
  %2107 = vmatprep.subr.mxu0 0.0
  %2108 = vmatpush2.msra.mxu0 0.0
  %2109 = vmatprep.subr.mxu0 0.0
  %2110 = vmatpush2.msra.mxu0 0.0
  %2111 = vmatprep.subr.mxu0 0.0
  %2112 = vmatpush2.msra.mxu0 0.0
  %2113 = vmatprep.subr.mxu0 0.0
  %2114 = vmatpush2.msra.mxu0 0.0
  %2115 = vmatprep.mubr.f32.mxu0 0.0
  %2116 = vmatmul.mubr.f32.gmra.mxu0 %v1905
  %v2117 = vpop.f32.mrf.mxu0
  %v2118 = vadd.f32 0.0, %v2117
  %v2119 = vpop.f32.mrf.mxu0
  %2120 = vdwg.mxu0
  %2121 = vmatprep.subr.mxu0 0.0
  %2122 = vmatpush1.msra.mxu0 0.0
  %2123 = vmatprep.subr.mxu0 0.0
  %2124 = vmatpush1.msra.mxu0 0.0
  %2125 = vmatprep.subr.mxu0 0.0
  %2126 = vmatpush1.msra.mxu0 0.0
  %2127 = vmatprep.subr.mxu0 0.0
  %2128 = vmatpush1.msra.mxu0 0.0
  %2129 = vmatprep.subr.mxu0 0.0
  %2130 = vmatpush1.msra.mxu0 0.0
  %2131 = vmatprep.subr.mxu0 0.0
  %2132 = vmatpush1.msra.mxu0 0.0
  %2133 = vmatprep.subr.mxu0 0.0
  %2134 = vmatpush1.msra.mxu0 0.0
  %2135 = vmatprep.subr.mxu0 0.0
  %2136 = vmatpush1.msra.mxu0 0.0
  %2137 = vmatprep.subr.mxu0 0.0
  %2138 = vmatpush1.msra.mxu0 0.0
  %2139 = vmatprep.subr.mxu0 0.0
  %2140 = vmatpush1.msra.mxu0 0.0
  %2141 = vmatprep.subr.mxu0 0.0
  %2142 = vmatpush1.msra.mxu0 0.0
  %2143 = vmatprep.subr.mxu0 0.0
  %2144 = vmatpush1.msra.mxu0 0.0
  %2145 = vmatprep.subr.mxu0 0.0
  %2146 = vmatpush1.msra.mxu0 0.0
  %2147 = vmatprep.subr.mxu0 0.0
  %2148 = vmatpush1.msra.mxu0 0.0
  %2149 = vmatprep.subr.mxu0 0.0
  %2150 = vmatpush1.msra.mxu0 0.0
  %2151 = vmatprep.subr.mxu0 0.0
  %2152 = vmatpush1.msra.mxu0 %v301
  %2153 = vmatprep.subr.mxu0 0.0
  %2154 = vmatpush2.msra.mxu0 0.0
  %2155 = vmatprep.subr.mxu0 0.0
  %2156 = vmatpush2.msra.mxu0 0.0
  %2157 = vmatprep.subr.mxu0 0.0
  %2158 = vmatpush2.msra.mxu0 0.0
  %2159 = vmatprep.subr.mxu0 0.0
  %2160 = vmatpush2.msra.mxu0 0.0
  %2161 = vmatprep.subr.mxu0 0.0
  %2162 = vmatpush2.msra.mxu0 0.0
  %2163 = vmatprep.subr.mxu0 0.0
  %2164 = vmatpush2.msra.mxu0 0.0
  %2165 = vmatprep.subr.mxu0 0.0
  %2166 = vmatpush2.msra.mxu0 0.0
  %2167 = vmatprep.subr.mxu0 0.0
  %2168 = vmatpush2.msra.mxu0 0.0
  %2169 = vmatprep.subr.mxu0 0.0
  %2170 = vmatpush2.msra.mxu0 0.0
  %2171 = vmatprep.subr.mxu0 0.0
  %2172 = vmatpush2.msra.mxu0 0.0
  %2173 = vmatprep.subr.mxu0 0.0
  %2174 = vmatpush2.msra.mxu0 0.0
  %2175 = vmatprep.subr.mxu0 0.0
  %2176 = vmatpush2.msra.mxu0 0.0
  %2177 = vmatprep.subr.mxu0 0.0
  %2178 = vmatpush2.msra.mxu0 0.0
  %2179 = vmatprep.subr.mxu0 0.0
  %2180 = vmatpush2.msra.mxu0 0.0
  %2181 = vmatprep.subr.mxu0 0.0
  %2182 = vmatpush2.msra.mxu0 0.0
  %2183 = vmatprep.subr.mxu0 0.0
  %2184 = vmatpush2.msra.mxu0 0.0
  %2185 = vmatprep.mubr.f32.mxu0 0.0
  %2186 = vmatmul.mubr.f32.gmra.mxu0 %v1978
  %v2187 = vpop.f32.mrf.mxu0
  %v2188 = vadd.f32 %v2118, %v2187
  %v2189 = vpop.f32.mrf.mxu0
  %2190 = vdwg.mxu0
  %v2191 = vadd.f32 %v2188, %v377
  %2192 = vmatprep.subr.mxu0 0.0
  %2193 = vmatpush1.msra.mxu0 0.0
  %2194 = vmatprep.subr.mxu0 0.0
  %2195 = vmatpush1.msra.mxu0 0.0
  %2196 = vmatprep.subr.mxu0 0.0
  %2197 = vmatpush1.msra.mxu0 0.0
  %2198 = vmatprep.subr.mxu0 0.0
  %2199 = vmatpush1.msra.mxu0 0.0
  %2200 = vmatprep.subr.mxu0 0.0
  %2201 = vmatpush1.msra.mxu0 0.0
  %2202 = vmatprep.subr.mxu0 0.0
  %2203 = vmatpush1.msra.mxu0 0.0
  %2204 = vmatprep.subr.mxu0 0.0
  %2205 = vmatpush1.msra.mxu0 0.0
  %2206 = vmatprep.subr.mxu0 0.0
  %2207 = vmatpush1.msra.mxu0 0.0
  %2208 = vmatprep.subr.mxu0 0.0
  %2209 = vmatpush1.msra.mxu0 0.0
  %2210 = vmatprep.subr.mxu0 0.0
  %2211 = vmatpush1.msra.mxu0 0.0
  %2212 = vmatprep.subr.mxu0 0.0
  %2213 = vmatpush1.msra.mxu0 0.0
  %2214 = vmatprep.subr.mxu0 0.0
  %2215 = vmatpush1.msra.mxu0 0.0
  %2216 = vmatprep.subr.mxu0 0.0
  %2217 = vmatpush1.msra.mxu0 0.0
  %2218 = vmatprep.subr.mxu0 0.0
  %2219 = vmatpush1.msra.mxu0 0.0
  %2220 = vmatprep.subr.mxu0 0.0
  %2221 = vmatpush1.msra.mxu0 0.0
  %2222 = vmatprep.subr.mxu0 0.0
  %2223 = vmatpush1.msra.mxu0 %v381
  %2224 = vmatprep.subr.mxu0 0.0
  %2225 = vmatpush2.msra.mxu0 0.0
  %2226 = vmatprep.subr.mxu0 0.0
  %2227 = vmatpush2.msra.mxu0 0.0
  %2228 = vmatprep.subr.mxu0 0.0
  %2229 = vmatpush2.msra.mxu0 0.0
  %2230 = vmatprep.subr.mxu0 0.0
  %2231 = vmatpush2.msra.mxu0 0.0
  %2232 = vmatprep.subr.mxu0 0.0
  %2233 = vmatpush2.msra.mxu0 0.0
  %2234 = vmatprep.subr.mxu0 0.0
  %2235 = vmatpush2.msra.mxu0 0.0
  %2236 = vmatprep.subr.mxu0 0.0
  %2237 = vmatpush2.msra.mxu0 0.0
  %2238 = vmatprep.subr.mxu0 0.0
  %2239 = vmatpush2.msra.mxu0 0.0
  %2240 = vmatprep.subr.mxu0 0.0
  %2241 = vmatpush2.msra.mxu0 0.0
  %2242 = vmatprep.subr.mxu0 0.0
  %2243 = vmatpush2.msra.mxu0 0.0
  %2244 = vmatprep.subr.mxu0 0.0
  %2245 = vmatpush2.msra.mxu0 0.0
  %2246 = vmatprep.subr.mxu0 0.0
  %2247 = vmatpush2.msra.mxu0 0.0
  %2248 = vmatprep.subr.mxu0 0.0
  %2249 = vmatpush2.msra.mxu0 0.0
  %2250 = vmatprep.subr.mxu0 0.0
  %2251 = vmatpush2.msra.mxu0 0.0
  %2252 = vmatprep.subr.mxu0 0.0
  %2253 = vmatpush2.msra.mxu0 0.0
  %2254 = vmatprep.subr.mxu0 0.0
  %2255 = vmatpush2.msra.mxu0 0.0
  %2256 = vmatprep.mubr.f32.mxu0 0.0
  %2257 = vmatmul.mubr.f32.gmra.mxu0 %v1905
  %v2258 = vpop.f32.mrf.mxu0
  %v2259 = vadd.f32 0.0, %v2258
  %v2260 = vpop.f32.mrf.mxu0
  %2261 = vdwg.mxu0
  %2262 = vmatprep.subr.mxu0 0.0
  %2263 = vmatpush1.msra.mxu0 0.0
  %2264 = vmatprep.subr.mxu0 0.0
  %2265 = vmatpush1.msra.mxu0 0.0
  %2266 = vmatprep.subr.mxu0 0.0
  %2267 = vmatpush1.msra.mxu0 0.0
  %2268 = vmatprep.subr.mxu0 0.0
  %2269 = vmatpush1.msra.mxu0 0.0
  %2270 = vmatprep.subr.mxu0 0.0
  %2271 = vmatpush1.msra.mxu0 0.0
  %2272 = vmatprep.subr.mxu0 0.0
  %2273 = vmatpush1.msra.mxu0 0.0
  %2274 = vmatprep.subr.mxu0 0.0
  %2275 = vmatpush1.msra.mxu0 0.0
  %2276 = vmatprep.subr.mxu0 0.0
  %2277 = vmatpush1.msra.mxu0 0.0
  %2278 = vmatprep.subr.mxu0 0.0
  %2279 = vmatpush1.msra.mxu0 0.0
  %2280 = vmatprep.subr.mxu0 0.0
  %2281 = vmatpush1.msra.mxu0 0.0
  %2282 = vmatprep.subr.mxu0 0.0
  %2283 = vmatpush1.msra.mxu0 0.0
  %2284 = vmatprep.subr.mxu0 0.0
  %2285 = vmatpush1.msra.mxu0 0.0
  %2286 = vmatprep.subr.mxu0 0.0
  %2287 = vmatpush1.msra.mxu0 0.0
  %2288 = vmatprep.subr.mxu0 0.0
  %2289 = vmatpush1.msra.mxu0 0.0
  %2290 = vmatprep.subr.mxu0 0.0
  %2291 = vmatpush1.msra.mxu0 0.0
  %2292 = vmatprep.subr.mxu0 0.0
  %2293 = vmatpush1.msra.mxu0 %v454
  %2294 = vmatprep.subr.mxu0 0.0
  %2295 = vmatpush2.msra.mxu0 0.0
  %2296 = vmatprep.subr.mxu0 0.0
  %2297 = vmatpush2.msra.mxu0 0.0
  %2298 = vmatprep.subr.mxu0 0.0
  %2299 = vmatpush2.msra.mxu0 0.0
  %2300 = vmatprep.subr.mxu0 0.0
  %2301 = vmatpush2.msra.mxu0 0.0
  %2302 = vmatprep.subr.mxu0 0.0
  %2303 = vmatpush2.msra.mxu0 0.0
  %2304 = vmatprep.subr.mxu0 0.0
  %2305 = vmatpush2.msra.mxu0 0.0
  %2306 = vmatprep.subr.mxu0 0.0
  %2307 = vmatpush2.msra.mxu0 0.0
  %2308 = vmatprep.subr.mxu0 0.0
  %2309 = vmatpush2.msra.mxu0 0.0
  %2310 = vmatprep.subr.mxu0 0.0
  %2311 = vmatpush2.msra.mxu0 0.0
  %2312 = vmatprep.subr.mxu0 0.0
  %2313 = vmatpush2.msra.mxu0 0.0
  %2314 = vmatprep.subr.mxu0 0.0
  %2315 = vmatpush2.msra.mxu0 0.0
  %2316 = vmatprep.subr.mxu0 0.0
  %2317 = vmatpush2.msra.mxu0 0.0
  %2318 = vmatprep.subr.mxu0 0.0
  %2319 = vmatpush2.msra.mxu0 0.0
  %2320 = vmatprep.subr.mxu0 0.0
  %2321 = vmatpush2.msra.mxu0 0.0
  %2322 = vmatprep.subr.mxu0 0.0
  %2323 = vmatpush2.msra.mxu0 0.0
  %2324 = vmatprep.subr.mxu0 0.0
  %2325 = vmatpush2.msra.mxu0 0.0
  %2326 = vmatprep.mubr.f32.mxu0 0.0
  %2327 = vmatmul.mubr.f32.gmra.mxu0 %v1978
  %v2328 = vpop.f32.mrf.mxu0
  %v2329 = vadd.f32 %v2259, %v2328
  %v2330 = vpop.f32.mrf.mxu0
  %2331 = vdwg.mxu0
  %v2332 = vadd.f32 %v2329, %v530
  %2333 = vmatprep.subr.mxu0 0.0
  %2334 = vmatpush1.msra.mxu0 0.0
  %2335 = vmatprep.subr.mxu0 0.0
  %2336 = vmatpush1.msra.mxu0 0.0
  %2337 = vmatprep.subr.mxu0 0.0
  %2338 = vmatpush1.msra.mxu0 0.0
  %2339 = vmatprep.subr.mxu0 0.0
  %2340 = vmatpush1.msra.mxu0 0.0
  %2341 = vmatprep.subr.mxu0 0.0
  %2342 = vmatpush1.msra.mxu0 0.0
  %2343 = vmatprep.subr.mxu0 0.0
  %2344 = vmatpush1.msra.mxu0 0.0
  %2345 = vmatprep.subr.mxu0 0.0
  %2346 = vmatpush1.msra.mxu0 0.0
  %2347 = vmatprep.subr.mxu0 0.0
  %2348 = vmatpush1.msra.mxu0 0.0
  %2349 = vmatprep.subr.mxu0 0.0
  %2350 = vmatpush1.msra.mxu0 0.0
  %2351 = vmatprep.subr.mxu0 0.0
  %2352 = vmatpush1.msra.mxu0 0.0
  %2353 = vmatprep.subr.mxu0 0.0
  %2354 = vmatpush1.msra.mxu0 0.0
  %2355 = vmatprep.subr.mxu0 0.0
  %2356 = vmatpush1.msra.mxu0 0.0
  %2357 = vmatprep.subr.mxu0 0.0
  %2358 = vmatpush1.msra.mxu0 0.0
  %2359 = vmatprep.subr.mxu0 0.0
  %2360 = vmatpush1.msra.mxu0 0.0
  %2361 = vmatprep.subr.mxu0 0.0
  %2362 = vmatpush1.msra.mxu0 0.0
  %2363 = vmatprep.subr.mxu0 0.0
  %2364 = vmatpush1.msra.mxu0 %v534
  %2365 = vmatprep.subr.mxu0 0.0
  %2366 = vmatpush2.msra.mxu0 0.0
  %2367 = vmatprep.subr.mxu0 0.0
  %2368 = vmatpush2.msra.mxu0 0.0
  %2369 = vmatprep.subr.mxu0 0.0
  %2370 = vmatpush2.msra.mxu0 0.0
  %2371 = vmatprep.subr.mxu0 0.0
  %2372 = vmatpush2.msra.mxu0 0.0
  %2373 = vmatprep.subr.mxu0 0.0
  %2374 = vmatpush2.msra.mxu0 0.0
  %2375 = vmatprep.subr.mxu0 0.0
  %2376 = vmatpush2.msra.mxu0 0.0
  %2377 = vmatprep.subr.mxu0 0.0
  %2378 = vmatpush2.msra.mxu0 0.0
  %2379 = vmatprep.subr.mxu0 0.0
  %2380 = vmatpush2.msra.mxu0 0.0
  %2381 = vmatprep.subr.mxu0 0.0
  %2382 = vmatpush2.msra.mxu0 0.0
  %2383 = vmatprep.subr.mxu0 0.0
  %2384 = vmatpush2.msra.mxu0 0.0
  %2385 = vmatprep.subr.mxu0 0.0
  %2386 = vmatpush2.msra.mxu0 0.0
  %2387 = vmatprep.subr.mxu0 0.0
  %2388 = vmatpush2.msra.mxu0 0.0
  %2389 = vmatprep.subr.mxu0 0.0
  %2390 = vmatpush2.msra.mxu0 0.0
  %2391 = vmatprep.subr.mxu0 0.0
  %2392 = vmatpush2.msra.mxu0 0.0
  %2393 = vmatprep.subr.mxu0 0.0
  %2394 = vmatpush2.msra.mxu0 0.0
  %2395 = vmatprep.subr.mxu0 0.0
  %2396 = vmatpush2.msra.mxu0 0.0
  %2397 = vmatprep.mubr.f32.mxu0 0.0
  %2398 = vmatmul.mubr.f32.gmra.mxu0 %v1905
  %v2399 = vpop.f32.mrf.mxu0
  %v2400 = vadd.f32 0.0, %v2399
  %v2401 = vpop.f32.mrf.mxu0
  %2402 = vdwg.mxu0
  %2403 = vmatprep.subr.mxu0 0.0
  %2404 = vmatpush1.msra.mxu0 0.0
  %2405 = vmatprep.subr.mxu0 0.0
  %2406 = vmatpush1.msra.mxu0 0.0
  %2407 = vmatprep.subr.mxu0 0.0
  %2408 = vmatpush1.msra.mxu0 0.0
  %2409 = vmatprep.subr.mxu0 0.0
  %2410 = vmatpush1.msra.mxu0 0.0
  %2411 = vmatprep.subr.mxu0 0.0
  %2412 = vmatpush1.msra.mxu0 0.0
  %2413 = vmatprep.subr.mxu0 0.0
  %2414 = vmatpush1.msra.mxu0 0.0
  %2415 = vmatprep.subr.mxu0 0.0
  %2416 = vmatpush1.msra.mxu0 0.0
  %2417 = vmatprep.subr.mxu0 0.0
  %2418 = vmatpush1.msra.mxu0 0.0
  %2419 = vmatprep.subr.mxu0 0.0
  %2420 = vmatpush1.msra.mxu0 0.0
  %2421 = vmatprep.subr.mxu0 0.0
  %2422 = vmatpush1.msra.mxu0 0.0
  %2423 = vmatprep.subr.mxu0 0.0
  %2424 = vmatpush1.msra.mxu0 0.0
  %2425 = vmatprep.subr.mxu0 0.0
  %2426 = vmatpush1.msra.mxu0 0.0
  %2427 = vmatprep.subr.mxu0 0.0
  %2428 = vmatpush1.msra.mxu0 0.0
  %2429 = vmatprep.subr.mxu0 0.0
  %2430 = vmatpush1.msra.mxu0 0.0
  %2431 = vmatprep.subr.mxu0 0.0
  %2432 = vmatpush1.msra.mxu0 0.0
  %2433 = vmatprep.subr.mxu0 0.0
  %2434 = vmatpush1.msra.mxu0 %v607
  %2435 = vmatprep.subr.mxu0 0.0
  %2436 = vmatpush2.msra.mxu0 0.0
  %2437 = vmatprep.subr.mxu0 0.0
  %2438 = vmatpush2.msra.mxu0 0.0
  %2439 = vmatprep.subr.mxu0 0.0
  %2440 = vmatpush2.msra.mxu0 0.0
  %2441 = vmatprep.subr.mxu0 0.0
  %2442 = vmatpush2.msra.mxu0 0.0
  %2443 = vmatprep.subr.mxu0 0.0
  %2444 = vmatpush2.msra.mxu0 0.0
  %2445 = vmatprep.subr.mxu0 0.0
  %2446 = vmatpush2.msra.mxu0 0.0
  %2447 = vmatprep.subr.mxu0 0.0
  %2448 = vmatpush2.msra.mxu0 0.0
  %2449 = vmatprep.subr.mxu0 0.0
  %2450 = vmatpush2.msra.mxu0 0.0
  %2451 = vmatprep.subr.mxu0 0.0
  %2452 = vmatpush2.msra.mxu0 0.0
  %2453 = vmatprep.subr.mxu0 0.0
  %2454 = vmatpush2.msra.mxu0 0.0
  %2455 = vmatprep.subr.mxu0 0.0
  %2456 = vmatpush2.msra.mxu0 0.0
  %2457 = vmatprep.subr.mxu0 0.0
  %2458 = vmatpush2.msra.mxu0 0.0
  %2459 = vmatprep.subr.mxu0 0.0
  %2460 = vmatpush2.msra.mxu0 0.0
  %2461 = vmatprep.subr.mxu0 0.0
  %2462 = vmatpush2.msra.mxu0 0.0
  %2463 = vmatprep.subr.mxu0 0.0
  %2464 = vmatpush2.msra.mxu0 0.0
  %2465 = vmatprep.subr.mxu0 0.0
  %2466 = vmatpush2.msra.mxu0 0.0
  %2467 = vmatprep.mubr.f32.mxu0 0.0
  %2468 = vmatmul.mubr.f32.gmra.mxu0 %v1978
  %v2469 = vpop.f32.mrf.mxu0
  %v2470 = vadd.f32 %v2400, %v2469
  %v2471 = vpop.f32.mrf.mxu0
  %2472 = vdwg.mxu0
  %v2473 = vadd.f32 %v2470, %v683
  %v2474 = vsub.f32 0.0, %v2050
  %v2475 = vmul.f32 %v2474, 1.442695
  %v2476 = vpow.pop %v2475
  %v2477 = vadd.f32 %v2476, 1.0
  %v2478 = vrcp.pop %v2477
  %v2479 = vmul.f32 1.0, %v2478
  %v2480 = vsub.f32 0.0, %v2191
  %v2481 = vmul.f32 %v2480, 1.442695
  %v2482 = vpow.pop %v2481
  %v2483 = vadd.f32 %v2482, 1.0
  %v2484 = vrcp.pop %v2483
  %v2485 = vmul.f32 1.0, %v2484
  %v2486 = vtanh.pop %v2332
  %v2487 = vsub.f32 0.0, %v2473
  %v2488 = vmul.f32 %v2487, 1.442695
  %v2489 = vpow.pop %v2488
  %v2490 = vadd.f32 %v2489, 1.0
  %v2491 = vrcp.pop %v2490
  %v2492 = vmul.f32 1.0, %v2491
  %v2493 = vmul.f32 %v2485, %v1899
  %v2494 = vmul.f32 %v2479, %v2486
  %v2495 = vadd.f32 %v2493, %v2494
  %v2496 = vtanh.pop %v2495
  %v2497 = vmul.f32 %v2492, %v2496
  %s2498 = scalar_lea.vmem %s0, 32
  %v2499 = vld [vmem:[%s2498] sm:$0xff]
  %v2501 = vsel %vm66, %v2497, 0
  %2503 = vmatprep.subr.mxu0 0.0
  %2504 = vmatpush1.msra.mxu0 0.0
  %2505 = vmatprep.subr.mxu0 0.0
  %2506 = vmatpush1.msra.mxu0 0.0
  %2507 = vmatprep.subr.mxu0 0.0
  %2508 = vmatpush1.msra.mxu0 0.0
  %2509 = vmatprep.subr.mxu0 0.0
  %2510 = vmatpush1.msra.mxu0 0.0
  %2511 = vmatprep.subr.mxu0 0.0
  %2512 = vmatpush1.msra.mxu0 0.0
  %2513 = vmatprep.subr.mxu0 0.0
  %2514 = vmatpush1.msra.mxu0 0.0
  %2515 = vmatprep.subr.mxu0 0.0
  %2516 = vmatpush1.msra.mxu0 0.0
  %2517 = vmatprep.subr.mxu0 0.0
  %2518 = vmatpush1.msra.mxu0 0.0
  %2519 = vmatprep.subr.mxu0 0.0
  %2520 = vmatpush1.msra.mxu0 0.0
  %2521 = vmatprep.subr.mxu0 0.0
  %2522 = vmatpush1.msra.mxu0 0.0
  %2523 = vmatprep.subr.mxu0 0.0
  %2524 = vmatpush1.msra.mxu0 0.0
  %2525 = vmatprep.subr.mxu0 0.0
  %2526 = vmatpush1.msra.mxu0 0.0
  %2527 = vmatprep.subr.mxu0 0.0
  %2528 = vmatpush1.msra.mxu0 0.0
  %2529 = vmatprep.subr.mxu0 0.0
  %2530 = vmatpush1.msra.mxu0 0.0
  %2531 = vmatprep.subr.mxu0 0.0
  %2532 = vmatpush1.msra.mxu0 0.0
  %2533 = vmatprep.subr.mxu0 0.0
  %2534 = vmatpush1.msra.mxu0 %v72
  %2535 = vmatprep.subr.mxu0 0.0
  %2536 = vmatpush2.msra.mxu0 0.0
  %2537 = vmatprep.subr.mxu0 0.0
  %2538 = vmatpush2.msra.mxu0 0.0
  %2539 = vmatprep.subr.mxu0 0.0
  %2540 = vmatpush2.msra.mxu0 0.0
  %2541 = vmatprep.subr.mxu0 0.0
  %2542 = vmatpush2.msra.mxu0 0.0
  %2543 = vmatprep.subr.mxu0 0.0
  %2544 = vmatpush2.msra.mxu0 0.0
  %2545 = vmatprep.subr.mxu0 0.0
  %2546 = vmatpush2.msra.mxu0 0.0
  %2547 = vmatprep.subr.mxu0 0.0
  %2548 = vmatpush2.msra.mxu0 0.0
  %2549 = vmatprep.subr.mxu0 0.0
  %2550 = vmatpush2.msra.mxu0 0.0
  %2551 = vmatprep.subr.mxu0 0.0
  %2552 = vmatpush2.msra.mxu0 0.0
  %2553 = vmatprep.subr.mxu0 0.0
  %2554 = vmatpush2.msra.mxu0 0.0
  %2555 = vmatprep.subr.mxu0 0.0
  %2556 = vmatpush2.msra.mxu0 0.0
  %2557 = vmatprep.subr.mxu0 0.0
  %2558 = vmatpush2.msra.mxu0 0.0
  %2559 = vmatprep.subr.mxu0 0.0
  %2560 = vmatpush2.msra.mxu0 0.0
  %2561 = vmatprep.subr.mxu0 0.0
  %2562 = vmatpush2.msra.mxu0 0.0
  %2563 = vmatprep.subr.mxu0 0.0
  %2564 = vmatpush2.msra.mxu0 0.0
  %2565 = vmatprep.subr.mxu0 0.0
  %2566 = vmatpush2.msra.mxu0 0.0
  %2567 = vmatprep.mubr.f32.mxu0 0.0
  %2568 = vmatmul.mubr.f32.gmra.mxu0 %v2501
  %v2569 = vpop.f32.mrf.mxu0
  %v2570 = vadd.f32 0.0, %v2569
  %v2571 = vpop.f32.mrf.mxu0
  %2572 = vdwg.mxu0
  %v2574 = vsel %vm66, %v2499, 0
  %2576 = vmatprep.subr.mxu0 0.0
  %2577 = vmatpush1.msra.mxu0 0.0
  %2578 = vmatprep.subr.mxu0 0.0
  %2579 = vmatpush1.msra.mxu0 0.0
  %2580 = vmatprep.subr.mxu0 0.0
  %2581 = vmatpush1.msra.mxu0 0.0
  %2582 = vmatprep.subr.mxu0 0.0
  %2583 = vmatpush1.msra.mxu0 0.0
  %2584 = vmatprep.subr.mxu0 0.0
  %2585 = vmatpush1.msra.mxu0 0.0
  %2586 = vmatprep.subr.mxu0 0.0
  %2587 = vmatpush1.msra.mxu0 0.0
  %2588 = vmatprep.subr.mxu0 0.0
  %2589 = vmatpush1.msra.mxu0 0.0
  %2590 = vmatprep.subr.mxu0 0.0
  %2591 = vmatpush1.msra.mxu0 0.0
  %2592 = vmatprep.subr.mxu0 0.0
  %2593 = vmatpush1.msra.mxu0 0.0
  %2594 = vmatprep.subr.mxu0 0.0
  %2595 = vmatpush1.msra.mxu0 0.0
  %2596 = vmatprep.subr.mxu0 0.0
  %2597 = vmatpush1.msra.mxu0 0.0
  %2598 = vmatprep.subr.mxu0 0.0
  %2599 = vmatpush1.msra.mxu0 0.0
  %2600 = vmatprep.subr.mxu0 0.0
  %2601 = vmatpush1.msra.mxu0 0.0
  %2602 = vmatprep.subr.mxu0 0.0
  %2603 = vmatpush1.msra.mxu0 0.0
  %2604 = vmatprep.subr.mxu0 0.0
  %2605 = vmatpush1.msra.mxu0 0.0
  %2606 = vmatprep.subr.mxu0 0.0
  %2607 = vmatpush1.msra.mxu0 %v148
  %2608 = vmatprep.subr.mxu0 0.0
  %2609 = vmatpush2.msra.mxu0 0.0
  %2610 = vmatprep.subr.mxu0 0.0
  %2611 = vmatpush2.msra.mxu0 0.0
  %2612 = vmatprep.subr.mxu0 0.0
  %2613 = vmatpush2.msra.mxu0 0.0
  %2614 = vmatprep.subr.mxu0 0.0
  %2615 = vmatpush2.msra.mxu0 0.0
  %2616 = vmatprep.subr.mxu0 0.0
  %2617 = vmatpush2.msra.mxu0 0.0
  %2618 = vmatprep.subr.mxu0 0.0
  %2619 = vmatpush2.msra.mxu0 0.0
  %2620 = vmatprep.subr.mxu0 0.0
  %2621 = vmatpush2.msra.mxu0 0.0
  %2622 = vmatprep.subr.mxu0 0.0
  %2623 = vmatpush2.msra.mxu0 0.0
  %2624 = vmatprep.subr.mxu0 0.0
  %2625 = vmatpush2.msra.mxu0 0.0
  %2626 = vmatprep.subr.mxu0 0.0
  %2627 = vmatpush2.msra.mxu0 0.0
  %2628 = vmatprep.subr.mxu0 0.0
  %2629 = vmatpush2.msra.mxu0 0.0
  %2630 = vmatprep.subr.mxu0 0.0
  %2631 = vmatpush2.msra.mxu0 0.0
  %2632 = vmatprep.subr.mxu0 0.0
  %2633 = vmatpush2.msra.mxu0 0.0
  %2634 = vmatprep.subr.mxu0 0.0
  %2635 = vmatpush2.msra.mxu0 0.0
  %2636 = vmatprep.subr.mxu0 0.0
  %2637 = vmatpush2.msra.mxu0 0.0
  %2638 = vmatprep.subr.mxu0 0.0
  %2639 = vmatpush2.msra.mxu0 0.0
  %2640 = vmatprep.mubr.f32.mxu0 0.0
  %2641 = vmatmul.mubr.f32.gmra.mxu0 %v2574
  %v2642 = vpop.f32.mrf.mxu0
  %v2643 = vadd.f32 %v2570, %v2642
  %v2644 = vpop.f32.mrf.mxu0
  %2645 = vdwg.mxu0
  %v2646 = vadd.f32 %v2643, %v224
  %2647 = vmatprep.subr.mxu0 0.0
  %2648 = vmatpush1.msra.mxu0 0.0
  %2649 = vmatprep.subr.mxu0 0.0
  %2650 = vmatpush1.msra.mxu0 0.0
  %2651 = vmatprep.subr.mxu0 0.0
  %2652 = vmatpush1.msra.mxu0 0.0
  %2653 = vmatprep.subr.mxu0 0.0
  %2654 = vmatpush1.msra.mxu0 0.0
  %2655 = vmatprep.subr.mxu0 0.0
  %2656 = vmatpush1.msra.mxu0 0.0
  %2657 = vmatprep.subr.mxu0 0.0
  %2658 = vmatpush1.msra.mxu0 0.0
  %2659 = vmatprep.subr.mxu0 0.0
  %2660 = vmatpush1.msra.mxu0 0.0
  %2661 = vmatprep.subr.mxu0 0.0
  %2662 = vmatpush1.msra.mxu0 0.0
  %2663 = vmatprep.subr.mxu0 0.0
  %2664 = vmatpush1.msra.mxu0 0.0
  %2665 = vmatprep.subr.mxu0 0.0
  %2666 = vmatpush1.msra.mxu0 0.0
  %2667 = vmatprep.subr.mxu0 0.0
  %2668 = vmatpush1.msra.mxu0 0.0
  %2669 = vmatprep.subr.mxu0 0.0
  %2670 = vmatpush1.msra.mxu0 0.0
  %2671 = vmatprep.subr.mxu0 0.0
  %2672 = vmatpush1.msra.mxu0 0.0
  %2673 = vmatprep.subr.mxu0 0.0
  %2674 = vmatpush1.msra.mxu0 0.0
  %2675 = vmatprep.subr.mxu0 0.0
  %2676 = vmatpush1.msra.mxu0 0.0
  %2677 = vmatprep.subr.mxu0 0.0
  %2678 = vmatpush1.msra.mxu0 %v228
  %2679 = vmatprep.subr.mxu0 0.0
  %2680 = vmatpush2.msra.mxu0 0.0
  %2681 = vmatprep.subr.mxu0 0.0
  %2682 = vmatpush2.msra.mxu0 0.0
  %2683 = vmatprep.subr.mxu0 0.0
  %2684 = vmatpush2.msra.mxu0 0.0
  %2685 = vmatprep.subr.mxu0 0.0
  %2686 = vmatpush2.msra.mxu0 0.0
  %2687 = vmatprep.subr.mxu0 0.0
  %2688 = vmatpush2.msra.mxu0 0.0
  %2689 = vmatprep.subr.mxu0 0.0
  %2690 = vmatpush2.msra.mxu0 0.0
  %2691 = vmatprep.subr.mxu0 0.0
  %2692 = vmatpush2.msra.mxu0 0.0
  %2693 = vmatprep.subr.mxu0 0.0
  %2694 = vmatpush2.msra.mxu0 0.0
  %2695 = vmatprep.subr.mxu0 0.0
  %2696 = vmatpush2.msra.mxu0 0.0
  %2697 = vmatprep.subr.mxu0 0.0
  %2698 = vmatpush2.msra.mxu0 0.0
  %2699 = vmatprep.subr.mxu0 0.0
  %2700 = vmatpush2.msra.mxu0 0.0
  %2701 = vmatprep.subr.mxu0 0.0
  %2702 = vmatpush2.msra.mxu0 0.0
  %2703 = vmatprep.subr.mxu0 0.0
  %2704 = vmatpush2.msra.mxu0 0.0
  %2705 = vmatprep.subr.mxu0 0.0
  %2706 = vmatpush2.msra.mxu0 0.0
  %2707 = vmatprep.subr.mxu0 0.0
  %2708 = vmatpush2.msra.mxu0 0.0
  %2709 = vmatprep.subr.mxu0 0.0
  %2710 = vmatpush2.msra.mxu0 0.0
  %2711 = vmatprep.mubr.f32.mxu0 0.0
  %2712 = vmatmul.mubr.f32.gmra.mxu0 %v2501
  %v2713 = vpop.f32.mrf.mxu0
  %v2714 = vadd.f32 0.0, %v2713
  %v2715 = vpop.f32.mrf.mxu0
  %2716 = vdwg.mxu0
  %2717 = vmatprep.subr.mxu0 0.0
  %2718 = vmatpush1.msra.mxu0 0.0
  %2719 = vmatprep.subr.mxu0 0.0
  %2720 = vmatpush1.msra.mxu0 0.0
  %2721 = vmatprep.subr.mxu0 0.0
  %2722 = vmatpush1.msra.mxu0 0.0
  %2723 = vmatprep.subr.mxu0 0.0
  %2724 = vmatpush1.msra.mxu0 0.0
  %2725 = vmatprep.subr.mxu0 0.0
  %2726 = vmatpush1.msra.mxu0 0.0
  %2727 = vmatprep.subr.mxu0 0.0
  %2728 = vmatpush1.msra.mxu0 0.0
  %2729 = vmatprep.subr.mxu0 0.0
  %2730 = vmatpush1.msra.mxu0 0.0
  %2731 = vmatprep.subr.mxu0 0.0
  %2732 = vmatpush1.msra.mxu0 0.0
  %2733 = vmatprep.subr.mxu0 0.0
  %2734 = vmatpush1.msra.mxu0 0.0
  %2735 = vmatprep.subr.mxu0 0.0
  %2736 = vmatpush1.msra.mxu0 0.0
  %2737 = vmatprep.subr.mxu0 0.0
  %2738 = vmatpush1.msra.mxu0 0.0
  %2739 = vmatprep.subr.mxu0 0.0
  %2740 = vmatpush1.msra.mxu0 0.0
  %2741 = vmatprep.subr.mxu0 0.0
  %2742 = vmatpush1.msra.mxu0 0.0
  %2743 = vmatprep.subr.mxu0 0.0
  %2744 = vmatpush1.msra.mxu0 0.0
  %2745 = vmatprep.subr.mxu0 0.0
  %2746 = vmatpush1.msra.mxu0 0.0
  %2747 = vmatprep.subr.mxu0 0.0
  %2748 = vmatpush1.msra.mxu0 %v301
  %2749 = vmatprep.subr.mxu0 0.0
  %2750 = vmatpush2.msra.mxu0 0.0
  %2751 = vmatprep.subr.mxu0 0.0
  %2752 = vmatpush2.msra.mxu0 0.0
  %2753 = vmatprep.subr.mxu0 0.0
  %2754 = vmatpush2.msra.mxu0 0.0
  %2755 = vmatprep.subr.mxu0 0.0
  %2756 = vmatpush2.msra.mxu0 0.0
  %2757 = vmatprep.subr.mxu0 0.0
  %2758 = vmatpush2.msra.mxu0 0.0
  %2759 = vmatprep.subr.mxu0 0.0
  %2760 = vmatpush2.msra.mxu0 0.0
  %2761 = vmatprep.subr.mxu0 0.0
  %2762 = vmatpush2.msra.mxu0 0.0
  %2763 = vmatprep.subr.mxu0 0.0
  %2764 = vmatpush2.msra.mxu0 0.0
  %2765 = vmatprep.subr.mxu0 0.0
  %2766 = vmatpush2.msra.mxu0 0.0
  %2767 = vmatprep.subr.mxu0 0.0
  %2768 = vmatpush2.msra.mxu0 0.0
  %2769 = vmatprep.subr.mxu0 0.0
  %2770 = vmatpush2.msra.mxu0 0.0
  %2771 = vmatprep.subr.mxu0 0.0
  %2772 = vmatpush2.msra.mxu0 0.0
  %2773 = vmatprep.subr.mxu0 0.0
  %2774 = vmatpush2.msra.mxu0 0.0
  %2775 = vmatprep.subr.mxu0 0.0
  %2776 = vmatpush2.msra.mxu0 0.0
  %2777 = vmatprep.subr.mxu0 0.0
  %2778 = vmatpush2.msra.mxu0 0.0
  %2779 = vmatprep.subr.mxu0 0.0
  %2780 = vmatpush2.msra.mxu0 0.0
  %2781 = vmatprep.mubr.f32.mxu0 0.0
  %2782 = vmatmul.mubr.f32.gmra.mxu0 %v2574
  %v2783 = vpop.f32.mrf.mxu0
  %v2784 = vadd.f32 %v2714, %v2783
  %v2785 = vpop.f32.mrf.mxu0
  %2786 = vdwg.mxu0
  %v2787 = vadd.f32 %v2784, %v377
  %2788 = vmatprep.subr.mxu0 0.0
  %2789 = vmatpush1.msra.mxu0 0.0
  %2790 = vmatprep.subr.mxu0 0.0
  %2791 = vmatpush1.msra.mxu0 0.0
  %2792 = vmatprep.subr.mxu0 0.0
  %2793 = vmatpush1.msra.mxu0 0.0
  %2794 = vmatprep.subr.mxu0 0.0
  %2795 = vmatpush1.msra.mxu0 0.0
  %2796 = vmatprep.subr.mxu0 0.0
  %2797 = vmatpush1.msra.mxu0 0.0
  %2798 = vmatprep.subr.mxu0 0.0
  %2799 = vmatpush1.msra.mxu0 0.0
  %2800 = vmatprep.subr.mxu0 0.0
  %2801 = vmatpush1.msra.mxu0 0.0
  %2802 = vmatprep.subr.mxu0 0.0
  %2803 = vmatpush1.msra.mxu0 0.0
  %2804 = vmatprep.subr.mxu0 0.0
  %2805 = vmatpush1.msra.mxu0 0.0
  %2806 = vmatprep.subr.mxu0 0.0
  %2807 = vmatpush1.msra.mxu0 0.0
  %2808 = vmatprep.subr.mxu0 0.0
  %2809 = vmatpush1.msra.mxu0 0.0
  %2810 = vmatprep.subr.mxu0 0.0
  %2811 = vmatpush1.msra.mxu0 0.0
  %2812 = vmatprep.subr.mxu0 0.0
  %2813 = vmatpush1.msra.mxu0 0.0
  %2814 = vmatprep.subr.mxu0 0.0
  %2815 = vmatpush1.msra.mxu0 0.0
  %2816 = vmatprep.subr.mxu0 0.0
  %2817 = vmatpush1.msra.mxu0 0.0
  %2818 = vmatprep.subr.mxu0 0.0
  %2819 = vmatpush1.msra.mxu0 %v381
  %2820 = vmatprep.subr.mxu0 0.0
  %2821 = vmatpush2.msra.mxu0 0.0
  %2822 = vmatprep.subr.mxu0 0.0
  %2823 = vmatpush2.msra.mxu0 0.0
  %2824 = vmatprep.subr.mxu0 0.0
  %2825 = vmatpush2.msra.mxu0 0.0
  %2826 = vmatprep.subr.mxu0 0.0
  %2827 = vmatpush2.msra.mxu0 0.0
  %2828 = vmatprep.subr.mxu0 0.0
  %2829 = vmatpush2.msra.mxu0 0.0
  %2830 = vmatprep.subr.mxu0 0.0
  %2831 = vmatpush2.msra.mxu0 0.0
  %2832 = vmatprep.subr.mxu0 0.0
  %2833 = vmatpush2.msra.mxu0 0.0
  %2834 = vmatprep.subr.mxu0 0.0
  %2835 = vmatpush2.msra.mxu0 0.0
  %2836 = vmatprep.subr.mxu0 0.0
  %2837 = vmatpush2.msra.mxu0 0.0
  %2838 = vmatprep.subr.mxu0 0.0
  %2839 = vmatpush2.msra.mxu0 0.0
  %2840 = vmatprep.subr.mxu0 0.0
  %2841 = vmatpush2.msra.mxu0 0.0
  %2842 = vmatprep.subr.mxu0 0.0
  %2843 = vmatpush2.msra.mxu0 0.0
  %2844 = vmatprep.subr.mxu0 0.0
  %2845 = vmatpush2.msra.mxu0 0.0
  %2846 = vmatprep.subr.mxu0 0.0
  %2847 = vmatpush2.msra.mxu0 0.0
  %2848 = vmatprep.subr.mxu0 0.0
  %2849 = vmatpush2.msra.mxu0 0.0
  %2850 = vmatprep.subr.mxu0 0.0
  %2851 = vmatpush2.msra.mxu0 0.0
  %2852 = vmatprep.mubr.f32.mxu0 0.0
  %2853 = vmatmul.mubr.f32.gmra.mxu0 %v2501
  %v2854 = vpop.f32.mrf.mxu0
  %v2855 = vadd.f32 0.0, %v2854
  %v2856 = vpop.f32.mrf.mxu0
  %2857 = vdwg.mxu0
  %2858 = vmatprep.subr.mxu0 0.0
  %2859 = vmatpush1.msra.mxu0 0.0
  %2860 = vmatprep.subr.mxu0 0.0
  %2861 = vmatpush1.msra.mxu0 0.0
  %2862 = vmatprep.subr.mxu0 0.0
  %2863 = vmatpush1.msra.mxu0 0.0
  %2864 = vmatprep.subr.mxu0 0.0
  %2865 = vmatpush1.msra.mxu0 0.0
  %2866 = vmatprep.subr.mxu0 0.0
  %2867 = vmatpush1.msra.mxu0 0.0
  %2868 = vmatprep.subr.mxu0 0.0
  %2869 = vmatpush1.msra.mxu0 0.0
  %2870 = vmatprep.subr.mxu0 0.0
  %2871 = vmatpush1.msra.mxu0 0.0
  %2872 = vmatprep.subr.mxu0 0.0
  %2873 = vmatpush1.msra.mxu0 0.0
  %2874 = vmatprep.subr.mxu0 0.0
  %2875 = vmatpush1.msra.mxu0 0.0
  %2876 = vmatprep.subr.mxu0 0.0
  %2877 = vmatpush1.msra.mxu0 0.0
  %2878 = vmatprep.subr.mxu0 0.0
  %2879 = vmatpush1.msra.mxu0 0.0
  %2880 = vmatprep.subr.mxu0 0.0
  %2881 = vmatpush1.msra.mxu0 0.0
  %2882 = vmatprep.subr.mxu0 0.0
  %2883 = vmatpush1.msra.mxu0 0.0
  %2884 = vmatprep.subr.mxu0 0.0
  %2885 = vmatpush1.msra.mxu0 0.0
  %2886 = vmatprep.subr.mxu0 0.0
  %2887 = vmatpush1.msra.mxu0 0.0
  %2888 = vmatprep.subr.mxu0 0.0
  %2889 = vmatpush1.msra.mxu0 %v454
  %2890 = vmatprep.subr.mxu0 0.0
  %2891 = vmatpush2.msra.mxu0 0.0
  %2892 = vmatprep.subr.mxu0 0.0
  %2893 = vmatpush2.msra.mxu0 0.0
  %2894 = vmatprep.subr.mxu0 0.0
  %2895 = vmatpush2.msra.mxu0 0.0
  %2896 = vmatprep.subr.mxu0 0.0
  %2897 = vmatpush2.msra.mxu0 0.0
  %2898 = vmatprep.subr.mxu0 0.0
  %2899 = vmatpush2.msra.mxu0 0.0
  %2900 = vmatprep.subr.mxu0 0.0
  %2901 = vmatpush2.msra.mxu0 0.0
  %2902 = vmatprep.subr.mxu0 0.0
  %2903 = vmatpush2.msra.mxu0 0.0
  %2904 = vmatprep.subr.mxu0 0.0
  %2905 = vmatpush2.msra.mxu0 0.0
  %2906 = vmatprep.subr.mxu0 0.0
  %2907 = vmatpush2.msra.mxu0 0.0
  %2908 = vmatprep.subr.mxu0 0.0
  %2909 = vmatpush2.msra.mxu0 0.0
  %2910 = vmatprep.subr.mxu0 0.0
  %2911 = vmatpush2.msra.mxu0 0.0
  %2912 = vmatprep.subr.mxu0 0.0
  %2913 = vmatpush2.msra.mxu0 0.0
  %2914 = vmatprep.subr.mxu0 0.0
  %2915 = vmatpush2.msra.mxu0 0.0
  %2916 = vmatprep.subr.mxu0 0.0
  %2917 = vmatpush2.msra.mxu0 0.0
  %2918 = vmatprep.subr.mxu0 0.0
  %2919 = vmatpush2.msra.mxu0 0.0
  %2920 = vmatprep.subr.mxu0 0.0
  %2921 = vmatpush2.msra.mxu0 0.0
  %2922 = vmatprep.mubr.f32.mxu0 0.0
  %2923 = vmatmul.mubr.f32.gmra.mxu0 %v2574
  %v2924 = vpop.f32.mrf.mxu0
  %v2925 = vadd.f32 %v2855, %v2924
  %v2926 = vpop.f32.mrf.mxu0
  %2927 = vdwg.mxu0
  %v2928 = vadd.f32 %v2925, %v530
  %2929 = vmatprep.subr.mxu0 0.0
  %2930 = vmatpush1.msra.mxu0 0.0
  %2931 = vmatprep.subr.mxu0 0.0
  %2932 = vmatpush1.msra.mxu0 0.0
  %2933 = vmatprep.subr.mxu0 0.0
  %2934 = vmatpush1.msra.mxu0 0.0
  %2935 = vmatprep.subr.mxu0 0.0
  %2936 = vmatpush1.msra.mxu0 0.0
  %2937 = vmatprep.subr.mxu0 0.0
  %2938 = vmatpush1.msra.mxu0 0.0
  %2939 = vmatprep.subr.mxu0 0.0
  %2940 = vmatpush1.msra.mxu0 0.0
  %2941 = vmatprep.subr.mxu0 0.0
  %2942 = vmatpush1.msra.mxu0 0.0
  %2943 = vmatprep.subr.mxu0 0.0
  %2944 = vmatpush1.msra.mxu0 0.0
  %2945 = vmatprep.subr.mxu0 0.0
  %2946 = vmatpush1.msra.mxu0 0.0
  %2947 = vmatprep.subr.mxu0 0.0
  %2948 = vmatpush1.msra.mxu0 0.0
  %2949 = vmatprep.subr.mxu0 0.0
  %2950 = vmatpush1.msra.mxu0 0.0
  %2951 = vmatprep.subr.mxu0 0.0
  %2952 = vmatpush1.msra.mxu0 0.0
  %2953 = vmatprep.subr.mxu0 0.0
  %2954 = vmatpush1.msra.mxu0 0.0
  %2955 = vmatprep.subr.mxu0 0.0
  %2956 = vmatpush1.msra.mxu0 0.0
  %2957 = vmatprep.subr.mxu0 0.0
  %2958 = vmatpush1.msra.mxu0 0.0
  %2959 = vmatprep.subr.mxu0 0.0
  %2960 = vmatpush1.msra.mxu0 %v534
  %2961 = vmatprep.subr.mxu0 0.0
  %2962 = vmatpush2.msra.mxu0 0.0
  %2963 = vmatprep.subr.mxu0 0.0
  %2964 = vmatpush2.msra.mxu0 0.0
  %2965 = vmatprep.subr.mxu0 0.0
  %2966 = vmatpush2.msra.mxu0 0.0
  %2967 = vmatprep.subr.mxu0 0.0
  %2968 = vmatpush2.msra.mxu0 0.0
  %2969 = vmatprep.subr.mxu0 0.0
  %2970 = vmatpush2.msra.mxu0 0.0
  %2971 = vmatprep.subr.mxu0 0.0
  %2972 = vmatpush2.msra.mxu0 0.0
  %2973 = vmatprep.subr.mxu0 0.0
  %2974 = vmatpush2.msra.mxu0 0.0
  %2975 = vmatprep.subr.mxu0 0.0
  %2976 = vmatpush2.msra.mxu0 0.0
  %2977 = vmatprep.subr.mxu0 0.0
  %2978 = vmatpush2.msra.mxu0 0.0
  %2979 = vmatprep.subr.mxu0 0.0
  %2980 = vmatpush2.msra.mxu0 0.0
  %2981 = vmatprep.subr.mxu0 0.0
  %2982 = vmatpush2.msra.mxu0 0.0
  %2983 = vmatprep.subr.mxu0 0.0
  %2984 = vmatpush2.msra.mxu0 0.0
  %2985 = vmatprep.subr.mxu0 0.0
  %2986 = vmatpush2.msra.mxu0 0.0
  %2987 = vmatprep.subr.mxu0 0.0
  %2988 = vmatpush2.msra.mxu0 0.0
  %2989 = vmatprep.subr.mxu0 0.0
  %2990 = vmatpush2.msra.mxu0 0.0
  %2991 = vmatprep.subr.mxu0 0.0
  %2992 = vmatpush2.msra.mxu0 0.0
  %2993 = vmatprep.mubr.f32.mxu0 0.0
  %2994 = vmatmul.mubr.f32.gmra.mxu0 %v2501
  %v2995 = vpop.f32.mrf.mxu0
  %v2996 = vadd.f32 0.0, %v2995
  %v2997 = vpop.f32.mrf.mxu0
  %2998 = vdwg.mxu0
  %2999 = vmatprep.subr.mxu0 0.0
  %3000 = vmatpush1.msra.mxu0 0.0
  %3001 = vmatprep.subr.mxu0 0.0
  %3002 = vmatpush1.msra.mxu0 0.0
  %3003 = vmatprep.subr.mxu0 0.0
  %3004 = vmatpush1.msra.mxu0 0.0
  %3005 = vmatprep.subr.mxu0 0.0
  %3006 = vmatpush1.msra.mxu0 0.0
  %3007 = vmatprep.subr.mxu0 0.0
  %3008 = vmatpush1.msra.mxu0 0.0
  %3009 = vmatprep.subr.mxu0 0.0
  %3010 = vmatpush1.msra.mxu0 0.0
  %3011 = vmatprep.subr.mxu0 0.0
  %3012 = vmatpush1.msra.mxu0 0.0
  %3013 = vmatprep.subr.mxu0 0.0
  %3014 = vmatpush1.msra.mxu0 0.0
  %3015 = vmatprep.subr.mxu0 0.0
  %3016 = vmatpush1.msra.mxu0 0.0
  %3017 = vmatprep.subr.mxu0 0.0
  %3018 = vmatpush1.msra.mxu0 0.0
  %3019 = vmatprep.subr.mxu0 0.0
  %3020 = vmatpush1.msra.mxu0 0.0
  %3021 = vmatprep.subr.mxu0 0.0
  %3022 = vmatpush1.msra.mxu0 0.0
  %3023 = vmatprep.subr.mxu0 0.0
  %3024 = vmatpush1.msra.mxu0 0.0
  %3025 = vmatprep.subr.mxu0 0.0
  %3026 = vmatpush1.msra.mxu0 0.0
  %3027 = vmatprep.subr.mxu0 0.0
  %3028 = vmatpush1.msra.mxu0 0.0
  %3029 = vmatprep.subr.mxu0 0.0
  %3030 = vmatpush1.msra.mxu0 %v607
  %3031 = vmatprep.subr.mxu0 0.0
  %3032 = vmatpush2.msra.mxu0 0.0
  %3033 = vmatprep.subr.mxu0 0.0
  %3034 = vmatpush2.msra.mxu0 0.0
  %3035 = vmatprep.subr.mxu0 0.0
  %3036 = vmatpush2.msra.mxu0 0.0
  %3037 = vmatprep.subr.mxu0 0.0
  %3038 = vmatpush2.msra.mxu0 0.0
  %3039 = vmatprep.subr.mxu0 0.0
  %3040 = vmatpush2.msra.mxu0 0.0
  %3041 = vmatprep.subr.mxu0 0.0
  %3042 = vmatpush2.msra.mxu0 0.0
  %3043 = vmatprep.subr.mxu0 0.0
  %3044 = vmatpush2.msra.mxu0 0.0
  %3045 = vmatprep.subr.mxu0 0.0
  %3046 = vmatpush2.msra.mxu0 0.0
  %3047 = vmatprep.subr.mxu0 0.0
  %3048 = vmatpush2.msra.mxu0 0.0
  %3049 = vmatprep.subr.mxu0 0.0
  %3050 = vmatpush2.msra.mxu0 0.0
  %3051 = vmatprep.subr.mxu0 0.0
  %3052 = vmatpush2.msra.mxu0 0.0
  %3053 = vmatprep.subr.mxu0 0.0
  %3054 = vmatpush2.msra.mxu0 0.0
  %3055 = vmatprep.subr.mxu0 0.0
  %3056 = vmatpush2.msra.mxu0 0.0
  %3057 = vmatprep.subr.mxu0 0.0
  %3058 = vmatpush2.msra.mxu0 0.0
  %3059 = vmatprep.subr.mxu0 0.0
  %3060 = vmatpush2.msra.mxu0 0.0
  %3061 = vmatprep.subr.mxu0 0.0
  %3062 = vmatpush2.msra.mxu0 0.0
  %3063 = vmatprep.mubr.f32.mxu0 0.0
  %3064 = vmatmul.mubr.f32.gmra.mxu0 %v2574
  %v3065 = vpop.f32.mrf.mxu0
  %v3066 = vadd.f32 %v2996, %v3065
  %v3067 = vpop.f32.mrf.mxu0
  %3068 = vdwg.mxu0
  %v3069 = vadd.f32 %v3066, %v683
  %v3070 = vsub.f32 0.0, %v2646
  %v3071 = vmul.f32 %v3070, 1.442695
  %v3072 = vpow.pop %v3071
  %v3073 = vadd.f32 %v3072, 1.0
  %v3074 = vrcp.pop %v3073
  %v3075 = vmul.f32 1.0, %v3074
  %v3076 = vsub.f32 0.0, %v2787
  %v3077 = vmul.f32 %v3076, 1.442695
  %v3078 = vpow.pop %v3077
  %v3079 = vadd.f32 %v3078, 1.0
  %v3080 = vrcp.pop %v3079
  %v3081 = vmul.f32 1.0, %v3080
  %v3082 = vtanh.pop %v2928
  %v3083 = vsub.f32 0.0, %v3069
  %v3084 = vmul.f32 %v3083, 1.442695
  %v3085 = vpow.pop %v3084
  %v3086 = vadd.f32 %v3085, 1.0
  %v3087 = vrcp.pop %v3086
  %v3088 = vmul.f32 1.0, %v3087
  %v3089 = vmul.f32 %v3081, %v2495
  %v3090 = vmul.f32 %v3075, %v3082
  %v3091 = vadd.f32 %v3089, %v3090
  %v3092 = vtanh.pop %v3091
  %v3093 = vmul.f32 %v3088, %v3092
  %s3094 = scalar_lea.vmem %s0, 40
  %v3095 = vld [vmem:[%s3094] sm:$0xff]
  %v3097 = vsel %vm66, %v3093, 0
  %3099 = vmatprep.subr.mxu0 0.0
  %3100 = vmatpush1.msra.mxu0 0.0
  %3101 = vmatprep.subr.mxu0 0.0
  %3102 = vmatpush1.msra.mxu0 0.0
  %3103 = vmatprep.subr.mxu0 0.0
  %3104 = vmatpush1.msra.mxu0 0.0
  %3105 = vmatprep.subr.mxu0 0.0
  %3106 = vmatpush1.msra.mxu0 0.0
  %3107 = vmatprep.subr.mxu0 0.0
  %3108 = vmatpush1.msra.mxu0 0.0
  %3109 = vmatprep.subr.mxu0 0.0
  %3110 = vmatpush1.msra.mxu0 0.0
  %3111 = vmatprep.subr.mxu0 0.0
  %3112 = vmatpush1.msra.mxu0 0.0
  %3113 = vmatprep.subr.mxu0 0.0
  %3114 = vmatpush1.msra.mxu0 0.0
  %3115 = vmatprep.subr.mxu0 0.0
  %3116 = vmatpush1.msra.mxu0 0.0
  %3117 = vmatprep.subr.mxu0 0.0
  %3118 = vmatpush1.msra.mxu0 0.0
  %3119 = vmatprep.subr.mxu0 0.0
  %3120 = vmatpush1.msra.mxu0 0.0
  %3121 = vmatprep.subr.mxu0 0.0
  %3122 = vmatpush1.msra.mxu0 0.0
  %3123 = vmatprep.subr.mxu0 0.0
  %3124 = vmatpush1.msra.mxu0 0.0
  %3125 = vmatprep.subr.mxu0 0.0
  %3126 = vmatpush1.msra.mxu0 0.0
  %3127 = vmatprep.subr.mxu0 0.0
  %3128 = vmatpush1.msra.mxu0 0.0
  %3129 = vmatprep.subr.mxu0 0.0
  %3130 = vmatpush1.msra.mxu0 %v72
  %3131 = vmatprep.subr.mxu0 0.0
  %3132 = vmatpush2.msra.mxu0 0.0
  %3133 = vmatprep.subr.mxu0 0.0
  %3134 = vmatpush2.msra.mxu0 0.0
  %3135 = vmatprep.subr.mxu0 0.0
  %3136 = vmatpush2.msra.mxu0 0.0
  %3137 = vmatprep.subr.mxu0 0.0
  %3138 = vmatpush2.msra.mxu0 0.0
  %3139 = vmatprep.subr.mxu0 0.0
  %3140 = vmatpush2.msra.mxu0 0.0
  %3141 = vmatprep.subr.mxu0 0.0
  %3142 = vmatpush2.msra.mxu0 0.0
  %3143 = vmatprep.subr.mxu0 0.0
  %3144 = vmatpush2.msra.mxu0 0.0
  %3145 = vmatprep.subr.mxu0 0.0
  %3146 = vmatpush2.msra.mxu0 0.0
  %3147 = vmatprep.subr.mxu0 0.0
  %3148 = vmatpush2.msra.mxu0 0.0
  %3149 = vmatprep.subr.mxu0 0.0
  %3150 = vmatpush2.msra.mxu0 0.0
  %3151 = vmatprep.subr.mxu0 0.0
  %3152 = vmatpush2.msra.mxu0 0.0
  %3153 = vmatprep.subr.mxu0 0.0
  %3154 = vmatpush2.msra.mxu0 0.0
  %3155 = vmatprep.subr.mxu0 0.0
  %3156 = vmatpush2.msra.mxu0 0.0
  %3157 = vmatprep.subr.mxu0 0.0
  %3158 = vmatpush2.msra.mxu0 0.0
  %3159 = vmatprep.subr.mxu0 0.0
  %3160 = vmatpush2.msra.mxu0 0.0
  %3161 = vmatprep.subr.mxu0 0.0
  %3162 = vmatpush2.msra.mxu0 0.0
  %3163 = vmatprep.mubr.f32.mxu0 0.0
  %3164 = vmatmul.mubr.f32.gmra.mxu0 %v3097
  %v3165 = vpop.f32.mrf.mxu0
  %v3166 = vadd.f32 0.0, %v3165
  %v3167 = vpop.f32.mrf.mxu0
  %3168 = vdwg.mxu0
  %v3170 = vsel %vm66, %v3095, 0
  %3172 = vmatprep.subr.mxu0 0.0
  %3173 = vmatpush1.msra.mxu0 0.0
  %3174 = vmatprep.subr.mxu0 0.0
  %3175 = vmatpush1.msra.mxu0 0.0
  %3176 = vmatprep.subr.mxu0 0.0
  %3177 = vmatpush1.msra.mxu0 0.0
  %3178 = vmatprep.subr.mxu0 0.0
  %3179 = vmatpush1.msra.mxu0 0.0
  %3180 = vmatprep.subr.mxu0 0.0
  %3181 = vmatpush1.msra.mxu0 0.0
  %3182 = vmatprep.subr.mxu0 0.0
  %3183 = vmatpush1.msra.mxu0 0.0
  %3184 = vmatprep.subr.mxu0 0.0
  %3185 = vmatpush1.msra.mxu0 0.0
  %3186 = vmatprep.subr.mxu0 0.0
  %3187 = vmatpush1.msra.mxu0 0.0
  %3188 = vmatprep.subr.mxu0 0.0
  %3189 = vmatpush1.msra.mxu0 0.0
  %3190 = vmatprep.subr.mxu0 0.0
  %3191 = vmatpush1.msra.mxu0 0.0
  %3192 = vmatprep.subr.mxu0 0.0
  %3193 = vmatpush1.msra.mxu0 0.0
  %3194 = vmatprep.subr.mxu0 0.0
  %3195 = vmatpush1.msra.mxu0 0.0
  %3196 = vmatprep.subr.mxu0 0.0
  %3197 = vmatpush1.msra.mxu0 0.0
  %3198 = vmatprep.subr.mxu0 0.0
  %3199 = vmatpush1.msra.mxu0 0.0
  %3200 = vmatprep.subr.mxu0 0.0
  %3201 = vmatpush1.msra.mxu0 0.0
  %3202 = vmatprep.subr.mxu0 0.0
  %3203 = vmatpush1.msra.mxu0 %v148
  %3204 = vmatprep.subr.mxu0 0.0
  %3205 = vmatpush2.msra.mxu0 0.0
  %3206 = vmatprep.subr.mxu0 0.0
  %3207 = vmatpush2.msra.mxu0 0.0
  %3208 = vmatprep.subr.mxu0 0.0
  %3209 = vmatpush2.msra.mxu0 0.0
  %3210 = vmatprep.subr.mxu0 0.0
  %3211 = vmatpush2.msra.mxu0 0.0
  %3212 = vmatprep.subr.mxu0 0.0
  %3213 = vmatpush2.msra.mxu0 0.0
  %3214 = vmatprep.subr.mxu0 0.0
  %3215 = vmatpush2.msra.mxu0 0.0
  %3216 = vmatprep.subr.mxu0 0.0
  %3217 = vmatpush2.msra.mxu0 0.0
  %3218 = vmatprep.subr.mxu0 0.0
  %3219 = vmatpush2.msra.mxu0 0.0
  %3220 = vmatprep.subr.mxu0 0.0
  %3221 = vmatpush2.msra.mxu0 0.0
  %3222 = vmatprep.subr.mxu0 0.0
  %3223 = vmatpush2.msra.mxu0 0.0
  %3224 = vmatprep.subr.mxu0 0.0
  %3225 = vmatpush2.msra.mxu0 0.0
  %3226 = vmatprep.subr.mxu0 0.0
  %3227 = vmatpush2.msra.mxu0 0.0
  %3228 = vmatprep.subr.mxu0 0.0
  %3229 = vmatpush2.msra.mxu0 0.0
  %3230 = vmatprep.subr.mxu0 0.0
  %3231 = vmatpush2.msra.mxu0 0.0
  %3232 = vmatprep.subr.mxu0 0.0
  %3233 = vmatpush2.msra.mxu0 0.0
  %3234 = vmatprep.subr.mxu0 0.0
  %3235 = vmatpush2.msra.mxu0 0.0
  %3236 = vmatprep.mubr.f32.mxu0 0.0
  %3237 = vmatmul.mubr.f32.gmra.mxu0 %v3170
  %v3238 = vpop.f32.mrf.mxu0
  %v3239 = vadd.f32 %v3166, %v3238
  %v3240 = vpop.f32.mrf.mxu0
  %3241 = vdwg.mxu0
  %v3242 = vadd.f32 %v3239, %v224
  %3243 = vmatprep.subr.mxu0 0.0
  %3244 = vmatpush1.msra.mxu0 0.0
  %3245 = vmatprep.subr.mxu0 0.0
  %3246 = vmatpush1.msra.mxu0 0.0
  %3247 = vmatprep.subr.mxu0 0.0
  %3248 = vmatpush1.msra.mxu0 0.0
  %3249 = vmatprep.subr.mxu0 0.0
  %3250 = vmatpush1.msra.mxu0 0.0
  %3251 = vmatprep.subr.mxu0 0.0
  %3252 = vmatpush1.msra.mxu0 0.0
  %3253 = vmatprep.subr.mxu0 0.0
  %3254 = vmatpush1.msra.mxu0 0.0
  %3255 = vmatprep.subr.mxu0 0.0
  %3256 = vmatpush1.msra.mxu0 0.0
  %3257 = vmatprep.subr.mxu0 0.0
  %3258 = vmatpush1.msra.mxu0 0.0
  %3259 = vmatprep.subr.mxu0 0.0
  %3260 = vmatpush1.msra.mxu0 0.0
  %3261 = vmatprep.subr.mxu0 0.0
  %3262 = vmatpush1.msra.mxu0 0.0
  %3263 = vmatprep.subr.mxu0 0.0
  %3264 = vmatpush1.msra.mxu0 0.0
  %3265 = vmatprep.subr.mxu0 0.0
  %3266 = vmatpush1.msra.mxu0 0.0
  %3267 = vmatprep.subr.mxu0 0.0
  %3268 = vmatpush1.msra.mxu0 0.0
  %3269 = vmatprep.subr.mxu0 0.0
  %3270 = vmatpush1.msra.mxu0 0.0
  %3271 = vmatprep.subr.mxu0 0.0
  %3272 = vmatpush1.msra.mxu0 0.0
  %3273 = vmatprep.subr.mxu0 0.0
  %3274 = vmatpush1.msra.mxu0 %v228
  %3275 = vmatprep.subr.mxu0 0.0
  %3276 = vmatpush2.msra.mxu0 0.0
  %3277 = vmatprep.subr.mxu0 0.0
  %3278 = vmatpush2.msra.mxu0 0.0
  %3279 = vmatprep.subr.mxu0 0.0
  %3280 = vmatpush2.msra.mxu0 0.0
  %3281 = vmatprep.subr.mxu0 0.0
  %3282 = vmatpush2.msra.mxu0 0.0
  %3283 = vmatprep.subr.mxu0 0.0
  %3284 = vmatpush2.msra.mxu0 0.0
  %3285 = vmatprep.subr.mxu0 0.0
  %3286 = vmatpush2.msra.mxu0 0.0
  %3287 = vmatprep.subr.mxu0 0.0
  %3288 = vmatpush2.msra.mxu0 0.0
  %3289 = vmatprep.subr.mxu0 0.0
  %3290 = vmatpush2.msra.mxu0 0.0
  %3291 = vmatprep.subr.mxu0 0.0
  %3292 = vmatpush2.msra.mxu0 0.0
  %3293 = vmatprep.subr.mxu0 0.0
  %3294 = vmatpush2.msra.mxu0 0.0
  %3295 = vmatprep.subr.mxu0 0.0
  %3296 = vmatpush2.msra.mxu0 0.0
  %3297 = vmatprep.subr.mxu0 0.0
  %3298 = vmatpush2.msra.mxu0 0.0
  %3299 = vmatprep.subr.mxu0 0.0
  %3300 = vmatpush2.msra.mxu0 0.0
  %3301 = vmatprep.subr.mxu0 0.0
  %3302 = vmatpush2.msra.mxu0 0.0
  %3303 = vmatprep.subr.mxu0 0.0
  %3304 = vmatpush2.msra.mxu0 0.0
  %3305 = vmatprep.subr.mxu0 0.0
  %3306 = vmatpush2.msra.mxu0 0.0
  %3307 = vmatprep.mubr.f32.mxu0 0.0
  %3308 = vmatmul.mubr.f32.gmra.mxu0 %v3097
  %v3309 = vpop.f32.mrf.mxu0
  %v3310 = vadd.f32 0.0, %v3309
  %v3311 = vpop.f32.mrf.mxu0
  %3312 = vdwg.mxu0
  %3313 = vmatprep.subr.mxu0 0.0
  %3314 = vmatpush1.msra.mxu0 0.0
  %3315 = vmatprep.subr.mxu0 0.0
  %3316 = vmatpush1.msra.mxu0 0.0
  %3317 = vmatprep.subr.mxu0 0.0
  %3318 = vmatpush1.msra.mxu0 0.0
  %3319 = vmatprep.subr.mxu0 0.0
  %3320 = vmatpush1.msra.mxu0 0.0
  %3321 = vmatprep.subr.mxu0 0.0
  %3322 = vmatpush1.msra.mxu0 0.0
  %3323 = vmatprep.subr.mxu0 0.0
  %3324 = vmatpush1.msra.mxu0 0.0
  %3325 = vmatprep.subr.mxu0 0.0
  %3326 = vmatpush1.msra.mxu0 0.0
  %3327 = vmatprep.subr.mxu0 0.0
  %3328 = vmatpush1.msra.mxu0 0.0
  %3329 = vmatprep.subr.mxu0 0.0
  %3330 = vmatpush1.msra.mxu0 0.0
  %3331 = vmatprep.subr.mxu0 0.0
  %3332 = vmatpush1.msra.mxu0 0.0
  %3333 = vmatprep.subr.mxu0 0.0
  %3334 = vmatpush1.msra.mxu0 0.0
  %3335 = vmatprep.subr.mxu0 0.0
  %3336 = vmatpush1.msra.mxu0 0.0
  %3337 = vmatprep.subr.mxu0 0.0
  %3338 = vmatpush1.msra.mxu0 0.0
  %3339 = vmatprep.subr.mxu0 0.0
  %3340 = vmatpush1.msra.mxu0 0.0
  %3341 = vmatprep.subr.mxu0 0.0
  %3342 = vmatpush1.msra.mxu0 0.0
  %3343 = vmatprep.subr.mxu0 0.0
  %3344 = vmatpush1.msra.mxu0 %v301
  %3345 = vmatprep.subr.mxu0 0.0
  %3346 = vmatpush2.msra.mxu0 0.0
  %3347 = vmatprep.subr.mxu0 0.0
  %3348 = vmatpush2.msra.mxu0 0.0
  %3349 = vmatprep.subr.mxu0 0.0
  %3350 = vmatpush2.msra.mxu0 0.0
  %3351 = vmatprep.subr.mxu0 0.0
  %3352 = vmatpush2.msra.mxu0 0.0
  %3353 = vmatprep.subr.mxu0 0.0
  %3354 = vmatpush2.msra.mxu0 0.0
  %3355 = vmatprep.subr.mxu0 0.0
  %3356 = vmatpush2.msra.mxu0 0.0
  %3357 = vmatprep.subr.mxu0 0.0
  %3358 = vmatpush2.msra.mxu0 0.0
  %3359 = vmatprep.subr.mxu0 0.0
  %3360 = vmatpush2.msra.mxu0 0.0
  %3361 = vmatprep.subr.mxu0 0.0
  %3362 = vmatpush2.msra.mxu0 0.0
  %3363 = vmatprep.subr.mxu0 0.0
  %3364 = vmatpush2.msra.mxu0 0.0
  %3365 = vmatprep.subr.mxu0 0.0
  %3366 = vmatpush2.msra.mxu0 0.0
  %3367 = vmatprep.subr.mxu0 0.0
  %3368 = vmatpush2.msra.mxu0 0.0
  %3369 = vmatprep.subr.mxu0 0.0
  %3370 = vmatpush2.msra.mxu0 0.0
  %3371 = vmatprep.subr.mxu0 0.0
  %3372 = vmatpush2.msra.mxu0 0.0
  %3373 = vmatprep.subr.mxu0 0.0
  %3374 = vmatpush2.msra.mxu0 0.0
  %3375 = vmatprep.subr.mxu0 0.0
  %3376 = vmatpush2.msra.mxu0 0.0
  %3377 = vmatprep.mubr.f32.mxu0 0.0
  %3378 = vmatmul.mubr.f32.gmra.mxu0 %v3170
  %v3379 = vpop.f32.mrf.mxu0
  %v3380 = vadd.f32 %v3310, %v3379
  %v3381 = vpop.f32.mrf.mxu0
  %3382 = vdwg.mxu0
  %v3383 = vadd.f32 %v3380, %v377
  %3384 = vmatprep.subr.mxu0 0.0
  %3385 = vmatpush1.msra.mxu0 0.0
  %3386 = vmatprep.subr.mxu0 0.0
  %3387 = vmatpush1.msra.mxu0 0.0
  %3388 = vmatprep.subr.mxu0 0.0
  %3389 = vmatpush1.msra.mxu0 0.0
  %3390 = vmatprep.subr.mxu0 0.0
  %3391 = vmatpush1.msra.mxu0 0.0
  %3392 = vmatprep.subr.mxu0 0.0
  %3393 = vmatpush1.msra.mxu0 0.0
  %3394 = vmatprep.subr.mxu0 0.0
  %3395 = vmatpush1.msra.mxu0 0.0
  %3396 = vmatprep.subr.mxu0 0.0
  %3397 = vmatpush1.msra.mxu0 0.0
  %3398 = vmatprep.subr.mxu0 0.0
  %3399 = vmatpush1.msra.mxu0 0.0
  %3400 = vmatprep.subr.mxu0 0.0
  %3401 = vmatpush1.msra.mxu0 0.0
  %3402 = vmatprep.subr.mxu0 0.0
  %3403 = vmatpush1.msra.mxu0 0.0
  %3404 = vmatprep.subr.mxu0 0.0
  %3405 = vmatpush1.msra.mxu0 0.0
  %3406 = vmatprep.subr.mxu0 0.0
  %3407 = vmatpush1.msra.mxu0 0.0
  %3408 = vmatprep.subr.mxu0 0.0
  %3409 = vmatpush1.msra.mxu0 0.0
  %3410 = vmatprep.subr.mxu0 0.0
  %3411 = vmatpush1.msra.mxu0 0.0
  %3412 = vmatprep.subr.mxu0 0.0
  %3413 = vmatpush1.msra.mxu0 0.0
  %3414 = vmatprep.subr.mxu0 0.0
  %3415 = vmatpush1.msra.mxu0 %v381
  %3416 = vmatprep.subr.mxu0 0.0
  %3417 = vmatpush2.msra.mxu0 0.0
  %3418 = vmatprep.subr.mxu0 0.0
  %3419 = vmatpush2.msra.mxu0 0.0
  %3420 = vmatprep.subr.mxu0 0.0
  %3421 = vmatpush2.msra.mxu0 0.0
  %3422 = vmatprep.subr.mxu0 0.0
  %3423 = vmatpush2.msra.mxu0 0.0
  %3424 = vmatprep.subr.mxu0 0.0
  %3425 = vmatpush2.msra.mxu0 0.0
  %3426 = vmatprep.subr.mxu0 0.0
  %3427 = vmatpush2.msra.mxu0 0.0
  %3428 = vmatprep.subr.mxu0 0.0
  %3429 = vmatpush2.msra.mxu0 0.0
  %3430 = vmatprep.subr.mxu0 0.0
  %3431 = vmatpush2.msra.mxu0 0.0
  %3432 = vmatprep.subr.mxu0 0.0
  %3433 = vmatpush2.msra.mxu0 0.0
  %3434 = vmatprep.subr.mxu0 0.0
  %3435 = vmatpush2.msra.mxu0 0.0
  %3436 = vmatprep.subr.mxu0 0.0
  %3437 = vmatpush2.msra.mxu0 0.0
  %3438 = vmatprep.subr.mxu0 0.0
  %3439 = vmatpush2.msra.mxu0 0.0
  %3440 = vmatprep.subr.mxu0 0.0
  %3441 = vmatpush2.msra.mxu0 0.0
  %3442 = vmatprep.subr.mxu0 0.0
  %3443 = vmatpush2.msra.mxu0 0.0
  %3444 = vmatprep.subr.mxu0 0.0
  %3445 = vmatpush2.msra.mxu0 0.0
  %3446 = vmatprep.subr.mxu0 0.0
  %3447 = vmatpush2.msra.mxu0 0.0
  %3448 = vmatprep.mubr.f32.mxu0 0.0
  %3449 = vmatmul.mubr.f32.gmra.mxu0 %v3097
  %v3450 = vpop.f32.mrf.mxu0
  %v3451 = vadd.f32 0.0, %v3450
  %v3452 = vpop.f32.mrf.mxu0
  %3453 = vdwg.mxu0
  %3454 = vmatprep.subr.mxu0 0.0
  %3455 = vmatpush1.msra.mxu0 0.0
  %3456 = vmatprep.subr.mxu0 0.0
  %3457 = vmatpush1.msra.mxu0 0.0
  %3458 = vmatprep.subr.mxu0 0.0
  %3459 = vmatpush1.msra.mxu0 0.0
  %3460 = vmatprep.subr.mxu0 0.0
  %3461 = vmatpush1.msra.mxu0 0.0
  %3462 = vmatprep.subr.mxu0 0.0
  %3463 = vmatpush1.msra.mxu0 0.0
  %3464 = vmatprep.subr.mxu0 0.0
  %3465 = vmatpush1.msra.mxu0 0.0
  %3466 = vmatprep.subr.mxu0 0.0
  %3467 = vmatpush1.msra.mxu0 0.0
  %3468 = vmatprep.subr.mxu0 0.0
  %3469 = vmatpush1.msra.mxu0 0.0
  %3470 = vmatprep.subr.mxu0 0.0
  %3471 = vmatpush1.msra.mxu0 0.0
  %3472 = vmatprep.subr.mxu0 0.0
  %3473 = vmatpush1.msra.mxu0 0.0
  %3474 = vmatprep.subr.mxu0 0.0
  %3475 = vmatpush1.msra.mxu0 0.0
  %3476 = vmatprep.subr.mxu0 0.0
  %3477 = vmatpush1.msra.mxu0 0.0
  %3478 = vmatprep.subr.mxu0 0.0
  %3479 = vmatpush1.msra.mxu0 0.0
  %3480 = vmatprep.subr.mxu0 0.0
  %3481 = vmatpush1.msra.mxu0 0.0
  %3482 = vmatprep.subr.mxu0 0.0
  %3483 = vmatpush1.msra.mxu0 0.0
  %3484 = vmatprep.subr.mxu0 0.0
  %3485 = vmatpush1.msra.mxu0 %v454
  %3486 = vmatprep.subr.mxu0 0.0
  %3487 = vmatpush2.msra.mxu0 0.0
  %3488 = vmatprep.subr.mxu0 0.0
  %3489 = vmatpush2.msra.mxu0 0.0
  %3490 = vmatprep.subr.mxu0 0.0
  %3491 = vmatpush2.msra.mxu0 0.0
  %3492 = vmatprep.subr.mxu0 0.0
  %3493 = vmatpush2.msra.mxu0 0.0
  %3494 = vmatprep.subr.mxu0 0.0
  %3495 = vmatpush2.msra.mxu0 0.0
  %3496 = vmatprep.subr.mxu0 0.0
  %3497 = vmatpush2.msra.mxu0 0.0
  %3498 = vmatprep.subr.mxu0 0.0
  %3499 = vmatpush2.msra.mxu0 0.0
  %3500 = vmatprep.subr.mxu0 0.0
  %3501 = vmatpush2.msra.mxu0 0.0
  %3502 = vmatprep.subr.mxu0 0.0
  %3503 = vmatpush2.msra.mxu0 0.0
  %3504 = vmatprep.subr.mxu0 0.0
  %3505 = vmatpush2.msra.mxu0 0.0
  %3506 = vmatprep.subr.mxu0 0.0
  %3507 = vmatpush2.msra.mxu0 0.0
  %3508 = vmatprep.subr.mxu0 0.0
  %3509 = vmatpush2.msra.mxu0 0.0
  %3510 = vmatprep.subr.mxu0 0.0
  %3511 = vmatpush2.msra.mxu0 0.0
  %3512 = vmatprep.subr.mxu0 0.0
  %3513 = vmatpush2.msra.mxu0 0.0
  %3514 = vmatprep.subr.mxu0 0.0
  %3515 = vmatpush2.msra.mxu0 0.0
  %3516 = vmatprep.subr.mxu0 0.0
  %3517 = vmatpush2.msra.mxu0 0.0
  %3518 = vmatprep.mubr.f32.mxu0 0.0
  %3519 = vmatmul.mubr.f32.gmra.mxu0 %v3170
  %v3520 = vpop.f32.mrf.mxu0
  %v3521 = vadd.f32 %v3451, %v3520
  %v3522 = vpop.f32.mrf.mxu0
  %3523 = vdwg.mxu0
  %v3524 = vadd.f32 %v3521, %v530
  %3525 = vmatprep.subr.mxu0 0.0
  %3526 = vmatpush1.msra.mxu0 0.0
  %3527 = vmatprep.subr.mxu0 0.0
  %3528 = vmatpush1.msra.mxu0 0.0
  %3529 = vmatprep.subr.mxu0 0.0
  %3530 = vmatpush1.msra.mxu0 0.0
  %3531 = vmatprep.subr.mxu0 0.0
  %3532 = vmatpush1.msra.mxu0 0.0
  %3533 = vmatprep.subr.mxu0 0.0
  %3534 = vmatpush1.msra.mxu0 0.0
  %3535 = vmatprep.subr.mxu0 0.0
  %3536 = vmatpush1.msra.mxu0 0.0
  %3537 = vmatprep.subr.mxu0 0.0
  %3538 = vmatpush1.msra.mxu0 0.0
  %3539 = vmatprep.subr.mxu0 0.0
  %3540 = vmatpush1.msra.mxu0 0.0
  %3541 = vmatprep.subr.mxu0 0.0
  %3542 = vmatpush1.msra.mxu0 0.0
  %3543 = vmatprep.subr.mxu0 0.0
  %3544 = vmatpush1.msra.mxu0 0.0
  %3545 = vmatprep.subr.mxu0 0.0
  %3546 = vmatpush1.msra.mxu0 0.0
  %3547 = vmatprep.subr.mxu0 0.0
  %3548 = vmatpush1.msra.mxu0 0.0
  %3549 = vmatprep.subr.mxu0 0.0
  %3550 = vmatpush1.msra.mxu0 0.0
  %3551 = vmatprep.subr.mxu0 0.0
  %3552 = vmatpush1.msra.mxu0 0.0
  %3553 = vmatprep.subr.mxu0 0.0
  %3554 = vmatpush1.msra.mxu0 0.0
  %3555 = vmatprep.subr.mxu0 0.0
  %3556 = vmatpush1.msra.mxu0 %v534
  %3557 = vmatprep.subr.mxu0 0.0
  %3558 = vmatpush2.msra.mxu0 0.0
  %3559 = vmatprep.subr.mxu0 0.0
  %3560 = vmatpush2.msra.mxu0 0.0
  %3561 = vmatprep.subr.mxu0 0.0
  %3562 = vmatpush2.msra.mxu0 0.0
  %3563 = vmatprep.subr.mxu0 0.0
  %3564 = vmatpush2.msra.mxu0 0.0
  %3565 = vmatprep.subr.mxu0 0.0
  %3566 = vmatpush2.msra.mxu0 0.0
  %3567 = vmatprep.subr.mxu0 0.0
  %3568 = vmatpush2.msra.mxu0 0.0
  %3569 = vmatprep.subr.mxu0 0.0
  %3570 = vmatpush2.msra.mxu0 0.0
  %3571 = vmatprep.subr.mxu0 0.0
  %3572 = vmatpush2.msra.mxu0 0.0
  %3573 = vmatprep.subr.mxu0 0.0
  %3574 = vmatpush2.msra.mxu0 0.0
  %3575 = vmatprep.subr.mxu0 0.0
  %3576 = vmatpush2.msra.mxu0 0.0
  %3577 = vmatprep.subr.mxu0 0.0
  %3578 = vmatpush2.msra.mxu0 0.0
  %3579 = vmatprep.subr.mxu0 0.0
  %3580 = vmatpush2.msra.mxu0 0.0
  %3581 = vmatprep.subr.mxu0 0.0
  %3582 = vmatpush2.msra.mxu0 0.0
  %3583 = vmatprep.subr.mxu0 0.0
  %3584 = vmatpush2.msra.mxu0 0.0
  %3585 = vmatprep.subr.mxu0 0.0
  %3586 = vmatpush2.msra.mxu0 0.0
  %3587 = vmatprep.subr.mxu0 0.0
  %3588 = vmatpush2.msra.mxu0 0.0
  %3589 = vmatprep.mubr.f32.mxu0 0.0
  %3590 = vmatmul.mubr.f32.gmra.mxu0 %v3097
  %v3591 = vpop.f32.mrf.mxu0
  %v3592 = vadd.f32 0.0, %v3591
  %v3593 = vpop.f32.mrf.mxu0
  %3594 = vdwg.mxu0
  %3595 = vmatprep.subr.mxu0 0.0
  %3596 = vmatpush1.msra.mxu0 0.0
  %3597 = vmatprep.subr.mxu0 0.0
  %3598 = vmatpush1.msra.mxu0 0.0
  %3599 = vmatprep.subr.mxu0 0.0
  %3600 = vmatpush1.msra.mxu0 0.0
  %3601 = vmatprep.subr.mxu0 0.0
  %3602 = vmatpush1.msra.mxu0 0.0
  %3603 = vmatprep.subr.mxu0 0.0
  %3604 = vmatpush1.msra.mxu0 0.0
  %3605 = vmatprep.subr.mxu0 0.0
  %3606 = vmatpush1.msra.mxu0 0.0
  %3607 = vmatprep.subr.mxu0 0.0
  %3608 = vmatpush1.msra.mxu0 0.0
  %3609 = vmatprep.subr.mxu0 0.0
  %3610 = vmatpush1.msra.mxu0 0.0
  %3611 = vmatprep.subr.mxu0 0.0
  %3612 = vmatpush1.msra.mxu0 0.0
  %3613 = vmatprep.subr.mxu0 0.0
  %3614 = vmatpush1.msra.mxu0 0.0
  %3615 = vmatprep.subr.mxu0 0.0
  %3616 = vmatpush1.msra.mxu0 0.0
  %3617 = vmatprep.subr.mxu0 0.0
  %3618 = vmatpush1.msra.mxu0 0.0
  %3619 = vmatprep.subr.mxu0 0.0
  %3620 = vmatpush1.msra.mxu0 0.0
  %3621 = vmatprep.subr.mxu0 0.0
  %3622 = vmatpush1.msra.mxu0 0.0
  %3623 = vmatprep.subr.mxu0 0.0
  %3624 = vmatpush1.msra.mxu0 0.0
  %3625 = vmatprep.subr.mxu0 0.0
  %3626 = vmatpush1.msra.mxu0 %v607
  %3627 = vmatprep.subr.mxu0 0.0
  %3628 = vmatpush2.msra.mxu0 0.0
  %3629 = vmatprep.subr.mxu0 0.0
  %3630 = vmatpush2.msra.mxu0 0.0
  %3631 = vmatprep.subr.mxu0 0.0
  %3632 = vmatpush2.msra.mxu0 0.0
  %3633 = vmatprep.subr.mxu0 0.0
  %3634 = vmatpush2.msra.mxu0 0.0
  %3635 = vmatprep.subr.mxu0 0.0
  %3636 = vmatpush2.msra.mxu0 0.0
  %3637 = vmatprep.subr.mxu0 0.0
  %3638 = vmatpush2.msra.mxu0 0.0
  %3639 = vmatprep.subr.mxu0 0.0
  %3640 = vmatpush2.msra.mxu0 0.0
  %3641 = vmatprep.subr.mxu0 0.0
  %3642 = vmatpush2.msra.mxu0 0.0
  %3643 = vmatprep.subr.mxu0 0.0
  %3644 = vmatpush2.msra.mxu0 0.0
  %3645 = vmatprep.subr.mxu0 0.0
  %3646 = vmatpush2.msra.mxu0 0.0
  %3647 = vmatprep.subr.mxu0 0.0
  %3648 = vmatpush2.msra.mxu0 0.0
  %3649 = vmatprep.subr.mxu0 0.0
  %3650 = vmatpush2.msra.mxu0 0.0
  %3651 = vmatprep.subr.mxu0 0.0
  %3652 = vmatpush2.msra.mxu0 0.0
  %3653 = vmatprep.subr.mxu0 0.0
  %3654 = vmatpush2.msra.mxu0 0.0
  %3655 = vmatprep.subr.mxu0 0.0
  %3656 = vmatpush2.msra.mxu0 0.0
  %3657 = vmatprep.subr.mxu0 0.0
  %3658 = vmatpush2.msra.mxu0 0.0
  %3659 = vmatprep.mubr.f32.mxu0 0.0
  %3660 = vmatmul.mubr.f32.gmra.mxu0 %v3170
  %v3661 = vpop.f32.mrf.mxu0
  %v3662 = vadd.f32 %v3592, %v3661
  %v3663 = vpop.f32.mrf.mxu0
  %3664 = vdwg.mxu0
  %v3665 = vadd.f32 %v3662, %v683
  %v3666 = vsub.f32 0.0, %v3242
  %v3667 = vmul.f32 %v3666, 1.442695
  %v3668 = vpow.pop %v3667
  %v3669 = vadd.f32 %v3668, 1.0
  %v3670 = vrcp.pop %v3669
  %v3671 = vmul.f32 1.0, %v3670
  %v3672 = vsub.f32 0.0, %v3383
  %v3673 = vmul.f32 %v3672, 1.442695
  %v3674 = vpow.pop %v3673
  %v3675 = vadd.f32 %v3674, 1.0
  %v3676 = vrcp.pop %v3675
  %v3677 = vmul.f32 1.0, %v3676
  %v3678 = vtanh.pop %v3524
  %v3679 = vsub.f32 0.0, %v3665
  %v3680 = vmul.f32 %v3679, 1.442695
  %v3681 = vpow.pop %v3680
  %v3682 = vadd.f32 %v3681, 1.0
  %v3683 = vrcp.pop %v3682
  %v3684 = vmul.f32 1.0, %v3683
  %v3685 = vmul.f32 %v3677, %v3091
  %v3686 = vmul.f32 %v3671, %v3678
  %v3687 = vadd.f32 %v3685, %v3686
  %v3688 = vtanh.pop %v3687
  %v3689 = vmul.f32 %v3684, %v3688
  %s3690 = scalar_lea.vmem %s0, 48
  %v3691 = vld [vmem:[%s3690] sm:$0xff]
  %v3693 = vsel %vm66, %v3689, 0
  %3695 = vmatprep.subr.mxu0 0.0
  %3696 = vmatpush1.msra.mxu0 0.0
  %3697 = vmatprep.subr.mxu0 0.0
  %3698 = vmatpush1.msra.mxu0 0.0
  %3699 = vmatprep.subr.mxu0 0.0
  %3700 = vmatpush1.msra.mxu0 0.0
  %3701 = vmatprep.subr.mxu0 0.0
  %3702 = vmatpush1.msra.mxu0 0.0
  %3703 = vmatprep.subr.mxu0 0.0
  %3704 = vmatpush1.msra.mxu0 0.0
  %3705 = vmatprep.subr.mxu0 0.0
  %3706 = vmatpush1.msra.mxu0 0.0
  %3707 = vmatprep.subr.mxu0 0.0
  %3708 = vmatpush1.msra.mxu0 0.0
  %3709 = vmatprep.subr.mxu0 0.0
  %3710 = vmatpush1.msra.mxu0 0.0
  %3711 = vmatprep.subr.mxu0 0.0
  %3712 = vmatpush1.msra.mxu0 0.0
  %3713 = vmatprep.subr.mxu0 0.0
  %3714 = vmatpush1.msra.mxu0 0.0
  %3715 = vmatprep.subr.mxu0 0.0
  %3716 = vmatpush1.msra.mxu0 0.0
  %3717 = vmatprep.subr.mxu0 0.0
  %3718 = vmatpush1.msra.mxu0 0.0
  %3719 = vmatprep.subr.mxu0 0.0
  %3720 = vmatpush1.msra.mxu0 0.0
  %3721 = vmatprep.subr.mxu0 0.0
  %3722 = vmatpush1.msra.mxu0 0.0
  %3723 = vmatprep.subr.mxu0 0.0
  %3724 = vmatpush1.msra.mxu0 0.0
  %3725 = vmatprep.subr.mxu0 0.0
  %3726 = vmatpush1.msra.mxu0 %v72
  %3727 = vmatprep.subr.mxu0 0.0
  %3728 = vmatpush2.msra.mxu0 0.0
  %3729 = vmatprep.subr.mxu0 0.0
  %3730 = vmatpush2.msra.mxu0 0.0
  %3731 = vmatprep.subr.mxu0 0.0
  %3732 = vmatpush2.msra.mxu0 0.0
  %3733 = vmatprep.subr.mxu0 0.0
  %3734 = vmatpush2.msra.mxu0 0.0
  %3735 = vmatprep.subr.mxu0 0.0
  %3736 = vmatpush2.msra.mxu0 0.0
  %3737 = vmatprep.subr.mxu0 0.0
  %3738 = vmatpush2.msra.mxu0 0.0
  %3739 = vmatprep.subr.mxu0 0.0
  %3740 = vmatpush2.msra.mxu0 0.0
  %3741 = vmatprep.subr.mxu0 0.0
  %3742 = vmatpush2.msra.mxu0 0.0
  %3743 = vmatprep.subr.mxu0 0.0
  %3744 = vmatpush2.msra.mxu0 0.0
  %3745 = vmatprep.subr.mxu0 0.0
  %3746 = vmatpush2.msra.mxu0 0.0
  %3747 = vmatprep.subr.mxu0 0.0
  %3748 = vmatpush2.msra.mxu0 0.0
  %3749 = vmatprep.subr.mxu0 0.0
  %3750 = vmatpush2.msra.mxu0 0.0
  %3751 = vmatprep.subr.mxu0 0.0
  %3752 = vmatpush2.msra.mxu0 0.0
  %3753 = vmatprep.subr.mxu0 0.0
  %3754 = vmatpush2.msra.mxu0 0.0
  %3755 = vmatprep.subr.mxu0 0.0
  %3756 = vmatpush2.msra.mxu0 0.0
  %3757 = vmatprep.subr.mxu0 0.0
  %3758 = vmatpush2.msra.mxu0 0.0
  %3759 = vmatprep.mubr.f32.mxu0 0.0
  %3760 = vmatmul.mubr.f32.gmra.mxu0 %v3693
  %v3761 = vpop.f32.mrf.mxu0
  %v3762 = vadd.f32 0.0, %v3761
  %v3763 = vpop.f32.mrf.mxu0
  %3764 = vdwg.mxu0
  %v3766 = vsel %vm66, %v3691, 0
  %3768 = vmatprep.subr.mxu0 0.0
  %3769 = vmatpush1.msra.mxu0 0.0
  %3770 = vmatprep.subr.mxu0 0.0
  %3771 = vmatpush1.msra.mxu0 0.0
  %3772 = vmatprep.subr.mxu0 0.0
  %3773 = vmatpush1.msra.mxu0 0.0
  %3774 = vmatprep.subr.mxu0 0.0
  %3775 = vmatpush1.msra.mxu0 0.0
  %3776 = vmatprep.subr.mxu0 0.0
  %3777 = vmatpush1.msra.mxu0 0.0
  %3778 = vmatprep.subr.mxu0 0.0
  %3779 = vmatpush1.msra.mxu0 0.0
  %3780 = vmatprep.subr.mxu0 0.0
  %3781 = vmatpush1.msra.mxu0 0.0
  %3782 = vmatprep.subr.mxu0 0.0
  %3783 = vmatpush1.msra.mxu0 0.0
  %3784 = vmatprep.subr.mxu0 0.0
  %3785 = vmatpush1.msra.mxu0 0.0
  %3786 = vmatprep.subr.mxu0 0.0
  %3787 = vmatpush1.msra.mxu0 0.0
  %3788 = vmatprep.subr.mxu0 0.0
  %3789 = vmatpush1.msra.mxu0 0.0
  %3790 = vmatprep.subr.mxu0 0.0
  %3791 = vmatpush1.msra.mxu0 0.0
  %3792 = vmatprep.subr.mxu0 0.0
  %3793 = vmatpush1.msra.mxu0 0.0
  %3794 = vmatprep.subr.mxu0 0.0
  %3795 = vmatpush1.msra.mxu0 0.0
  %3796 = vmatprep.subr.mxu0 0.0
  %3797 = vmatpush1.msra.mxu0 0.0
  %3798 = vmatprep.subr.mxu0 0.0
  %3799 = vmatpush1.msra.mxu0 %v148
  %3800 = vmatprep.subr.mxu0 0.0
  %3801 = vmatpush2.msra.mxu0 0.0
  %3802 = vmatprep.subr.mxu0 0.0
  %3803 = vmatpush2.msra.mxu0 0.0
  %3804 = vmatprep.subr.mxu0 0.0
  %3805 = vmatpush2.msra.mxu0 0.0
  %3806 = vmatprep.subr.mxu0 0.0
  %3807 = vmatpush2.msra.mxu0 0.0
  %3808 = vmatprep.subr.mxu0 0.0
  %3809 = vmatpush2.msra.mxu0 0.0
  %3810 = vmatprep.subr.mxu0 0.0
  %3811 = vmatpush2.msra.mxu0 0.0
  %3812 = vmatprep.subr.mxu0 0.0
  %3813 = vmatpush2.msra.mxu0 0.0
  %3814 = vmatprep.subr.mxu0 0.0
  %3815 = vmatpush2.msra.mxu0 0.0
  %3816 = vmatprep.subr.mxu0 0.0
  %3817 = vmatpush2.msra.mxu0 0.0
  %3818 = vmatprep.subr.mxu0 0.0
  %3819 = vmatpush2.msra.mxu0 0.0
  %3820 = vmatprep.subr.mxu0 0.0
  %3821 = vmatpush2.msra.mxu0 0.0
  %3822 = vmatprep.subr.mxu0 0.0
  %3823 = vmatpush2.msra.mxu0 0.0
  %3824 = vmatprep.subr.mxu0 0.0
  %3825 = vmatpush2.msra.mxu0 0.0
  %3826 = vmatprep.subr.mxu0 0.0
  %3827 = vmatpush2.msra.mxu0 0.0
  %3828 = vmatprep.subr.mxu0 0.0
  %3829 = vmatpush2.msra.mxu0 0.0
  %3830 = vmatprep.subr.mxu0 0.0
  %3831 = vmatpush2.msra.mxu0 0.0
  %3832 = vmatprep.mubr.f32.mxu0 0.0
  %3833 = vmatmul.mubr.f32.gmra.mxu0 %v3766
  %v3834 = vpop.f32.mrf.mxu0
  %v3835 = vadd.f32 %v3762, %v3834
  %v3836 = vpop.f32.mrf.mxu0
  %3837 = vdwg.mxu0
  %v3838 = vadd.f32 %v3835, %v224
  %3839 = vmatprep.subr.mxu0 0.0
  %3840 = vmatpush1.msra.mxu0 0.0
  %3841 = vmatprep.subr.mxu0 0.0
  %3842 = vmatpush1.msra.mxu0 0.0
  %3843 = vmatprep.subr.mxu0 0.0
  %3844 = vmatpush1.msra.mxu0 0.0
  %3845 = vmatprep.subr.mxu0 0.0
  %3846 = vmatpush1.msra.mxu0 0.0
  %3847 = vmatprep.subr.mxu0 0.0
  %3848 = vmatpush1.msra.mxu0 0.0
  %3849 = vmatprep.subr.mxu0 0.0
  %3850 = vmatpush1.msra.mxu0 0.0
  %3851 = vmatprep.subr.mxu0 0.0
  %3852 = vmatpush1.msra.mxu0 0.0
  %3853 = vmatprep.subr.mxu0 0.0
  %3854 = vmatpush1.msra.mxu0 0.0
  %3855 = vmatprep.subr.mxu0 0.0
  %3856 = vmatpush1.msra.mxu0 0.0
  %3857 = vmatprep.subr.mxu0 0.0
  %3858 = vmatpush1.msra.mxu0 0.0
  %3859 = vmatprep.subr.mxu0 0.0
  %3860 = vmatpush1.msra.mxu0 0.0
  %3861 = vmatprep.subr.mxu0 0.0
  %3862 = vmatpush1.msra.mxu0 0.0
  %3863 = vmatprep.subr.mxu0 0.0
  %3864 = vmatpush1.msra.mxu0 0.0
  %3865 = vmatprep.subr.mxu0 0.0
  %3866 = vmatpush1.msra.mxu0 0.0
  %3867 = vmatprep.subr.mxu0 0.0
  %3868 = vmatpush1.msra.mxu0 0.0
  %3869 = vmatprep.subr.mxu0 0.0
  %3870 = vmatpush1.msra.mxu0 %v228
  %3871 = vmatprep.subr.mxu0 0.0
  %3872 = vmatpush2.msra.mxu0 0.0
  %3873 = vmatprep.subr.mxu0 0.0
  %3874 = vmatpush2.msra.mxu0 0.0
  %3875 = vmatprep.subr.mxu0 0.0
  %3876 = vmatpush2.msra.mxu0 0.0
  %3877 = vmatprep.subr.mxu0 0.0
  %3878 = vmatpush2.msra.mxu0 0.0
  %3879 = vmatprep.subr.mxu0 0.0
  %3880 = vmatpush2.msra.mxu0 0.0
  %3881 = vmatprep.subr.mxu0 0.0
  %3882 = vmatpush2.msra.mxu0 0.0
  %3883 = vmatprep.subr.mxu0 0.0
  %3884 = vmatpush2.msra.mxu0 0.0
  %3885 = vmatprep.subr.mxu0 0.0
  %3886 = vmatpush2.msra.mxu0 0.0
  %3887 = vmatprep.subr.mxu0 0.0
  %3888 = vmatpush2.msra.mxu0 0.0
  %3889 = vmatprep.subr.mxu0 0.0
  %3890 = vmatpush2.msra.mxu0 0.0
  %3891 = vmatprep.subr.mxu0 0.0
  %3892 = vmatpush2.msra.mxu0 0.0
  %3893 = vmatprep.subr.mxu0 0.0
  %3894 = vmatpush2.msra.mxu0 0.0
  %3895 = vmatprep.subr.mxu0 0.0
  %3896 = vmatpush2.msra.mxu0 0.0
  %3897 = vmatprep.subr.mxu0 0.0
  %3898 = vmatpush2.msra.mxu0 0.0
  %3899 = vmatprep.subr.mxu0 0.0
  %3900 = vmatpush2.msra.mxu0 0.0
  %3901 = vmatprep.subr.mxu0 0.0
  %3902 = vmatpush2.msra.mxu0 0.0
  %3903 = vmatprep.mubr.f32.mxu0 0.0
  %3904 = vmatmul.mubr.f32.gmra.mxu0 %v3693
  %v3905 = vpop.f32.mrf.mxu0
  %v3906 = vadd.f32 0.0, %v3905
  %v3907 = vpop.f32.mrf.mxu0
  %3908 = vdwg.mxu0
  %3909 = vmatprep.subr.mxu0 0.0
  %3910 = vmatpush1.msra.mxu0 0.0
  %3911 = vmatprep.subr.mxu0 0.0
  %3912 = vmatpush1.msra.mxu0 0.0
  %3913 = vmatprep.subr.mxu0 0.0
  %3914 = vmatpush1.msra.mxu0 0.0
  %3915 = vmatprep.subr.mxu0 0.0
  %3916 = vmatpush1.msra.mxu0 0.0
  %3917 = vmatprep.subr.mxu0 0.0
  %3918 = vmatpush1.msra.mxu0 0.0
  %3919 = vmatprep.subr.mxu0 0.0
  %3920 = vmatpush1.msra.mxu0 0.0
  %3921 = vmatprep.subr.mxu0 0.0
  %3922 = vmatpush1.msra.mxu0 0.0
  %3923 = vmatprep.subr.mxu0 0.0
  %3924 = vmatpush1.msra.mxu0 0.0
  %3925 = vmatprep.subr.mxu0 0.0
  %3926 = vmatpush1.msra.mxu0 0.0
  %3927 = vmatprep.subr.mxu0 0.0
  %3928 = vmatpush1.msra.mxu0 0.0
  %3929 = vmatprep.subr.mxu0 0.0
  %3930 = vmatpush1.msra.mxu0 0.0
  %3931 = vmatprep.subr.mxu0 0.0
  %3932 = vmatpush1.msra.mxu0 0.0
  %3933 = vmatprep.subr.mxu0 0.0
  %3934 = vmatpush1.msra.mxu0 0.0
  %3935 = vmatprep.subr.mxu0 0.0
  %3936 = vmatpush1.msra.mxu0 0.0
  %3937 = vmatprep.subr.mxu0 0.0
  %3938 = vmatpush1.msra.mxu0 0.0
  %3939 = vmatprep.subr.mxu0 0.0
  %3940 = vmatpush1.msra.mxu0 %v301
  %3941 = vmatprep.subr.mxu0 0.0
  %3942 = vmatpush2.msra.mxu0 0.0
  %3943 = vmatprep.subr.mxu0 0.0
  %3944 = vmatpush2.msra.mxu0 0.0
  %3945 = vmatprep.subr.mxu0 0.0
  %3946 = vmatpush2.msra.mxu0 0.0
  %3947 = vmatprep.subr.mxu0 0.0
  %3948 = vmatpush2.msra.mxu0 0.0
  %3949 = vmatprep.subr.mxu0 0.0
  %3950 = vmatpush2.msra.mxu0 0.0
  %3951 = vmatprep.subr.mxu0 0.0
  %3952 = vmatpush2.msra.mxu0 0.0
  %3953 = vmatprep.subr.mxu0 0.0
  %3954 = vmatpush2.msra.mxu0 0.0
  %3955 = vmatprep.subr.mxu0 0.0
  %3956 = vmatpush2.msra.mxu0 0.0
  %3957 = vmatprep.subr.mxu0 0.0
  %3958 = vmatpush2.msra.mxu0 0.0
  %3959 = vmatprep.subr.mxu0 0.0
  %3960 = vmatpush2.msra.mxu0 0.0
  %3961 = vmatprep.subr.mxu0 0.0
  %3962 = vmatpush2.msra.mxu0 0.0
  %3963 = vmatprep.subr.mxu0 0.0
  %3964 = vmatpush2.msra.mxu0 0.0
  %3965 = vmatprep.subr.mxu0 0.0
  %3966 = vmatpush2.msra.mxu0 0.0
  %3967 = vmatprep.subr.mxu0 0.0
  %3968 = vmatpush2.msra.mxu0 0.0
  %3969 = vmatprep.subr.mxu0 0.0
  %3970 = vmatpush2.msra.mxu0 0.0
  %3971 = vmatprep.subr.mxu0 0.0
  %3972 = vmatpush2.msra.mxu0 0.0
  %3973 = vmatprep.mubr.f32.mxu0 0.0
  %3974 = vmatmul.mubr.f32.gmra.mxu0 %v3766
  %v3975 = vpop.f32.mrf.mxu0
  %v3976 = vadd.f32 %v3906, %v3975
  %v3977 = vpop.f32.mrf.mxu0
  %3978 = vdwg.mxu0
  %v3979 = vadd.f32 %v3976, %v377
  %3980 = vmatprep.subr.mxu0 0.0
  %3981 = vmatpush1.msra.mxu0 0.0
  %3982 = vmatprep.subr.mxu0 0.0
  %3983 = vmatpush1.msra.mxu0 0.0
  %3984 = vmatprep.subr.mxu0 0.0
  %3985 = vmatpush1.msra.mxu0 0.0
  %3986 = vmatprep.subr.mxu0 0.0
  %3987 = vmatpush1.msra.mxu0 0.0
  %3988 = vmatprep.subr.mxu0 0.0
  %3989 = vmatpush1.msra.mxu0 0.0
  %3990 = vmatprep.subr.mxu0 0.0
  %3991 = vmatpush1.msra.mxu0 0.0
  %3992 = vmatprep.subr.mxu0 0.0
  %3993 = vmatpush1.msra.mxu0 0.0
  %3994 = vmatprep.subr.mxu0 0.0
  %3995 = vmatpush1.msra.mxu0 0.0
  %3996 = vmatprep.subr.mxu0 0.0
  %3997 = vmatpush1.msra.mxu0 0.0
  %3998 = vmatprep.subr.mxu0 0.0
  %3999 = vmatpush1.msra.mxu0 0.0
  %4000 = vmatprep.subr.mxu0 0.0
  %4001 = vmatpush1.msra.mxu0 0.0
  %4002 = vmatprep.subr.mxu0 0.0
  %4003 = vmatpush1.msra.mxu0 0.0
  %4004 = vmatprep.subr.mxu0 0.0
  %4005 = vmatpush1.msra.mxu0 0.0
  %4006 = vmatprep.subr.mxu0 0.0
  %4007 = vmatpush1.msra.mxu0 0.0
  %4008 = vmatprep.subr.mxu0 0.0
  %4009 = vmatpush1.msra.mxu0 0.0
  %4010 = vmatprep.subr.mxu0 0.0
  %4011 = vmatpush1.msra.mxu0 %v381
  %4012 = vmatprep.subr.mxu0 0.0
  %4013 = vmatpush2.msra.mxu0 0.0
  %4014 = vmatprep.subr.mxu0 0.0
  %4015 = vmatpush2.msra.mxu0 0.0
  %4016 = vmatprep.subr.mxu0 0.0
  %4017 = vmatpush2.msra.mxu0 0.0
  %4018 = vmatprep.subr.mxu0 0.0
  %4019 = vmatpush2.msra.mxu0 0.0
  %4020 = vmatprep.subr.mxu0 0.0
  %4021 = vmatpush2.msra.mxu0 0.0
  %4022 = vmatprep.subr.mxu0 0.0
  %4023 = vmatpush2.msra.mxu0 0.0
  %4024 = vmatprep.subr.mxu0 0.0
  %4025 = vmatpush2.msra.mxu0 0.0
  %4026 = vmatprep.subr.mxu0 0.0
  %4027 = vmatpush2.msra.mxu0 0.0
  %4028 = vmatprep.subr.mxu0 0.0
  %4029 = vmatpush2.msra.mxu0 0.0
  %4030 = vmatprep.subr.mxu0 0.0
  %4031 = vmatpush2.msra.mxu0 0.0
  %4032 = vmatprep.subr.mxu0 0.0
  %4033 = vmatpush2.msra.mxu0 0.0
  %4034 = vmatprep.subr.mxu0 0.0
  %4035 = vmatpush2.msra.mxu0 0.0
  %4036 = vmatprep.subr.mxu0 0.0
  %4037 = vmatpush2.msra.mxu0 0.0
  %4038 = vmatprep.subr.mxu0 0.0
  %4039 = vmatpush2.msra.mxu0 0.0
  %4040 = vmatprep.subr.mxu0 0.0
  %4041 = vmatpush2.msra.mxu0 0.0
  %4042 = vmatprep.subr.mxu0 0.0
  %4043 = vmatpush2.msra.mxu0 0.0
  %4044 = vmatprep.mubr.f32.mxu0 0.0
  %4045 = vmatmul.mubr.f32.gmra.mxu0 %v3693
  %v4046 = vpop.f32.mrf.mxu0
  %v4047 = vadd.f32 0.0, %v4046
  %v4048 = vpop.f32.mrf.mxu0
  %4049 = vdwg.mxu0
  %4050 = vmatprep.subr.mxu0 0.0
  %4051 = vmatpush1.msra.mxu0 0.0
  %4052 = vmatprep.subr.mxu0 0.0
  %4053 = vmatpush1.msra.mxu0 0.0
  %4054 = vmatprep.subr.mxu0 0.0
  %4055 = vmatpush1.msra.mxu0 0.0
  %4056 = vmatprep.subr.mxu0 0.0
  %4057 = vmatpush1.msra.mxu0 0.0
  %4058 = vmatprep.subr.mxu0 0.0
  %4059 = vmatpush1.msra.mxu0 0.0
  %4060 = vmatprep.subr.mxu0 0.0
  %4061 = vmatpush1.msra.mxu0 0.0
  %4062 = vmatprep.subr.mxu0 0.0
  %4063 = vmatpush1.msra.mxu0 0.0
  %4064 = vmatprep.subr.mxu0 0.0
  %4065 = vmatpush1.msra.mxu0 0.0
  %4066 = vmatprep.subr.mxu0 0.0
  %4067 = vmatpush1.msra.mxu0 0.0
  %4068 = vmatprep.subr.mxu0 0.0
  %4069 = vmatpush1.msra.mxu0 0.0
  %4070 = vmatprep.subr.mxu0 0.0
  %4071 = vmatpush1.msra.mxu0 0.0
  %4072 = vmatprep.subr.mxu0 0.0
  %4073 = vmatpush1.msra.mxu0 0.0
  %4074 = vmatprep.subr.mxu0 0.0
  %4075 = vmatpush1.msra.mxu0 0.0
  %4076 = vmatprep.subr.mxu0 0.0
  %4077 = vmatpush1.msra.mxu0 0.0
  %4078 = vmatprep.subr.mxu0 0.0
  %4079 = vmatpush1.msra.mxu0 0.0
  %4080 = vmatprep.subr.mxu0 0.0
  %4081 = vmatpush1.msra.mxu0 %v454
  %4082 = vmatprep.subr.mxu0 0.0
  %4083 = vmatpush2.msra.mxu0 0.0
  %4084 = vmatprep.subr.mxu0 0.0
  %4085 = vmatpush2.msra.mxu0 0.0
  %4086 = vmatprep.subr.mxu0 0.0
  %4087 = vmatpush2.msra.mxu0 0.0
  %4088 = vmatprep.subr.mxu0 0.0
  %4089 = vmatpush2.msra.mxu0 0.0
  %4090 = vmatprep.subr.mxu0 0.0
  %4091 = vmatpush2.msra.mxu0 0.0
  %4092 = vmatprep.subr.mxu0 0.0
  %4093 = vmatpush2.msra.mxu0 0.0
  %4094 = vmatprep.subr.mxu0 0.0
  %4095 = vmatpush2.msra.mxu0 0.0
  %4096 = vmatprep.subr.mxu0 0.0
  %4097 = vmatpush2.msra.mxu0 0.0
  %4098 = vmatprep.subr.mxu0 0.0
  %4099 = vmatpush2.msra.mxu0 0.0
  %4100 = vmatprep.subr.mxu0 0.0
  %4101 = vmatpush2.msra.mxu0 0.0
  %4102 = vmatprep.subr.mxu0 0.0
  %4103 = vmatpush2.msra.mxu0 0.0
  %4104 = vmatprep.subr.mxu0 0.0
  %4105 = vmatpush2.msra.mxu0 0.0
  %4106 = vmatprep.subr.mxu0 0.0
  %4107 = vmatpush2.msra.mxu0 0.0
  %4108 = vmatprep.subr.mxu0 0.0
  %4109 = vmatpush2.msra.mxu0 0.0
  %4110 = vmatprep.subr.mxu0 0.0
  %4111 = vmatpush2.msra.mxu0 0.0
  %4112 = vmatprep.subr.mxu0 0.0
  %4113 = vmatpush2.msra.mxu0 0.0
  %4114 = vmatprep.mubr.f32.mxu0 0.0
  %4115 = vmatmul.mubr.f32.gmra.mxu0 %v3766
  %v4116 = vpop.f32.mrf.mxu0
  %v4117 = vadd.f32 %v4047, %v4116
  %v4118 = vpop.f32.mrf.mxu0
  %4119 = vdwg.mxu0
  %v4120 = vadd.f32 %v4117, %v530
  %4121 = vmatprep.subr.mxu0 0.0
  %4122 = vmatpush1.msra.mxu0 0.0
  %4123 = vmatprep.subr.mxu0 0.0
  %4124 = vmatpush1.msra.mxu0 0.0
  %4125 = vmatprep.subr.mxu0 0.0
  %4126 = vmatpush1.msra.mxu0 0.0
  %4127 = vmatprep.subr.mxu0 0.0
  %4128 = vmatpush1.msra.mxu0 0.0
  %4129 = vmatprep.subr.mxu0 0.0
  %4130 = vmatpush1.msra.mxu0 0.0
  %4131 = vmatprep.subr.mxu0 0.0
  %4132 = vmatpush1.msra.mxu0 0.0
  %4133 = vmatprep.subr.mxu0 0.0
  %4134 = vmatpush1.msra.mxu0 0.0
  %4135 = vmatprep.subr.mxu0 0.0
  %4136 = vmatpush1.msra.mxu0 0.0
  %4137 = vmatprep.subr.mxu0 0.0
  %4138 = vmatpush1.msra.mxu0 0.0
  %4139 = vmatprep.subr.mxu0 0.0
  %4140 = vmatpush1.msra.mxu0 0.0
  %4141 = vmatprep.subr.mxu0 0.0
  %4142 = vmatpush1.msra.mxu0 0.0
  %4143 = vmatprep.subr.mxu0 0.0
  %4144 = vmatpush1.msra.mxu0 0.0
  %4145 = vmatprep.subr.mxu0 0.0
  %4146 = vmatpush1.msra.mxu0 0.0
  %4147 = vmatprep.subr.mxu0 0.0
  %4148 = vmatpush1.msra.mxu0 0.0
  %4149 = vmatprep.subr.mxu0 0.0
  %4150 = vmatpush1.msra.mxu0 0.0
  %4151 = vmatprep.subr.mxu0 0.0
  %4152 = vmatpush1.msra.mxu0 %v534
  %4153 = vmatprep.subr.mxu0 0.0
  %4154 = vmatpush2.msra.mxu0 0.0
  %4155 = vmatprep.subr.mxu0 0.0
  %4156 = vmatpush2.msra.mxu0 0.0
  %4157 = vmatprep.subr.mxu0 0.0
  %4158 = vmatpush2.msra.mxu0 0.0
  %4159 = vmatprep.subr.mxu0 0.0
  %4160 = vmatpush2.msra.mxu0 0.0
  %4161 = vmatprep.subr.mxu0 0.0
  %4162 = vmatpush2.msra.mxu0 0.0
  %4163 = vmatprep.subr.mxu0 0.0
  %4164 = vmatpush2.msra.mxu0 0.0
  %4165 = vmatprep.subr.mxu0 0.0
  %4166 = vmatpush2.msra.mxu0 0.0
  %4167 = vmatprep.subr.mxu0 0.0
  %4168 = vmatpush2.msra.mxu0 0.0
  %4169 = vmatprep.subr.mxu0 0.0
  %4170 = vmatpush2.msra.mxu0 0.0
  %4171 = vmatprep.subr.mxu0 0.0
  %4172 = vmatpush2.msra.mxu0 0.0
  %4173 = vmatprep.subr.mxu0 0.0
  %4174 = vmatpush2.msra.mxu0 0.0
  %4175 = vmatprep.subr.mxu0 0.0
  %4176 = vmatpush2.msra.mxu0 0.0
  %4177 = vmatprep.subr.mxu0 0.0
  %4178 = vmatpush2.msra.mxu0 0.0
  %4179 = vmatprep.subr.mxu0 0.0
  %4180 = vmatpush2.msra.mxu0 0.0
  %4181 = vmatprep.subr.mxu0 0.0
  %4182 = vmatpush2.msra.mxu0 0.0
  %4183 = vmatprep.subr.mxu0 0.0
  %4184 = vmatpush2.msra.mxu0 0.0
  %4185 = vmatprep.mubr.f32.mxu0 0.0
  %4186 = vmatmul.mubr.f32.gmra.mxu0 %v3693
  %v4187 = vpop.f32.mrf.mxu0
  %v4188 = vadd.f32 0.0, %v4187
  %v4189 = vpop.f32.mrf.mxu0
  %4190 = vdwg.mxu0
  %4191 = vmatprep.subr.mxu0 0.0
  %4192 = vmatpush1.msra.mxu0 0.0
  %4193 = vmatprep.subr.mxu0 0.0
  %4194 = vmatpush1.msra.mxu0 0.0
  %4195 = vmatprep.subr.mxu0 0.0
  %4196 = vmatpush1.msra.mxu0 0.0
  %4197 = vmatprep.subr.mxu0 0.0
  %4198 = vmatpush1.msra.mxu0 0.0
  %4199 = vmatprep.subr.mxu0 0.0
  %4200 = vmatpush1.msra.mxu0 0.0
  %4201 = vmatprep.subr.mxu0 0.0
  %4202 = vmatpush1.msra.mxu0 0.0
  %4203 = vmatprep.subr.mxu0 0.0
  %4204 = vmatpush1.msra.mxu0 0.0
  %4205 = vmatprep.subr.mxu0 0.0
  %4206 = vmatpush1.msra.mxu0 0.0
  %4207 = vmatprep.subr.mxu0 0.0
  %4208 = vmatpush1.msra.mxu0 0.0
  %4209 = vmatprep.subr.mxu0 0.0
  %4210 = vmatpush1.msra.mxu0 0.0
  %4211 = vmatprep.subr.mxu0 0.0
  %4212 = vmatpush1.msra.mxu0 0.0
  %4213 = vmatprep.subr.mxu0 0.0
  %4214 = vmatpush1.msra.mxu0 0.0
  %4215 = vmatprep.subr.mxu0 0.0
  %4216 = vmatpush1.msra.mxu0 0.0
  %4217 = vmatprep.subr.mxu0 0.0
  %4218 = vmatpush1.msra.mxu0 0.0
  %4219 = vmatprep.subr.mxu0 0.0
  %4220 = vmatpush1.msra.mxu0 0.0
  %4221 = vmatprep.subr.mxu0 0.0
  %4222 = vmatpush1.msra.mxu0 %v607
  %4223 = vmatprep.subr.mxu0 0.0
  %4224 = vmatpush2.msra.mxu0 0.0
  %4225 = vmatprep.subr.mxu0 0.0
  %4226 = vmatpush2.msra.mxu0 0.0
  %4227 = vmatprep.subr.mxu0 0.0
  %4228 = vmatpush2.msra.mxu0 0.0
  %4229 = vmatprep.subr.mxu0 0.0
  %4230 = vmatpush2.msra.mxu0 0.0
  %4231 = vmatprep.subr.mxu0 0.0
  %4232 = vmatpush2.msra.mxu0 0.0
  %4233 = vmatprep.subr.mxu0 0.0
  %4234 = vmatpush2.msra.mxu0 0.0
  %4235 = vmatprep.subr.mxu0 0.0
  %4236 = vmatpush2.msra.mxu0 0.0
  %4237 = vmatprep.subr.mxu0 0.0
  %4238 = vmatpush2.msra.mxu0 0.0
  %4239 = vmatprep.subr.mxu0 0.0
  %4240 = vmatpush2.msra.mxu0 0.0
  %4241 = vmatprep.subr.mxu0 0.0
  %4242 = vmatpush2.msra.mxu0 0.0
  %4243 = vmatprep.subr.mxu0 0.0
  %4244 = vmatpush2.msra.mxu0 0.0
  %4245 = vmatprep.subr.mxu0 0.0
  %4246 = vmatpush2.msra.mxu0 0.0
  %4247 = vmatprep.subr.mxu0 0.0
  %4248 = vmatpush2.msra.mxu0 0.0
  %4249 = vmatprep.subr.mxu0 0.0
  %4250 = vmatpush2.msra.mxu0 0.0
  %4251 = vmatprep.subr.mxu0 0.0
  %4252 = vmatpush2.msra.mxu0 0.0
  %4253 = vmatprep.subr.mxu0 0.0
  %4254 = vmatpush2.msra.mxu0 0.0
  %4255 = vmatprep.mubr.f32.mxu0 0.0
  %4256 = vmatmul.mubr.f32.gmra.mxu0 %v3766
  %v4257 = vpop.f32.mrf.mxu0
  %v4258 = vadd.f32 %v4188, %v4257
  %v4259 = vpop.f32.mrf.mxu0
  %4260 = vdwg.mxu0
  %v4261 = vadd.f32 %v4258, %v683
  %v4262 = vsub.f32 0.0, %v3838
  %v4263 = vmul.f32 %v4262, 1.442695
  %v4264 = vpow.pop %v4263
  %v4265 = vadd.f32 %v4264, 1.0
  %v4266 = vrcp.pop %v4265
  %v4267 = vmul.f32 1.0, %v4266
  %v4268 = vsub.f32 0.0, %v3979
  %v4269 = vmul.f32 %v4268, 1.442695
  %v4270 = vpow.pop %v4269
  %v4271 = vadd.f32 %v4270, 1.0
  %v4272 = vrcp.pop %v4271
  %v4273 = vmul.f32 1.0, %v4272
  %v4274 = vtanh.pop %v4120
  %v4275 = vsub.f32 0.0, %v4261
  %v4276 = vmul.f32 %v4275, 1.442695
  %v4277 = vpow.pop %v4276
  %v4278 = vadd.f32 %v4277, 1.0
  %v4279 = vrcp.pop %v4278
  %v4280 = vmul.f32 1.0, %v4279
  %v4281 = vmul.f32 %v4273, %v3687
  %v4282 = vmul.f32 %v4267, %v4274
  %v4283 = vadd.f32 %v4281, %v4282
  %v4284 = vtanh.pop %v4283
  %v4285 = vmul.f32 %v4280, %v4284
  %s4286 = scalar_lea.vmem %s0, 56
  %v4287 = vld [vmem:[%s4286] sm:$0xff]
  %v4289 = vsel %vm66, %v4285, 0
  %4291 = vmatprep.subr.mxu0 0.0
  %4292 = vmatpush1.msra.mxu0 0.0
  %4293 = vmatprep.subr.mxu0 0.0
  %4294 = vmatpush1.msra.mxu0 0.0
  %4295 = vmatprep.subr.mxu0 0.0
  %4296 = vmatpush1.msra.mxu0 0.0
  %4297 = vmatprep.subr.mxu0 0.0
  %4298 = vmatpush1.msra.mxu0 0.0
  %4299 = vmatprep.subr.mxu0 0.0
  %4300 = vmatpush1.msra.mxu0 0.0
  %4301 = vmatprep.subr.mxu0 0.0
  %4302 = vmatpush1.msra.mxu0 0.0
  %4303 = vmatprep.subr.mxu0 0.0
  %4304 = vmatpush1.msra.mxu0 0.0
  %4305 = vmatprep.subr.mxu0 0.0
  %4306 = vmatpush1.msra.mxu0 0.0
  %4307 = vmatprep.subr.mxu0 0.0
  %4308 = vmatpush1.msra.mxu0 0.0
  %4309 = vmatprep.subr.mxu0 0.0
  %4310 = vmatpush1.msra.mxu0 0.0
  %4311 = vmatprep.subr.mxu0 0.0
  %4312 = vmatpush1.msra.mxu0 0.0
  %4313 = vmatprep.subr.mxu0 0.0
  %4314 = vmatpush1.msra.mxu0 0.0
  %4315 = vmatprep.subr.mxu0 0.0
  %4316 = vmatpush1.msra.mxu0 0.0
  %4317 = vmatprep.subr.mxu0 0.0
  %4318 = vmatpush1.msra.mxu0 0.0
  %4319 = vmatprep.subr.mxu0 0.0
  %4320 = vmatpush1.msra.mxu0 0.0
  %4321 = vmatprep.subr.mxu0 0.0
  %4322 = vmatpush1.msra.mxu0 %v72
  %4323 = vmatprep.subr.mxu0 0.0
  %4324 = vmatpush2.msra.mxu0 0.0
  %4325 = vmatprep.subr.mxu0 0.0
  %4326 = vmatpush2.msra.mxu0 0.0
  %4327 = vmatprep.subr.mxu0 0.0
  %4328 = vmatpush2.msra.mxu0 0.0
  %4329 = vmatprep.subr.mxu0 0.0
  %4330 = vmatpush2.msra.mxu0 0.0
  %4331 = vmatprep.subr.mxu0 0.0
  %4332 = vmatpush2.msra.mxu0 0.0
  %4333 = vmatprep.subr.mxu0 0.0
  %4334 = vmatpush2.msra.mxu0 0.0
  %4335 = vmatprep.subr.mxu0 0.0
  %4336 = vmatpush2.msra.mxu0 0.0
  %4337 = vmatprep.subr.mxu0 0.0
  %4338 = vmatpush2.msra.mxu0 0.0
  %4339 = vmatprep.subr.mxu0 0.0
  %4340 = vmatpush2.msra.mxu0 0.0
  %4341 = vmatprep.subr.mxu0 0.0
  %4342 = vmatpush2.msra.mxu0 0.0
  %4343 = vmatprep.subr.mxu0 0.0
  %4344 = vmatpush2.msra.mxu0 0.0
  %4345 = vmatprep.subr.mxu0 0.0
  %4346 = vmatpush2.msra.mxu0 0.0
  %4347 = vmatprep.subr.mxu0 0.0
  %4348 = vmatpush2.msra.mxu0 0.0
  %4349 = vmatprep.subr.mxu0 0.0
  %4350 = vmatpush2.msra.mxu0 0.0
  %4351 = vmatprep.subr.mxu0 0.0
  %4352 = vmatpush2.msra.mxu0 0.0
  %4353 = vmatprep.subr.mxu0 0.0
  %4354 = vmatpush2.msra.mxu0 0.0
  %4355 = vmatprep.mubr.f32.mxu0 0.0
  %4356 = vmatmul.mubr.f32.gmra.mxu0 %v4289
  %v4357 = vpop.f32.mrf.mxu0
  %v4358 = vadd.f32 0.0, %v4357
  %v4359 = vpop.f32.mrf.mxu0
  %4360 = vdwg.mxu0
  %v4362 = vsel %vm66, %v4287, 0
  %4364 = vmatprep.subr.mxu0 0.0
  %4365 = vmatpush1.msra.mxu0 0.0
  %4366 = vmatprep.subr.mxu0 0.0
  %4367 = vmatpush1.msra.mxu0 0.0
  %4368 = vmatprep.subr.mxu0 0.0
  %4369 = vmatpush1.msra.mxu0 0.0
  %4370 = vmatprep.subr.mxu0 0.0
  %4371 = vmatpush1.msra.mxu0 0.0
  %4372 = vmatprep.subr.mxu0 0.0
  %4373 = vmatpush1.msra.mxu0 0.0
  %4374 = vmatprep.subr.mxu0 0.0
  %4375 = vmatpush1.msra.mxu0 0.0
  %4376 = vmatprep.subr.mxu0 0.0
  %4377 = vmatpush1.msra.mxu0 0.0
  %4378 = vmatprep.subr.mxu0 0.0
  %4379 = vmatpush1.msra.mxu0 0.0
  %4380 = vmatprep.subr.mxu0 0.0
  %4381 = vmatpush1.msra.mxu0 0.0
  %4382 = vmatprep.subr.mxu0 0.0
  %4383 = vmatpush1.msra.mxu0 0.0
  %4384 = vmatprep.subr.mxu0 0.0
  %4385 = vmatpush1.msra.mxu0 0.0
  %4386 = vmatprep.subr.mxu0 0.0
  %4387 = vmatpush1.msra.mxu0 0.0
  %4388 = vmatprep.subr.mxu0 0.0
  %4389 = vmatpush1.msra.mxu0 0.0
  %4390 = vmatprep.subr.mxu0 0.0
  %4391 = vmatpush1.msra.mxu0 0.0
  %4392 = vmatprep.subr.mxu0 0.0
  %4393 = vmatpush1.msra.mxu0 0.0
  %4394 = vmatprep.subr.mxu0 0.0
  %4395 = vmatpush1.msra.mxu0 %v148
  %4396 = vmatprep.subr.mxu0 0.0
  %4397 = vmatpush2.msra.mxu0 0.0
  %4398 = vmatprep.subr.mxu0 0.0
  %4399 = vmatpush2.msra.mxu0 0.0
  %4400 = vmatprep.subr.mxu0 0.0
  %4401 = vmatpush2.msra.mxu0 0.0
  %4402 = vmatprep.subr.mxu0 0.0
  %4403 = vmatpush2.msra.mxu0 0.0
  %4404 = vmatprep.subr.mxu0 0.0
  %4405 = vmatpush2.msra.mxu0 0.0
  %4406 = vmatprep.subr.mxu0 0.0
  %4407 = vmatpush2.msra.mxu0 0.0
  %4408 = vmatprep.subr.mxu0 0.0
  %4409 = vmatpush2.msra.mxu0 0.0
  %4410 = vmatprep.subr.mxu0 0.0
  %4411 = vmatpush2.msra.mxu0 0.0
  %4412 = vmatprep.subr.mxu0 0.0
  %4413 = vmatpush2.msra.mxu0 0.0
  %4414 = vmatprep.subr.mxu0 0.0
  %4415 = vmatpush2.msra.mxu0 0.0
  %4416 = vmatprep.subr.mxu0 0.0
  %4417 = vmatpush2.msra.mxu0 0.0
  %4418 = vmatprep.subr.mxu0 0.0
  %4419 = vmatpush2.msra.mxu0 0.0
  %4420 = vmatprep.subr.mxu0 0.0
  %4421 = vmatpush2.msra.mxu0 0.0
  %4422 = vmatprep.subr.mxu0 0.0
  %4423 = vmatpush2.msra.mxu0 0.0
  %4424 = vmatprep.subr.mxu0 0.0
  %4425 = vmatpush2.msra.mxu0 0.0
  %4426 = vmatprep.subr.mxu0 0.0
  %4427 = vmatpush2.msra.mxu0 0.0
  %4428 = vmatprep.mubr.f32.mxu0 0.0
  %4429 = vmatmul.mubr.f32.gmra.mxu0 %v4362
  %v4430 = vpop.f32.mrf.mxu0
  %v4431 = vadd.f32 %v4358, %v4430
  %v4432 = vpop.f32.mrf.mxu0
  %4433 = vdwg.mxu0
  %v4434 = vadd.f32 %v4431, %v224
  %4435 = vmatprep.subr.mxu0 0.0
  %4436 = vmatpush1.msra.mxu0 0.0
  %4437 = vmatprep.subr.mxu0 0.0
  %4438 = vmatpush1.msra.mxu0 0.0
  %4439 = vmatprep.subr.mxu0 0.0
  %4440 = vmatpush1.msra.mxu0 0.0
  %4441 = vmatprep.subr.mxu0 0.0
  %4442 = vmatpush1.msra.mxu0 0.0
  %4443 = vmatprep.subr.mxu0 0.0
  %4444 = vmatpush1.msra.mxu0 0.0
  %4445 = vmatprep.subr.mxu0 0.0
  %4446 = vmatpush1.msra.mxu0 0.0
  %4447 = vmatprep.subr.mxu0 0.0
  %4448 = vmatpush1.msra.mxu0 0.0
  %4449 = vmatprep.subr.mxu0 0.0
  %4450 = vmatpush1.msra.mxu0 0.0
  %4451 = vmatprep.subr.mxu0 0.0
  %4452 = vmatpush1.msra.mxu0 0.0
  %4453 = vmatprep.subr.mxu0 0.0
  %4454 = vmatpush1.msra.mxu0 0.0
  %4455 = vmatprep.subr.mxu0 0.0
  %4456 = vmatpush1.msra.mxu0 0.0
  %4457 = vmatprep.subr.mxu0 0.0
  %4458 = vmatpush1.msra.mxu0 0.0
  %4459 = vmatprep.subr.mxu0 0.0
  %4460 = vmatpush1.msra.mxu0 0.0
  %4461 = vmatprep.subr.mxu0 0.0
  %4462 = vmatpush1.msra.mxu0 0.0
  %4463 = vmatprep.subr.mxu0 0.0
  %4464 = vmatpush1.msra.mxu0 0.0
  %4465 = vmatprep.subr.mxu0 0.0
  %4466 = vmatpush1.msra.mxu0 %v228
  %4467 = vmatprep.subr.mxu0 0.0
  %4468 = vmatpush2.msra.mxu0 0.0
  %4469 = vmatprep.subr.mxu0 0.0
  %4470 = vmatpush2.msra.mxu0 0.0
  %4471 = vmatprep.subr.mxu0 0.0
  %4472 = vmatpush2.msra.mxu0 0.0
  %4473 = vmatprep.subr.mxu0 0.0
  %4474 = vmatpush2.msra.mxu0 0.0
  %4475 = vmatprep.subr.mxu0 0.0
  %4476 = vmatpush2.msra.mxu0 0.0
  %4477 = vmatprep.subr.mxu0 0.0
  %4478 = vmatpush2.msra.mxu0 0.0
  %4479 = vmatprep.subr.mxu0 0.0
  %4480 = vmatpush2.msra.mxu0 0.0
  %4481 = vmatprep.subr.mxu0 0.0
  %4482 = vmatpush2.msra.mxu0 0.0
  %4483 = vmatprep.subr.mxu0 0.0
  %4484 = vmatpush2.msra.mxu0 0.0
  %4485 = vmatprep.subr.mxu0 0.0
  %4486 = vmatpush2.msra.mxu0 0.0
  %4487 = vmatprep.subr.mxu0 0.0
  %4488 = vmatpush2.msra.mxu0 0.0
  %4489 = vmatprep.subr.mxu0 0.0
  %4490 = vmatpush2.msra.mxu0 0.0
  %4491 = vmatprep.subr.mxu0 0.0
  %4492 = vmatpush2.msra.mxu0 0.0
  %4493 = vmatprep.subr.mxu0 0.0
  %4494 = vmatpush2.msra.mxu0 0.0
  %4495 = vmatprep.subr.mxu0 0.0
  %4496 = vmatpush2.msra.mxu0 0.0
  %4497 = vmatprep.subr.mxu0 0.0
  %4498 = vmatpush2.msra.mxu0 0.0
  %4499 = vmatprep.mubr.f32.mxu0 0.0
  %4500 = vmatmul.mubr.f32.gmra.mxu0 %v4289
  %v4501 = vpop.f32.mrf.mxu0
  %v4502 = vadd.f32 0.0, %v4501
  %v4503 = vpop.f32.mrf.mxu0
  %4504 = vdwg.mxu0
  %4505 = vmatprep.subr.mxu0 0.0
  %4506 = vmatpush1.msra.mxu0 0.0
  %4507 = vmatprep.subr.mxu0 0.0
  %4508 = vmatpush1.msra.mxu0 0.0
  %4509 = vmatprep.subr.mxu0 0.0
  %4510 = vmatpush1.msra.mxu0 0.0
  %4511 = vmatprep.subr.mxu0 0.0
  %4512 = vmatpush1.msra.mxu0 0.0
  %4513 = vmatprep.subr.mxu0 0.0
  %4514 = vmatpush1.msra.mxu0 0.0
  %4515 = vmatprep.subr.mxu0 0.0
  %4516 = vmatpush1.msra.mxu0 0.0
  %4517 = vmatprep.subr.mxu0 0.0
  %4518 = vmatpush1.msra.mxu0 0.0
  %4519 = vmatprep.subr.mxu0 0.0
  %4520 = vmatpush1.msra.mxu0 0.0
  %4521 = vmatprep.subr.mxu0 0.0
  %4522 = vmatpush1.msra.mxu0 0.0
  %4523 = vmatprep.subr.mxu0 0.0
  %4524 = vmatpush1.msra.mxu0 0.0
  %4525 = vmatprep.subr.mxu0 0.0
  %4526 = vmatpush1.msra.mxu0 0.0
  %4527 = vmatprep.subr.mxu0 0.0
  %4528 = vmatpush1.msra.mxu0 0.0
  %4529 = vmatprep.subr.mxu0 0.0
  %4530 = vmatpush1.msra.mxu0 0.0
  %4531 = vmatprep.subr.mxu0 0.0
  %4532 = vmatpush1.msra.mxu0 0.0
  %4533 = vmatprep.subr.mxu0 0.0
  %4534 = vmatpush1.msra.mxu0 0.0
  %4535 = vmatprep.subr.mxu0 0.0
  %4536 = vmatpush1.msra.mxu0 %v301
  %4537 = vmatprep.subr.mxu0 0.0
  %4538 = vmatpush2.msra.mxu0 0.0
  %4539 = vmatprep.subr.mxu0 0.0
  %4540 = vmatpush2.msra.mxu0 0.0
  %4541 = vmatprep.subr.mxu0 0.0
  %4542 = vmatpush2.msra.mxu0 0.0
  %4543 = vmatprep.subr.mxu0 0.0
  %4544 = vmatpush2.msra.mxu0 0.0
  %4545 = vmatprep.subr.mxu0 0.0
  %4546 = vmatpush2.msra.mxu0 0.0
  %4547 = vmatprep.subr.mxu0 0.0
  %4548 = vmatpush2.msra.mxu0 0.0
  %4549 = vmatprep.subr.mxu0 0.0
  %4550 = vmatpush2.msra.mxu0 0.0
  %4551 = vmatprep.subr.mxu0 0.0
  %4552 = vmatpush2.msra.mxu0 0.0
  %4553 = vmatprep.subr.mxu0 0.0
  %4554 = vmatpush2.msra.mxu0 0.0
  %4555 = vmatprep.subr.mxu0 0.0
  %4556 = vmatpush2.msra.mxu0 0.0
  %4557 = vmatprep.subr.mxu0 0.0
  %4558 = vmatpush2.msra.mxu0 0.0
  %4559 = vmatprep.subr.mxu0 0.0
  %4560 = vmatpush2.msra.mxu0 0.0
  %4561 = vmatprep.subr.mxu0 0.0
  %4562 = vmatpush2.msra.mxu0 0.0
  %4563 = vmatprep.subr.mxu0 0.0
  %4564 = vmatpush2.msra.mxu0 0.0
  %4565 = vmatprep.subr.mxu0 0.0
  %4566 = vmatpush2.msra.mxu0 0.0
  %4567 = vmatprep.subr.mxu0 0.0
  %4568 = vmatpush2.msra.mxu0 0.0
  %4569 = vmatprep.mubr.f32.mxu0 0.0
  %4570 = vmatmul.mubr.f32.gmra.mxu0 %v4362
  %v4571 = vpop.f32.mrf.mxu0
  %v4572 = vadd.f32 %v4502, %v4571
  %v4573 = vpop.f32.mrf.mxu0
  %4574 = vdwg.mxu0
  %v4575 = vadd.f32 %v4572, %v377
  %4576 = vmatprep.subr.mxu0 0.0
  %4577 = vmatpush1.msra.mxu0 0.0
  %4578 = vmatprep.subr.mxu0 0.0
  %4579 = vmatpush1.msra.mxu0 0.0
  %4580 = vmatprep.subr.mxu0 0.0
  %4581 = vmatpush1.msra.mxu0 0.0
  %4582 = vmatprep.subr.mxu0 0.0
  %4583 = vmatpush1.msra.mxu0 0.0
  %4584 = vmatprep.subr.mxu0 0.0
  %4585 = vmatpush1.msra.mxu0 0.0
  %4586 = vmatprep.subr.mxu0 0.0
  %4587 = vmatpush1.msra.mxu0 0.0
  %4588 = vmatprep.subr.mxu0 0.0
  %4589 = vmatpush1.msra.mxu0 0.0
  %4590 = vmatprep.subr.mxu0 0.0
  %4591 = vmatpush1.msra.mxu0 0.0
  %4592 = vmatprep.subr.mxu0 0.0
  %4593 = vmatpush1.msra.mxu0 0.0
  %4594 = vmatprep.subr.mxu0 0.0
  %4595 = vmatpush1.msra.mxu0 0.0
  %4596 = vmatprep.subr.mxu0 0.0
  %4597 = vmatpush1.msra.mxu0 0.0
  %4598 = vmatprep.subr.mxu0 0.0
  %4599 = vmatpush1.msra.mxu0 0.0
  %4600 = vmatprep.subr.mxu0 0.0
  %4601 = vmatpush1.msra.mxu0 0.0
  %4602 = vmatprep.subr.mxu0 0.0
  %4603 = vmatpush1.msra.mxu0 0.0
  %4604 = vmatprep.subr.mxu0 0.0
  %4605 = vmatpush1.msra.mxu0 0.0
  %4606 = vmatprep.subr.mxu0 0.0
  %4607 = vmatpush1.msra.mxu0 %v381
  %4608 = vmatprep.subr.mxu0 0.0
  %4609 = vmatpush2.msra.mxu0 0.0
  %4610 = vmatprep.subr.mxu0 0.0
  %4611 = vmatpush2.msra.mxu0 0.0
  %4612 = vmatprep.subr.mxu0 0.0
  %4613 = vmatpush2.msra.mxu0 0.0
  %4614 = vmatprep.subr.mxu0 0.0
  %4615 = vmatpush2.msra.mxu0 0.0
  %4616 = vmatprep.subr.mxu0 0.0
  %4617 = vmatpush2.msra.mxu0 0.0
  %4618 = vmatprep.subr.mxu0 0.0
  %4619 = vmatpush2.msra.mxu0 0.0
  %4620 = vmatprep.subr.mxu0 0.0
  %4621 = vmatpush2.msra.mxu0 0.0
  %4622 = vmatprep.subr.mxu0 0.0
  %4623 = vmatpush2.msra.mxu0 0.0
  %4624 = vmatprep.subr.mxu0 0.0
  %4625 = vmatpush2.msra.mxu0 0.0
  %4626 = vmatprep.subr.mxu0 0.0
  %4627 = vmatpush2.msra.mxu0 0.0
  %4628 = vmatprep.subr.mxu0 0.0
  %4629 = vmatpush2.msra.mxu0 0.0
  %4630 = vmatprep.subr.mxu0 0.0
  %4631 = vmatpush2.msra.mxu0 0.0
  %4632 = vmatprep.subr.mxu0 0.0
  %4633 = vmatpush2.msra.mxu0 0.0
  %4634 = vmatprep.subr.mxu0 0.0
  %4635 = vmatpush2.msra.mxu0 0.0
  %4636 = vmatprep.subr.mxu0 0.0
  %4637 = vmatpush2.msra.mxu0 0.0
  %4638 = vmatprep.subr.mxu0 0.0
  %4639 = vmatpush2.msra.mxu0 0.0
  %4640 = vmatprep.mubr.f32.mxu0 0.0
  %4641 = vmatmul.mubr.f32.gmra.mxu0 %v4289
  %v4642 = vpop.f32.mrf.mxu0
  %v4643 = vadd.f32 0.0, %v4642
  %v4644 = vpop.f32.mrf.mxu0
  %4645 = vdwg.mxu0
  %4646 = vmatprep.subr.mxu0 0.0
  %4647 = vmatpush1.msra.mxu0 0.0
  %4648 = vmatprep.subr.mxu0 0.0
  %4649 = vmatpush1.msra.mxu0 0.0
  %4650 = vmatprep.subr.mxu0 0.0
  %4651 = vmatpush1.msra.mxu0 0.0
  %4652 = vmatprep.subr.mxu0 0.0
  %4653 = vmatpush1.msra.mxu0 0.0
  %4654 = vmatprep.subr.mxu0 0.0
  %4655 = vmatpush1.msra.mxu0 0.0
  %4656 = vmatprep.subr.mxu0 0.0
  %4657 = vmatpush1.msra.mxu0 0.0
  %4658 = vmatprep.subr.mxu0 0.0
  %4659 = vmatpush1.msra.mxu0 0.0
  %4660 = vmatprep.subr.mxu0 0.0
  %4661 = vmatpush1.msra.mxu0 0.0
  %4662 = vmatprep.subr.mxu0 0.0
  %4663 = vmatpush1.msra.mxu0 0.0
  %4664 = vmatprep.subr.mxu0 0.0
  %4665 = vmatpush1.msra.mxu0 0.0
  %4666 = vmatprep.subr.mxu0 0.0
  %4667 = vmatpush1.msra.mxu0 0.0
  %4668 = vmatprep.subr.mxu0 0.0
  %4669 = vmatpush1.msra.mxu0 0.0
  %4670 = vmatprep.subr.mxu0 0.0
  %4671 = vmatpush1.msra.mxu0 0.0
  %4672 = vmatprep.subr.mxu0 0.0
  %4673 = vmatpush1.msra.mxu0 0.0
  %4674 = vmatprep.subr.mxu0 0.0
  %4675 = vmatpush1.msra.mxu0 0.0
  %4676 = vmatprep.subr.mxu0 0.0
  %4677 = vmatpush1.msra.mxu0 %v454
  %4678 = vmatprep.subr.mxu0 0.0
  %4679 = vmatpush2.msra.mxu0 0.0
  %4680 = vmatprep.subr.mxu0 0.0
  %4681 = vmatpush2.msra.mxu0 0.0
  %4682 = vmatprep.subr.mxu0 0.0
  %4683 = vmatpush2.msra.mxu0 0.0
  %4684 = vmatprep.subr.mxu0 0.0
  %4685 = vmatpush2.msra.mxu0 0.0
  %4686 = vmatprep.subr.mxu0 0.0
  %4687 = vmatpush2.msra.mxu0 0.0
  %4688 = vmatprep.subr.mxu0 0.0
  %4689 = vmatpush2.msra.mxu0 0.0
  %4690 = vmatprep.subr.mxu0 0.0
  %4691 = vmatpush2.msra.mxu0 0.0
  %4692 = vmatprep.subr.mxu0 0.0
  %4693 = vmatpush2.msra.mxu0 0.0
  %4694 = vmatprep.subr.mxu0 0.0
  %4695 = vmatpush2.msra.mxu0 0.0
  %4696 = vmatprep.subr.mxu0 0.0
  %4697 = vmatpush2.msra.mxu0 0.0
  %4698 = vmatprep.subr.mxu0 0.0
  %4699 = vmatpush2.msra.mxu0 0.0
  %4700 = vmatprep.subr.mxu0 0.0
  %4701 = vmatpush2.msra.mxu0 0.0
  %4702 = vmatprep.subr.mxu0 0.0
  %4703 = vmatpush2.msra.mxu0 0.0
  %4704 = vmatprep.subr.mxu0 0.0
  %4705 = vmatpush2.msra.mxu0 0.0
  %4706 = vmatprep.subr.mxu0 0.0
  %4707 = vmatpush2.msra.mxu0 0.0
  %4708 = vmatprep.subr.mxu0 0.0
  %4709 = vmatpush2.msra.mxu0 0.0
  %4710 = vmatprep.mubr.f32.mxu0 0.0
  %4711 = vmatmul.mubr.f32.gmra.mxu0 %v4362
  %v4712 = vpop.f32.mrf.mxu0
  %v4713 = vadd.f32 %v4643, %v4712
  %v4714 = vpop.f32.mrf.mxu0
  %4715 = vdwg.mxu0
  %v4716 = vadd.f32 %v4713, %v530
  %4717 = vmatprep.subr.mxu0 0.0
  %4718 = vmatpush1.msra.mxu0 0.0
  %4719 = vmatprep.subr.mxu0 0.0
  %4720 = vmatpush1.msra.mxu0 0.0
  %4721 = vmatprep.subr.mxu0 0.0
  %4722 = vmatpush1.msra.mxu0 0.0
  %4723 = vmatprep.subr.mxu0 0.0
  %4724 = vmatpush1.msra.mxu0 0.0
  %4725 = vmatprep.subr.mxu0 0.0
  %4726 = vmatpush1.msra.mxu0 0.0
  %4727 = vmatprep.subr.mxu0 0.0
  %4728 = vmatpush1.msra.mxu0 0.0
  %4729 = vmatprep.subr.mxu0 0.0
  %4730 = vmatpush1.msra.mxu0 0.0
  %4731 = vmatprep.subr.mxu0 0.0
  %4732 = vmatpush1.msra.mxu0 0.0
  %4733 = vmatprep.subr.mxu0 0.0
  %4734 = vmatpush1.msra.mxu0 0.0
  %4735 = vmatprep.subr.mxu0 0.0
  %4736 = vmatpush1.msra.mxu0 0.0
  %4737 = vmatprep.subr.mxu0 0.0
  %4738 = vmatpush1.msra.mxu0 0.0
  %4739 = vmatprep.subr.mxu0 0.0
  %4740 = vmatpush1.msra.mxu0 0.0
  %4741 = vmatprep.subr.mxu0 0.0
  %4742 = vmatpush1.msra.mxu0 0.0
  %4743 = vmatprep.subr.mxu0 0.0
  %4744 = vmatpush1.msra.mxu0 0.0
  %4745 = vmatprep.subr.mxu0 0.0
  %4746 = vmatpush1.msra.mxu0 0.0
  %4747 = vmatprep.subr.mxu0 0.0
  %4748 = vmatpush1.msra.mxu0 %v534
  %4749 = vmatprep.subr.mxu0 0.0
  %4750 = vmatpush2.msra.mxu0 0.0
  %4751 = vmatprep.subr.mxu0 0.0
  %4752 = vmatpush2.msra.mxu0 0.0
  %4753 = vmatprep.subr.mxu0 0.0
  %4754 = vmatpush2.msra.mxu0 0.0
  %4755 = vmatprep.subr.mxu0 0.0
  %4756 = vmatpush2.msra.mxu0 0.0
  %4757 = vmatprep.subr.mxu0 0.0
  %4758 = vmatpush2.msra.mxu0 0.0
  %4759 = vmatprep.subr.mxu0 0.0
  %4760 = vmatpush2.msra.mxu0 0.0
  %4761 = vmatprep.subr.mxu0 0.0
  %4762 = vmatpush2.msra.mxu0 0.0
  %4763 = vmatprep.subr.mxu0 0.0
  %4764 = vmatpush2.msra.mxu0 0.0
  %4765 = vmatprep.subr.mxu0 0.0
  %4766 = vmatpush2.msra.mxu0 0.0
  %4767 = vmatprep.subr.mxu0 0.0
  %4768 = vmatpush2.msra.mxu0 0.0
  %4769 = vmatprep.subr.mxu0 0.0
  %4770 = vmatpush2.msra.mxu0 0.0
  %4771 = vmatprep.subr.mxu0 0.0
  %4772 = vmatpush2.msra.mxu0 0.0
  %4773 = vmatprep.subr.mxu0 0.0
  %4774 = vmatpush2.msra.mxu0 0.0
  %4775 = vmatprep.subr.mxu0 0.0
  %4776 = vmatpush2.msra.mxu0 0.0
  %4777 = vmatprep.subr.mxu0 0.0
  %4778 = vmatpush2.msra.mxu0 0.0
  %4779 = vmatprep.subr.mxu0 0.0
  %4780 = vmatpush2.msra.mxu0 0.0
  %4781 = vmatprep.mubr.f32.mxu0 0.0
  %4782 = vmatmul.mubr.f32.gmra.mxu0 %v4289
  %v4783 = vpop.f32.mrf.mxu0
  %v4784 = vadd.f32 0.0, %v4783
  %v4785 = vpop.f32.mrf.mxu0
  %4786 = vdwg.mxu0
  %4787 = vmatprep.subr.mxu0 0.0
  %4788 = vmatpush1.msra.mxu0 0.0
  %4789 = vmatprep.subr.mxu0 0.0
  %4790 = vmatpush1.msra.mxu0 0.0
  %4791 = vmatprep.subr.mxu0 0.0
  %4792 = vmatpush1.msra.mxu0 0.0
  %4793 = vmatprep.subr.mxu0 0.0
  %4794 = vmatpush1.msra.mxu0 0.0
  %4795 = vmatprep.subr.mxu0 0.0
  %4796 = vmatpush1.msra.mxu0 0.0
  %4797 = vmatprep.subr.mxu0 0.0
  %4798 = vmatpush1.msra.mxu0 0.0
  %4799 = vmatprep.subr.mxu0 0.0
  %4800 = vmatpush1.msra.mxu0 0.0
  %4801 = vmatprep.subr.mxu0 0.0
  %4802 = vmatpush1.msra.mxu0 0.0
  %4803 = vmatprep.subr.mxu0 0.0
  %4804 = vmatpush1.msra.mxu0 0.0
  %4805 = vmatprep.subr.mxu0 0.0
  %4806 = vmatpush1.msra.mxu0 0.0
  %4807 = vmatprep.subr.mxu0 0.0
  %4808 = vmatpush1.msra.mxu0 0.0
  %4809 = vmatprep.subr.mxu0 0.0
  %4810 = vmatpush1.msra.mxu0 0.0
  %4811 = vmatprep.subr.mxu0 0.0
  %4812 = vmatpush1.msra.mxu0 0.0
  %4813 = vmatprep.subr.mxu0 0.0
  %4814 = vmatpush1.msra.mxu0 0.0
  %4815 = vmatprep.subr.mxu0 0.0
  %4816 = vmatpush1.msra.mxu0 0.0
  %4817 = vmatprep.subr.mxu0 0.0
  %4818 = vmatpush1.msra.mxu0 %v607
  %4819 = vmatprep.subr.mxu0 0.0
  %4820 = vmatpush2.msra.mxu0 0.0
  %4821 = vmatprep.subr.mxu0 0.0
  %4822 = vmatpush2.msra.mxu0 0.0
  %4823 = vmatprep.subr.mxu0 0.0
  %4824 = vmatpush2.msra.mxu0 0.0
  %4825 = vmatprep.subr.mxu0 0.0
  %4826 = vmatpush2.msra.mxu0 0.0
  %4827 = vmatprep.subr.mxu0 0.0
  %4828 = vmatpush2.msra.mxu0 0.0
  %4829 = vmatprep.subr.mxu0 0.0
  %4830 = vmatpush2.msra.mxu0 0.0
  %4831 = vmatprep.subr.mxu0 0.0
  %4832 = vmatpush2.msra.mxu0 0.0
  %4833 = vmatprep.subr.mxu0 0.0
  %4834 = vmatpush2.msra.mxu0 0.0
  %4835 = vmatprep.subr.mxu0 0.0
  %4836 = vmatpush2.msra.mxu0 0.0
  %4837 = vmatprep.subr.mxu0 0.0
  %4838 = vmatpush2.msra.mxu0 0.0
  %4839 = vmatprep.subr.mxu0 0.0
  %4840 = vmatpush2.msra.mxu0 0.0
  %4841 = vmatprep.subr.mxu0 0.0
  %4842 = vmatpush2.msra.mxu0 0.0
  %4843 = vmatprep.subr.mxu0 0.0
  %4844 = vmatpush2.msra.mxu0 0.0
  %4845 = vmatprep.subr.mxu0 0.0
  %4846 = vmatpush2.msra.mxu0 0.0
  %4847 = vmatprep.subr.mxu0 0.0
  %4848 = vmatpush2.msra.mxu0 0.0
  %4849 = vmatprep.subr.mxu0 0.0
  %4850 = vmatpush2.msra.mxu0 0.0
  %4851 = vmatprep.mubr.f32.mxu0 0.0
  %4852 = vmatmul.mubr.f32.gmra.mxu0 %v4362
  %v4853 = vpop.f32.mrf.mxu0
  %v4854 = vadd.f32 %v4784, %v4853
  %v4855 = vpop.f32.mrf.mxu0
  %4856 = vdwg.mxu0
  %v4857 = vadd.f32 %v4854, %v683
  %v4858 = vsub.f32 0.0, %v4434
  %v4859 = vmul.f32 %v4858, 1.442695
  %v4860 = vpow.pop %v4859
  %v4861 = vadd.f32 %v4860, 1.0
  %v4862 = vrcp.pop %v4861
  %v4863 = vmul.f32 1.0, %v4862
  %v4864 = vsub.f32 0.0, %v4575
  %v4865 = vmul.f32 %v4864, 1.442695
  %v4866 = vpow.pop %v4865
  %v4867 = vadd.f32 %v4866, 1.0
  %v4868 = vrcp.pop %v4867
  %v4869 = vmul.f32 1.0, %v4868
  %v4870 = vtanh.pop %v4716
  %v4871 = vsub.f32 0.0, %v4857
  %v4872 = vmul.f32 %v4871, 1.442695
  %v4873 = vpow.pop %v4872
  %v4874 = vadd.f32 %v4873, 1.0
  %v4875 = vrcp.pop %v4874
  %v4876 = vmul.f32 1.0, %v4875
  %v4877 = vmul.f32 %v4869, %v4283
  %v4878 = vmul.f32 %v4863, %v4870
  %v4879 = vadd.f32 %v4877, %v4878
  %v4880 = vtanh.pop %v4879
  %v4881 = vmul.f32 %v4876, %v4880
  %v4882 = vld [vmem:[%s5] sm:$0x3]
  %s4883 = scalar_lea.vmem %s5, 2
  %v4884 = vld [vmem:[%s4883] sm:$0x3]
  %s4885 = scalar_lea.vmem %s5, 4
  %v4886 = vld [vmem:[%s4885] sm:$0x3]
  %s4887 = scalar_lea.vmem %s5, 6
  %v4888 = vld [vmem:[%s4887] sm:$0x3]
  %v4889 = vld [vmem:[%s6] sm:$0xf]
  %s4890 = scalar_lea.vmem %s6, 4
  %v4891 = vld [vmem:[%s4890] sm:$0xf]
  %s4892 = scalar_lea.vmem %s6, 8
  %v4893 = vld [vmem:[%s4892] sm:$0xf]
  %s4894 = scalar_lea.vmem %s6, 12
  %v4895 = vld [vmem:[%s4894] sm:$0xf]
  %v4896 = vld [vmem:[%s7] sm:$0x1]
  %s4897 = scalar_lea.vmem %s7, 1
  %v4898 = vld [vmem:[%s4897] sm:$0x1]
  %s4899 = scalar_lea.vmem %s7, 2
  %v4900 = vld [vmem:[%s4899] sm:$0x1]
  %s4901 = scalar_lea.vmem %s7, 3
  %v4902 = vld [vmem:[%s4901] sm:$0x1]
  %v4903 = vld [vmem:[%s1] sm:$0xff]
  %v4905 = vsel %vm70, %v4889, 0
  %4907 = vmatprep.subr.mxu0 0.0
  %4908 = vmatpush1.msra.mxu0 0.0
  %4909 = vmatprep.subr.mxu0 0.0
  %4910 = vmatpush1.msra.mxu0 0.0
  %4911 = vmatprep.subr.mxu0 0.0
  %4912 = vmatpush1.msra.mxu0 0.0
  %4913 = vmatprep.subr.mxu0 0.0
  %4914 = vmatpush1.msra.mxu0 0.0
  %4915 = vmatprep.subr.mxu0 0.0
  %4916 = vmatpush1.msra.mxu0 0.0
  %4917 = vmatprep.subr.mxu0 0.0
  %4918 = vmatpush1.msra.mxu0 0.0
  %4919 = vmatprep.subr.mxu0 0.0
  %4920 = vmatpush1.msra.mxu0 0.0
  %4921 = vmatprep.subr.mxu0 0.0
  %4922 = vmatpush1.msra.mxu0 0.0
  %4923 = vmatprep.subr.mxu0 0.0
  %4924 = vmatpush1.msra.mxu0 0.0
  %4925 = vmatprep.subr.mxu0 0.0
  %4926 = vmatpush1.msra.mxu0 0.0
  %4927 = vmatprep.subr.mxu0 0.0
  %4928 = vmatpush1.msra.mxu0 0.0
  %4929 = vmatprep.subr.mxu0 0.0
  %4930 = vmatpush1.msra.mxu0 0.0
  %4931 = vmatprep.subr.mxu0 0.0
  %4932 = vmatpush1.msra.mxu0 0.0
  %4933 = vmatprep.subr.mxu0 0.0
  %4934 = vmatpush1.msra.mxu0 0.0
  %4935 = vmatprep.subr.mxu0 0.0
  %4936 = vmatpush1.msra.mxu0 0.0
  %4937 = vmatprep.subr.mxu0 0.0
  %4938 = vmatpush1.msra.mxu0 %v4905
  %4939 = vmatprep.subr.mxu0 0.0
  %4940 = vmatpush2.msra.mxu0 0.0
  %4941 = vmatprep.subr.mxu0 0.0
  %4942 = vmatpush2.msra.mxu0 0.0
  %4943 = vmatprep.subr.mxu0 0.0
  %4944 = vmatpush2.msra.mxu0 0.0
  %4945 = vmatprep.subr.mxu0 0.0
  %4946 = vmatpush2.msra.mxu0 0.0
  %4947 = vmatprep.subr.mxu0 0.0
  %4948 = vmatpush2.msra.mxu0 0.0
  %4949 = vmatprep.subr.mxu0 0.0
  %4950 = vmatpush2.msra.mxu0 0.0
  %4951 = vmatprep.subr.mxu0 0.0
  %4952 = vmatpush2.msra.mxu0 0.0
  %4953 = vmatprep.subr.mxu0 0.0
  %4954 = vmatpush2.msra.mxu0 0.0
  %4955 = vmatprep.subr.mxu0 0.0
  %4956 = vmatpush2.msra.mxu0 0.0
  %4957 = vmatprep.subr.mxu0 0.0
  %4958 = vmatpush2.msra.mxu0 0.0
  %4959 = vmatprep.subr.mxu0 0.0
  %4960 = vmatpush2.msra.mxu0 0.0
  %4961 = vmatprep.subr.mxu0 0.0
  %4962 = vmatpush2.msra.mxu0 0.0
  %4963 = vmatprep.subr.mxu0 0.0
  %4964 = vmatpush2.msra.mxu0 0.0
  %4965 = vmatprep.subr.mxu0 0.0
  %4966 = vmatpush2.msra.mxu0 0.0
  %4967 = vmatprep.subr.mxu0 0.0
  %4968 = vmatpush2.msra.mxu0 0.0
  %4969 = vmatprep.subr.mxu0 0.0
  %4970 = vmatpush2.msra.mxu0 0.0
  %4971 = vmatprep.mubr.f32.mxu0 0.0
  %4972 = vmatmul.mubr.f32.gmra.mxu0 %v68
  %v4973 = vpop.f32.mrf.mxu0
  %v4974 = vadd.f32 0.0, %v4973
  %v4975 = vpop.f32.mrf.mxu0
  %4976 = vdwg.mxu0
  %vm4977 = vcmask 15360
  %v4979 = vsel %vm4977, %v4903, 0
  %vm4981 = vcmask 1041408
  %v4983 = vsel %vm4981, %v4882, 0
  %4985 = vmatprep.subr.mxu0 0.0
  %4986 = vmatpush1.msra.mxu0 0.0
  %4987 = vmatprep.subr.mxu0 0.0
  %4988 = vmatpush1.msra.mxu0 0.0
  %4989 = vmatprep.subr.mxu0 0.0
  %4990 = vmatpush1.msra.mxu0 0.0
  %4991 = vmatprep.subr.mxu0 0.0
  %4992 = vmatpush1.msra.mxu0 0.0
  %4993 = vmatprep.subr.mxu0 0.0
  %4994 = vmatpush1.msra.mxu0 0.0
  %4995 = vmatprep.subr.mxu0 0.0
  %4996 = vmatpush1.msra.mxu0 0.0
  %4997 = vmatprep.subr.mxu0 0.0
  %4998 = vmatpush1.msra.mxu0 0.0
  %4999 = vmatprep.subr.mxu0 0.0
  %5000 = vmatpush1.msra.mxu0 0.0
  %5001 = vmatprep.subr.mxu0 0.0
  %5002 = vmatpush1.msra.mxu0 0.0
  %5003 = vmatprep.subr.mxu0 0.0
  %5004 = vmatpush1.msra.mxu0 0.0
  %5005 = vmatprep.subr.mxu0 0.0
  %5006 = vmatpush1.msra.mxu0 0.0
  %5007 = vmatprep.subr.mxu0 0.0
  %5008 = vmatpush1.msra.mxu0 0.0
  %5009 = vmatprep.subr.mxu0 0.0
  %5010 = vmatpush1.msra.mxu0 0.0
  %5011 = vmatprep.subr.mxu0 0.0
  %5012 = vmatpush1.msra.mxu0 0.0
  %5013 = vmatprep.subr.mxu0 0.0
  %5014 = vmatpush1.msra.mxu0 0.0
  %5015 = vmatprep.subr.mxu0 0.0
  %5016 = vmatpush1.msra.mxu0 %v4983
  %5017 = vmatprep.subr.mxu0 0.0
  %5018 = vmatpush2.msra.mxu0 0.0
  %5019 = vmatprep.subr.mxu0 0.0
  %5020 = vmatpush2.msra.mxu0 0.0
  %5021 = vmatprep.subr.mxu0 0.0
  %5022 = vmatpush2.msra.mxu0 0.0
  %5023 = vmatprep.subr.mxu0 0.0
  %5024 = vmatpush2.msra.mxu0 0.0
  %5025 = vmatprep.subr.mxu0 0.0
  %5026 = vmatpush2.msra.mxu0 0.0
  %5027 = vmatprep.subr.mxu0 0.0
  %5028 = vmatpush2.msra.mxu0 0.0
  %5029 = vmatprep.subr.mxu0 0.0
  %5030 = vmatpush2.msra.mxu0 0.0
  %5031 = vmatprep.subr.mxu0 0.0
  %5032 = vmatpush2.msra.mxu0 0.0
  %5033 = vmatprep.subr.mxu0 0.0
  %5034 = vmatpush2.msra.mxu0 0.0
  %5035 = vmatprep.subr.mxu0 0.0
  %5036 = vmatpush2.msra.mxu0 0.0
  %5037 = vmatprep.subr.mxu0 0.0
  %5038 = vmatpush2.msra.mxu0 0.0
  %5039 = vmatprep.subr.mxu0 0.0
  %5040 = vmatpush2.msra.mxu0 0.0
  %5041 = vmatprep.subr.mxu0 0.0
  %5042 = vmatpush2.msra.mxu0 0.0
  %5043 = vmatprep.subr.mxu0 0.0
  %5044 = vmatpush2.msra.mxu0 0.0
  %5045 = vmatprep.subr.mxu0 0.0
  %5046 = vmatpush2.msra.mxu0 0.0
  %5047 = vmatprep.subr.mxu0 0.0
  %5048 = vmatpush2.msra.mxu0 0.0
  %5049 = vmatprep.mubr.f32.mxu0 0.0
  %5050 = vmatmul.mubr.f32.gmra.mxu0 %v4979
  %v5051 = vpop.f32.mrf.mxu0
  %v5052 = vadd.f32 %v4974, %v5051
  %v5053 = vpop.f32.mrf.mxu0
  %5054 = vdwg.mxu0
  %v5056 = vlaneseq
  %v5057 = vshrl.u32 %v5056, 7
  %v5058 = vsub.s32 0, %v5057
  %v5059 = vrot.slane %v4896, %v5058
  %v5061 = vadd.f32 %v5052, %v5059
  %v5063 = vsel %vm70, %v4891, 0
  %5065 = vmatprep.subr.mxu0 0.0
  %5066 = vmatpush1.msra.mxu0 0.0
  %5067 = vmatprep.subr.mxu0 0.0
  %5068 = vmatpush1.msra.mxu0 0.0
  %5069 = vmatprep.subr.mxu0 0.0
  %5070 = vmatpush1.msra.mxu0 0.0
  %5071 = vmatprep.subr.mxu0 0.0
  %5072 = vmatpush1.msra.mxu0 0.0
  %5073 = vmatprep.subr.mxu0 0.0
  %5074 = vmatpush1.msra.mxu0 0.0
  %5075 = vmatprep.subr.mxu0 0.0
  %5076 = vmatpush1.msra.mxu0 0.0
  %5077 = vmatprep.subr.mxu0 0.0
  %5078 = vmatpush1.msra.mxu0 0.0
  %5079 = vmatprep.subr.mxu0 0.0
  %5080 = vmatpush1.msra.mxu0 0.0
  %5081 = vmatprep.subr.mxu0 0.0
  %5082 = vmatpush1.msra.mxu0 0.0
  %5083 = vmatprep.subr.mxu0 0.0
  %5084 = vmatpush1.msra.mxu0 0.0
  %5085 = vmatprep.subr.mxu0 0.0
  %5086 = vmatpush1.msra.mxu0 0.0
  %5087 = vmatprep.subr.mxu0 0.0
  %5088 = vmatpush1.msra.mxu0 0.0
  %5089 = vmatprep.subr.mxu0 0.0
  %5090 = vmatpush1.msra.mxu0 0.0
  %5091 = vmatprep.subr.mxu0 0.0
  %5092 = vmatpush1.msra.mxu0 0.0
  %5093 = vmatprep.subr.mxu0 0.0
  %5094 = vmatpush1.msra.mxu0 0.0
  %5095 = vmatprep.subr.mxu0 0.0
  %5096 = vmatpush1.msra.mxu0 %v5063
  %5097 = vmatprep.subr.mxu0 0.0
  %5098 = vmatpush2.msra.mxu0 0.0
  %5099 = vmatprep.subr.mxu0 0.0
  %5100 = vmatpush2.msra.mxu0 0.0
  %5101 = vmatprep.subr.mxu0 0.0
  %5102 = vmatpush2.msra.mxu0 0.0
  %5103 = vmatprep.subr.mxu0 0.0
  %5104 = vmatpush2.msra.mxu0 0.0
  %5105 = vmatprep.subr.mxu0 0.0
  %5106 = vmatpush2.msra.mxu0 0.0
  %5107 = vmatprep.subr.mxu0 0.0
  %5108 = vmatpush2.msra.mxu0 0.0
  %5109 = vmatprep.subr.mxu0 0.0
  %5110 = vmatpush2.msra.mxu0 0.0
  %5111 = vmatprep.subr.mxu0 0.0
  %5112 = vmatpush2.msra.mxu0 0.0
  %5113 = vmatprep.subr.mxu0 0.0
  %5114 = vmatpush2.msra.mxu0 0.0
  %5115 = vmatprep.subr.mxu0 0.0
  %5116 = vmatpush2.msra.mxu0 0.0
  %5117 = vmatprep.subr.mxu0 0.0
  %5118 = vmatpush2.msra.mxu0 0.0
  %5119 = vmatprep.subr.mxu0 0.0
  %5120 = vmatpush2.msra.mxu0 0.0
  %5121 = vmatprep.subr.mxu0 0.0
  %5122 = vmatpush2.msra.mxu0 0.0
  %5123 = vmatprep.subr.mxu0 0.0
  %5124 = vmatpush2.msra.mxu0 0.0
  %5125 = vmatprep.subr.mxu0 0.0
  %5126 = vmatpush2.msra.mxu0 0.0
  %5127 = vmatprep.subr.mxu0 0.0
  %5128 = vmatpush2.msra.mxu0 0.0
  %5129 = vmatprep.mubr.f32.mxu0 0.0
  %5130 = vmatmul.mubr.f32.gmra.mxu0 %v68
  %v5131 = vpop.f32.mrf.mxu0
  %v5132 = vadd.f32 0.0, %v5131
  %v5133 = vpop.f32.mrf.mxu0
  %5134 = vdwg.mxu0
  %v5136 = vsel %vm4981, %v4884, 0
  %5138 = vmatprep.subr.mxu0 0.0
  %5139 = vmatpush1.msra.mxu0 0.0
  %5140 = vmatprep.subr.mxu0 0.0
  %5141 = vmatpush1.msra.mxu0 0.0
  %5142 = vmatprep.subr.mxu0 0.0
  %5143 = vmatpush1.msra.mxu0 0.0
  %5144 = vmatprep.subr.mxu0 0.0
  %5145 = vmatpush1.msra.mxu0 0.0
  %5146 = vmatprep.subr.mxu0 0.0
  %5147 = vmatpush1.msra.mxu0 0.0
  %5148 = vmatprep.subr.mxu0 0.0
  %5149 = vmatpush1.msra.mxu0 0.0
  %5150 = vmatprep.subr.mxu0 0.0
  %5151 = vmatpush1.msra.mxu0 0.0
  %5152 = vmatprep.subr.mxu0 0.0
  %5153 = vmatpush1.msra.mxu0 0.0
  %5154 = vmatprep.subr.mxu0 0.0
  %5155 = vmatpush1.msra.mxu0 0.0
  %5156 = vmatprep.subr.mxu0 0.0
  %5157 = vmatpush1.msra.mxu0 0.0
  %5158 = vmatprep.subr.mxu0 0.0
  %5159 = vmatpush1.msra.mxu0 0.0
  %5160 = vmatprep.subr.mxu0 0.0
  %5161 = vmatpush1.msra.mxu0 0.0
  %5162 = vmatprep.subr.mxu0 0.0
  %5163 = vmatpush1.msra.mxu0 0.0
  %5164 = vmatprep.subr.mxu0 0.0
  %5165 = vmatpush1.msra.mxu0 0.0
  %5166 = vmatprep.subr.mxu0 0.0
  %5167 = vmatpush1.msra.mxu0 0.0
  %5168 = vmatprep.subr.mxu0 0.0
  %5169 = vmatpush1.msra.mxu0 %v5136
  %5170 = vmatprep.subr.mxu0 0.0
  %5171 = vmatpush2.msra.mxu0 0.0
  %5172 = vmatprep.subr.mxu0 0.0
  %5173 = vmatpush2.msra.mxu0 0.0
  %5174 = vmatprep.subr.mxu0 0.0
  %5175 = vmatpush2.msra.mxu0 0.0
  %5176 = vmatprep.subr.mxu0 0.0
  %5177 = vmatpush2.msra.mxu0 0.0
  %5178 = vmatprep.subr.mxu0 0.0
  %5179 = vmatpush2.msra.mxu0 0.0
  %5180 = vmatprep.subr.mxu0 0.0
  %5181 = vmatpush2.msra.mxu0 0.0
  %5182 = vmatprep.subr.mxu0 0.0
  %5183 = vmatpush2.msra.mxu0 0.0
  %5184 = vmatprep.subr.mxu0 0.0
  %5185 = vmatpush2.msra.mxu0 0.0
  %5186 = vmatprep.subr.mxu0 0.0
  %5187 = vmatpush2.msra.mxu0 0.0
  %5188 = vmatprep.subr.mxu0 0.0
  %5189 = vmatpush2.msra.mxu0 0.0
  %5190 = vmatprep.subr.mxu0 0.0
  %5191 = vmatpush2.msra.mxu0 0.0
  %5192 = vmatprep.subr.mxu0 0.0
  %5193 = vmatpush2.msra.mxu0 0.0
  %5194 = vmatprep.subr.mxu0 0.0
  %5195 = vmatpush2.msra.mxu0 0.0
  %5196 = vmatprep.subr.mxu0 0.0
  %5197 = vmatpush2.msra.mxu0 0.0
  %5198 = vmatprep.subr.mxu0 0.0
  %5199 = vmatpush2.msra.mxu0 0.0
  %5200 = vmatprep.subr.mxu0 0.0
  %5201 = vmatpush2.msra.mxu0 0.0
  %5202 = vmatprep.mubr.f32.mxu0 0.0
  %5203 = vmatmul.mubr.f32.gmra.mxu0 %v4979
  %v5204 = vpop.f32.mrf.mxu0
  %v5205 = vadd.f32 %v5132, %v5204
  %v5206 = vpop.f32.mrf.mxu0
  %5207 = vdwg.mxu0
  %v5209 = vlaneseq
  %v5210 = vshrl.u32 %v5209, 7
  %v5211 = vsub.s32 0, %v5210
  %v5212 = vrot.slane %v4898, %v5211
  %v5214 = vadd.f32 %v5205, %v5212
  %v5216 = vsel %vm70, %v4893, 0
  %5218 = vmatprep.subr.mxu0 0.0
  %5219 = vmatpush1.msra.mxu0 0.0
  %5220 = vmatprep.subr.mxu0 0.0
  %5221 = vmatpush1.msra.mxu0 0.0
  %5222 = vmatprep.subr.mxu0 0.0
  %5223 = vmatpush1.msra.mxu0 0.0
  %5224 = vmatprep.subr.mxu0 0.0
  %5225 = vmatpush1.msra.mxu0 0.0
  %5226 = vmatprep.subr.mxu0 0.0
  %5227 = vmatpush1.msra.mxu0 0.0
  %5228 = vmatprep.subr.mxu0 0.0
  %5229 = vmatpush1.msra.mxu0 0.0
  %5230 = vmatprep.subr.mxu0 0.0
  %5231 = vmatpush1.msra.mxu0 0.0
  %5232 = vmatprep.subr.mxu0 0.0
  %5233 = vmatpush1.msra.mxu0 0.0
  %5234 = vmatprep.subr.mxu0 0.0
  %5235 = vmatpush1.msra.mxu0 0.0
  %5236 = vmatprep.subr.mxu0 0.0
  %5237 = vmatpush1.msra.mxu0 0.0
  %5238 = vmatprep.subr.mxu0 0.0
  %5239 = vmatpush1.msra.mxu0 0.0
  %5240 = vmatprep.subr.mxu0 0.0
  %5241 = vmatpush1.msra.mxu0 0.0
  %5242 = vmatprep.subr.mxu0 0.0
  %5243 = vmatpush1.msra.mxu0 0.0
  %5244 = vmatprep.subr.mxu0 0.0
  %5245 = vmatpush1.msra.mxu0 0.0
  %5246 = vmatprep.subr.mxu0 0.0
  %5247 = vmatpush1.msra.mxu0 0.0
  %5248 = vmatprep.subr.mxu0 0.0
  %5249 = vmatpush1.msra.mxu0 %v5216
  %5250 = vmatprep.subr.mxu0 0.0
  %5251 = vmatpush2.msra.mxu0 0.0
  %5252 = vmatprep.subr.mxu0 0.0
  %5253 = vmatpush2.msra.mxu0 0.0
  %5254 = vmatprep.subr.mxu0 0.0
  %5255 = vmatpush2.msra.mxu0 0.0
  %5256 = vmatprep.subr.mxu0 0.0
  %5257 = vmatpush2.msra.mxu0 0.0
  %5258 = vmatprep.subr.mxu0 0.0
  %5259 = vmatpush2.msra.mxu0 0.0
  %5260 = vmatprep.subr.mxu0 0.0
  %5261 = vmatpush2.msra.mxu0 0.0
  %5262 = vmatprep.subr.mxu0 0.0
  %5263 = vmatpush2.msra.mxu0 0.0
  %5264 = vmatprep.subr.mxu0 0.0
  %5265 = vmatpush2.msra.mxu0 0.0
  %5266 = vmatprep.subr.mxu0 0.0
  %5267 = vmatpush2.msra.mxu0 0.0
  %5268 = vmatprep.subr.mxu0 0.0
  %5269 = vmatpush2.msra.mxu0 0.0
  %5270 = vmatprep.subr.mxu0 0.0
  %5271 = vmatpush2.msra.mxu0 0.0
  %5272 = vmatprep.subr.mxu0 0.0
  %5273 = vmatpush2.msra.mxu0 0.0
  %5274 = vmatprep.subr.mxu0 0.0
  %5275 = vmatpush2.msra.mxu0 0.0
  %5276 = vmatprep.subr.mxu0 0.0
  %5277 = vmatpush2.msra.mxu0 0.0
  %5278 = vmatprep.subr.mxu0 0.0
  %5279 = vmatpush2.msra.mxu0 0.0
  %5280 = vmatprep.subr.mxu0 0.0
  %5281 = vmatpush2.msra.mxu0 0.0
  %5282 = vmatprep.mubr.f32.mxu0 0.0
  %5283 = vmatmul.mubr.f32.gmra.mxu0 %v68
  %v5284 = vpop.f32.mrf.mxu0
  %v5285 = vadd.f32 0.0, %v5284
  %v5286 = vpop.f32.mrf.mxu0
  %5287 = vdwg.mxu0
  %v5289 = vsel %vm4981, %v4886, 0
  %5291 = vmatprep.subr.mxu0 0.0
  %5292 = vmatpush1.msra.mxu0 0.0
  %5293 = vmatprep.subr.mxu0 0.0
  %5294 = vmatpush1.msra.mxu0 0.0
  %5295 = vmatprep.subr.mxu0 0.0
  %5296 = vmatpush1.msra.mxu0 0.0
  %5297 = vmatprep.subr.mxu0 0.0
  %5298 = vmatpush1.msra.mxu0 0.0
  %5299 = vmatprep.subr.mxu0 0.0
  %5300 = vmatpush1.msra.mxu0 0.0
  %5301 = vmatprep.subr.mxu0 0.0
  %5302 = vmatpush1.msra.mxu0 0.0
  %5303 = vmatprep.subr.mxu0 0.0
  %5304 = vmatpush1.msra.mxu0 0.0
  %5305 = vmatprep.subr.mxu0 0.0
  %5306 = vmatpush1.msra.mxu0 0.0
  %5307 = vmatprep.subr.mxu0 0.0
  %5308 = vmatpush1.msra.mxu0 0.0
  %5309 = vmatprep.subr.mxu0 0.0
  %5310 = vmatpush1.msra.mxu0 0.0
  %5311 = vmatprep.subr.mxu0 0.0
  %5312 = vmatpush1.msra.mxu0 0.0
  %5313 = vmatprep.subr.mxu0 0.0
  %5314 = vmatpush1.msra.mxu0 0.0
  %5315 = vmatprep.subr.mxu0 0.0
  %5316 = vmatpush1.msra.mxu0 0.0
  %5317 = vmatprep.subr.mxu0 0.0
  %5318 = vmatpush1.msra.mxu0 0.0
  %5319 = vmatprep.subr.mxu0 0.0
  %5320 = vmatpush1.msra.mxu0 0.0
  %5321 = vmatprep.subr.mxu0 0.0
  %5322 = vmatpush1.msra.mxu0 %v5289
  %5323 = vmatprep.subr.mxu0 0.0
  %5324 = vmatpush2.msra.mxu0 0.0
  %5325 = vmatprep.subr.mxu0 0.0
  %5326 = vmatpush2.msra.mxu0 0.0
  %5327 = vmatprep.subr.mxu0 0.0
  %5328 = vmatpush2.msra.mxu0 0.0
  %5329 = vmatprep.subr.mxu0 0.0
  %5330 = vmatpush2.msra.mxu0 0.0
  %5331 = vmatprep.subr.mxu0 0.0
  %5332 = vmatpush2.msra.mxu0 0.0
  %5333 = vmatprep.subr.mxu0 0.0
  %5334 = vmatpush2.msra.mxu0 0.0
  %5335 = vmatprep.subr.mxu0 0.0
  %5336 = vmatpush2.msra.mxu0 0.0
  %5337 = vmatprep.subr.mxu0 0.0
  %5338 = vmatpush2.msra.mxu0 0.0
  %5339 = vmatprep.subr.mxu0 0.0
  %5340 = vmatpush2.msra.mxu0 0.0
  %5341 = vmatprep.subr.mxu0 0.0
  %5342 = vmatpush2.msra.mxu0 0.0
  %5343 = vmatprep.subr.mxu0 0.0
  %5344 = vmatpush2.msra.mxu0 0.0
  %5345 = vmatprep.subr.mxu0 0.0
  %5346 = vmatpush2.msra.mxu0 0.0
  %5347 = vmatprep.subr.mxu0 0.0
  %5348 = vmatpush2.msra.mxu0 0.0
  %5349 = vmatprep.subr.mxu0 0.0
  %5350 = vmatpush2.msra.mxu0 0.0
  %5351 = vmatprep.subr.mxu0 0.0
  %5352 = vmatpush2.msra.mxu0 0.0
  %5353 = vmatprep.subr.mxu0 0.0
  %5354 = vmatpush2.msra.mxu0 0.0
  %5355 = vmatprep.mubr.f32.mxu0 0.0
  %5356 = vmatmul.mubr.f32.gmra.mxu0 %v4979
  %v5357 = vpop.f32.mrf.mxu0
  %v5358 = vadd.f32 %v5285, %v5357
  %v5359 = vpop.f32.mrf.mxu0
  %5360 = vdwg.mxu0
  %v5362 = vlaneseq
  %v5363 = vshrl.u32 %v5362, 7
  %v5364 = vsub.s32 0, %v5363
  %v5365 = vrot.slane %v4900, %v5364
  %v5367 = vadd.f32 %v5358, %v5365
  %v5369 = vsel %vm70, %v4895, 0
  %5371 = vmatprep.subr.mxu0 0.0
  %5372 = vmatpush1.msra.mxu0 0.0
  %5373 = vmatprep.subr.mxu0 0.0
  %5374 = vmatpush1.msra.mxu0 0.0
  %5375 = vmatprep.subr.mxu0 0.0
  %5376 = vmatpush1.msra.mxu0 0.0
  %5377 = vmatprep.subr.mxu0 0.0
  %5378 = vmatpush1.msra.mxu0 0.0
  %5379 = vmatprep.subr.mxu0 0.0
  %5380 = vmatpush1.msra.mxu0 0.0
  %5381 = vmatprep.subr.mxu0 0.0
  %5382 = vmatpush1.msra.mxu0 0.0
  %5383 = vmatprep.subr.mxu0 0.0
  %5384 = vmatpush1.msra.mxu0 0.0
  %5385 = vmatprep.subr.mxu0 0.0
  %5386 = vmatpush1.msra.mxu0 0.0
  %5387 = vmatprep.subr.mxu0 0.0
  %5388 = vmatpush1.msra.mxu0 0.0
  %5389 = vmatprep.subr.mxu0 0.0
  %5390 = vmatpush1.msra.mxu0 0.0
  %5391 = vmatprep.subr.mxu0 0.0
  %5392 = vmatpush1.msra.mxu0 0.0
  %5393 = vmatprep.subr.mxu0 0.0
  %5394 = vmatpush1.msra.mxu0 0.0
  %5395 = vmatprep.subr.mxu0 0.0
  %5396 = vmatpush1.msra.mxu0 0.0
  %5397 = vmatprep.subr.mxu0 0.0
  %5398 = vmatpush1.msra.mxu0 0.0
  %5399 = vmatprep.subr.mxu0 0.0
  %5400 = vmatpush1.msra.mxu0 0.0
  %5401 = vmatprep.subr.mxu0 0.0
  %5402 = vmatpush1.msra.mxu0 %v5369
  %5403 = vmatprep.subr.mxu0 0.0
  %5404 = vmatpush2.msra.mxu0 0.0
  %5405 = vmatprep.subr.mxu0 0.0
  %5406 = vmatpush2.msra.mxu0 0.0
  %5407 = vmatprep.subr.mxu0 0.0
  %5408 = vmatpush2.msra.mxu0 0.0
  %5409 = vmatprep.subr.mxu0 0.0
  %5410 = vmatpush2.msra.mxu0 0.0
  %5411 = vmatprep.subr.mxu0 0.0
  %5412 = vmatpush2.msra.mxu0 0.0
  %5413 = vmatprep.subr.mxu0 0.0
  %5414 = vmatpush2.msra.mxu0 0.0
  %5415 = vmatprep.subr.mxu0 0.0
  %5416 = vmatpush2.msra.mxu0 0.0
  %5417 = vmatprep.subr.mxu0 0.0
  %5418 = vmatpush2.msra.mxu0 0.0
  %5419 = vmatprep.subr.mxu0 0.0
  %5420 = vmatpush2.msra.mxu0 0.0
  %5421 = vmatprep.subr.mxu0 0.0
  %5422 = vmatpush2.msra.mxu0 0.0
  %5423 = vmatprep.subr.mxu0 0.0
  %5424 = vmatpush2.msra.mxu0 0.0
  %5425 = vmatprep.subr.mxu0 0.0
  %5426 = vmatpush2.msra.mxu0 0.0
  %5427 = vmatprep.subr.mxu0 0.0
  %5428 = vmatpush2.msra.mxu0 0.0
  %5429 = vmatprep.subr.mxu0 0.0
  %5430 = vmatpush2.msra.mxu0 0.0
  %5431 = vmatprep.subr.mxu0 0.0
  %5432 = vmatpush2.msra.mxu0 0.0
  %5433 = vmatprep.subr.mxu0 0.0
  %5434 = vmatpush2.msra.mxu0 0.0
  %5435 = vmatprep.mubr.f32.mxu0 0.0
  %5436 = vmatmul.mubr.f32.gmra.mxu0 %v68
  %v5437 = vpop.f32.mrf.mxu0
  %v5438 = vadd.f32 0.0, %v5437
  %v5439 = vpop.f32.mrf.mxu0
  %5440 = vdwg.mxu0
  %v5442 = vsel %vm4981, %v4888, 0
  %5444 = vmatprep.subr.mxu0 0.0
  %5445 = vmatpush1.msra.mxu0 0.0
  %5446 = vmatprep.subr.mxu0 0.0
  %5447 = vmatpush1.msra.mxu0 0.0
  %5448 = vmatprep.subr.mxu0 0.0
  %5449 = vmatpush1.msra.mxu0 0.0
  %5450 = vmatprep.subr.mxu0 0.0
  %5451 = vmatpush1.msra.mxu0 0.0
  %5452 = vmatprep.subr.mxu0 0.0
  %5453 = vmatpush1.msra.mxu0 0.0
  %5454 = vmatprep.subr.mxu0 0.0
  %5455 = vmatpush1.msra.mxu0 0.0
  %5456 = vmatprep.subr.mxu0 0.0
  %5457 = vmatpush1.msra.mxu0 0.0
  %5458 = vmatprep.subr.mxu0 0.0
  %5459 = vmatpush1.msra.mxu0 0.0
  %5460 = vmatprep.subr.mxu0 0.0
  %5461 = vmatpush1.msra.mxu0 0.0
  %5462 = vmatprep.subr.mxu0 0.0
  %5463 = vmatpush1.msra.mxu0 0.0
  %5464 = vmatprep.subr.mxu0 0.0
  %5465 = vmatpush1.msra.mxu0 0.0
  %5466 = vmatprep.subr.mxu0 0.0
  %5467 = vmatpush1.msra.mxu0 0.0
  %5468 = vmatprep.subr.mxu0 0.0
  %5469 = vmatpush1.msra.mxu0 0.0
  %5470 = vmatprep.subr.mxu0 0.0
  %5471 = vmatpush1.msra.mxu0 0.0
  %5472 = vmatprep.subr.mxu0 0.0
  %5473 = vmatpush1.msra.mxu0 0.0
  %5474 = vmatprep.subr.mxu0 0.0
  %5475 = vmatpush1.msra.mxu0 %v5442
  %5476 = vmatprep.subr.mxu0 0.0
  %5477 = vmatpush2.msra.mxu0 0.0
  %5478 = vmatprep.subr.mxu0 0.0
  %5479 = vmatpush2.msra.mxu0 0.0
  %5480 = vmatprep.subr.mxu0 0.0
  %5481 = vmatpush2.msra.mxu0 0.0
  %5482 = vmatprep.subr.mxu0 0.0
  %5483 = vmatpush2.msra.mxu0 0.0
  %5484 = vmatprep.subr.mxu0 0.0
  %5485 = vmatpush2.msra.mxu0 0.0
  %5486 = vmatprep.subr.mxu0 0.0
  %5487 = vmatpush2.msra.mxu0 0.0
  %5488 = vmatprep.subr.mxu0 0.0
  %5489 = vmatpush2.msra.mxu0 0.0
  %5490 = vmatprep.subr.mxu0 0.0
  %5491 = vmatpush2.msra.mxu0 0.0
  %5492 = vmatprep.subr.mxu0 0.0
  %5493 = vmatpush2.msra.mxu0 0.0
  %5494 = vmatprep.subr.mxu0 0.0
  %5495 = vmatpush2.msra.mxu0 0.0
  %5496 = vmatprep.subr.mxu0 0.0
  %5497 = vmatpush2.msra.mxu0 0.0
  %5498 = vmatprep.subr.mxu0 0.0
  %5499 = vmatpush2.msra.mxu0 0.0
  %5500 = vmatprep.subr.mxu0 0.0
  %5501 = vmatpush2.msra.mxu0 0.0
  %5502 = vmatprep.subr.mxu0 0.0
  %5503 = vmatpush2.msra.mxu0 0.0
  %5504 = vmatprep.subr.mxu0 0.0
  %5505 = vmatpush2.msra.mxu0 0.0
  %5506 = vmatprep.subr.mxu0 0.0
  %5507 = vmatpush2.msra.mxu0 0.0
  %5508 = vmatprep.mubr.f32.mxu0 0.0
  %5509 = vmatmul.mubr.f32.gmra.mxu0 %v4979
  %v5510 = vpop.f32.mrf.mxu0
  %v5511 = vadd.f32 %v5438, %v5510
  %v5512 = vpop.f32.mrf.mxu0
  %5513 = vdwg.mxu0
  %v5515 = vlaneseq
  %v5516 = vshrl.u32 %v5515, 7
  %v5517 = vsub.s32 0, %v5516
  %v5518 = vrot.slane %v4902, %v5517
  %v5520 = vadd.f32 %v5511, %v5518
  %v5521 = vsub.f32 0.0, %v5061
  %v5522 = vmul.f32 %v5521, 1.442695
  %v5523 = vpow.pop %v5522
  %v5524 = vadd.f32 %v5523, 1.0
  %v5525 = vrcp.pop %v5524
  %v5526 = vmul.f32 1.0, %v5525
  %v5527 = vsub.f32 0.0, %v5214
  %v5528 = vmul.f32 %v5527, 1.442695
  %v5529 = vpow.pop %v5528
  %v5530 = vadd.f32 %v5529, 1.0
  %v5531 = vrcp.pop %v5530
  %v5532 = vmul.f32 1.0, %v5531
  %v5533 = vtanh.pop %v5367
  %v5534 = vsub.f32 0.0, %v5520
  %v5535 = vmul.f32 %v5534, 1.442695
  %v5536 = vpow.pop %v5535
  %v5537 = vadd.f32 %v5536, 1.0
  %v5538 = vrcp.pop %v5537
  %v5539 = vmul.f32 1.0, %v5538
  %v5540 = vmul.f32 %v5532, 0.0
  %v5541 = vmul.f32 %v5526, %v5533
  %v5542 = vadd.f32 %v5540, %v5541
  %v5543 = vtanh.pop %v5542
  %v5544 = vmul.f32 %v5539, %v5543
  %s5545 = scalar_lea.vmem %s1, 8
  %v5546 = vld [vmem:[%s5545] sm:$0xff]
  %v5548 = vsel %vm66, %v5544, 0
  %5550 = vmatprep.subr.mxu0 0.0
  %5551 = vmatpush1.msra.mxu0 0.0
  %5552 = vmatprep.subr.mxu0 0.0
  %5553 = vmatpush1.msra.mxu0 0.0
  %5554 = vmatprep.subr.mxu0 0.0
  %5555 = vmatpush1.msra.mxu0 0.0
  %5556 = vmatprep.subr.mxu0 0.0
  %5557 = vmatpush1.msra.mxu0 0.0
  %5558 = vmatprep.subr.mxu0 0.0
  %5559 = vmatpush1.msra.mxu0 0.0
  %5560 = vmatprep.subr.mxu0 0.0
  %5561 = vmatpush1.msra.mxu0 0.0
  %5562 = vmatprep.subr.mxu0 0.0
  %5563 = vmatpush1.msra.mxu0 0.0
  %5564 = vmatprep.subr.mxu0 0.0
  %5565 = vmatpush1.msra.mxu0 0.0
  %5566 = vmatprep.subr.mxu0 0.0
  %5567 = vmatpush1.msra.mxu0 0.0
  %5568 = vmatprep.subr.mxu0 0.0
  %5569 = vmatpush1.msra.mxu0 0.0
  %5570 = vmatprep.subr.mxu0 0.0
  %5571 = vmatpush1.msra.mxu0 0.0
  %5572 = vmatprep.subr.mxu0 0.0
  %5573 = vmatpush1.msra.mxu0 0.0
  %5574 = vmatprep.subr.mxu0 0.0
  %5575 = vmatpush1.msra.mxu0 0.0
  %5576 = vmatprep.subr.mxu0 0.0
  %5577 = vmatpush1.msra.mxu0 0.0
  %5578 = vmatprep.subr.mxu0 0.0
  %5579 = vmatpush1.msra.mxu0 0.0
  %5580 = vmatprep.subr.mxu0 0.0
  %5581 = vmatpush1.msra.mxu0 %v4905
  %5582 = vmatprep.subr.mxu0 0.0
  %5583 = vmatpush2.msra.mxu0 0.0
  %5584 = vmatprep.subr.mxu0 0.0
  %5585 = vmatpush2.msra.mxu0 0.0
  %5586 = vmatprep.subr.mxu0 0.0
  %5587 = vmatpush2.msra.mxu0 0.0
  %5588 = vmatprep.subr.mxu0 0.0
  %5589 = vmatpush2.msra.mxu0 0.0
  %5590 = vmatprep.subr.mxu0 0.0
  %5591 = vmatpush2.msra.mxu0 0.0
  %5592 = vmatprep.subr.mxu0 0.0
  %5593 = vmatpush2.msra.mxu0 0.0
  %5594 = vmatprep.subr.mxu0 0.0
  %5595 = vmatpush2.msra.mxu0 0.0
  %5596 = vmatprep.subr.mxu0 0.0
  %5597 = vmatpush2.msra.mxu0 0.0
  %5598 = vmatprep.subr.mxu0 0.0
  %5599 = vmatpush2.msra.mxu0 0.0
  %5600 = vmatprep.subr.mxu0 0.0
  %5601 = vmatpush2.msra.mxu0 0.0
  %5602 = vmatprep.subr.mxu0 0.0
  %5603 = vmatpush2.msra.mxu0 0.0
  %5604 = vmatprep.subr.mxu0 0.0
  %5605 = vmatpush2.msra.mxu0 0.0
  %5606 = vmatprep.subr.mxu0 0.0
  %5607 = vmatpush2.msra.mxu0 0.0
  %5608 = vmatprep.subr.mxu0 0.0
  %5609 = vmatpush2.msra.mxu0 0.0
  %5610 = vmatprep.subr.mxu0 0.0
  %5611 = vmatpush2.msra.mxu0 0.0
  %5612 = vmatprep.subr.mxu0 0.0
  %5613 = vmatpush2.msra.mxu0 0.0
  %5614 = vmatprep.mubr.f32.mxu0 0.0
  %5615 = vmatmul.mubr.f32.gmra.mxu0 %v5548
  %v5616 = vpop.f32.mrf.mxu0
  %v5617 = vadd.f32 0.0, %v5616
  %v5618 = vpop.f32.mrf.mxu0
  %5619 = vdwg.mxu0
  %v5621 = vsel %vm4977, %v5546, 0
  %5623 = vmatprep.subr.mxu0 0.0
  %5624 = vmatpush1.msra.mxu0 0.0
  %5625 = vmatprep.subr.mxu0 0.0
  %5626 = vmatpush1.msra.mxu0 0.0
  %5627 = vmatprep.subr.mxu0 0.0
  %5628 = vmatpush1.msra.mxu0 0.0
  %5629 = vmatprep.subr.mxu0 0.0
  %5630 = vmatpush1.msra.mxu0 0.0
  %5631 = vmatprep.subr.mxu0 0.0
  %5632 = vmatpush1.msra.mxu0 0.0
  %5633 = vmatprep.subr.mxu0 0.0
  %5634 = vmatpush1.msra.mxu0 0.0
  %5635 = vmatprep.subr.mxu0 0.0
  %5636 = vmatpush1.msra.mxu0 0.0
  %5637 = vmatprep.subr.mxu0 0.0
  %5638 = vmatpush1.msra.mxu0 0.0
  %5639 = vmatprep.subr.mxu0 0.0
  %5640 = vmatpush1.msra.mxu0 0.0
  %5641 = vmatprep.subr.mxu0 0.0
  %5642 = vmatpush1.msra.mxu0 0.0
  %5643 = vmatprep.subr.mxu0 0.0
  %5644 = vmatpush1.msra.mxu0 0.0
  %5645 = vmatprep.subr.mxu0 0.0
  %5646 = vmatpush1.msra.mxu0 0.0
  %5647 = vmatprep.subr.mxu0 0.0
  %5648 = vmatpush1.msra.mxu0 0.0
  %5649 = vmatprep.subr.mxu0 0.0
  %5650 = vmatpush1.msra.mxu0 0.0
  %5651 = vmatprep.subr.mxu0 0.0
  %5652 = vmatpush1.msra.mxu0 0.0
  %5653 = vmatprep.subr.mxu0 0.0
  %5654 = vmatpush1.msra.mxu0 %v4983
  %5655 = vmatprep.subr.mxu0 0.0
  %5656 = vmatpush2.msra.mxu0 0.0
  %5657 = vmatprep.subr.mxu0 0.0
  %5658 = vmatpush2.msra.mxu0 0.0
  %5659 = vmatprep.subr.mxu0 0.0
  %5660 = vmatpush2.msra.mxu0 0.0
  %5661 = vmatprep.subr.mxu0 0.0
  %5662 = vmatpush2.msra.mxu0 0.0
  %5663 = vmatprep.subr.mxu0 0.0
  %5664 = vmatpush2.msra.mxu0 0.0
  %5665 = vmatprep.subr.mxu0 0.0
  %5666 = vmatpush2.msra.mxu0 0.0
  %5667 = vmatprep.subr.mxu0 0.0
  %5668 = vmatpush2.msra.mxu0 0.0
  %5669 = vmatprep.subr.mxu0 0.0
  %5670 = vmatpush2.msra.mxu0 0.0
  %5671 = vmatprep.subr.mxu0 0.0
  %5672 = vmatpush2.msra.mxu0 0.0
  %5673 = vmatprep.subr.mxu0 0.0
  %5674 = vmatpush2.msra.mxu0 0.0
  %5675 = vmatprep.subr.mxu0 0.0
  %5676 = vmatpush2.msra.mxu0 0.0
  %5677 = vmatprep.subr.mxu0 0.0
  %5678 = vmatpush2.msra.mxu0 0.0
  %5679 = vmatprep.subr.mxu0 0.0
  %5680 = vmatpush2.msra.mxu0 0.0
  %5681 = vmatprep.subr.mxu0 0.0
  %5682 = vmatpush2.msra.mxu0 0.0
  %5683 = vmatprep.subr.mxu0 0.0
  %5684 = vmatpush2.msra.mxu0 0.0
  %5685 = vmatprep.subr.mxu0 0.0
  %5686 = vmatpush2.msra.mxu0 0.0
  %5687 = vmatprep.mubr.f32.mxu0 0.0
  %5688 = vmatmul.mubr.f32.gmra.mxu0 %v5621
  %v5689 = vpop.f32.mrf.mxu0
  %v5690 = vadd.f32 %v5617, %v5689
  %v5691 = vpop.f32.mrf.mxu0
  %5692 = vdwg.mxu0
  %v5693 = vadd.f32 %v5690, %v5059
  %5694 = vmatprep.subr.mxu0 0.0
  %5695 = vmatpush1.msra.mxu0 0.0
  %5696 = vmatprep.subr.mxu0 0.0
  %5697 = vmatpush1.msra.mxu0 0.0
  %5698 = vmatprep.subr.mxu0 0.0
  %5699 = vmatpush1.msra.mxu0 0.0
  %5700 = vmatprep.subr.mxu0 0.0
  %5701 = vmatpush1.msra.mxu0 0.0
  %5702 = vmatprep.subr.mxu0 0.0
  %5703 = vmatpush1.msra.mxu0 0.0
  %5704 = vmatprep.subr.mxu0 0.0
  %5705 = vmatpush1.msra.mxu0 0.0
  %5706 = vmatprep.subr.mxu0 0.0
  %5707 = vmatpush1.msra.mxu0 0.0
  %5708 = vmatprep.subr.mxu0 0.0
  %5709 = vmatpush1.msra.mxu0 0.0
  %5710 = vmatprep.subr.mxu0 0.0
  %5711 = vmatpush1.msra.mxu0 0.0
  %5712 = vmatprep.subr.mxu0 0.0
  %5713 = vmatpush1.msra.mxu0 0.0
  %5714 = vmatprep.subr.mxu0 0.0
  %5715 = vmatpush1.msra.mxu0 0.0
  %5716 = vmatprep.subr.mxu0 0.0
  %5717 = vmatpush1.msra.mxu0 0.0
  %5718 = vmatprep.subr.mxu0 0.0
  %5719 = vmatpush1.msra.mxu0 0.0
  %5720 = vmatprep.subr.mxu0 0.0
  %5721 = vmatpush1.msra.mxu0 0.0
  %5722 = vmatprep.subr.mxu0 0.0
  %5723 = vmatpush1.msra.mxu0 0.0
  %5724 = vmatprep.subr.mxu0 0.0
  %5725 = vmatpush1.msra.mxu0 %v5063
  %5726 = vmatprep.subr.mxu0 0.0
  %5727 = vmatpush2.msra.mxu0 0.0
  %5728 = vmatprep.subr.mxu0 0.0
  %5729 = vmatpush2.msra.mxu0 0.0
  %5730 = vmatprep.subr.mxu0 0.0
  %5731 = vmatpush2.msra.mxu0 0.0
  %5732 = vmatprep.subr.mxu0 0.0
  %5733 = vmatpush2.msra.mxu0 0.0
  %5734 = vmatprep.subr.mxu0 0.0
  %5735 = vmatpush2.msra.mxu0 0.0
  %5736 = vmatprep.subr.mxu0 0.0
  %5737 = vmatpush2.msra.mxu0 0.0
  %5738 = vmatprep.subr.mxu0 0.0
  %5739 = vmatpush2.msra.mxu0 0.0
  %5740 = vmatprep.subr.mxu0 0.0
  %5741 = vmatpush2.msra.mxu0 0.0
  %5742 = vmatprep.subr.mxu0 0.0
  %5743 = vmatpush2.msra.mxu0 0.0
  %5744 = vmatprep.subr.mxu0 0.0
  %5745 = vmatpush2.msra.mxu0 0.0
  %5746 = vmatprep.subr.mxu0 0.0
  %5747 = vmatpush2.msra.mxu0 0.0
  %5748 = vmatprep.subr.mxu0 0.0
  %5749 = vmatpush2.msra.mxu0 0.0
  %5750 = vmatprep.subr.mxu0 0.0
  %5751 = vmatpush2.msra.mxu0 0.0
  %5752 = vmatprep.subr.mxu0 0.0
  %5753 = vmatpush2.msra.mxu0 0.0
  %5754 = vmatprep.subr.mxu0 0.0
  %5755 = vmatpush2.msra.mxu0 0.0
  %5756 = vmatprep.subr.mxu0 0.0
  %5757 = vmatpush2.msra.mxu0 0.0
  %5758 = vmatprep.mubr.f32.mxu0 0.0
  %5759 = vmatmul.mubr.f32.gmra.mxu0 %v5548
  %v5760 = vpop.f32.mrf.mxu0
  %v5761 = vadd.f32 0.0, %v5760
  %v5762 = vpop.f32.mrf.mxu0
  %5763 = vdwg.mxu0
  %5764 = vmatprep.subr.mxu0 0.0
  %5765 = vmatpush1.msra.mxu0 0.0
  %5766 = vmatprep.subr.mxu0 0.0
  %5767 = vmatpush1.msra.mxu0 0.0
  %5768 = vmatprep.subr.mxu0 0.0
  %5769 = vmatpush1.msra.mxu0 0.0
  %5770 = vmatprep.subr.mxu0 0.0
  %5771 = vmatpush1.msra.mxu0 0.0
  %5772 = vmatprep.subr.mxu0 0.0
  %5773 = vmatpush1.msra.mxu0 0.0
  %5774 = vmatprep.subr.mxu0 0.0
  %5775 = vmatpush1.msra.mxu0 0.0
  %5776 = vmatprep.subr.mxu0 0.0
  %5777 = vmatpush1.msra.mxu0 0.0
  %5778 = vmatprep.subr.mxu0 0.0
  %5779 = vmatpush1.msra.mxu0 0.0
  %5780 = vmatprep.subr.mxu0 0.0
  %5781 = vmatpush1.msra.mxu0 0.0
  %5782 = vmatprep.subr.mxu0 0.0
  %5783 = vmatpush1.msra.mxu0 0.0
  %5784 = vmatprep.subr.mxu0 0.0
  %5785 = vmatpush1.msra.mxu0 0.0
  %5786 = vmatprep.subr.mxu0 0.0
  %5787 = vmatpush1.msra.mxu0 0.0
  %5788 = vmatprep.subr.mxu0 0.0
  %5789 = vmatpush1.msra.mxu0 0.0
  %5790 = vmatprep.subr.mxu0 0.0
  %5791 = vmatpush1.msra.mxu0 0.0
  %5792 = vmatprep.subr.mxu0 0.0
  %5793 = vmatpush1.msra.mxu0 0.0
  %5794 = vmatprep.subr.mxu0 0.0
  %5795 = vmatpush1.msra.mxu0 %v5136
  %5796 = vmatprep.subr.mxu0 0.0
  %5797 = vmatpush2.msra.mxu0 0.0
  %5798 = vmatprep.subr.mxu0 0.0
  %5799 = vmatpush2.msra.mxu0 0.0
  %5800 = vmatprep.subr.mxu0 0.0
  %5801 = vmatpush2.msra.mxu0 0.0
  %5802 = vmatprep.subr.mxu0 0.0
  %5803 = vmatpush2.msra.mxu0 0.0
  %5804 = vmatprep.subr.mxu0 0.0
  %5805 = vmatpush2.msra.mxu0 0.0
  %5806 = vmatprep.subr.mxu0 0.0
  %5807 = vmatpush2.msra.mxu0 0.0
  %5808 = vmatprep.subr.mxu0 0.0
  %5809 = vmatpush2.msra.mxu0 0.0
  %5810 = vmatprep.subr.mxu0 0.0
  %5811 = vmatpush2.msra.mxu0 0.0
  %5812 = vmatprep.subr.mxu0 0.0
  %5813 = vmatpush2.msra.mxu0 0.0
  %5814 = vmatprep.subr.mxu0 0.0
  %5815 = vmatpush2.msra.mxu0 0.0
  %5816 = vmatprep.subr.mxu0 0.0
  %5817 = vmatpush2.msra.mxu0 0.0
  %5818 = vmatprep.subr.mxu0 0.0
  %5819 = vmatpush2.msra.mxu0 0.0
  %5820 = vmatprep.subr.mxu0 0.0
  %5821 = vmatpush2.msra.mxu0 0.0
  %5822 = vmatprep.subr.mxu0 0.0
  %5823 = vmatpush2.msra.mxu0 0.0
  %5824 = vmatprep.subr.mxu0 0.0
  %5825 = vmatpush2.msra.mxu0 0.0
  %5826 = vmatprep.subr.mxu0 0.0
  %5827 = vmatpush2.msra.mxu0 0.0
  %5828 = vmatprep.mubr.f32.mxu0 0.0
  %5829 = vmatmul.mubr.f32.gmra.mxu0 %v5621
  %v5830 = vpop.f32.mrf.mxu0
  %v5831 = vadd.f32 %v5761, %v5830
  %v5832 = vpop.f32.mrf.mxu0
  %5833 = vdwg.mxu0
  %v5834 = vadd.f32 %v5831, %v5212
  %5835 = vmatprep.subr.mxu0 0.0
  %5836 = vmatpush1.msra.mxu0 0.0
  %5837 = vmatprep.subr.mxu0 0.0
  %5838 = vmatpush1.msra.mxu0 0.0
  %5839 = vmatprep.subr.mxu0 0.0
  %5840 = vmatpush1.msra.mxu0 0.0
  %5841 = vmatprep.subr.mxu0 0.0
  %5842 = vmatpush1.msra.mxu0 0.0
  %5843 = vmatprep.subr.mxu0 0.0
  %5844 = vmatpush1.msra.mxu0 0.0
  %5845 = vmatprep.subr.mxu0 0.0
  %5846 = vmatpush1.msra.mxu0 0.0
  %5847 = vmatprep.subr.mxu0 0.0
  %5848 = vmatpush1.msra.mxu0 0.0
  %5849 = vmatprep.subr.mxu0 0.0
  %5850 = vmatpush1.msra.mxu0 0.0
  %5851 = vmatprep.subr.mxu0 0.0
  %5852 = vmatpush1.msra.mxu0 0.0
  %5853 = vmatprep.subr.mxu0 0.0
  %5854 = vmatpush1.msra.mxu0 0.0
  %5855 = vmatprep.subr.mxu0 0.0
  %5856 = vmatpush1.msra.mxu0 0.0
  %5857 = vmatprep.subr.mxu0 0.0
  %5858 = vmatpush1.msra.mxu0 0.0
  %5859 = vmatprep.subr.mxu0 0.0
  %5860 = vmatpush1.msra.mxu0 0.0
  %5861 = vmatprep.subr.mxu0 0.0
  %5862 = vmatpush1.msra.mxu0 0.0
  %5863 = vmatprep.subr.mxu0 0.0
  %5864 = vmatpush1.msra.mxu0 0.0
  %5865 = vmatprep.subr.mxu0 0.0
  %5866 = vmatpush1.msra.mxu0 %v5216
  %5867 = vmatprep.subr.mxu0 0.0
  %5868 = vmatpush2.msra.mxu0 0.0
  %5869 = vmatprep.subr.mxu0 0.0
  %5870 = vmatpush2.msra.mxu0 0.0
  %5871 = vmatprep.subr.mxu0 0.0
  %5872 = vmatpush2.msra.mxu0 0.0
  %5873 = vmatprep.subr.mxu0 0.0
  %5874 = vmatpush2.msra.mxu0 0.0
  %5875 = vmatprep.subr.mxu0 0.0
  %5876 = vmatpush2.msra.mxu0 0.0
  %5877 = vmatprep.subr.mxu0 0.0
  %5878 = vmatpush2.msra.mxu0 0.0
  %5879 = vmatprep.subr.mxu0 0.0
  %5880 = vmatpush2.msra.mxu0 0.0
  %5881 = vmatprep.subr.mxu0 0.0
  %5882 = vmatpush2.msra.mxu0 0.0
  %5883 = vmatprep.subr.mxu0 0.0
  %5884 = vmatpush2.msra.mxu0 0.0
  %5885 = vmatprep.subr.mxu0 0.0
  %5886 = vmatpush2.msra.mxu0 0.0
  %5887 = vmatprep.subr.mxu0 0.0
  %5888 = vmatpush2.msra.mxu0 0.0
  %5889 = vmatprep.subr.mxu0 0.0
  %5890 = vmatpush2.msra.mxu0 0.0
  %5891 = vmatprep.subr.mxu0 0.0
  %5892 = vmatpush2.msra.mxu0 0.0
  %5893 = vmatprep.subr.mxu0 0.0
  %5894 = vmatpush2.msra.mxu0 0.0
  %5895 = vmatprep.subr.mxu0 0.0
  %5896 = vmatpush2.msra.mxu0 0.0
  %5897 = vmatprep.subr.mxu0 0.0
  %5898 = vmatpush2.msra.mxu0 0.0
  %5899 = vmatprep.mubr.f32.mxu0 0.0
  %5900 = vmatmul.mubr.f32.gmra.mxu0 %v5548
  %v5901 = vpop.f32.mrf.mxu0
  %v5902 = vadd.f32 0.0, %v5901
  %v5903 = vpop.f32.mrf.mxu0
  %5904 = vdwg.mxu0
  %5905 = vmatprep.subr.mxu0 0.0
  %5906 = vmatpush1.msra.mxu0 0.0
  %5907 = vmatprep.subr.mxu0 0.0
  %5908 = vmatpush1.msra.mxu0 0.0
  %5909 = vmatprep.subr.mxu0 0.0
  %5910 = vmatpush1.msra.mxu0 0.0
  %5911 = vmatprep.subr.mxu0 0.0
  %5912 = vmatpush1.msra.mxu0 0.0
  %5913 = vmatprep.subr.mxu0 0.0
  %5914 = vmatpush1.msra.mxu0 0.0
  %5915 = vmatprep.subr.mxu0 0.0
  %5916 = vmatpush1.msra.mxu0 0.0
  %5917 = vmatprep.subr.mxu0 0.0
  %5918 = vmatpush1.msra.mxu0 0.0
  %5919 = vmatprep.subr.mxu0 0.0
  %5920 = vmatpush1.msra.mxu0 0.0
  %5921 = vmatprep.subr.mxu0 0.0
  %5922 = vmatpush1.msra.mxu0 0.0
  %5923 = vmatprep.subr.mxu0 0.0
  %5924 = vmatpush1.msra.mxu0 0.0
  %5925 = vmatprep.subr.mxu0 0.0
  %5926 = vmatpush1.msra.mxu0 0.0
  %5927 = vmatprep.subr.mxu0 0.0
  %5928 = vmatpush1.msra.mxu0 0.0
  %5929 = vmatprep.subr.mxu0 0.0
  %5930 = vmatpush1.msra.mxu0 0.0
  %5931 = vmatprep.subr.mxu0 0.0
  %5932 = vmatpush1.msra.mxu0 0.0
  %5933 = vmatprep.subr.mxu0 0.0
  %5934 = vmatpush1.msra.mxu0 0.0
  %5935 = vmatprep.subr.mxu0 0.0
  %5936 = vmatpush1.msra.mxu0 %v5289
  %5937 = vmatprep.subr.mxu0 0.0
  %5938 = vmatpush2.msra.mxu0 0.0
  %5939 = vmatprep.subr.mxu0 0.0
  %5940 = vmatpush2.msra.mxu0 0.0
  %5941 = vmatprep.subr.mxu0 0.0
  %5942 = vmatpush2.msra.mxu0 0.0
  %5943 = vmatprep.subr.mxu0 0.0
  %5944 = vmatpush2.msra.mxu0 0.0
  %5945 = vmatprep.subr.mxu0 0.0
  %5946 = vmatpush2.msra.mxu0 0.0
  %5947 = vmatprep.subr.mxu0 0.0
  %5948 = vmatpush2.msra.mxu0 0.0
  %5949 = vmatprep.subr.mxu0 0.0
  %5950 = vmatpush2.msra.mxu0 0.0
  %5951 = vmatprep.subr.mxu0 0.0
  %5952 = vmatpush2.msra.mxu0 0.0
  %5953 = vmatprep.subr.mxu0 0.0
  %5954 = vmatpush2.msra.mxu0 0.0
  %5955 = vmatprep.subr.mxu0 0.0
  %5956 = vmatpush2.msra.mxu0 0.0
  %5957 = vmatprep.subr.mxu0 0.0
  %5958 = vmatpush2.msra.mxu0 0.0
  %5959 = vmatprep.subr.mxu0 0.0
  %5960 = vmatpush2.msra.mxu0 0.0
  %5961 = vmatprep.subr.mxu0 0.0
  %5962 = vmatpush2.msra.mxu0 0.0
  %5963 = vmatprep.subr.mxu0 0.0
  %5964 = vmatpush2.msra.mxu0 0.0
  %5965 = vmatprep.subr.mxu0 0.0
  %5966 = vmatpush2.msra.mxu0 0.0
  %5967 = vmatprep.subr.mxu0 0.0
  %5968 = vmatpush2.msra.mxu0 0.0
  %5969 = vmatprep.mubr.f32.mxu0 0.0
  %5970 = vmatmul.mubr.f32.gmra.mxu0 %v5621
  %v5971 = vpop.f32.mrf.mxu0
  %v5972 = vadd.f32 %v5902, %v5971
  %v5973 = vpop.f32.mrf.mxu0
  %5974 = vdwg.mxu0
  %v5975 = vadd.f32 %v5972, %v5365
  %5976 = vmatprep.subr.mxu0 0.0
  %5977 = vmatpush1.msra.mxu0 0.0
  %5978 = vmatprep.subr.mxu0 0.0
  %5979 = vmatpush1.msra.mxu0 0.0
  %5980 = vmatprep.subr.mxu0 0.0
  %5981 = vmatpush1.msra.mxu0 0.0
  %5982 = vmatprep.subr.mxu0 0.0
  %5983 = vmatpush1.msra.mxu0 0.0
  %5984 = vmatprep.subr.mxu0 0.0
  %5985 = vmatpush1.msra.mxu0 0.0
  %5986 = vmatprep.subr.mxu0 0.0
  %5987 = vmatpush1.msra.mxu0 0.0
  %5988 = vmatprep.subr.mxu0 0.0
  %5989 = vmatpush1.msra.mxu0 0.0
  %5990 = vmatprep.subr.mxu0 0.0
  %5991 = vmatpush1.msra.mxu0 0.0
  %5992 = vmatprep.subr.mxu0 0.0
  %5993 = vmatpush1.msra.mxu0 0.0
  %5994 = vmatprep.subr.mxu0 0.0
  %5995 = vmatpush1.msra.mxu0 0.0
  %5996 = vmatprep.subr.mxu0 0.0
  %5997 = vmatpush1.msra.mxu0 0.0
  %5998 = vmatprep.subr.mxu0 0.0
  %5999 = vmatpush1.msra.mxu0 0.0
  %6000 = vmatprep.subr.mxu0 0.0
  %6001 = vmatpush1.msra.mxu0 0.0
  %6002 = vmatprep.subr.mxu0 0.0
  %6003 = vmatpush1.msra.mxu0 0.0
  %6004 = vmatprep.subr.mxu0 0.0
  %6005 = vmatpush1.msra.mxu0 0.0
  %6006 = vmatprep.subr.mxu0 0.0
  %6007 = vmatpush1.msra.mxu0 %v5369
  %6008 = vmatprep.subr.mxu0 0.0
  %6009 = vmatpush2.msra.mxu0 0.0
  %6010 = vmatprep.subr.mxu0 0.0
  %6011 = vmatpush2.msra.mxu0 0.0
  %6012 = vmatprep.subr.mxu0 0.0
  %6013 = vmatpush2.msra.mxu0 0.0
  %6014 = vmatprep.subr.mxu0 0.0
  %6015 = vmatpush2.msra.mxu0 0.0
  %6016 = vmatprep.subr.mxu0 0.0
  %6017 = vmatpush2.msra.mxu0 0.0
  %6018 = vmatprep.subr.mxu0 0.0
  %6019 = vmatpush2.msra.mxu0 0.0
  %6020 = vmatprep.subr.mxu0 0.0
  %6021 = vmatpush2.msra.mxu0 0.0
  %6022 = vmatprep.subr.mxu0 0.0
  %6023 = vmatpush2.msra.mxu0 0.0
  %6024 = vmatprep.subr.mxu0 0.0
  %6025 = vmatpush2.msra.mxu0 0.0
  %6026 = vmatprep.subr.mxu0 0.0
  %6027 = vmatpush2.msra.mxu0 0.0
  %6028 = vmatprep.subr.mxu0 0.0
  %6029 = vmatpush2.msra.mxu0 0.0
  %6030 = vmatprep.subr.mxu0 0.0
  %6031 = vmatpush2.msra.mxu0 0.0
  %6032 = vmatprep.subr.mxu0 0.0
  %6033 = vmatpush2.msra.mxu0 0.0
  %6034 = vmatprep.subr.mxu0 0.0
  %6035 = vmatpush2.msra.mxu0 0.0
  %6036 = vmatprep.subr.mxu0 0.0
  %6037 = vmatpush2.msra.mxu0 0.0
  %6038 = vmatprep.subr.mxu0 0.0
  %6039 = vmatpush2.msra.mxu0 0.0
  %6040 = vmatprep.mubr.f32.mxu0 0.0
  %6041 = vmatmul.mubr.f32.gmra.mxu0 %v5548
  %v6042 = vpop.f32.mrf.mxu0
  %v6043 = vadd.f32 0.0, %v6042
  %v6044 = vpop.f32.mrf.mxu0
  %6045 = vdwg.mxu0
  %6046 = vmatprep.subr.mxu0 0.0
  %6047 = vmatpush1.msra.mxu0 0.0
  %6048 = vmatprep.subr.mxu0 0.0
  %6049 = vmatpush1.msra.mxu0 0.0
  %6050 = vmatprep.subr.mxu0 0.0
  %6051 = vmatpush1.msra.mxu0 0.0
  %6052 = vmatprep.subr.mxu0 0.0
  %6053 = vmatpush1.msra.mxu0 0.0
  %6054 = vmatprep.subr.mxu0 0.0
  %6055 = vmatpush1.msra.mxu0 0.0
  %6056 = vmatprep.subr.mxu0 0.0
  %6057 = vmatpush1.msra.mxu0 0.0
  %6058 = vmatprep.subr.mxu0 0.0
  %6059 = vmatpush1.msra.mxu0 0.0
  %6060 = vmatprep.subr.mxu0 0.0
  %6061 = vmatpush1.msra.mxu0 0.0
  %6062 = vmatprep.subr.mxu0 0.0
  %6063 = vmatpush1.msra.mxu0 0.0
  %6064 = vmatprep.subr.mxu0 0.0
  %6065 = vmatpush1.msra.mxu0 0.0
  %6066 = vmatprep.subr.mxu0 0.0
  %6067 = vmatpush1.msra.mxu0 0.0
  %6068 = vmatprep.subr.mxu0 0.0
  %6069 = vmatpush1.msra.mxu0 0.0
  %6070 = vmatprep.subr.mxu0 0.0
  %6071 = vmatpush1.msra.mxu0 0.0
  %6072 = vmatprep.subr.mxu0 0.0
  %6073 = vmatpush1.msra.mxu0 0.0
  %6074 = vmatprep.subr.mxu0 0.0
  %6075 = vmatpush1.msra.mxu0 0.0
  %6076 = vmatprep.subr.mxu0 0.0
  %6077 = vmatpush1.msra.mxu0 %v5442
  %6078 = vmatprep.subr.mxu0 0.0
  %6079 = vmatpush2.msra.mxu0 0.0
  %6080 = vmatprep.subr.mxu0 0.0
  %6081 = vmatpush2.msra.mxu0 0.0
  %6082 = vmatprep.subr.mxu0 0.0
  %6083 = vmatpush2.msra.mxu0 0.0
  %6084 = vmatprep.subr.mxu0 0.0
  %6085 = vmatpush2.msra.mxu0 0.0
  %6086 = vmatprep.subr.mxu0 0.0
  %6087 = vmatpush2.msra.mxu0 0.0
  %6088 = vmatprep.subr.mxu0 0.0
  %6089 = vmatpush2.msra.mxu0 0.0
  %6090 = vmatprep.subr.mxu0 0.0
  %6091 = vmatpush2.msra.mxu0 0.0
  %6092 = vmatprep.subr.mxu0 0.0
  %6093 = vmatpush2.msra.mxu0 0.0
  %6094 = vmatprep.subr.mxu0 0.0
  %6095 = vmatpush2.msra.mxu0 0.0
  %6096 = vmatprep.subr.mxu0 0.0
  %6097 = vmatpush2.msra.mxu0 0.0
  %6098 = vmatprep.subr.mxu0 0.0
  %6099 = vmatpush2.msra.mxu0 0.0
  %6100 = vmatprep.subr.mxu0 0.0
  %6101 = vmatpush2.msra.mxu0 0.0
  %6102 = vmatprep.subr.mxu0 0.0
  %6103 = vmatpush2.msra.mxu0 0.0
  %6104 = vmatprep.subr.mxu0 0.0
  %6105 = vmatpush2.msra.mxu0 0.0
  %6106 = vmatprep.subr.mxu0 0.0
  %6107 = vmatpush2.msra.mxu0 0.0
  %6108 = vmatprep.subr.mxu0 0.0
  %6109 = vmatpush2.msra.mxu0 0.0
  %6110 = vmatprep.mubr.f32.mxu0 0.0
  %6111 = vmatmul.mubr.f32.gmra.mxu0 %v5621
  %v6112 = vpop.f32.mrf.mxu0
  %v6113 = vadd.f32 %v6043, %v6112
  %v6114 = vpop.f32.mrf.mxu0
  %6115 = vdwg.mxu0
  %v6116 = vadd.f32 %v6113, %v5518
  %v6117 = vsub.f32 0.0, %v5693
  %v6118 = vmul.f32 %v6117, 1.442695
  %v6119 = vpow.pop %v6118
  %v6120 = vadd.f32 %v6119, 1.0
  %v6121 = vrcp.pop %v6120
  %v6122 = vmul.f32 1.0, %v6121
  %v6123 = vsub.f32 0.0, %v5834
  %v6124 = vmul.f32 %v6123, 1.442695
  %v6125 = vpow.pop %v6124
  %v6126 = vadd.f32 %v6125, 1.0
  %v6127 = vrcp.pop %v6126
  %v6128 = vmul.f32 1.0, %v6127
  %v6129 = vtanh.pop %v5975
  %v6130 = vsub.f32 0.0, %v6116
  %v6131 = vmul.f32 %v6130, 1.442695
  %v6132 = vpow.pop %v6131
  %v6133 = vadd.f32 %v6132, 1.0
  %v6134 = vrcp.pop %v6133
  %v6135 = vmul.f32 1.0, %v6134
  %v6136 = vmul.f32 %v6128, %v5542
  %v6137 = vmul.f32 %v6122, %v6129
  %v6138 = vadd.f32 %v6136, %v6137
  %v6139 = vtanh.pop %v6138
  %v6140 = vmul.f32 %v6135, %v6139
  %s6141 = scalar_lea.vmem %s1, 16
  %v6142 = vld [vmem:[%s6141] sm:$0xff]
  %v6144 = vsel %vm66, %v6140, 0
  %6146 = vmatprep.subr.mxu0 0.0
  %6147 = vmatpush1.msra.mxu0 0.0
  %6148 = vmatprep.subr.mxu0 0.0
  %6149 = vmatpush1.msra.mxu0 0.0
  %6150 = vmatprep.subr.mxu0 0.0
  %6151 = vmatpush1.msra.mxu0 0.0
  %6152 = vmatprep.subr.mxu0 0.0
  %6153 = vmatpush1.msra.mxu0 0.0
  %6154 = vmatprep.subr.mxu0 0.0
  %6155 = vmatpush1.msra.mxu0 0.0
  %6156 = vmatprep.subr.mxu0 0.0
  %6157 = vmatpush1.msra.mxu0 0.0
  %6158 = vmatprep.subr.mxu0 0.0
  %6159 = vmatpush1.msra.mxu0 0.0
  %6160 = vmatprep.subr.mxu0 0.0
  %6161 = vmatpush1.msra.mxu0 0.0
  %6162 = vmatprep.subr.mxu0 0.0
  %6163 = vmatpush1.msra.mxu0 0.0
  %6164 = vmatprep.subr.mxu0 0.0
  %6165 = vmatpush1.msra.mxu0 0.0
  %6166 = vmatprep.subr.mxu0 0.0
  %6167 = vmatpush1.msra.mxu0 0.0
  %6168 = vmatprep.subr.mxu0 0.0
  %6169 = vmatpush1.msra.mxu0 0.0
  %6170 = vmatprep.subr.mxu0 0.0
  %6171 = vmatpush1.msra.mxu0 0.0
  %6172 = vmatprep.subr.mxu0 0.0
  %6173 = vmatpush1.msra.mxu0 0.0
  %6174 = vmatprep.subr.mxu0 0.0
  %6175 = vmatpush1.msra.mxu0 0.0
  %6176 = vmatprep.subr.mxu0 0.0
  %6177 = vmatpush1.msra.mxu0 %v4905
  %6178 = vmatprep.subr.mxu0 0.0
  %6179 = vmatpush2.msra.mxu0 0.0
  %6180 = vmatprep.subr.mxu0 0.0
  %6181 = vmatpush2.msra.mxu0 0.0
  %6182 = vmatprep.subr.mxu0 0.0
  %6183 = vmatpush2.msra.mxu0 0.0
  %6184 = vmatprep.subr.mxu0 0.0
  %6185 = vmatpush2.msra.mxu0 0.0
  %6186 = vmatprep.subr.mxu0 0.0
  %6187 = vmatpush2.msra.mxu0 0.0
  %6188 = vmatprep.subr.mxu0 0.0
  %6189 = vmatpush2.msra.mxu0 0.0
  %6190 = vmatprep.subr.mxu0 0.0
  %6191 = vmatpush2.msra.mxu0 0.0
  %6192 = vmatprep.subr.mxu0 0.0
  %6193 = vmatpush2.msra.mxu0 0.0
  %6194 = vmatprep.subr.mxu0 0.0
  %6195 = vmatpush2.msra.mxu0 0.0
  %6196 = vmatprep.subr.mxu0 0.0
  %6197 = vmatpush2.msra.mxu0 0.0
  %6198 = vmatprep.subr.mxu0 0.0
  %6199 = vmatpush2.msra.mxu0 0.0
  %6200 = vmatprep.subr.mxu0 0.0
  %6201 = vmatpush2.msra.mxu0 0.0
  %6202 = vmatprep.subr.mxu0 0.0
  %6203 = vmatpush2.msra.mxu0 0.0
  %6204 = vmatprep.subr.mxu0 0.0
  %6205 = vmatpush2.msra.mxu0 0.0
  %6206 = vmatprep.subr.mxu0 0.0
  %6207 = vmatpush2.msra.mxu0 0.0
  %6208 = vmatprep.subr.mxu0 0.0
  %6209 = vmatpush2.msra.mxu0 0.0
  %6210 = vmatprep.mubr.f32.mxu0 0.0
  %6211 = vmatmul.mubr.f32.gmra.mxu0 %v6144
  %v6212 = vpop.f32.mrf.mxu0
  %v6213 = vadd.f32 0.0, %v6212
  %v6214 = vpop.f32.mrf.mxu0
  %6215 = vdwg.mxu0
  %v6217 = vsel %vm4977, %v6142, 0
  %6219 = vmatprep.subr.mxu0 0.0
  %6220 = vmatpush1.msra.mxu0 0.0
  %6221 = vmatprep.subr.mxu0 0.0
  %6222 = vmatpush1.msra.mxu0 0.0
  %6223 = vmatprep.subr.mxu0 0.0
  %6224 = vmatpush1.msra.mxu0 0.0
  %6225 = vmatprep.subr.mxu0 0.0
  %6226 = vmatpush1.msra.mxu0 0.0
  %6227 = vmatprep.subr.mxu0 0.0
  %6228 = vmatpush1.msra.mxu0 0.0
  %6229 = vmatprep.subr.mxu0 0.0
  %6230 = vmatpush1.msra.mxu0 0.0
  %6231 = vmatprep.subr.mxu0 0.0
  %6232 = vmatpush1.msra.mxu0 0.0
  %6233 = vmatprep.subr.mxu0 0.0
  %6234 = vmatpush1.msra.mxu0 0.0
  %6235 = vmatprep.subr.mxu0 0.0
  %6236 = vmatpush1.msra.mxu0 0.0
  %6237 = vmatprep.subr.mxu0 0.0
  %6238 = vmatpush1.msra.mxu0 0.0
  %6239 = vmatprep.subr.mxu0 0.0
  %6240 = vmatpush1.msra.mxu0 0.0
  %6241 = vmatprep.subr.mxu0 0.0
  %6242 = vmatpush1.msra.mxu0 0.0
  %6243 = vmatprep.subr.mxu0 0.0
  %6244 = vmatpush1.msra.mxu0 0.0
  %6245 = vmatprep.subr.mxu0 0.0
  %6246 = vmatpush1.msra.mxu0 0.0
  %6247 = vmatprep.subr.mxu0 0.0
  %6248 = vmatpush1.msra.mxu0 0.0
  %6249 = vmatprep.subr.mxu0 0.0
  %6250 = vmatpush1.msra.mxu0 %v4983
  %6251 = vmatprep.subr.mxu0 0.0
  %6252 = vmatpush2.msra.mxu0 0.0
  %6253 = vmatprep.subr.mxu0 0.0
  %6254 = vmatpush2.msra.mxu0 0.0
  %6255 = vmatprep.subr.mxu0 0.0
  %6256 = vmatpush2.msra.mxu0 0.0
  %6257 = vmatprep.subr.mxu0 0.0
  %6258 = vmatpush2.msra.mxu0 0.0
  %6259 = vmatprep.subr.mxu0 0.0
  %6260 = vmatpush2.msra.mxu0 0.0
  %6261 = vmatprep.subr.mxu0 0.0
  %6262 = vmatpush2.msra.mxu0 0.0
  %6263 = vmatprep.subr.mxu0 0.0
  %6264 = vmatpush2.msra.mxu0 0.0
  %6265 = vmatprep.subr.mxu0 0.0
  %6266 = vmatpush2.msra.mxu0 0.0
  %6267 = vmatprep.subr.mxu0 0.0
  %6268 = vmatpush2.msra.mxu0 0.0
  %6269 = vmatprep.subr.mxu0 0.0
  %6270 = vmatpush2.msra.mxu0 0.0
  %6271 = vmatprep.subr.mxu0 0.0
  %6272 = vmatpush2.msra.mxu0 0.0
  %6273 = vmatprep.subr.mxu0 0.0
  %6274 = vmatpush2.msra.mxu0 0.0
  %6275 = vmatprep.subr.mxu0 0.0
  %6276 = vmatpush2.msra.mxu0 0.0
  %6277 = vmatprep.subr.mxu0 0.0
  %6278 = vmatpush2.msra.mxu0 0.0
  %6279 = vmatprep.subr.mxu0 0.0
  %6280 = vmatpush2.msra.mxu0 0.0
  %6281 = vmatprep.subr.mxu0 0.0
  %6282 = vmatpush2.msra.mxu0 0.0
  %6283 = vmatprep.mubr.f32.mxu0 0.0
  %6284 = vmatmul.mubr.f32.gmra.mxu0 %v6217
  %v6285 = vpop.f32.mrf.mxu0
  %v6286 = vadd.f32 %v6213, %v6285
  %v6287 = vpop.f32.mrf.mxu0
  %6288 = vdwg.mxu0
  %v6289 = vadd.f32 %v6286, %v5059
  %6290 = vmatprep.subr.mxu0 0.0
  %6291 = vmatpush1.msra.mxu0 0.0
  %6292 = vmatprep.subr.mxu0 0.0
  %6293 = vmatpush1.msra.mxu0 0.0
  %6294 = vmatprep.subr.mxu0 0.0
  %6295 = vmatpush1.msra.mxu0 0.0
  %6296 = vmatprep.subr.mxu0 0.0
  %6297 = vmatpush1.msra.mxu0 0.0
  %6298 = vmatprep.subr.mxu0 0.0
  %6299 = vmatpush1.msra.mxu0 0.0
  %6300 = vmatprep.subr.mxu0 0.0
  %6301 = vmatpush1.msra.mxu0 0.0
  %6302 = vmatprep.subr.mxu0 0.0
  %6303 = vmatpush1.msra.mxu0 0.0
  %6304 = vmatprep.subr.mxu0 0.0
  %6305 = vmatpush1.msra.mxu0 0.0
  %6306 = vmatprep.subr.mxu0 0.0
  %6307 = vmatpush1.msra.mxu0 0.0
  %6308 = vmatprep.subr.mxu0 0.0
  %6309 = vmatpush1.msra.mxu0 0.0
  %6310 = vmatprep.subr.mxu0 0.0
  %6311 = vmatpush1.msra.mxu0 0.0
  %6312 = vmatprep.subr.mxu0 0.0
  %6313 = vmatpush1.msra.mxu0 0.0
  %6314 = vmatprep.subr.mxu0 0.0
  %6315 = vmatpush1.msra.mxu0 0.0
  %6316 = vmatprep.subr.mxu0 0.0
  %6317 = vmatpush1.msra.mxu0 0.0
  %6318 = vmatprep.subr.mxu0 0.0
  %6319 = vmatpush1.msra.mxu0 0.0
  %6320 = vmatprep.subr.mxu0 0.0
  %6321 = vmatpush1.msra.mxu0 %v5063
  %6322 = vmatprep.subr.mxu0 0.0
  %6323 = vmatpush2.msra.mxu0 0.0
  %6324 = vmatprep.subr.mxu0 0.0
  %6325 = vmatpush2.msra.mxu0 0.0
  %6326 = vmatprep.subr.mxu0 0.0
  %6327 = vmatpush2.msra.mxu0 0.0
  %6328 = vmatprep.subr.mxu0 0.0
  %6329 = vmatpush2.msra.mxu0 0.0
  %6330 = vmatprep.subr.mxu0 0.0
  %6331 = vmatpush2.msra.mxu0 0.0
  %6332 = vmatprep.subr.mxu0 0.0
  %6333 = vmatpush2.msra.mxu0 0.0
  %6334 = vmatprep.subr.mxu0 0.0
  %6335 = vmatpush2.msra.mxu0 0.0
  %6336 = vmatprep.subr.mxu0 0.0
  %6337 = vmatpush2.msra.mxu0 0.0
  %6338 = vmatprep.subr.mxu0 0.0
  %6339 = vmatpush2.msra.mxu0 0.0
  %6340 = vmatprep.subr.mxu0 0.0
  %6341 = vmatpush2.msra.mxu0 0.0
  %6342 = vmatprep.subr.mxu0 0.0
  %6343 = vmatpush2.msra.mxu0 0.0
  %6344 = vmatprep.subr.mxu0 0.0
  %6345 = vmatpush2.msra.mxu0 0.0
  %6346 = vmatprep.subr.mxu0 0.0
  %6347 = vmatpush2.msra.mxu0 0.0
  %6348 = vmatprep.subr.mxu0 0.0
  %6349 = vmatpush2.msra.mxu0 0.0
  %6350 = vmatprep.subr.mxu0 0.0
  %6351 = vmatpush2.msra.mxu0 0.0
  %6352 = vmatprep.subr.mxu0 0.0
  %6353 = vmatpush2.msra.mxu0 0.0
  %6354 = vmatprep.mubr.f32.mxu0 0.0
  %6355 = vmatmul.mubr.f32.gmra.mxu0 %v6144
  %v6356 = vpop.f32.mrf.mxu0
  %v6357 = vadd.f32 0.0, %v6356
  %v6358 = vpop.f32.mrf.mxu0
  %6359 = vdwg.mxu0
  %6360 = vmatprep.subr.mxu0 0.0
  %6361 = vmatpush1.msra.mxu0 0.0
  %6362 = vmatprep.subr.mxu0 0.0
  %6363 = vmatpush1.msra.mxu0 0.0
  %6364 = vmatprep.subr.mxu0 0.0
  %6365 = vmatpush1.msra.mxu0 0.0
  %6366 = vmatprep.subr.mxu0 0.0
  %6367 = vmatpush1.msra.mxu0 0.0
  %6368 = vmatprep.subr.mxu0 0.0
  %6369 = vmatpush1.msra.mxu0 0.0
  %6370 = vmatprep.subr.mxu0 0.0
  %6371 = vmatpush1.msra.mxu0 0.0
  %6372 = vmatprep.subr.mxu0 0.0
  %6373 = vmatpush1.msra.mxu0 0.0
  %6374 = vmatprep.subr.mxu0 0.0
  %6375 = vmatpush1.msra.mxu0 0.0
  %6376 = vmatprep.subr.mxu0 0.0
  %6377 = vmatpush1.msra.mxu0 0.0
  %6378 = vmatprep.subr.mxu0 0.0
  %6379 = vmatpush1.msra.mxu0 0.0
  %6380 = vmatprep.subr.mxu0 0.0
  %6381 = vmatpush1.msra.mxu0 0.0
  %6382 = vmatprep.subr.mxu0 0.0
  %6383 = vmatpush1.msra.mxu0 0.0
  %6384 = vmatprep.subr.mxu0 0.0
  %6385 = vmatpush1.msra.mxu0 0.0
  %6386 = vmatprep.subr.mxu0 0.0
  %6387 = vmatpush1.msra.mxu0 0.0
  %6388 = vmatprep.subr.mxu0 0.0
  %6389 = vmatpush1.msra.mxu0 0.0
  %6390 = vmatprep.subr.mxu0 0.0
  %6391 = vmatpush1.msra.mxu0 %v5136
  %6392 = vmatprep.subr.mxu0 0.0
  %6393 = vmatpush2.msra.mxu0 0.0
  %6394 = vmatprep.subr.mxu0 0.0
  %6395 = vmatpush2.msra.mxu0 0.0
  %6396 = vmatprep.subr.mxu0 0.0
  %6397 = vmatpush2.msra.mxu0 0.0
  %6398 = vmatprep.subr.mxu0 0.0
  %6399 = vmatpush2.msra.mxu0 0.0
  %6400 = vmatprep.subr.mxu0 0.0
  %6401 = vmatpush2.msra.mxu0 0.0
  %6402 = vmatprep.subr.mxu0 0.0
  %6403 = vmatpush2.msra.mxu0 0.0
  %6404 = vmatprep.subr.mxu0 0.0
  %6405 = vmatpush2.msra.mxu0 0.0
  %6406 = vmatprep.subr.mxu0 0.0
  %6407 = vmatpush2.msra.mxu0 0.0
  %6408 = vmatprep.subr.mxu0 0.0
  %6409 = vmatpush2.msra.mxu0 0.0
  %6410 = vmatprep.subr.mxu0 0.0
  %6411 = vmatpush2.msra.mxu0 0.0
  %6412 = vmatprep.subr.mxu0 0.0
  %6413 = vmatpush2.msra.mxu0 0.0
  %6414 = vmatprep.subr.mxu0 0.0
  %6415 = vmatpush2.msra.mxu0 0.0
  %6416 = vmatprep.subr.mxu0 0.0
  %6417 = vmatpush2.msra.mxu0 0.0
  %6418 = vmatprep.subr.mxu0 0.0
  %6419 = vmatpush2.msra.mxu0 0.0
  %6420 = vmatprep.subr.mxu0 0.0
  %6421 = vmatpush2.msra.mxu0 0.0
  %6422 = vmatprep.subr.mxu0 0.0
  %6423 = vmatpush2.msra.mxu0 0.0
  %6424 = vmatprep.mubr.f32.mxu0 0.0
  %6425 = vmatmul.mubr.f32.gmra.mxu0 %v6217
  %v6426 = vpop.f32.mrf.mxu0
  %v6427 = vadd.f32 %v6357, %v6426
  %v6428 = vpop.f32.mrf.mxu0
  %6429 = vdwg.mxu0
  %v6430 = vadd.f32 %v6427, %v5212
  %6431 = vmatprep.subr.mxu0 0.0
  %6432 = vmatpush1.msra.mxu0 0.0
  %6433 = vmatprep.subr.mxu0 0.0
  %6434 = vmatpush1.msra.mxu0 0.0
  %6435 = vmatprep.subr.mxu0 0.0
  %6436 = vmatpush1.msra.mxu0 0.0
  %6437 = vmatprep.subr.mxu0 0.0
  %6438 = vmatpush1.msra.mxu0 0.0
  %6439 = vmatprep.subr.mxu0 0.0
  %6440 = vmatpush1.msra.mxu0 0.0
  %6441 = vmatprep.subr.mxu0 0.0
  %6442 = vmatpush1.msra.mxu0 0.0
  %6443 = vmatprep.subr.mxu0 0.0
  %6444 = vmatpush1.msra.mxu0 0.0
  %6445 = vmatprep.subr.mxu0 0.0
  %6446 = vmatpush1.msra.mxu0 0.0
  %6447 = vmatprep.subr.mxu0 0.0
  %6448 = vmatpush1.msra.mxu0 0.0
  %6449 = vmatprep.subr.mxu0 0.0
  %6450 = vmatpush1.msra.mxu0 0.0
  %6451 = vmatprep.subr.mxu0 0.0
  %6452 = vmatpush1.msra.mxu0 0.0
  %6453 = vmatprep.subr.mxu0 0.0
  %6454 = vmatpush1.msra.mxu0 0.0
  %6455 = vmatprep.subr.mxu0 0.0
  %6456 = vmatpush1.msra.mxu0 0.0
  %6457 = vmatprep.subr.mxu0 0.0
  %6458 = vmatpush1.msra.mxu0 0.0
  %6459 = vmatprep.subr.mxu0 0.0
  %6460 = vmatpush1.msra.mxu0 0.0
  %6461 = vmatprep.subr.mxu0 0.0
  %6462 = vmatpush1.msra.mxu0 %v5216
  %6463 = vmatprep.subr.mxu0 0.0
  %6464 = vmatpush2.msra.mxu0 0.0
  %6465 = vmatprep.subr.mxu0 0.0
  %6466 = vmatpush2.msra.mxu0 0.0
  %6467 = vmatprep.subr.mxu0 0.0
  %6468 = vmatpush2.msra.mxu0 0.0
  %6469 = vmatprep.subr.mxu0 0.0
  %6470 = vmatpush2.msra.mxu0 0.0
  %6471 = vmatprep.subr.mxu0 0.0
  %6472 = vmatpush2.msra.mxu0 0.0
  %6473 = vmatprep.subr.mxu0 0.0
  %6474 = vmatpush2.msra.mxu0 0.0
  %6475 = vmatprep.subr.mxu0 0.0
  %6476 = vmatpush2.msra.mxu0 0.0
  %6477 = vmatprep.subr.mxu0 0.0
  %6478 = vmatpush2.msra.mxu0 0.0
  %6479 = vmatprep.subr.mxu0 0.0
  %6480 = vmatpush2.msra.mxu0 0.0
  %6481 = vmatprep.subr.mxu0 0.0
  %6482 = vmatpush2.msra.mxu0 0.0
  %6483 = vmatprep.subr.mxu0 0.0
  %6484 = vmatpush2.msra.mxu0 0.0
  %6485 = vmatprep.subr.mxu0 0.0
  %6486 = vmatpush2.msra.mxu0 0.0
  %6487 = vmatprep.subr.mxu0 0.0
  %6488 = vmatpush2.msra.mxu0 0.0
  %6489 = vmatprep.subr.mxu0 0.0
  %6490 = vmatpush2.msra.mxu0 0.0
  %6491 = vmatprep.subr.mxu0 0.0
  %6492 = vmatpush2.msra.mxu0 0.0
  %6493 = vmatprep.subr.mxu0 0.0
  %6494 = vmatpush2.msra.mxu0 0.0
  %6495 = vmatprep.mubr.f32.mxu0 0.0
  %6496 = vmatmul.mubr.f32.gmra.mxu0 %v6144
  %v6497 = vpop.f32.mrf.mxu0
  %v6498 = vadd.f32 0.0, %v6497
  %v6499 = vpop.f32.mrf.mxu0
  %6500 = vdwg.mxu0
  %6501 = vmatprep.subr.mxu0 0.0
  %6502 = vmatpush1.msra.mxu0 0.0
  %6503 = vmatprep.subr.mxu0 0.0
  %6504 = vmatpush1.msra.mxu0 0.0
  %6505 = vmatprep.subr.mxu0 0.0
  %6506 = vmatpush1.msra.mxu0 0.0
  %6507 = vmatprep.subr.mxu0 0.0
  %6508 = vmatpush1.msra.mxu0 0.0
  %6509 = vmatprep.subr.mxu0 0.0
  %6510 = vmatpush1.msra.mxu0 0.0
  %6511 = vmatprep.subr.mxu0 0.0
  %6512 = vmatpush1.msra.mxu0 0.0
  %6513 = vmatprep.subr.mxu0 0.0
  %6514 = vmatpush1.msra.mxu0 0.0
  %6515 = vmatprep.subr.mxu0 0.0
  %6516 = vmatpush1.msra.mxu0 0.0
  %6517 = vmatprep.subr.mxu0 0.0
  %6518 = vmatpush1.msra.mxu0 0.0
  %6519 = vmatprep.subr.mxu0 0.0
  %6520 = vmatpush1.msra.mxu0 0.0
  %6521 = vmatprep.subr.mxu0 0.0
  %6522 = vmatpush1.msra.mxu0 0.0
  %6523 = vmatprep.subr.mxu0 0.0
  %6524 = vmatpush1.msra.mxu0 0.0
  %6525 = vmatprep.subr.mxu0 0.0
  %6526 = vmatpush1.msra.mxu0 0.0
  %6527 = vmatprep.subr.mxu0 0.0
  %6528 = vmatpush1.msra.mxu0 0.0
  %6529 = vmatprep.subr.mxu0 0.0
  %6530 = vmatpush1.msra.mxu0 0.0
  %6531 = vmatprep.subr.mxu0 0.0
  %6532 = vmatpush1.msra.mxu0 %v5289
  %6533 = vmatprep.subr.mxu0 0.0
  %6534 = vmatpush2.msra.mxu0 0.0
  %6535 = vmatprep.subr.mxu0 0.0
  %6536 = vmatpush2.msra.mxu0 0.0
  %6537 = vmatprep.subr.mxu0 0.0
  %6538 = vmatpush2.msra.mxu0 0.0
  %6539 = vmatprep.subr.mxu0 0.0
  %6540 = vmatpush2.msra.mxu0 0.0
  %6541 = vmatprep.subr.mxu0 0.0
  %6542 = vmatpush2.msra.mxu0 0.0
  %6543 = vmatprep.subr.mxu0 0.0
  %6544 = vmatpush2.msra.mxu0 0.0
  %6545 = vmatprep.subr.mxu0 0.0
  %6546 = vmatpush2.msra.mxu0 0.0
  %6547 = vmatprep.subr.mxu0 0.0
  %6548 = vmatpush2.msra.mxu0 0.0
  %6549 = vmatprep.subr.mxu0 0.0
  %6550 = vmatpush2.msra.mxu0 0.0
  %6551 = vmatprep.subr.mxu0 0.0
  %6552 = vmatpush2.msra.mxu0 0.0
  %6553 = vmatprep.subr.mxu0 0.0
  %6554 = vmatpush2.msra.mxu0 0.0
  %6555 = vmatprep.subr.mxu0 0.0
  %6556 = vmatpush2.msra.mxu0 0.0
  %6557 = vmatprep.subr.mxu0 0.0
  %6558 = vmatpush2.msra.mxu0 0.0
  %6559 = vmatprep.subr.mxu0 0.0
  %6560 = vmatpush2.msra.mxu0 0.0
  %6561 = vmatprep.subr.mxu0 0.0
  %6562 = vmatpush2.msra.mxu0 0.0
  %6563 = vmatprep.subr.mxu0 0.0
  %6564 = vmatpush2.msra.mxu0 0.0
  %6565 = vmatprep.mubr.f32.mxu0 0.0
  %6566 = vmatmul.mubr.f32.gmra.mxu0 %v6217
  %v6567 = vpop.f32.mrf.mxu0
  %v6568 = vadd.f32 %v6498, %v6567
  %v6569 = vpop.f32.mrf.mxu0
  %6570 = vdwg.mxu0
  %v6571 = vadd.f32 %v6568, %v5365
  %6572 = vmatprep.subr.mxu0 0.0
  %6573 = vmatpush1.msra.mxu0 0.0
  %6574 = vmatprep.subr.mxu0 0.0
  %6575 = vmatpush1.msra.mxu0 0.0
  %6576 = vmatprep.subr.mxu0 0.0
  %6577 = vmatpush1.msra.mxu0 0.0
  %6578 = vmatprep.subr.mxu0 0.0
  %6579 = vmatpush1.msra.mxu0 0.0
  %6580 = vmatprep.subr.mxu0 0.0
  %6581 = vmatpush1.msra.mxu0 0.0
  %6582 = vmatprep.subr.mxu0 0.0
  %6583 = vmatpush1.msra.mxu0 0.0
  %6584 = vmatprep.subr.mxu0 0.0
  %6585 = vmatpush1.msra.mxu0 0.0
  %6586 = vmatprep.subr.mxu0 0.0
  %6587 = vmatpush1.msra.mxu0 0.0
  %6588 = vmatprep.subr.mxu0 0.0
  %6589 = vmatpush1.msra.mxu0 0.0
  %6590 = vmatprep.subr.mxu0 0.0
  %6591 = vmatpush1.msra.mxu0 0.0
  %6592 = vmatprep.subr.mxu0 0.0
  %6593 = vmatpush1.msra.mxu0 0.0
  %6594 = vmatprep.subr.mxu0 0.0
  %6595 = vmatpush1.msra.mxu0 0.0
  %6596 = vmatprep.subr.mxu0 0.0
  %6597 = vmatpush1.msra.mxu0 0.0
  %6598 = vmatprep.subr.mxu0 0.0
  %6599 = vmatpush1.msra.mxu0 0.0
  %6600 = vmatprep.subr.mxu0 0.0
  %6601 = vmatpush1.msra.mxu0 0.0
  %6602 = vmatprep.subr.mxu0 0.0
  %6603 = vmatpush1.msra.mxu0 %v5369
  %6604 = vmatprep.subr.mxu0 0.0
  %6605 = vmatpush2.msra.mxu0 0.0
  %6606 = vmatprep.subr.mxu0 0.0
  %6607 = vmatpush2.msra.mxu0 0.0
  %6608 = vmatprep.subr.mxu0 0.0
  %6609 = vmatpush2.msra.mxu0 0.0
  %6610 = vmatprep.subr.mxu0 0.0
  %6611 = vmatpush2.msra.mxu0 0.0
  %6612 = vmatprep.subr.mxu0 0.0
  %6613 = vmatpush2.msra.mxu0 0.0
  %6614 = vmatprep.subr.mxu0 0.0
  %6615 = vmatpush2.msra.mxu0 0.0
  %6616 = vmatprep.subr.mxu0 0.0
  %6617 = vmatpush2.msra.mxu0 0.0
  %6618 = vmatprep.subr.mxu0 0.0
  %6619 = vmatpush2.msra.mxu0 0.0
  %6620 = vmatprep.subr.mxu0 0.0
  %6621 = vmatpush2.msra.mxu0 0.0
  %6622 = vmatprep.subr.mxu0 0.0
  %6623 = vmatpush2.msra.mxu0 0.0
  %6624 = vmatprep.subr.mxu0 0.0
  %6625 = vmatpush2.msra.mxu0 0.0
  %6626 = vmatprep.subr.mxu0 0.0
  %6627 = vmatpush2.msra.mxu0 0.0
  %6628 = vmatprep.subr.mxu0 0.0
  %6629 = vmatpush2.msra.mxu0 0.0
  %6630 = vmatprep.subr.mxu0 0.0
  %6631 = vmatpush2.msra.mxu0 0.0
  %6632 = vmatprep.subr.mxu0 0.0
  %6633 = vmatpush2.msra.mxu0 0.0
  %6634 = vmatprep.subr.mxu0 0.0
  %6635 = vmatpush2.msra.mxu0 0.0
  %6636 = vmatprep.mubr.f32.mxu0 0.0
  %6637 = vmatmul.mubr.f32.gmra.mxu0 %v6144
  %v6638 = vpop.f32.mrf.mxu0
  %v6639 = vadd.f32 0.0, %v6638
  %v6640 = vpop.f32.mrf.mxu0
  %6641 = vdwg.mxu0
  %6642 = vmatprep.subr.mxu0 0.0
  %6643 = vmatpush1.msra.mxu0 0.0
  %6644 = vmatprep.subr.mxu0 0.0
  %6645 = vmatpush1.msra.mxu0 0.0
  %6646 = vmatprep.subr.mxu0 0.0
  %6647 = vmatpush1.msra.mxu0 0.0
  %6648 = vmatprep.subr.mxu0 0.0
  %6649 = vmatpush1.msra.mxu0 0.0
  %6650 = vmatprep.subr.mxu0 0.0
  %6651 = vmatpush1.msra.mxu0 0.0
  %6652 = vmatprep.subr.mxu0 0.0
  %6653 = vmatpush1.msra.mxu0 0.0
  %6654 = vmatprep.subr.mxu0 0.0
  %6655 = vmatpush1.msra.mxu0 0.0
  %6656 = vmatprep.subr.mxu0 0.0
  %6657 = vmatpush1.msra.mxu0 0.0
  %6658 = vmatprep.subr.mxu0 0.0
  %6659 = vmatpush1.msra.mxu0 0.0
  %6660 = vmatprep.subr.mxu0 0.0
  %6661 = vmatpush1.msra.mxu0 0.0
  %6662 = vmatprep.subr.mxu0 0.0
  %6663 = vmatpush1.msra.mxu0 0.0
  %6664 = vmatprep.subr.mxu0 0.0
  %6665 = vmatpush1.msra.mxu0 0.0
  %6666 = vmatprep.subr.mxu0 0.0
  %6667 = vmatpush1.msra.mxu0 0.0
  %6668 = vmatprep.subr.mxu0 0.0
  %6669 = vmatpush1.msra.mxu0 0.0
  %6670 = vmatprep.subr.mxu0 0.0
  %6671 = vmatpush1.msra.mxu0 0.0
  %6672 = vmatprep.subr.mxu0 0.0
  %6673 = vmatpush1.msra.mxu0 %v5442
  %6674 = vmatprep.subr.mxu0 0.0
  %6675 = vmatpush2.msra.mxu0 0.0
  %6676 = vmatprep.subr.mxu0 0.0
  %6677 = vmatpush2.msra.mxu0 0.0
  %6678 = vmatprep.subr.mxu0 0.0
  %6679 = vmatpush2.msra.mxu0 0.0
  %6680 = vmatprep.subr.mxu0 0.0
  %6681 = vmatpush2.msra.mxu0 0.0
  %6682 = vmatprep.subr.mxu0 0.0
  %6683 = vmatpush2.msra.mxu0 0.0
  %6684 = vmatprep.subr.mxu0 0.0
  %6685 = vmatpush2.msra.mxu0 0.0
  %6686 = vmatprep.subr.mxu0 0.0
  %6687 = vmatpush2.msra.mxu0 0.0
  %6688 = vmatprep.subr.mxu0 0.0
  %6689 = vmatpush2.msra.mxu0 0.0
  %6690 = vmatprep.subr.mxu0 0.0
  %6691 = vmatpush2.msra.mxu0 0.0
  %6692 = vmatprep.subr.mxu0 0.0
  %6693 = vmatpush2.msra.mxu0 0.0
  %6694 = vmatprep.subr.mxu0 0.0
  %6695 = vmatpush2.msra.mxu0 0.0
  %6696 = vmatprep.subr.mxu0 0.0
  %6697 = vmatpush2.msra.mxu0 0.0
  %6698 = vmatprep.subr.mxu0 0.0
  %6699 = vmatpush2.msra.mxu0 0.0
  %6700 = vmatprep.subr.mxu0 0.0
  %6701 = vmatpush2.msra.mxu0 0.0
  %6702 = vmatprep.subr.mxu0 0.0
  %6703 = vmatpush2.msra.mxu0 0.0
  %6704 = vmatprep.subr.mxu0 0.0
  %6705 = vmatpush2.msra.mxu0 0.0
  %6706 = vmatprep.mubr.f32.mxu0 0.0
  %6707 = vmatmul.mubr.f32.gmra.mxu0 %v6217
  %v6708 = vpop.f32.mrf.mxu0
  %v6709 = vadd.f32 %v6639, %v6708
  %v6710 = vpop.f32.mrf.mxu0
  %6711 = vdwg.mxu0
  %v6712 = vadd.f32 %v6709, %v5518
  %v6713 = vsub.f32 0.0, %v6289
  %v6714 = vmul.f32 %v6713, 1.442695
  %v6715 = vpow.pop %v6714
  %v6716 = vadd.f32 %v6715, 1.0
  %v6717 = vrcp.pop %v6716
  %v6718 = vmul.f32 1.0, %v6717
  %v6719 = vsub.f32 0.0, %v6430
  %v6720 = vmul.f32 %v6719, 1.442695
  %v6721 = vpow.pop %v6720
  %v6722 = vadd.f32 %v6721, 1.0
  %v6723 = vrcp.pop %v6722
  %v6724 = vmul.f32 1.0, %v6723
  %v6725 = vtanh.pop %v6571
  %v6726 = vsub.f32 0.0, %v6712
  %v6727 = vmul.f32 %v6726, 1.442695
  %v6728 = vpow.pop %v6727
  %v6729 = vadd.f32 %v6728, 1.0
  %v6730 = vrcp.pop %v6729
  %v6731 = vmul.f32 1.0, %v6730
  %v6732 = vmul.f32 %v6724, %v6138
  %v6733 = vmul.f32 %v6718, %v6725
  %v6734 = vadd.f32 %v6732, %v6733
  %v6735 = vtanh.pop %v6734
  %v6736 = vmul.f32 %v6731, %v6735
  %s6737 = scalar_lea.vmem %s1, 24
  %v6738 = vld [vmem:[%s6737] sm:$0xff]
  %v6740 = vsel %vm66, %v6736, 0
  %6742 = vmatprep.subr.mxu0 0.0
  %6743 = vmatpush1.msra.mxu0 0.0
  %6744 = vmatprep.subr.mxu0 0.0
  %6745 = vmatpush1.msra.mxu0 0.0
  %6746 = vmatprep.subr.mxu0 0.0
  %6747 = vmatpush1.msra.mxu0 0.0
  %6748 = vmatprep.subr.mxu0 0.0
  %6749 = vmatpush1.msra.mxu0 0.0
  %6750 = vmatprep.subr.mxu0 0.0
  %6751 = vmatpush1.msra.mxu0 0.0
  %6752 = vmatprep.subr.mxu0 0.0
  %6753 = vmatpush1.msra.mxu0 0.0
  %6754 = vmatprep.subr.mxu0 0.0
  %6755 = vmatpush1.msra.mxu0 0.0
  %6756 = vmatprep.subr.mxu0 0.0
  %6757 = vmatpush1.msra.mxu0 0.0
  %6758 = vmatprep.subr.mxu0 0.0
  %6759 = vmatpush1.msra.mxu0 0.0
  %6760 = vmatprep.subr.mxu0 0.0
  %6761 = vmatpush1.msra.mxu0 0.0
  %6762 = vmatprep.subr.mxu0 0.0
  %6763 = vmatpush1.msra.mxu0 0.0
  %6764 = vmatprep.subr.mxu0 0.0
  %6765 = vmatpush1.msra.mxu0 0.0
  %6766 = vmatprep.subr.mxu0 0.0
  %6767 = vmatpush1.msra.mxu0 0.0
  %6768 = vmatprep.subr.mxu0 0.0
  %6769 = vmatpush1.msra.mxu0 0.0
  %6770 = vmatprep.subr.mxu0 0.0
  %6771 = vmatpush1.msra.mxu0 0.0
  %6772 = vmatprep.subr.mxu0 0.0
  %6773 = vmatpush1.msra.mxu0 %v4905
  %6774 = vmatprep.subr.mxu0 0.0
  %6775 = vmatpush2.msra.mxu0 0.0
  %6776 = vmatprep.subr.mxu0 0.0
  %6777 = vmatpush2.msra.mxu0 0.0
  %6778 = vmatprep.subr.mxu0 0.0
  %6779 = vmatpush2.msra.mxu0 0.0
  %6780 = vmatprep.subr.mxu0 0.0
  %6781 = vmatpush2.msra.mxu0 0.0
  %6782 = vmatprep.subr.mxu0 0.0
  %6783 = vmatpush2.msra.mxu0 0.0
  %6784 = vmatprep.subr.mxu0 0.0
  %6785 = vmatpush2.msra.mxu0 0.0
  %6786 = vmatprep.subr.mxu0 0.0
  %6787 = vmatpush2.msra.mxu0 0.0
  %6788 = vmatprep.subr.mxu0 0.0
  %6789 = vmatpush2.msra.mxu0 0.0
  %6790 = vmatprep.subr.mxu0 0.0
  %6791 = vmatpush2.msra.mxu0 0.0
  %6792 = vmatprep.subr.mxu0 0.0
  %6793 = vmatpush2.msra.mxu0 0.0
  %6794 = vmatprep.subr.mxu0 0.0
  %6795 = vmatpush2.msra.mxu0 0.0
  %6796 = vmatprep.subr.mxu0 0.0
  %6797 = vmatpush2.msra.mxu0 0.0
  %6798 = vmatprep.subr.mxu0 0.0
  %6799 = vmatpush2.msra.mxu0 0.0
  %6800 = vmatprep.subr.mxu0 0.0
  %6801 = vmatpush2.msra.mxu0 0.0
  %6802 = vmatprep.subr.mxu0 0.0
  %6803 = vmatpush2.msra.mxu0 0.0
  %6804 = vmatprep.subr.mxu0 0.0
  %6805 = vmatpush2.msra.mxu0 0.0
  %6806 = vmatprep.mubr.f32.mxu0 0.0
  %6807 = vmatmul.mubr.f32.gmra.mxu0 %v6740
  %v6808 = vpop.f32.mrf.mxu0
  %v6809 = vadd.f32 0.0, %v6808
  %v6810 = vpop.f32.mrf.mxu0
  %6811 = vdwg.mxu0
  %v6813 = vsel %vm4977, %v6738, 0
  %6815 = vmatprep.subr.mxu0 0.0
  %6816 = vmatpush1.msra.mxu0 0.0
  %6817 = vmatprep.subr.mxu0 0.0
  %6818 = vmatpush1.msra.mxu0 0.0
  %6819 = vmatprep.subr.mxu0 0.0
  %6820 = vmatpush1.msra.mxu0 0.0
  %6821 = vmatprep.subr.mxu0 0.0
  %6822 = vmatpush1.msra.mxu0 0.0
  %6823 = vmatprep.subr.mxu0 0.0
  %6824 = vmatpush1.msra.mxu0 0.0
  %6825 = vmatprep.subr.mxu0 0.0
  %6826 = vmatpush1.msra.mxu0 0.0
  %6827 = vmatprep.subr.mxu0 0.0
  %6828 = vmatpush1.msra.mxu0 0.0
  %6829 = vmatprep.subr.mxu0 0.0
  %6830 = vmatpush1.msra.mxu0 0.0
  %6831 = vmatprep.subr.mxu0 0.0
  %6832 = vmatpush1.msra.mxu0 0.0
  %6833 = vmatprep.subr.mxu0 0.0
  %6834 = vmatpush1.msra.mxu0 0.0
  %6835 = vmatprep.subr.mxu0 0.0
  %6836 = vmatpush1.msra.mxu0 0.0
  %6837 = vmatprep.subr.mxu0 0.0
  %6838 = vmatpush1.msra.mxu0 0.0
  %6839 = vmatprep.subr.mxu0 0.0
  %6840 = vmatpush1.msra.mxu0 0.0
  %6841 = vmatprep.subr.mxu0 0.0
  %6842 = vmatpush1.msra.mxu0 0.0
  %6843 = vmatprep.subr.mxu0 0.0
  %6844 = vmatpush1.msra.mxu0 0.0
  %6845 = vmatprep.subr.mxu0 0.0
  %6846 = vmatpush1.msra.mxu0 %v4983
  %6847 = vmatprep.subr.mxu0 0.0
  %6848 = vmatpush2.msra.mxu0 0.0
  %6849 = vmatprep.subr.mxu0 0.0
  %6850 = vmatpush2.msra.mxu0 0.0
  %6851 = vmatprep.subr.mxu0 0.0
  %6852 = vmatpush2.msra.mxu0 0.0
  %6853 = vmatprep.subr.mxu0 0.0
  %6854 = vmatpush2.msra.mxu0 0.0
  %6855 = vmatprep.subr.mxu0 0.0
  %6856 = vmatpush2.msra.mxu0 0.0
  %6857 = vmatprep.subr.mxu0 0.0
  %6858 = vmatpush2.msra.mxu0 0.0
  %6859 = vmatprep.subr.mxu0 0.0
  %6860 = vmatpush2.msra.mxu0 0.0
  %6861 = vmatprep.subr.mxu0 0.0
  %6862 = vmatpush2.msra.mxu0 0.0
  %6863 = vmatprep.subr.mxu0 0.0
  %6864 = vmatpush2.msra.mxu0 0.0
  %6865 = vmatprep.subr.mxu0 0.0
  %6866 = vmatpush2.msra.mxu0 0.0
  %6867 = vmatprep.subr.mxu0 0.0
  %6868 = vmatpush2.msra.mxu0 0.0
  %6869 = vmatprep.subr.mxu0 0.0
  %6870 = vmatpush2.msra.mxu0 0.0
  %6871 = vmatprep.subr.mxu0 0.0
  %6872 = vmatpush2.msra.mxu0 0.0
  %6873 = vmatprep.subr.mxu0 0.0
  %6874 = vmatpush2.msra.mxu0 0.0
  %6875 = vmatprep.subr.mxu0 0.0
  %6876 = vmatpush2.msra.mxu0 0.0
  %6877 = vmatprep.subr.mxu0 0.0
  %6878 = vmatpush2.msra.mxu0 0.0
  %6879 = vmatprep.mubr.f32.mxu0 0.0
  %6880 = vmatmul.mubr.f32.gmra.mxu0 %v6813
  %v6881 = vpop.f32.mrf.mxu0
  %v6882 = vadd.f32 %v6809, %v6881
  %v6883 = vpop.f32.mrf.mxu0
  %6884 = vdwg.mxu0
  %v6885 = vadd.f32 %v6882, %v5059
  %6886 = vmatprep.subr.mxu0 0.0
  %6887 = vmatpush1.msra.mxu0 0.0
  %6888 = vmatprep.subr.mxu0 0.0
  %6889 = vmatpush1.msra.mxu0 0.0
  %6890 = vmatprep.subr.mxu0 0.0
  %6891 = vmatpush1.msra.mxu0 0.0
  %6892 = vmatprep.subr.mxu0 0.0
  %6893 = vmatpush1.msra.mxu0 0.0
  %6894 = vmatprep.subr.mxu0 0.0
  %6895 = vmatpush1.msra.mxu0 0.0
  %6896 = vmatprep.subr.mxu0 0.0
  %6897 = vmatpush1.msra.mxu0 0.0
  %6898 = vmatprep.subr.mxu0 0.0
  %6899 = vmatpush1.msra.mxu0 0.0
  %6900 = vmatprep.subr.mxu0 0.0
  %6901 = vmatpush1.msra.mxu0 0.0
  %6902 = vmatprep.subr.mxu0 0.0
  %6903 = vmatpush1.msra.mxu0 0.0
  %6904 = vmatprep.subr.mxu0 0.0
  %6905 = vmatpush1.msra.mxu0 0.0
  %6906 = vmatprep.subr.mxu0 0.0
  %6907 = vmatpush1.msra.mxu0 0.0
  %6908 = vmatprep.subr.mxu0 0.0
  %6909 = vmatpush1.msra.mxu0 0.0
  %6910 = vmatprep.subr.mxu0 0.0
  %6911 = vmatpush1.msra.mxu0 0.0
  %6912 = vmatprep.subr.mxu0 0.0
  %6913 = vmatpush1.msra.mxu0 0.0
  %6914 = vmatprep.subr.mxu0 0.0
  %6915 = vmatpush1.msra.mxu0 0.0
  %6916 = vmatprep.subr.mxu0 0.0
  %6917 = vmatpush1.msra.mxu0 %v5063
  %6918 = vmatprep.subr.mxu0 0.0
  %6919 = vmatpush2.msra.mxu0 0.0
  %6920 = vmatprep.subr.mxu0 0.0
  %6921 = vmatpush2.msra.mxu0 0.0
  %6922 = vmatprep.subr.mxu0 0.0
  %6923 = vmatpush2.msra.mxu0 0.0
  %6924 = vmatprep.subr.mxu0 0.0
  %6925 = vmatpush2.msra.mxu0 0.0
  %6926 = vmatprep.subr.mxu0 0.0
  %6927 = vmatpush2.msra.mxu0 0.0
  %6928 = vmatprep.subr.mxu0 0.0
  %6929 = vmatpush2.msra.mxu0 0.0
  %6930 = vmatprep.subr.mxu0 0.0
  %6931 = vmatpush2.msra.mxu0 0.0
  %6932 = vmatprep.subr.mxu0 0.0
  %6933 = vmatpush2.msra.mxu0 0.0
  %6934 = vmatprep.subr.mxu0 0.0
  %6935 = vmatpush2.msra.mxu0 0.0
  %6936 = vmatprep.subr.mxu0 0.0
  %6937 = vmatpush2.msra.mxu0 0.0
  %6938 = vmatprep.subr.mxu0 0.0
  %6939 = vmatpush2.msra.mxu0 0.0
  %6940 = vmatprep.subr.mxu0 0.0
  %6941 = vmatpush2.msra.mxu0 0.0
  %6942 = vmatprep.subr.mxu0 0.0
  %6943 = vmatpush2.msra.mxu0 0.0
  %6944 = vmatprep.subr.mxu0 0.0
  %6945 = vmatpush2.msra.mxu0 0.0
  %6946 = vmatprep.subr.mxu0 0.0
  %6947 = vmatpush2.msra.mxu0 0.0
  %6948 = vmatprep.subr.mxu0 0.0
  %6949 = vmatpush2.msra.mxu0 0.0
  %6950 = vmatprep.mubr.f32.mxu0 0.0
  %6951 = vmatmul.mubr.f32.gmra.mxu0 %v6740
  %v6952 = vpop.f32.mrf.mxu0
  %v6953 = vadd.f32 0.0, %v6952
  %v6954 = vpop.f32.mrf.mxu0
  %6955 = vdwg.mxu0
  %6956 = vmatprep.subr.mxu0 0.0
  %6957 = vmatpush1.msra.mxu0 0.0
  %6958 = vmatprep.subr.mxu0 0.0
  %6959 = vmatpush1.msra.mxu0 0.0
  %6960 = vmatprep.subr.mxu0 0.0
  %6961 = vmatpush1.msra.mxu0 0.0
  %6962 = vmatprep.subr.mxu0 0.0
  %6963 = vmatpush1.msra.mxu0 0.0
  %6964 = vmatprep.subr.mxu0 0.0
  %6965 = vmatpush1.msra.mxu0 0.0
  %6966 = vmatprep.subr.mxu0 0.0
  %6967 = vmatpush1.msra.mxu0 0.0
  %6968 = vmatprep.subr.mxu0 0.0
  %6969 = vmatpush1.msra.mxu0 0.0
  %6970 = vmatprep.subr.mxu0 0.0
  %6971 = vmatpush1.msra.mxu0 0.0
  %6972 = vmatprep.subr.mxu0 0.0
  %6973 = vmatpush1.msra.mxu0 0.0
  %6974 = vmatprep.subr.mxu0 0.0
  %6975 = vmatpush1.msra.mxu0 0.0
  %6976 = vmatprep.subr.mxu0 0.0
  %6977 = vmatpush1.msra.mxu0 0.0
  %6978 = vmatprep.subr.mxu0 0.0
  %6979 = vmatpush1.msra.mxu0 0.0
  %6980 = vmatprep.subr.mxu0 0.0
  %6981 = vmatpush1.msra.mxu0 0.0
  %6982 = vmatprep.subr.mxu0 0.0
  %6983 = vmatpush1.msra.mxu0 0.0
  %6984 = vmatprep.subr.mxu0 0.0
  %6985 = vmatpush1.msra.mxu0 0.0
  %6986 = vmatprep.subr.mxu0 0.0
  %6987 = vmatpush1.msra.mxu0 %v5136
  %6988 = vmatprep.subr.mxu0 0.0
  %6989 = vmatpush2.msra.mxu0 0.0
  %6990 = vmatprep.subr.mxu0 0.0
  %6991 = vmatpush2.msra.mxu0 0.0
  %6992 = vmatprep.subr.mxu0 0.0
  %6993 = vmatpush2.msra.mxu0 0.0
  %6994 = vmatprep.subr.mxu0 0.0
  %6995 = vmatpush2.msra.mxu0 0.0
  %6996 = vmatprep.subr.mxu0 0.0
  %6997 = vmatpush2.msra.mxu0 0.0
  %6998 = vmatprep.subr.mxu0 0.0
  %6999 = vmatpush2.msra.mxu0 0.0
  %7000 = vmatprep.subr.mxu0 0.0
  %7001 = vmatpush2.msra.mxu0 0.0
  %7002 = vmatprep.subr.mxu0 0.0
  %7003 = vmatpush2.msra.mxu0 0.0
  %7004 = vmatprep.subr.mxu0 0.0
  %7005 = vmatpush2.msra.mxu0 0.0
  %7006 = vmatprep.subr.mxu0 0.0
  %7007 = vmatpush2.msra.mxu0 0.0
  %7008 = vmatprep.subr.mxu0 0.0
  %7009 = vmatpush2.msra.mxu0 0.0
  %7010 = vmatprep.subr.mxu0 0.0
  %7011 = vmatpush2.msra.mxu0 0.0
  %7012 = vmatprep.subr.mxu0 0.0
  %7013 = vmatpush2.msra.mxu0 0.0
  %7014 = vmatprep.subr.mxu0 0.0
  %7015 = vmatpush2.msra.mxu0 0.0
  %7016 = vmatprep.subr.mxu0 0.0
  %7017 = vmatpush2.msra.mxu0 0.0
  %7018 = vmatprep.subr.mxu0 0.0
  %7019 = vmatpush2.msra.mxu0 0.0
  %7020 = vmatprep.mubr.f32.mxu0 0.0
  %7021 = vmatmul.mubr.f32.gmra.mxu0 %v6813
  %v7022 = vpop.f32.mrf.mxu0
  %v7023 = vadd.f32 %v6953, %v7022
  %v7024 = vpop.f32.mrf.mxu0
  %7025 = vdwg.mxu0
  %v7026 = vadd.f32 %v7023, %v5212
  %7027 = vmatprep.subr.mxu0 0.0
  %7028 = vmatpush1.msra.mxu0 0.0
  %7029 = vmatprep.subr.mxu0 0.0
  %7030 = vmatpush1.msra.mxu0 0.0
  %7031 = vmatprep.subr.mxu0 0.0
  %7032 = vmatpush1.msra.mxu0 0.0
  %7033 = vmatprep.subr.mxu0 0.0
  %7034 = vmatpush1.msra.mxu0 0.0
  %7035 = vmatprep.subr.mxu0 0.0
  %7036 = vmatpush1.msra.mxu0 0.0
  %7037 = vmatprep.subr.mxu0 0.0
  %7038 = vmatpush1.msra.mxu0 0.0
  %7039 = vmatprep.subr.mxu0 0.0
  %7040 = vmatpush1.msra.mxu0 0.0
  %7041 = vmatprep.subr.mxu0 0.0
  %7042 = vmatpush1.msra.mxu0 0.0
  %7043 = vmatprep.subr.mxu0 0.0
  %7044 = vmatpush1.msra.mxu0 0.0
  %7045 = vmatprep.subr.mxu0 0.0
  %7046 = vmatpush1.msra.mxu0 0.0
  %7047 = vmatprep.subr.mxu0 0.0
  %7048 = vmatpush1.msra.mxu0 0.0
  %7049 = vmatprep.subr.mxu0 0.0
  %7050 = vmatpush1.msra.mxu0 0.0
  %7051 = vmatprep.subr.mxu0 0.0
  %7052 = vmatpush1.msra.mxu0 0.0
  %7053 = vmatprep.subr.mxu0 0.0
  %7054 = vmatpush1.msra.mxu0 0.0
  %7055 = vmatprep.subr.mxu0 0.0
  %7056 = vmatpush1.msra.mxu0 0.0
  %7057 = vmatprep.subr.mxu0 0.0
  %7058 = vmatpush1.msra.mxu0 %v5216
  %7059 = vmatprep.subr.mxu0 0.0
  %7060 = vmatpush2.msra.mxu0 0.0
  %7061 = vmatprep.subr.mxu0 0.0
  %7062 = vmatpush2.msra.mxu0 0.0
  %7063 = vmatprep.subr.mxu0 0.0
  %7064 = vmatpush2.msra.mxu0 0.0
  %7065 = vmatprep.subr.mxu0 0.0
  %7066 = vmatpush2.msra.mxu0 0.0
  %7067 = vmatprep.subr.mxu0 0.0
  %7068 = vmatpush2.msra.mxu0 0.0
  %7069 = vmatprep.subr.mxu0 0.0
  %7070 = vmatpush2.msra.mxu0 0.0
  %7071 = vmatprep.subr.mxu0 0.0
  %7072 = vmatpush2.msra.mxu0 0.0
  %7073 = vmatprep.subr.mxu0 0.0
  %7074 = vmatpush2.msra.mxu0 0.0
  %7075 = vmatprep.subr.mxu0 0.0
  %7076 = vmatpush2.msra.mxu0 0.0
  %7077 = vmatprep.subr.mxu0 0.0
  %7078 = vmatpush2.msra.mxu0 0.0
  %7079 = vmatprep.subr.mxu0 0.0
  %7080 = vmatpush2.msra.mxu0 0.0
  %7081 = vmatprep.subr.mxu0 0.0
  %7082 = vmatpush2.msra.mxu0 0.0
  %7083 = vmatprep.subr.mxu0 0.0
  %7084 = vmatpush2.msra.mxu0 0.0
  %7085 = vmatprep.subr.mxu0 0.0
  %7086 = vmatpush2.msra.mxu0 0.0
  %7087 = vmatprep.subr.mxu0 0.0
  %7088 = vmatpush2.msra.mxu0 0.0
  %7089 = vmatprep.subr.mxu0 0.0
  %7090 = vmatpush2.msra.mxu0 0.0
  %7091 = vmatprep.mubr.f32.mxu0 0.0
  %7092 = vmatmul.mubr.f32.gmra.mxu0 %v6740
  %v7093 = vpop.f32.mrf.mxu0
  %v7094 = vadd.f32 0.0, %v7093
  %v7095 = vpop.f32.mrf.mxu0
  %7096 = vdwg.mxu0
  %7097 = vmatprep.subr.mxu0 0.0
  %7098 = vmatpush1.msra.mxu0 0.0
  %7099 = vmatprep.subr.mxu0 0.0
  %7100 = vmatpush1.msra.mxu0 0.0
  %7101 = vmatprep.subr.mxu0 0.0
  %7102 = vmatpush1.msra.mxu0 0.0
  %7103 = vmatprep.subr.mxu0 0.0
  %7104 = vmatpush1.msra.mxu0 0.0
  %7105 = vmatprep.subr.mxu0 0.0
  %7106 = vmatpush1.msra.mxu0 0.0
  %7107 = vmatprep.subr.mxu0 0.0
  %7108 = vmatpush1.msra.mxu0 0.0
  %7109 = vmatprep.subr.mxu0 0.0
  %7110 = vmatpush1.msra.mxu0 0.0
  %7111 = vmatprep.subr.mxu0 0.0
  %7112 = vmatpush1.msra.mxu0 0.0
  %7113 = vmatprep.subr.mxu0 0.0
  %7114 = vmatpush1.msra.mxu0 0.0
  %7115 = vmatprep.subr.mxu0 0.0
  %7116 = vmatpush1.msra.mxu0 0.0
  %7117 = vmatprep.subr.mxu0 0.0
  %7118 = vmatpush1.msra.mxu0 0.0
  %7119 = vmatprep.subr.mxu0 0.0
  %7120 = vmatpush1.msra.mxu0 0.0
  %7121 = vmatprep.subr.mxu0 0.0
  %7122 = vmatpush1.msra.mxu0 0.0
  %7123 = vmatprep.subr.mxu0 0.0
  %7124 = vmatpush1.msra.mxu0 0.0
  %7125 = vmatprep.subr.mxu0 0.0
  %7126 = vmatpush1.msra.mxu0 0.0
  %7127 = vmatprep.subr.mxu0 0.0
  %7128 = vmatpush1.msra.mxu0 %v5289
  %7129 = vmatprep.subr.mxu0 0.0
  %7130 = vmatpush2.msra.mxu0 0.0
  %7131 = vmatprep.subr.mxu0 0.0
  %7132 = vmatpush2.msra.mxu0 0.0
  %7133 = vmatprep.subr.mxu0 0.0
  %7134 = vmatpush2.msra.mxu0 0.0
  %7135 = vmatprep.subr.mxu0 0.0
  %7136 = vmatpush2.msra.mxu0 0.0
  %7137 = vmatprep.subr.mxu0 0.0
  %7138 = vmatpush2.msra.mxu0 0.0
  %7139 = vmatprep.subr.mxu0 0.0
  %7140 = vmatpush2.msra.mxu0 0.0
  %7141 = vmatprep.subr.mxu0 0.0
  %7142 = vmatpush2.msra.mxu0 0.0
  %7143 = vmatprep.subr.mxu0 0.0
  %7144 = vmatpush2.msra.mxu0 0.0
  %7145 = vmatprep.subr.mxu0 0.0
  %7146 = vmatpush2.msra.mxu0 0.0
  %7147 = vmatprep.subr.mxu0 0.0
  %7148 = vmatpush2.msra.mxu0 0.0
  %7149 = vmatprep.subr.mxu0 0.0
  %7150 = vmatpush2.msra.mxu0 0.0
  %7151 = vmatprep.subr.mxu0 0.0
  %7152 = vmatpush2.msra.mxu0 0.0
  %7153 = vmatprep.subr.mxu0 0.0
  %7154 = vmatpush2.msra.mxu0 0.0
  %7155 = vmatprep.subr.mxu0 0.0
  %7156 = vmatpush2.msra.mxu0 0.0
  %7157 = vmatprep.subr.mxu0 0.0
  %7158 = vmatpush2.msra.mxu0 0.0
  %7159 = vmatprep.subr.mxu0 0.0
  %7160 = vmatpush2.msra.mxu0 0.0
  %7161 = vmatprep.mubr.f32.mxu0 0.0
  %7162 = vmatmul.mubr.f32.gmra.mxu0 %v6813
  %v7163 = vpop.f32.mrf.mxu0
  %v7164 = vadd.f32 %v7094, %v7163
  %v7165 = vpop.f32.mrf.mxu0
  %7166 = vdwg.mxu0
  %v7167 = vadd.f32 %v7164, %v5365
  %7168 = vmatprep.subr.mxu0 0.0
  %7169 = vmatpush1.msra.mxu0 0.0
  %7170 = vmatprep.subr.mxu0 0.0
  %7171 = vmatpush1.msra.mxu0 0.0
  %7172 = vmatprep.subr.mxu0 0.0
  %7173 = vmatpush1.msra.mxu0 0.0
  %7174 = vmatprep.subr.mxu0 0.0
  %7175 = vmatpush1.msra.mxu0 0.0
  %7176 = vmatprep.subr.mxu0 0.0
  %7177 = vmatpush1.msra.mxu0 0.0
  %7178 = vmatprep.subr.mxu0 0.0
  %7179 = vmatpush1.msra.mxu0 0.0
  %7180 = vmatprep.subr.mxu0 0.0
  %7181 = vmatpush1.msra.mxu0 0.0
  %7182 = vmatprep.subr.mxu0 0.0
  %7183 = vmatpush1.msra.mxu0 0.0
  %7184 = vmatprep.subr.mxu0 0.0
  %7185 = vmatpush1.msra.mxu0 0.0
  %7186 = vmatprep.subr.mxu0 0.0
  %7187 = vmatpush1.msra.mxu0 0.0
  %7188 = vmatprep.subr.mxu0 0.0
  %7189 = vmatpush1.msra.mxu0 0.0
  %7190 = vmatprep.subr.mxu0 0.0
  %7191 = vmatpush1.msra.mxu0 0.0
  %7192 = vmatprep.subr.mxu0 0.0
  %7193 = vmatpush1.msra.mxu0 0.0
  %7194 = vmatprep.subr.mxu0 0.0
  %7195 = vmatpush1.msra.mxu0 0.0
  %7196 = vmatprep.subr.mxu0 0.0
  %7197 = vmatpush1.msra.mxu0 0.0
  %7198 = vmatprep.subr.mxu0 0.0
  %7199 = vmatpush1.msra.mxu0 %v5369
  %7200 = vmatprep.subr.mxu0 0.0
  %7201 = vmatpush2.msra.mxu0 0.0
  %7202 = vmatprep.subr.mxu0 0.0
  %7203 = vmatpush2.msra.mxu0 0.0
  %7204 = vmatprep.subr.mxu0 0.0
  %7205 = vmatpush2.msra.mxu0 0.0
  %7206 = vmatprep.subr.mxu0 0.0
  %7207 = vmatpush2.msra.mxu0 0.0
  %7208 = vmatprep.subr.mxu0 0.0
  %7209 = vmatpush2.msra.mxu0 0.0
  %7210 = vmatprep.subr.mxu0 0.0
  %7211 = vmatpush2.msra.mxu0 0.0
  %7212 = vmatprep.subr.mxu0 0.0
  %7213 = vmatpush2.msra.mxu0 0.0
  %7214 = vmatprep.subr.mxu0 0.0
  %7215 = vmatpush2.msra.mxu0 0.0
  %7216 = vmatprep.subr.mxu0 0.0
  %7217 = vmatpush2.msra.mxu0 0.0
  %7218 = vmatprep.subr.mxu0 0.0
  %7219 = vmatpush2.msra.mxu0 0.0
  %7220 = vmatprep.subr.mxu0 0.0
  %7221 = vmatpush2.msra.mxu0 0.0
  %7222 = vmatprep.subr.mxu0 0.0
  %7223 = vmatpush2.msra.mxu0 0.0
  %7224 = vmatprep.subr.mxu0 0.0
  %7225 = vmatpush2.msra.mxu0 0.0
  %7226 = vmatprep.subr.mxu0 0.0
  %7227 = vmatpush2.msra.mxu0 0.0
  %7228 = vmatprep.subr.mxu0 0.0
  %7229 = vmatpush2.msra.mxu0 0.0
  %7230 = vmatprep.subr.mxu0 0.0
  %7231 = vmatpush2.msra.mxu0 0.0
  %7232 = vmatprep.mubr.f32.mxu0 0.0
  %7233 = vmatmul.mubr.f32.gmra.mxu0 %v6740
  %v7234 = vpop.f32.mrf.mxu0
  %v7235 = vadd.f32 0.0, %v7234
  %v7236 = vpop.f32.mrf.mxu0
  %7237 = vdwg.mxu0
  %7238 = vmatprep.subr.mxu0 0.0
  %7239 = vmatpush1.msra.mxu0 0.0
  %7240 = vmatprep.subr.mxu0 0.0
  %7241 = vmatpush1.msra.mxu0 0.0
  %7242 = vmatprep.subr.mxu0 0.0
  %7243 = vmatpush1.msra.mxu0 0.0
  %7244 = vmatprep.subr.mxu0 0.0
  %7245 = vmatpush1.msra.mxu0 0.0
  %7246 = vmatprep.subr.mxu0 0.0
  %7247 = vmatpush1.msra.mxu0 0.0
  %7248 = vmatprep.subr.mxu0 0.0
  %7249 = vmatpush1.msra.mxu0 0.0
  %7250 = vmatprep.subr.mxu0 0.0
  %7251 = vmatpush1.msra.mxu0 0.0
  %7252 = vmatprep.subr.mxu0 0.0
  %7253 = vmatpush1.msra.mxu0 0.0
  %7254 = vmatprep.subr.mxu0 0.0
  %7255 = vmatpush1.msra.mxu0 0.0
  %7256 = vmatprep.subr.mxu0 0.0
  %7257 = vmatpush1.msra.mxu0 0.0
  %7258 = vmatprep.subr.mxu0 0.0
  %7259 = vmatpush1.msra.mxu0 0.0
  %7260 = vmatprep.subr.mxu0 0.0
  %7261 = vmatpush1.msra.mxu0 0.0
  %7262 = vmatprep.subr.mxu0 0.0
  %7263 = vmatpush1.msra.mxu0 0.0
  %7264 = vmatprep.subr.mxu0 0.0
  %7265 = vmatpush1.msra.mxu0 0.0
  %7266 = vmatprep.subr.mxu0 0.0
  %7267 = vmatpush1.msra.mxu0 0.0
  %7268 = vmatprep.subr.mxu0 0.0
  %7269 = vmatpush1.msra.mxu0 %v5442
  %7270 = vmatprep.subr.mxu0 0.0
  %7271 = vmatpush2.msra.mxu0 0.0
  %7272 = vmatprep.subr.mxu0 0.0
  %7273 = vmatpush2.msra.mxu0 0.0
  %7274 = vmatprep.subr.mxu0 0.0
  %7275 = vmatpush2.msra.mxu0 0.0
  %7276 = vmatprep.subr.mxu0 0.0
  %7277 = vmatpush2.msra.mxu0 0.0
  %7278 = vmatprep.subr.mxu0 0.0
  %7279 = vmatpush2.msra.mxu0 0.0
  %7280 = vmatprep.subr.mxu0 0.0
  %7281 = vmatpush2.msra.mxu0 0.0
  %7282 = vmatprep.subr.mxu0 0.0
  %7283 = vmatpush2.msra.mxu0 0.0
  %7284 = vmatprep.subr.mxu0 0.0
  %7285 = vmatpush2.msra.mxu0 0.0
  %7286 = vmatprep.subr.mxu0 0.0
  %7287 = vmatpush2.msra.mxu0 0.0
  %7288 = vmatprep.subr.mxu0 0.0
  %7289 = vmatpush2.msra.mxu0 0.0
  %7290 = vmatprep.subr.mxu0 0.0
  %7291 = vmatpush2.msra.mxu0 0.0
  %7292 = vmatprep.subr.mxu0 0.0
  %7293 = vmatpush2.msra.mxu0 0.0
  %7294 = vmatprep.subr.mxu0 0.0
  %7295 = vmatpush2.msra.mxu0 0.0
  %7296 = vmatprep.subr.mxu0 0.0
  %7297 = vmatpush2.msra.mxu0 0.0
  %7298 = vmatprep.subr.mxu0 0.0
  %7299 = vmatpush2.msra.mxu0 0.0
  %7300 = vmatprep.subr.mxu0 0.0
  %7301 = vmatpush2.msra.mxu0 0.0
  %7302 = vmatprep.mubr.f32.mxu0 0.0
  %7303 = vmatmul.mubr.f32.gmra.mxu0 %v6813
  %v7304 = vpop.f32.mrf.mxu0
  %v7305 = vadd.f32 %v7235, %v7304
  %v7306 = vpop.f32.mrf.mxu0
  %7307 = vdwg.mxu0
  %v7308 = vadd.f32 %v7305, %v5518
  %v7309 = vsub.f32 0.0, %v6885
  %v7310 = vmul.f32 %v7309, 1.442695
  %v7311 = vpow.pop %v7310
  %v7312 = vadd.f32 %v7311, 1.0
  %v7313 = vrcp.pop %v7312
  %v7314 = vmul.f32 1.0, %v7313
  %v7315 = vsub.f32 0.0, %v7026
  %v7316 = vmul.f32 %v7315, 1.442695
  %v7317 = vpow.pop %v7316
  %v7318 = vadd.f32 %v7317, 1.0
  %v7319 = vrcp.pop %v7318
  %v7320 = vmul.f32 1.0, %v7319
  %v7321 = vtanh.pop %v7167
  %v7322 = vsub.f32 0.0, %v7308
  %v7323 = vmul.f32 %v7322, 1.442695
  %v7324 = vpow.pop %v7323
  %v7325 = vadd.f32 %v7324, 1.0
  %v7326 = vrcp.pop %v7325
  %v7327 = vmul.f32 1.0, %v7326
  %v7328 = vmul.f32 %v7320, %v6734
  %v7329 = vmul.f32 %v7314, %v7321
  %v7330 = vadd.f32 %v7328, %v7329
  %v7331 = vtanh.pop %v7330
  %v7332 = vmul.f32 %v7327, %v7331
  %s7333 = scalar_lea.vmem %s1, 32
  %v7334 = vld [vmem:[%s7333] sm:$0xff]
  %v7336 = vsel %vm66, %v7332, 0
  %7338 = vmatprep.subr.mxu0 0.0
  %7339 = vmatpush1.msra.mxu0 0.0
  %7340 = vmatprep.subr.mxu0 0.0
  %7341 = vmatpush1.msra.mxu0 0.0
  %7342 = vmatprep.subr.mxu0 0.0
  %7343 = vmatpush1.msra.mxu0 0.0
  %7344 = vmatprep.subr.mxu0 0.0
  %7345 = vmatpush1.msra.mxu0 0.0
  %7346 = vmatprep.subr.mxu0 0.0
  %7347 = vmatpush1.msra.mxu0 0.0
  %7348 = vmatprep.subr.mxu0 0.0
  %7349 = vmatpush1.msra.mxu0 0.0
  %7350 = vmatprep.subr.mxu0 0.0
  %7351 = vmatpush1.msra.mxu0 0.0
  %7352 = vmatprep.subr.mxu0 0.0
  %7353 = vmatpush1.msra.mxu0 0.0
  %7354 = vmatprep.subr.mxu0 0.0
  %7355 = vmatpush1.msra.mxu0 0.0
  %7356 = vmatprep.subr.mxu0 0.0
  %7357 = vmatpush1.msra.mxu0 0.0
  %7358 = vmatprep.subr.mxu0 0.0
  %7359 = vmatpush1.msra.mxu0 0.0
  %7360 = vmatprep.subr.mxu0 0.0
  %7361 = vmatpush1.msra.mxu0 0.0
  %7362 = vmatprep.subr.mxu0 0.0
  %7363 = vmatpush1.msra.mxu0 0.0
  %7364 = vmatprep.subr.mxu0 0.0
  %7365 = vmatpush1.msra.mxu0 0.0
  %7366 = vmatprep.subr.mxu0 0.0
  %7367 = vmatpush1.msra.mxu0 0.0
  %7368 = vmatprep.subr.mxu0 0.0
  %7369 = vmatpush1.msra.mxu0 %v4905
  %7370 = vmatprep.subr.mxu0 0.0
  %7371 = vmatpush2.msra.mxu0 0.0
  %7372 = vmatprep.subr.mxu0 0.0
  %7373 = vmatpush2.msra.mxu0 0.0
  %7374 = vmatprep.subr.mxu0 0.0
  %7375 = vmatpush2.msra.mxu0 0.0
  %7376 = vmatprep.subr.mxu0 0.0
  %7377 = vmatpush2.msra.mxu0 0.0
  %7378 = vmatprep.subr.mxu0 0.0
  %7379 = vmatpush2.msra.mxu0 0.0
  %7380 = vmatprep.subr.mxu0 0.0
  %7381 = vmatpush2.msra.mxu0 0.0
  %7382 = vmatprep.subr.mxu0 0.0
  %7383 = vmatpush2.msra.mxu0 0.0
  %7384 = vmatprep.subr.mxu0 0.0
  %7385 = vmatpush2.msra.mxu0 0.0
  %7386 = vmatprep.subr.mxu0 0.0
  %7387 = vmatpush2.msra.mxu0 0.0
  %7388 = vmatprep.subr.mxu0 0.0
  %7389 = vmatpush2.msra.mxu0 0.0
  %7390 = vmatprep.subr.mxu0 0.0
  %7391 = vmatpush2.msra.mxu0 0.0
  %7392 = vmatprep.subr.mxu0 0.0
  %7393 = vmatpush2.msra.mxu0 0.0
  %7394 = vmatprep.subr.mxu0 0.0
  %7395 = vmatpush2.msra.mxu0 0.0
  %7396 = vmatprep.subr.mxu0 0.0
  %7397 = vmatpush2.msra.mxu0 0.0
  %7398 = vmatprep.subr.mxu0 0.0
  %7399 = vmatpush2.msra.mxu0 0.0
  %7400 = vmatprep.subr.mxu0 0.0
  %7401 = vmatpush2.msra.mxu0 0.0
  %7402 = vmatprep.mubr.f32.mxu0 0.0
  %7403 = vmatmul.mubr.f32.gmra.mxu0 %v7336
  %v7404 = vpop.f32.mrf.mxu0
  %v7405 = vadd.f32 0.0, %v7404
  %v7406 = vpop.f32.mrf.mxu0
  %7407 = vdwg.mxu0
  %v7409 = vsel %vm4977, %v7334, 0
  %7411 = vmatprep.subr.mxu0 0.0
  %7412 = vmatpush1.msra.mxu0 0.0
  %7413 = vmatprep.subr.mxu0 0.0
  %7414 = vmatpush1.msra.mxu0 0.0
  %7415 = vmatprep.subr.mxu0 0.0
  %7416 = vmatpush1.msra.mxu0 0.0
  %7417 = vmatprep.subr.mxu0 0.0
  %7418 = vmatpush1.msra.mxu0 0.0
  %7419 = vmatprep.subr.mxu0 0.0
  %7420 = vmatpush1.msra.mxu0 0.0
  %7421 = vmatprep.subr.mxu0 0.0
  %7422 = vmatpush1.msra.mxu0 0.0
  %7423 = vmatprep.subr.mxu0 0.0
  %7424 = vmatpush1.msra.mxu0 0.0
  %7425 = vmatprep.subr.mxu0 0.0
  %7426 = vmatpush1.msra.mxu0 0.0
  %7427 = vmatprep.subr.mxu0 0.0
  %7428 = vmatpush1.msra.mxu0 0.0
  %7429 = vmatprep.subr.mxu0 0.0
  %7430 = vmatpush1.msra.mxu0 0.0
  %7431 = vmatprep.subr.mxu0 0.0
  %7432 = vmatpush1.msra.mxu0 0.0
  %7433 = vmatprep.subr.mxu0 0.0
  %7434 = vmatpush1.msra.mxu0 0.0
  %7435 = vmatprep.subr.mxu0 0.0
  %7436 = vmatpush1.msra.mxu0 0.0
  %7437 = vmatprep.subr.mxu0 0.0
  %7438 = vmatpush1.msra.mxu0 0.0
  %7439 = vmatprep.subr.mxu0 0.0
  %7440 = vmatpush1.msra.mxu0 0.0
  %7441 = vmatprep.subr.mxu0 0.0
  %7442 = vmatpush1.msra.mxu0 %v4983
  %7443 = vmatprep.subr.mxu0 0.0
  %7444 = vmatpush2.msra.mxu0 0.0
  %7445 = vmatprep.subr.mxu0 0.0
  %7446 = vmatpush2.msra.mxu0 0.0
  %7447 = vmatprep.subr.mxu0 0.0
  %7448 = vmatpush2.msra.mxu0 0.0
  %7449 = vmatprep.subr.mxu0 0.0
  %7450 = vmatpush2.msra.mxu0 0.0
  %7451 = vmatprep.subr.mxu0 0.0
  %7452 = vmatpush2.msra.mxu0 0.0
  %7453 = vmatprep.subr.mxu0 0.0
  %7454 = vmatpush2.msra.mxu0 0.0
  %7455 = vmatprep.subr.mxu0 0.0
  %7456 = vmatpush2.msra.mxu0 0.0
  %7457 = vmatprep.subr.mxu0 0.0
  %7458 = vmatpush2.msra.mxu0 0.0
  %7459 = vmatprep.subr.mxu0 0.0
  %7460 = vmatpush2.msra.mxu0 0.0
  %7461 = vmatprep.subr.mxu0 0.0
  %7462 = vmatpush2.msra.mxu0 0.0
  %7463 = vmatprep.subr.mxu0 0.0
  %7464 = vmatpush2.msra.mxu0 0.0
  %7465 = vmatprep.subr.mxu0 0.0
  %7466 = vmatpush2.msra.mxu0 0.0
  %7467 = vmatprep.subr.mxu0 0.0
  %7468 = vmatpush2.msra.mxu0 0.0
  %7469 = vmatprep.subr.mxu0 0.0
  %7470 = vmatpush2.msra.mxu0 0.0
  %7471 = vmatprep.subr.mxu0 0.0
  %7472 = vmatpush2.msra.mxu0 0.0
  %7473 = vmatprep.subr.mxu0 0.0
  %7474 = vmatpush2.msra.mxu0 0.0
  %7475 = vmatprep.mubr.f32.mxu0 0.0
  %7476 = vmatmul.mubr.f32.gmra.mxu0 %v7409
  %v7477 = vpop.f32.mrf.mxu0
  %v7478 = vadd.f32 %v7405, %v7477
  %v7479 = vpop.f32.mrf.mxu0
  %7480 = vdwg.mxu0
  %v7481 = vadd.f32 %v7478, %v5059
  %7482 = vmatprep.subr.mxu0 0.0
  %7483 = vmatpush1.msra.mxu0 0.0
  %7484 = vmatprep.subr.mxu0 0.0
  %7485 = vmatpush1.msra.mxu0 0.0
  %7486 = vmatprep.subr.mxu0 0.0
  %7487 = vmatpush1.msra.mxu0 0.0
  %7488 = vmatprep.subr.mxu0 0.0
  %7489 = vmatpush1.msra.mxu0 0.0
  %7490 = vmatprep.subr.mxu0 0.0
  %7491 = vmatpush1.msra.mxu0 0.0
  %7492 = vmatprep.subr.mxu0 0.0
  %7493 = vmatpush1.msra.mxu0 0.0
  %7494 = vmatprep.subr.mxu0 0.0
  %7495 = vmatpush1.msra.mxu0 0.0
  %7496 = vmatprep.subr.mxu0 0.0
  %7497 = vmatpush1.msra.mxu0 0.0
  %7498 = vmatprep.subr.mxu0 0.0
  %7499 = vmatpush1.msra.mxu0 0.0
  %7500 = vmatprep.subr.mxu0 0.0
  %7501 = vmatpush1.msra.mxu0 0.0
  %7502 = vmatprep.subr.mxu0 0.0
  %7503 = vmatpush1.msra.mxu0 0.0
  %7504 = vmatprep.subr.mxu0 0.0
  %7505 = vmatpush1.msra.mxu0 0.0
  %7506 = vmatprep.subr.mxu0 0.0
  %7507 = vmatpush1.msra.mxu0 0.0
  %7508 = vmatprep.subr.mxu0 0.0
  %7509 = vmatpush1.msra.mxu0 0.0
  %7510 = vmatprep.subr.mxu0 0.0
  %7511 = vmatpush1.msra.mxu0 0.0
  %7512 = vmatprep.subr.mxu0 0.0
  %7513 = vmatpush1.msra.mxu0 %v5063
  %7514 = vmatprep.subr.mxu0 0.0
  %7515 = vmatpush2.msra.mxu0 0.0
  %7516 = vmatprep.subr.mxu0 0.0
  %7517 = vmatpush2.msra.mxu0 0.0
  %7518 = vmatprep.subr.mxu0 0.0
  %7519 = vmatpush2.msra.mxu0 0.0
  %7520 = vmatprep.subr.mxu0 0.0
  %7521 = vmatpush2.msra.mxu0 0.0
  %7522 = vmatprep.subr.mxu0 0.0
  %7523 = vmatpush2.msra.mxu0 0.0
  %7524 = vmatprep.subr.mxu0 0.0
  %7525 = vmatpush2.msra.mxu0 0.0
  %7526 = vmatprep.subr.mxu0 0.0
  %7527 = vmatpush2.msra.mxu0 0.0
  %7528 = vmatprep.subr.mxu0 0.0
  %7529 = vmatpush2.msra.mxu0 0.0
  %7530 = vmatprep.subr.mxu0 0.0
  %7531 = vmatpush2.msra.mxu0 0.0
  %7532 = vmatprep.subr.mxu0 0.0
  %7533 = vmatpush2.msra.mxu0 0.0
  %7534 = vmatprep.subr.mxu0 0.0
  %7535 = vmatpush2.msra.mxu0 0.0
  %7536 = vmatprep.subr.mxu0 0.0
  %7537 = vmatpush2.msra.mxu0 0.0
  %7538 = vmatprep.subr.mxu0 0.0
  %7539 = vmatpush2.msra.mxu0 0.0
  %7540 = vmatprep.subr.mxu0 0.0
  %7541 = vmatpush2.msra.mxu0 0.0
  %7542 = vmatprep.subr.mxu0 0.0
  %7543 = vmatpush2.msra.mxu0 0.0
  %7544 = vmatprep.subr.mxu0 0.0
  %7545 = vmatpush2.msra.mxu0 0.0
  %7546 = vmatprep.mubr.f32.mxu0 0.0
  %7547 = vmatmul.mubr.f32.gmra.mxu0 %v7336
  %v7548 = vpop.f32.mrf.mxu0
  %v7549 = vadd.f32 0.0, %v7548
  %v7550 = vpop.f32.mrf.mxu0
  %7551 = vdwg.mxu0
  %7552 = vmatprep.subr.mxu0 0.0
  %7553 = vmatpush1.msra.mxu0 0.0
  %7554 = vmatprep.subr.mxu0 0.0
  %7555 = vmatpush1.msra.mxu0 0.0
  %7556 = vmatprep.subr.mxu0 0.0
  %7557 = vmatpush1.msra.mxu0 0.0
  %7558 = vmatprep.subr.mxu0 0.0
  %7559 = vmatpush1.msra.mxu0 0.0
  %7560 = vmatprep.subr.mxu0 0.0
  %7561 = vmatpush1.msra.mxu0 0.0
  %7562 = vmatprep.subr.mxu0 0.0
  %7563 = vmatpush1.msra.mxu0 0.0
  %7564 = vmatprep.subr.mxu0 0.0
  %7565 = vmatpush1.msra.mxu0 0.0
  %7566 = vmatprep.subr.mxu0 0.0
  %7567 = vmatpush1.msra.mxu0 0.0
  %7568 = vmatprep.subr.mxu0 0.0
  %7569 = vmatpush1.msra.mxu0 0.0
  %7570 = vmatprep.subr.mxu0 0.0
  %7571 = vmatpush1.msra.mxu0 0.0
  %7572 = vmatprep.subr.mxu0 0.0
  %7573 = vmatpush1.msra.mxu0 0.0
  %7574 = vmatprep.subr.mxu0 0.0
  %7575 = vmatpush1.msra.mxu0 0.0
  %7576 = vmatprep.subr.mxu0 0.0
  %7577 = vmatpush1.msra.mxu0 0.0
  %7578 = vmatprep.subr.mxu0 0.0
  %7579 = vmatpush1.msra.mxu0 0.0
  %7580 = vmatprep.subr.mxu0 0.0
  %7581 = vmatpush1.msra.mxu0 0.0
  %7582 = vmatprep.subr.mxu0 0.0
  %7583 = vmatpush1.msra.mxu0 %v5136
  %7584 = vmatprep.subr.mxu0 0.0
  %7585 = vmatpush2.msra.mxu0 0.0
  %7586 = vmatprep.subr.mxu0 0.0
  %7587 = vmatpush2.msra.mxu0 0.0
  %7588 = vmatprep.subr.mxu0 0.0
  %7589 = vmatpush2.msra.mxu0 0.0
  %7590 = vmatprep.subr.mxu0 0.0
  %7591 = vmatpush2.msra.mxu0 0.0
  %7592 = vmatprep.subr.mxu0 0.0
  %7593 = vmatpush2.msra.mxu0 0.0
  %7594 = vmatprep.subr.mxu0 0.0
  %7595 = vmatpush2.msra.mxu0 0.0
  %7596 = vmatprep.subr.mxu0 0.0
  %7597 = vmatpush2.msra.mxu0 0.0
  %7598 = vmatprep.subr.mxu0 0.0
  %7599 = vmatpush2.msra.mxu0 0.0
  %7600 = vmatprep.subr.mxu0 0.0
  %7601 = vmatpush2.msra.mxu0 0.0
  %7602 = vmatprep.subr.mxu0 0.0
  %7603 = vmatpush2.msra.mxu0 0.0
  %7604 = vmatprep.subr.mxu0 0.0
  %7605 = vmatpush2.msra.mxu0 0.0
  %7606 = vmatprep.subr.mxu0 0.0
  %7607 = vmatpush2.msra.mxu0 0.0
  %7608 = vmatprep.subr.mxu0 0.0
  %7609 = vmatpush2.msra.mxu0 0.0
  %7610 = vmatprep.subr.mxu0 0.0
  %7611 = vmatpush2.msra.mxu0 0.0
  %7612 = vmatprep.subr.mxu0 0.0
  %7613 = vmatpush2.msra.mxu0 0.0
  %7614 = vmatprep.subr.mxu0 0.0
  %7615 = vmatpush2.msra.mxu0 0.0
  %7616 = vmatprep.mubr.f32.mxu0 0.0
  %7617 = vmatmul.mubr.f32.gmra.mxu0 %v7409
  %v7618 = vpop.f32.mrf.mxu0
  %v7619 = vadd.f32 %v7549, %v7618
  %v7620 = vpop.f32.mrf.mxu0
  %7621 = vdwg.mxu0
  %v7622 = vadd.f32 %v7619, %v5212
  %7623 = vmatprep.subr.mxu0 0.0
  %7624 = vmatpush1.msra.mxu0 0.0
  %7625 = vmatprep.subr.mxu0 0.0
  %7626 = vmatpush1.msra.mxu0 0.0
  %7627 = vmatprep.subr.mxu0 0.0
  %7628 = vmatpush1.msra.mxu0 0.0
  %7629 = vmatprep.subr.mxu0 0.0
  %7630 = vmatpush1.msra.mxu0 0.0
  %7631 = vmatprep.subr.mxu0 0.0
  %7632 = vmatpush1.msra.mxu0 0.0
  %7633 = vmatprep.subr.mxu0 0.0
  %7634 = vmatpush1.msra.mxu0 0.0
  %7635 = vmatprep.subr.mxu0 0.0
  %7636 = vmatpush1.msra.mxu0 0.0
  %7637 = vmatprep.subr.mxu0 0.0
  %7638 = vmatpush1.msra.mxu0 0.0
  %7639 = vmatprep.subr.mxu0 0.0
  %7640 = vmatpush1.msra.mxu0 0.0
  %7641 = vmatprep.subr.mxu0 0.0
  %7642 = vmatpush1.msra.mxu0 0.0
  %7643 = vmatprep.subr.mxu0 0.0
  %7644 = vmatpush1.msra.mxu0 0.0
  %7645 = vmatprep.subr.mxu0 0.0
  %7646 = vmatpush1.msra.mxu0 0.0
  %7647 = vmatprep.subr.mxu0 0.0
  %7648 = vmatpush1.msra.mxu0 0.0
  %7649 = vmatprep.subr.mxu0 0.0
  %7650 = vmatpush1.msra.mxu0 0.0
  %7651 = vmatprep.subr.mxu0 0.0
  %7652 = vmatpush1.msra.mxu0 0.0
  %7653 = vmatprep.subr.mxu0 0.0
  %7654 = vmatpush1.msra.mxu0 %v5216
  %7655 = vmatprep.subr.mxu0 0.0
  %7656 = vmatpush2.msra.mxu0 0.0
  %7657 = vmatprep.subr.mxu0 0.0
  %7658 = vmatpush2.msra.mxu0 0.0
  %7659 = vmatprep.subr.mxu0 0.0
  %7660 = vmatpush2.msra.mxu0 0.0
  %7661 = vmatprep.subr.mxu0 0.0
  %7662 = vmatpush2.msra.mxu0 0.0
  %7663 = vmatprep.subr.mxu0 0.0
  %7664 = vmatpush2.msra.mxu0 0.0
  %7665 = vmatprep.subr.mxu0 0.0
  %7666 = vmatpush2.msra.mxu0 0.0
  %7667 = vmatprep.subr.mxu0 0.0
  %7668 = vmatpush2.msra.mxu0 0.0
  %7669 = vmatprep.subr.mxu0 0.0
  %7670 = vmatpush2.msra.mxu0 0.0
  %7671 = vmatprep.subr.mxu0 0.0
  %7672 = vmatpush2.msra.mxu0 0.0
  %7673 = vmatprep.subr.mxu0 0.0
  %7674 = vmatpush2.msra.mxu0 0.0
  %7675 = vmatprep.subr.mxu0 0.0
  %7676 = vmatpush2.msra.mxu0 0.0
  %7677 = vmatprep.subr.mxu0 0.0
  %7678 = vmatpush2.msra.mxu0 0.0
  %7679 = vmatprep.subr.mxu0 0.0
  %7680 = vmatpush2.msra.mxu0 0.0
  %7681 = vmatprep.subr.mxu0 0.0
  %7682 = vmatpush2.msra.mxu0 0.0
  %7683 = vmatprep.subr.mxu0 0.0
  %7684 = vmatpush2.msra.mxu0 0.0
  %7685 = vmatprep.subr.mxu0 0.0
  %7686 = vmatpush2.msra.mxu0 0.0
  %7687 = vmatprep.mubr.f32.mxu0 0.0
  %7688 = vmatmul.mubr.f32.gmra.mxu0 %v7336
  %v7689 = vpop.f32.mrf.mxu0
  %v7690 = vadd.f32 0.0, %v7689
  %v7691 = vpop.f32.mrf.mxu0
  %7692 = vdwg.mxu0
  %7693 = vmatprep.subr.mxu0 0.0
  %7694 = vmatpush1.msra.mxu0 0.0
  %7695 = vmatprep.subr.mxu0 0.0
  %7696 = vmatpush1.msra.mxu0 0.0
  %7697 = vmatprep.subr.mxu0 0.0
  %7698 = vmatpush1.msra.mxu0 0.0
  %7699 = vmatprep.subr.mxu0 0.0
  %7700 = vmatpush1.msra.mxu0 0.0
  %7701 = vmatprep.subr.mxu0 0.0
  %7702 = vmatpush1.msra.mxu0 0.0
  %7703 = vmatprep.subr.mxu0 0.0
  %7704 = vmatpush1.msra.mxu0 0.0
  %7705 = vmatprep.subr.mxu0 0.0
  %7706 = vmatpush1.msra.mxu0 0.0
  %7707 = vmatprep.subr.mxu0 0.0
  %7708 = vmatpush1.msra.mxu0 0.0
  %7709 = vmatprep.subr.mxu0 0.0
  %7710 = vmatpush1.msra.mxu0 0.0
  %7711 = vmatprep.subr.mxu0 0.0
  %7712 = vmatpush1.msra.mxu0 0.0
  %7713 = vmatprep.subr.mxu0 0.0
  %7714 = vmatpush1.msra.mxu0 0.0
  %7715 = vmatprep.subr.mxu0 0.0
  %7716 = vmatpush1.msra.mxu0 0.0
  %7717 = vmatprep.subr.mxu0 0.0
  %7718 = vmatpush1.msra.mxu0 0.0
  %7719 = vmatprep.subr.mxu0 0.0
  %7720 = vmatpush1.msra.mxu0 0.0
  %7721 = vmatprep.subr.mxu0 0.0
  %7722 = vmatpush1.msra.mxu0 0.0
  %7723 = vmatprep.subr.mxu0 0.0
  %7724 = vmatpush1.msra.mxu0 %v5289
  %7725 = vmatprep.subr.mxu0 0.0
  %7726 = vmatpush2.msra.mxu0 0.0
  %7727 = vmatprep.subr.mxu0 0.0
  %7728 = vmatpush2.msra.mxu0 0.0
  %7729 = vmatprep.subr.mxu0 0.0
  %7730 = vmatpush2.msra.mxu0 0.0
  %7731 = vmatprep.subr.mxu0 0.0
  %7732 = vmatpush2.msra.mxu0 0.0
  %7733 = vmatprep.subr.mxu0 0.0
  %7734 = vmatpush2.msra.mxu0 0.0
  %7735 = vmatprep.subr.mxu0 0.0
  %7736 = vmatpush2.msra.mxu0 0.0
  %7737 = vmatprep.subr.mxu0 0.0
  %7738 = vmatpush2.msra.mxu0 0.0
  %7739 = vmatprep.subr.mxu0 0.0
  %7740 = vmatpush2.msra.mxu0 0.0
  %7741 = vmatprep.subr.mxu0 0.0
  %7742 = vmatpush2.msra.mxu0 0.0
  %7743 = vmatprep.subr.mxu0 0.0
  %7744 = vmatpush2.msra.mxu0 0.0
  %7745 = vmatprep.subr.mxu0 0.0
  %7746 = vmatpush2.msra.mxu0 0.0
  %7747 = vmatprep.subr.mxu0 0.0
  %7748 = vmatpush2.msra.mxu0 0.0
  %7749 = vmatprep.subr.mxu0 0.0
  %7750 = vmatpush2.msra.mxu0 0.0
  %7751 = vmatprep.subr.mxu0 0.0
  %7752 = vmatpush2.msra.mxu0 0.0
  %7753 = vmatprep.subr.mxu0 0.0
  %7754 = vmatpush2.msra.mxu0 0.0
  %7755 = vmatprep.subr.mxu0 0.0
  %7756 = vmatpush2.msra.mxu0 0.0
  %7757 = vmatprep.mubr.f32.mxu0 0.0
  %7758 = vmatmul.mubr.f32.gmra.mxu0 %v7409
  %v7759 = vpop.f32.mrf.mxu0
  %v7760 = vadd.f32 %v7690, %v7759
  %v7761 = vpop.f32.mrf.mxu0
  %7762 = vdwg.mxu0
  %v7763 = vadd.f32 %v7760, %v5365
  %7764 = vmatprep.subr.mxu0 0.0
  %7765 = vmatpush1.msra.mxu0 0.0
  %7766 = vmatprep.subr.mxu0 0.0
  %7767 = vmatpush1.msra.mxu0 0.0
  %7768 = vmatprep.subr.mxu0 0.0
  %7769 = vmatpush1.msra.mxu0 0.0
  %7770 = vmatprep.subr.mxu0 0.0
  %7771 = vmatpush1.msra.mxu0 0.0
  %7772 = vmatprep.subr.mxu0 0.0
  %7773 = vmatpush1.msra.mxu0 0.0
  %7774 = vmatprep.subr.mxu0 0.0
  %7775 = vmatpush1.msra.mxu0 0.0
  %7776 = vmatprep.subr.mxu0 0.0
  %7777 = vmatpush1.msra.mxu0 0.0
  %7778 = vmatprep.subr.mxu0 0.0
  %7779 = vmatpush1.msra.mxu0 0.0
  %7780 = vmatprep.subr.mxu0 0.0
  %7781 = vmatpush1.msra.mxu0 0.0
  %7782 = vmatprep.subr.mxu0 0.0
  %7783 = vmatpush1.msra.mxu0 0.0
  %7784 = vmatprep.subr.mxu0 0.0
  %7785 = vmatpush1.msra.mxu0 0.0
  %7786 = vmatprep.subr.mxu0 0.0
  %7787 = vmatpush1.msra.mxu0 0.0
  %7788 = vmatprep.subr.mxu0 0.0
  %7789 = vmatpush1.msra.mxu0 0.0
  %7790 = vmatprep.subr.mxu0 0.0
  %7791 = vmatpush1.msra.mxu0 0.0
  %7792 = vmatprep.subr.mxu0 0.0
  %7793 = vmatpush1.msra.mxu0 0.0
  %7794 = vmatprep.subr.mxu0 0.0
  %7795 = vmatpush1.msra.mxu0 %v5369
  %7796 = vmatprep.subr.mxu0 0.0
  %7797 = vmatpush2.msra.mxu0 0.0
  %7798 = vmatprep.subr.mxu0 0.0
  %7799 = vmatpush2.msra.mxu0 0.0
  %7800 = vmatprep.subr.mxu0 0.0
  %7801 = vmatpush2.msra.mxu0 0.0
  %7802 = vmatprep.subr.mxu0 0.0
  %7803 = vmatpush2.msra.mxu0 0.0
  %7804 = vmatprep.subr.mxu0 0.0
  %7805 = vmatpush2.msra.mxu0 0.0
  %7806 = vmatprep.subr.mxu0 0.0
  %7807 = vmatpush2.msra.mxu0 0.0
  %7808 = vmatprep.subr.mxu0 0.0
  %7809 = vmatpush2.msra.mxu0 0.0
  %7810 = vmatprep.subr.mxu0 0.0
  %7811 = vmatpush2.msra.mxu0 0.0
  %7812 = vmatprep.subr.mxu0 0.0
  %7813 = vmatpush2.msra.mxu0 0.0
  %7814 = vmatprep.subr.mxu0 0.0
  %7815 = vmatpush2.msra.mxu0 0.0
  %7816 = vmatprep.subr.mxu0 0.0
  %7817 = vmatpush2.msra.mxu0 0.0
  %7818 = vmatprep.subr.mxu0 0.0
  %7819 = vmatpush2.msra.mxu0 0.0
  %7820 = vmatprep.subr.mxu0 0.0
  %7821 = vmatpush2.msra.mxu0 0.0
  %7822 = vmatprep.subr.mxu0 0.0
  %7823 = vmatpush2.msra.mxu0 0.0
  %7824 = vmatprep.subr.mxu0 0.0
  %7825 = vmatpush2.msra.mxu0 0.0
  %7826 = vmatprep.subr.mxu0 0.0
  %7827 = vmatpush2.msra.mxu0 0.0
  %7828 = vmatprep.mubr.f32.mxu0 0.0
  %7829 = vmatmul.mubr.f32.gmra.mxu0 %v7336
  %v7830 = vpop.f32.mrf.mxu0
  %v7831 = vadd.f32 0.0, %v7830
  %v7832 = vpop.f32.mrf.mxu0
  %7833 = vdwg.mxu0
  %7834 = vmatprep.subr.mxu0 0.0
  %7835 = vmatpush1.msra.mxu0 0.0
  %7836 = vmatprep.subr.mxu0 0.0
  %7837 = vmatpush1.msra.mxu0 0.0
  %7838 = vmatprep.subr.mxu0 0.0
  %7839 = vmatpush1.msra.mxu0 0.0
  %7840 = vmatprep.subr.mxu0 0.0
  %7841 = vmatpush1.msra.mxu0 0.0
  %7842 = vmatprep.subr.mxu0 0.0
  %7843 = vmatpush1.msra.mxu0 0.0
  %7844 = vmatprep.subr.mxu0 0.0
  %7845 = vmatpush1.msra.mxu0 0.0
  %7846 = vmatprep.subr.mxu0 0.0
  %7847 = vmatpush1.msra.mxu0 0.0
  %7848 = vmatprep.subr.mxu0 0.0
  %7849 = vmatpush1.msra.mxu0 0.0
  %7850 = vmatprep.subr.mxu0 0.0
  %7851 = vmatpush1.msra.mxu0 0.0
  %7852 = vmatprep.subr.mxu0 0.0
  %7853 = vmatpush1.msra.mxu0 0.0
  %7854 = vmatprep.subr.mxu0 0.0
  %7855 = vmatpush1.msra.mxu0 0.0
  %7856 = vmatprep.subr.mxu0 0.0
  %7857 = vmatpush1.msra.mxu0 0.0
  %7858 = vmatprep.subr.mxu0 0.0
  %7859 = vmatpush1.msra.mxu0 0.0
  %7860 = vmatprep.subr.mxu0 0.0
  %7861 = vmatpush1.msra.mxu0 0.0
  %7862 = vmatprep.subr.mxu0 0.0
  %7863 = vmatpush1.msra.mxu0 0.0
  %7864 = vmatprep.subr.mxu0 0.0
  %7865 = vmatpush1.msra.mxu0 %v5442
  %7866 = vmatprep.subr.mxu0 0.0
  %7867 = vmatpush2.msra.mxu0 0.0
  %7868 = vmatprep.subr.mxu0 0.0
  %7869 = vmatpush2.msra.mxu0 0.0
  %7870 = vmatprep.subr.mxu0 0.0
  %7871 = vmatpush2.msra.mxu0 0.0
  %7872 = vmatprep.subr.mxu0 0.0
  %7873 = vmatpush2.msra.mxu0 0.0
  %7874 = vmatprep.subr.mxu0 0.0
  %7875 = vmatpush2.msra.mxu0 0.0
  %7876 = vmatprep.subr.mxu0 0.0
  %7877 = vmatpush2.msra.mxu0 0.0
  %7878 = vmatprep.subr.mxu0 0.0
  %7879 = vmatpush2.msra.mxu0 0.0
  %7880 = vmatprep.subr.mxu0 0.0
  %7881 = vmatpush2.msra.mxu0 0.0
  %7882 = vmatprep.subr.mxu0 0.0
  %7883 = vmatpush2.msra.mxu0 0.0
  %7884 = vmatprep.subr.mxu0 0.0
  %7885 = vmatpush2.msra.mxu0 0.0
  %7886 = vmatprep.subr.mxu0 0.0
  %7887 = vmatpush2.msra.mxu0 0.0
  %7888 = vmatprep.subr.mxu0 0.0
  %7889 = vmatpush2.msra.mxu0 0.0
  %7890 = vmatprep.subr.mxu0 0.0
  %7891 = vmatpush2.msra.mxu0 0.0
  %7892 = vmatprep.subr.mxu0 0.0
  %7893 = vmatpush2.msra.mxu0 0.0
  %7894 = vmatprep.subr.mxu0 0.0
  %7895 = vmatpush2.msra.mxu0 0.0
  %7896 = vmatprep.subr.mxu0 0.0
  %7897 = vmatpush2.msra.mxu0 0.0
  %7898 = vmatprep.mubr.f32.mxu0 0.0
  %7899 = vmatmul.mubr.f32.gmra.mxu0 %v7409
  %v7900 = vpop.f32.mrf.mxu0
  %v7901 = vadd.f32 %v7831, %v7900
  %v7902 = vpop.f32.mrf.mxu0
  %7903 = vdwg.mxu0
  %v7904 = vadd.f32 %v7901, %v5518
  %v7905 = vsub.f32 0.0, %v7481
  %v7906 = vmul.f32 %v7905, 1.442695
  %v7907 = vpow.pop %v7906
  %v7908 = vadd.f32 %v7907, 1.0
  %v7909 = vrcp.pop %v7908
  %v7910 = vmul.f32 1.0, %v7909
  %v7911 = vsub.f32 0.0, %v7622
  %v7912 = vmul.f32 %v7911, 1.442695
  %v7913 = vpow.pop %v7912
  %v7914 = vadd.f32 %v7913, 1.0
  %v7915 = vrcp.pop %v7914
  %v7916 = vmul.f32 1.0, %v7915
  %v7917 = vtanh.pop %v7763
  %v7918 = vsub.f32 0.0, %v7904
  %v7919 = vmul.f32 %v7918, 1.442695
  %v7920 = vpow.pop %v7919
  %v7921 = vadd.f32 %v7920, 1.0
  %v7922 = vrcp.pop %v7921
  %v7923 = vmul.f32 1.0, %v7922
  %v7924 = vmul.f32 %v7916, %v7330
  %v7925 = vmul.f32 %v7910, %v7917
  %v7926 = vadd.f32 %v7924, %v7925
  %v7927 = vtanh.pop %v7926
  %v7928 = vmul.f32 %v7923, %v7927
  %s7929 = scalar_lea.vmem %s1, 40
  %v7930 = vld [vmem:[%s7929] sm:$0xff]
  %v7932 = vsel %vm66, %v7928, 0
  %7934 = vmatprep.subr.mxu0 0.0
  %7935 = vmatpush1.msra.mxu0 0.0
  %7936 = vmatprep.subr.mxu0 0.0
  %7937 = vmatpush1.msra.mxu0 0.0
  %7938 = vmatprep.subr.mxu0 0.0
  %7939 = vmatpush1.msra.mxu0 0.0
  %7940 = vmatprep.subr.mxu0 0.0
  %7941 = vmatpush1.msra.mxu0 0.0
  %7942 = vmatprep.subr.mxu0 0.0
  %7943 = vmatpush1.msra.mxu0 0.0
  %7944 = vmatprep.subr.mxu0 0.0
  %7945 = vmatpush1.msra.mxu0 0.0
  %7946 = vmatprep.subr.mxu0 0.0
  %7947 = vmatpush1.msra.mxu0 0.0
  %7948 = vmatprep.subr.mxu0 0.0
  %7949 = vmatpush1.msra.mxu0 0.0
  %7950 = vmatprep.subr.mxu0 0.0
  %7951 = vmatpush1.msra.mxu0 0.0
  %7952 = vmatprep.subr.mxu0 0.0
  %7953 = vmatpush1.msra.mxu0 0.0
  %7954 = vmatprep.subr.mxu0 0.0
  %7955 = vmatpush1.msra.mxu0 0.0
  %7956 = vmatprep.subr.mxu0 0.0
  %7957 = vmatpush1.msra.mxu0 0.0
  %7958 = vmatprep.subr.mxu0 0.0
  %7959 = vmatpush1.msra.mxu0 0.0
  %7960 = vmatprep.subr.mxu0 0.0
  %7961 = vmatpush1.msra.mxu0 0.0
  %7962 = vmatprep.subr.mxu0 0.0
  %7963 = vmatpush1.msra.mxu0 0.0
  %7964 = vmatprep.subr.mxu0 0.0
  %7965 = vmatpush1.msra.mxu0 %v4905
  %7966 = vmatprep.subr.mxu0 0.0
  %7967 = vmatpush2.msra.mxu0 0.0
  %7968 = vmatprep.subr.mxu0 0.0
  %7969 = vmatpush2.msra.mxu0 0.0
  %7970 = vmatprep.subr.mxu0 0.0
  %7971 = vmatpush2.msra.mxu0 0.0
  %7972 = vmatprep.subr.mxu0 0.0
  %7973 = vmatpush2.msra.mxu0 0.0
  %7974 = vmatprep.subr.mxu0 0.0
  %7975 = vmatpush2.msra.mxu0 0.0
  %7976 = vmatprep.subr.mxu0 0.0
  %7977 = vmatpush2.msra.mxu0 0.0
  %7978 = vmatprep.subr.mxu0 0.0
  %7979 = vmatpush2.msra.mxu0 0.0
  %7980 = vmatprep.subr.mxu0 0.0
  %7981 = vmatpush2.msra.mxu0 0.0
  %7982 = vmatprep.subr.mxu0 0.0
  %7983 = vmatpush2.msra.mxu0 0.0
  %7984 = vmatprep.subr.mxu0 0.0
  %7985 = vmatpush2.msra.mxu0 0.0
  %7986 = vmatprep.subr.mxu0 0.0
  %7987 = vmatpush2.msra.mxu0 0.0
  %7988 = vmatprep.subr.mxu0 0.0
  %7989 = vmatpush2.msra.mxu0 0.0
  %7990 = vmatprep.subr.mxu0 0.0
  %7991 = vmatpush2.msra.mxu0 0.0
  %7992 = vmatprep.subr.mxu0 0.0
  %7993 = vmatpush2.msra.mxu0 0.0
  %7994 = vmatprep.subr.mxu0 0.0
  %7995 = vmatpush2.msra.mxu0 0.0
  %7996 = vmatprep.subr.mxu0 0.0
  %7997 = vmatpush2.msra.mxu0 0.0
  %7998 = vmatprep.mubr.f32.mxu0 0.0
  %7999 = vmatmul.mubr.f32.gmra.mxu0 %v7932
  %v8000 = vpop.f32.mrf.mxu0
  %v8001 = vadd.f32 0.0, %v8000
  %v8002 = vpop.f32.mrf.mxu0
  %8003 = vdwg.mxu0
  %v8005 = vsel %vm4977, %v7930, 0
  %8007 = vmatprep.subr.mxu0 0.0
  %8008 = vmatpush1.msra.mxu0 0.0
  %8009 = vmatprep.subr.mxu0 0.0
  %8010 = vmatpush1.msra.mxu0 0.0
  %8011 = vmatprep.subr.mxu0 0.0
  %8012 = vmatpush1.msra.mxu0 0.0
  %8013 = vmatprep.subr.mxu0 0.0
  %8014 = vmatpush1.msra.mxu0 0.0
  %8015 = vmatprep.subr.mxu0 0.0
  %8016 = vmatpush1.msra.mxu0 0.0
  %8017 = vmatprep.subr.mxu0 0.0
  %8018 = vmatpush1.msra.mxu0 0.0
  %8019 = vmatprep.subr.mxu0 0.0
  %8020 = vmatpush1.msra.mxu0 0.0
  %8021 = vmatprep.subr.mxu0 0.0
  %8022 = vmatpush1.msra.mxu0 0.0
  %8023 = vmatprep.subr.mxu0 0.0
  %8024 = vmatpush1.msra.mxu0 0.0
  %8025 = vmatprep.subr.mxu0 0.0
  %8026 = vmatpush1.msra.mxu0 0.0
  %8027 = vmatprep.subr.mxu0 0.0
  %8028 = vmatpush1.msra.mxu0 0.0
  %8029 = vmatprep.subr.mxu0 0.0
  %8030 = vmatpush1.msra.mxu0 0.0
  %8031 = vmatprep.subr.mxu0 0.0
  %8032 = vmatpush1.msra.mxu0 0.0
  %8033 = vmatprep.subr.mxu0 0.0
  %8034 = vmatpush1.msra.mxu0 0.0
  %8035 = vmatprep.subr.mxu0 0.0
  %8036 = vmatpush1.msra.mxu0 0.0
  %8037 = vmatprep.subr.mxu0 0.0
  %8038 = vmatpush1.msra.mxu0 %v4983
  %8039 = vmatprep.subr.mxu0 0.0
  %8040 = vmatpush2.msra.mxu0 0.0
  %8041 = vmatprep.subr.mxu0 0.0
  %8042 = vmatpush2.msra.mxu0 0.0
  %8043 = vmatprep.subr.mxu0 0.0
  %8044 = vmatpush2.msra.mxu0 0.0
  %8045 = vmatprep.subr.mxu0 0.0
  %8046 = vmatpush2.msra.mxu0 0.0
  %8047 = vmatprep.subr.mxu0 0.0
  %8048 = vmatpush2.msra.mxu0 0.0
  %8049 = vmatprep.subr.mxu0 0.0
  %8050 = vmatpush2.msra.mxu0 0.0
  %8051 = vmatprep.subr.mxu0 0.0
  %8052 = vmatpush2.msra.mxu0 0.0
  %8053 = vmatprep.subr.mxu0 0.0
  %8054 = vmatpush2.msra.mxu0 0.0
  %8055 = vmatprep.subr.mxu0 0.0
  %8056 = vmatpush2.msra.mxu0 0.0
  %8057 = vmatprep.subr.mxu0 0.0
  %8058 = vmatpush2.msra.mxu0 0.0
  %8059 = vmatprep.subr.mxu0 0.0
  %8060 = vmatpush2.msra.mxu0 0.0
  %8061 = vmatprep.subr.mxu0 0.0
  %8062 = vmatpush2.msra.mxu0 0.0
  %8063 = vmatprep.subr.mxu0 0.0
  %8064 = vmatpush2.msra.mxu0 0.0
  %8065 = vmatprep.subr.mxu0 0.0
  %8066 = vmatpush2.msra.mxu0 0.0
  %8067 = vmatprep.subr.mxu0 0.0
  %8068 = vmatpush2.msra.mxu0 0.0
  %8069 = vmatprep.subr.mxu0 0.0
  %8070 = vmatpush2.msra.mxu0 0.0
  %8071 = vmatprep.mubr.f32.mxu0 0.0
  %8072 = vmatmul.mubr.f32.gmra.mxu0 %v8005
  %v8073 = vpop.f32.mrf.mxu0
  %v8074 = vadd.f32 %v8001, %v8073
  %v8075 = vpop.f32.mrf.mxu0
  %8076 = vdwg.mxu0
  %v8077 = vadd.f32 %v8074, %v5059
  %8078 = vmatprep.subr.mxu0 0.0
  %8079 = vmatpush1.msra.mxu0 0.0
  %8080 = vmatprep.subr.mxu0 0.0
  %8081 = vmatpush1.msra.mxu0 0.0
  %8082 = vmatprep.subr.mxu0 0.0
  %8083 = vmatpush1.msra.mxu0 0.0
  %8084 = vmatprep.subr.mxu0 0.0
  %8085 = vmatpush1.msra.mxu0 0.0
  %8086 = vmatprep.subr.mxu0 0.0
  %8087 = vmatpush1.msra.mxu0 0.0
  %8088 = vmatprep.subr.mxu0 0.0
  %8089 = vmatpush1.msra.mxu0 0.0
  %8090 = vmatprep.subr.mxu0 0.0
  %8091 = vmatpush1.msra.mxu0 0.0
  %8092 = vmatprep.subr.mxu0 0.0
  %8093 = vmatpush1.msra.mxu0 0.0
  %8094 = vmatprep.subr.mxu0 0.0
  %8095 = vmatpush1.msra.mxu0 0.0
  %8096 = vmatprep.subr.mxu0 0.0
  %8097 = vmatpush1.msra.mxu0 0.0
  %8098 = vmatprep.subr.mxu0 0.0
  %8099 = vmatpush1.msra.mxu0 0.0
  %8100 = vmatprep.subr.mxu0 0.0
  %8101 = vmatpush1.msra.mxu0 0.0
  %8102 = vmatprep.subr.mxu0 0.0
  %8103 = vmatpush1.msra.mxu0 0.0
  %8104 = vmatprep.subr.mxu0 0.0
  %8105 = vmatpush1.msra.mxu0 0.0
  %8106 = vmatprep.subr.mxu0 0.0
  %8107 = vmatpush1.msra.mxu0 0.0
  %8108 = vmatprep.subr.mxu0 0.0
  %8109 = vmatpush1.msra.mxu0 %v5063
  %8110 = vmatprep.subr.mxu0 0.0
  %8111 = vmatpush2.msra.mxu0 0.0
  %8112 = vmatprep.subr.mxu0 0.0
  %8113 = vmatpush2.msra.mxu0 0.0
  %8114 = vmatprep.subr.mxu0 0.0
  %8115 = vmatpush2.msra.mxu0 0.0
  %8116 = vmatprep.subr.mxu0 0.0
  %8117 = vmatpush2.msra.mxu0 0.0
  %8118 = vmatprep.subr.mxu0 0.0
  %8119 = vmatpush2.msra.mxu0 0.0
  %8120 = vmatprep.subr.mxu0 0.0
  %8121 = vmatpush2.msra.mxu0 0.0
  %8122 = vmatprep.subr.mxu0 0.0
  %8123 = vmatpush2.msra.mxu0 0.0
  %8124 = vmatprep.subr.mxu0 0.0
  %8125 = vmatpush2.msra.mxu0 0.0
  %8126 = vmatprep.subr.mxu0 0.0
  %8127 = vmatpush2.msra.mxu0 0.0
  %8128 = vmatprep.subr.mxu0 0.0
  %8129 = vmatpush2.msra.mxu0 0.0
  %8130 = vmatprep.subr.mxu0 0.0
  %8131 = vmatpush2.msra.mxu0 0.0
  %8132 = vmatprep.subr.mxu0 0.0
  %8133 = vmatpush2.msra.mxu0 0.0
  %8134 = vmatprep.subr.mxu0 0.0
  %8135 = vmatpush2.msra.mxu0 0.0
  %8136 = vmatprep.subr.mxu0 0.0
  %8137 = vmatpush2.msra.mxu0 0.0
  %8138 = vmatprep.subr.mxu0 0.0
  %8139 = vmatpush2.msra.mxu0 0.0
  %8140 = vmatprep.subr.mxu0 0.0
  %8141 = vmatpush2.msra.mxu0 0.0
  %8142 = vmatprep.mubr.f32.mxu0 0.0
  %8143 = vmatmul.mubr.f32.gmra.mxu0 %v7932
  %v8144 = vpop.f32.mrf.mxu0
  %v8145 = vadd.f32 0.0, %v8144
  %v8146 = vpop.f32.mrf.mxu0
  %8147 = vdwg.mxu0
  %8148 = vmatprep.subr.mxu0 0.0
  %8149 = vmatpush1.msra.mxu0 0.0
  %8150 = vmatprep.subr.mxu0 0.0
  %8151 = vmatpush1.msra.mxu0 0.0
  %8152 = vmatprep.subr.mxu0 0.0
  %8153 = vmatpush1.msra.mxu0 0.0
  %8154 = vmatprep.subr.mxu0 0.0
  %8155 = vmatpush1.msra.mxu0 0.0
  %8156 = vmatprep.subr.mxu0 0.0
  %8157 = vmatpush1.msra.mxu0 0.0
  %8158 = vmatprep.subr.mxu0 0.0
  %8159 = vmatpush1.msra.mxu0 0.0
  %8160 = vmatprep.subr.mxu0 0.0
  %8161 = vmatpush1.msra.mxu0 0.0
  %8162 = vmatprep.subr.mxu0 0.0
  %8163 = vmatpush1.msra.mxu0 0.0
  %8164 = vmatprep.subr.mxu0 0.0
  %8165 = vmatpush1.msra.mxu0 0.0
  %8166 = vmatprep.subr.mxu0 0.0
  %8167 = vmatpush1.msra.mxu0 0.0
  %8168 = vmatprep.subr.mxu0 0.0
  %8169 = vmatpush1.msra.mxu0 0.0
  %8170 = vmatprep.subr.mxu0 0.0
  %8171 = vmatpush1.msra.mxu0 0.0
  %8172 = vmatprep.subr.mxu0 0.0
  %8173 = vmatpush1.msra.mxu0 0.0
  %8174 = vmatprep.subr.mxu0 0.0
  %8175 = vmatpush1.msra.mxu0 0.0
  %8176 = vmatprep.subr.mxu0 0.0
  %8177 = vmatpush1.msra.mxu0 0.0
  %8178 = vmatprep.subr.mxu0 0.0
  %8179 = vmatpush1.msra.mxu0 %v5136
  %8180 = vmatprep.subr.mxu0 0.0
  %8181 = vmatpush2.msra.mxu0 0.0
  %8182 = vmatprep.subr.mxu0 0.0
  %8183 = vmatpush2.msra.mxu0 0.0
  %8184 = vmatprep.subr.mxu0 0.0
  %8185 = vmatpush2.msra.mxu0 0.0
  %8186 = vmatprep.subr.mxu0 0.0
  %8187 = vmatpush2.msra.mxu0 0.0
  %8188 = vmatprep.subr.mxu0 0.0
  %8189 = vmatpush2.msra.mxu0 0.0
  %8190 = vmatprep.subr.mxu0 0.0
  %8191 = vmatpush2.msra.mxu0 0.0
  %8192 = vmatprep.subr.mxu0 0.0
  %8193 = vmatpush2.msra.mxu0 0.0
  %8194 = vmatprep.subr.mxu0 0.0
  %8195 = vmatpush2.msra.mxu0 0.0
  %8196 = vmatprep.subr.mxu0 0.0
  %8197 = vmatpush2.msra.mxu0 0.0
  %8198 = vmatprep.subr.mxu0 0.0
  %8199 = vmatpush2.msra.mxu0 0.0
  %8200 = vmatprep.subr.mxu0 0.0
  %8201 = vmatpush2.msra.mxu0 0.0
  %8202 = vmatprep.subr.mxu0 0.0
  %8203 = vmatpush2.msra.mxu0 0.0
  %8204 = vmatprep.subr.mxu0 0.0
  %8205 = vmatpush2.msra.mxu0 0.0
  %8206 = vmatprep.subr.mxu0 0.0
  %8207 = vmatpush2.msra.mxu0 0.0
  %8208 = vmatprep.subr.mxu0 0.0
  %8209 = vmatpush2.msra.mxu0 0.0
  %8210 = vmatprep.subr.mxu0 0.0
  %8211 = vmatpush2.msra.mxu0 0.0
  %8212 = vmatprep.mubr.f32.mxu0 0.0
  %8213 = vmatmul.mubr.f32.gmra.mxu0 %v8005
  %v8214 = vpop.f32.mrf.mxu0
  %v8215 = vadd.f32 %v8145, %v8214
  %v8216 = vpop.f32.mrf.mxu0
  %8217 = vdwg.mxu0
  %v8218 = vadd.f32 %v8215, %v5212
  %8219 = vmatprep.subr.mxu0 0.0
  %8220 = vmatpush1.msra.mxu0 0.0
  %8221 = vmatprep.subr.mxu0 0.0
  %8222 = vmatpush1.msra.mxu0 0.0
  %8223 = vmatprep.subr.mxu0 0.0
  %8224 = vmatpush1.msra.mxu0 0.0
  %8225 = vmatprep.subr.mxu0 0.0
  %8226 = vmatpush1.msra.mxu0 0.0
  %8227 = vmatprep.subr.mxu0 0.0
  %8228 = vmatpush1.msra.mxu0 0.0
  %8229 = vmatprep.subr.mxu0 0.0
  %8230 = vmatpush1.msra.mxu0 0.0
  %8231 = vmatprep.subr.mxu0 0.0
  %8232 = vmatpush1.msra.mxu0 0.0
  %8233 = vmatprep.subr.mxu0 0.0
  %8234 = vmatpush1.msra.mxu0 0.0
  %8235 = vmatprep.subr.mxu0 0.0
  %8236 = vmatpush1.msra.mxu0 0.0
  %8237 = vmatprep.subr.mxu0 0.0
  %8238 = vmatpush1.msra.mxu0 0.0
  %8239 = vmatprep.subr.mxu0 0.0
  %8240 = vmatpush1.msra.mxu0 0.0
  %8241 = vmatprep.subr.mxu0 0.0
  %8242 = vmatpush1.msra.mxu0 0.0
  %8243 = vmatprep.subr.mxu0 0.0
  %8244 = vmatpush1.msra.mxu0 0.0
  %8245 = vmatprep.subr.mxu0 0.0
  %8246 = vmatpush1.msra.mxu0 0.0
  %8247 = vmatprep.subr.mxu0 0.0
  %8248 = vmatpush1.msra.mxu0 0.0
  %8249 = vmatprep.subr.mxu0 0.0
  %8250 = vmatpush1.msra.mxu0 %v5216
  %8251 = vmatprep.subr.mxu0 0.0
  %8252 = vmatpush2.msra.mxu0 0.0
  %8253 = vmatprep.subr.mxu0 0.0
  %8254 = vmatpush2.msra.mxu0 0.0
  %8255 = vmatprep.subr.mxu0 0.0
  %8256 = vmatpush2.msra.mxu0 0.0
  %8257 = vmatprep.subr.mxu0 0.0
  %8258 = vmatpush2.msra.mxu0 0.0
  %8259 = vmatprep.subr.mxu0 0.0
  %8260 = vmatpush2.msra.mxu0 0.0
  %8261 = vmatprep.subr.mxu0 0.0
  %8262 = vmatpush2.msra.mxu0 0.0
  %8263 = vmatprep.subr.mxu0 0.0
  %8264 = vmatpush2.msra.mxu0 0.0
  %8265 = vmatprep.subr.mxu0 0.0
  %8266 = vmatpush2.msra.mxu0 0.0
  %8267 = vmatprep.subr.mxu0 0.0
  %8268 = vmatpush2.msra.mxu0 0.0
  %8269 = vmatprep.subr.mxu0 0.0
  %8270 = vmatpush2.msra.mxu0 0.0
  %8271 = vmatprep.subr.mxu0 0.0
  %8272 = vmatpush2.msra.mxu0 0.0
  %8273 = vmatprep.subr.mxu0 0.0
  %8274 = vmatpush2.msra.mxu0 0.0
  %8275 = vmatprep.subr.mxu0 0.0
  %8276 = vmatpush2.msra.mxu0 0.0
  %8277 = vmatprep.subr.mxu0 0.0
  %8278 = vmatpush2.msra.mxu0 0.0
  %8279 = vmatprep.subr.mxu0 0.0
  %8280 = vmatpush2.msra.mxu0 0.0
  %8281 = vmatprep.subr.mxu0 0.0
  %8282 = vmatpush2.msra.mxu0 0.0
  %8283 = vmatprep.mubr.f32.mxu0 0.0
  %8284 = vmatmul.mubr.f32.gmra.mxu0 %v7932
  %v8285 = vpop.f32.mrf.mxu0
  %v8286 = vadd.f32 0.0, %v8285
  %v8287 = vpop.f32.mrf.mxu0
  %8288 = vdwg.mxu0
  %8289 = vmatprep.subr.mxu0 0.0
  %8290 = vmatpush1.msra.mxu0 0.0
  %8291 = vmatprep.subr.mxu0 0.0
  %8292 = vmatpush1.msra.mxu0 0.0
  %8293 = vmatprep.subr.mxu0 0.0
  %8294 = vmatpush1.msra.mxu0 0.0
  %8295 = vmatprep.subr.mxu0 0.0
  %8296 = vmatpush1.msra.mxu0 0.0
  %8297 = vmatprep.subr.mxu0 0.0
  %8298 = vmatpush1.msra.mxu0 0.0
  %8299 = vmatprep.subr.mxu0 0.0
  %8300 = vmatpush1.msra.mxu0 0.0
  %8301 = vmatprep.subr.mxu0 0.0
  %8302 = vmatpush1.msra.mxu0 0.0
  %8303 = vmatprep.subr.mxu0 0.0
  %8304 = vmatpush1.msra.mxu0 0.0
  %8305 = vmatprep.subr.mxu0 0.0
  %8306 = vmatpush1.msra.mxu0 0.0
  %8307 = vmatprep.subr.mxu0 0.0
  %8308 = vmatpush1.msra.mxu0 0.0
  %8309 = vmatprep.subr.mxu0 0.0
  %8310 = vmatpush1.msra.mxu0 0.0
  %8311 = vmatprep.subr.mxu0 0.0
  %8312 = vmatpush1.msra.mxu0 0.0
  %8313 = vmatprep.subr.mxu0 0.0
  %8314 = vmatpush1.msra.mxu0 0.0
  %8315 = vmatprep.subr.mxu0 0.0
  %8316 = vmatpush1.msra.mxu0 0.0
  %8317 = vmatprep.subr.mxu0 0.0
  %8318 = vmatpush1.msra.mxu0 0.0
  %8319 = vmatprep.subr.mxu0 0.0
  %8320 = vmatpush1.msra.mxu0 %v5289
  %8321 = vmatprep.subr.mxu0 0.0
  %8322 = vmatpush2.msra.mxu0 0.0
  %8323 = vmatprep.subr.mxu0 0.0
  %8324 = vmatpush2.msra.mxu0 0.0
  %8325 = vmatprep.subr.mxu0 0.0
  %8326 = vmatpush2.msra.mxu0 0.0
  %8327 = vmatprep.subr.mxu0 0.0
  %8328 = vmatpush2.msra.mxu0 0.0
  %8329 = vmatprep.subr.mxu0 0.0
  %8330 = vmatpush2.msra.mxu0 0.0
  %8331 = vmatprep.subr.mxu0 0.0
  %8332 = vmatpush2.msra.mxu0 0.0
  %8333 = vmatprep.subr.mxu0 0.0
  %8334 = vmatpush2.msra.mxu0 0.0
  %8335 = vmatprep.subr.mxu0 0.0
  %8336 = vmatpush2.msra.mxu0 0.0
  %8337 = vmatprep.subr.mxu0 0.0
  %8338 = vmatpush2.msra.mxu0 0.0
  %8339 = vmatprep.subr.mxu0 0.0
  %8340 = vmatpush2.msra.mxu0 0.0
  %8341 = vmatprep.subr.mxu0 0.0
  %8342 = vmatpush2.msra.mxu0 0.0
  %8343 = vmatprep.subr.mxu0 0.0
  %8344 = vmatpush2.msra.mxu0 0.0
  %8345 = vmatprep.subr.mxu0 0.0
  %8346 = vmatpush2.msra.mxu0 0.0
  %8347 = vmatprep.subr.mxu0 0.0
  %8348 = vmatpush2.msra.mxu0 0.0
  %8349 = vmatprep.subr.mxu0 0.0
  %8350 = vmatpush2.msra.mxu0 0.0
  %8351 = vmatprep.subr.mxu0 0.0
  %8352 = vmatpush2.msra.mxu0 0.0
  %8353 = vmatprep.mubr.f32.mxu0 0.0
  %8354 = vmatmul.mubr.f32.gmra.mxu0 %v8005
  %v8355 = vpop.f32.mrf.mxu0
  %v8356 = vadd.f32 %v8286, %v8355
  %v8357 = vpop.f32.mrf.mxu0
  %8358 = vdwg.mxu0
  %v8359 = vadd.f32 %v8356, %v5365
  %8360 = vmatprep.subr.mxu0 0.0
  %8361 = vmatpush1.msra.mxu0 0.0
  %8362 = vmatprep.subr.mxu0 0.0
  %8363 = vmatpush1.msra.mxu0 0.0
  %8364 = vmatprep.subr.mxu0 0.0
  %8365 = vmatpush1.msra.mxu0 0.0
  %8366 = vmatprep.subr.mxu0 0.0
  %8367 = vmatpush1.msra.mxu0 0.0
  %8368 = vmatprep.subr.mxu0 0.0
  %8369 = vmatpush1.msra.mxu0 0.0
  %8370 = vmatprep.subr.mxu0 0.0
  %8371 = vmatpush1.msra.mxu0 0.0
  %8372 = vmatprep.subr.mxu0 0.0
  %8373 = vmatpush1.msra.mxu0 0.0
  %8374 = vmatprep.subr.mxu0 0.0
  %8375 = vmatpush1.msra.mxu0 0.0
  %8376 = vmatprep.subr.mxu0 0.0
  %8377 = vmatpush1.msra.mxu0 0.0
  %8378 = vmatprep.subr.mxu0 0.0
  %8379 = vmatpush1.msra.mxu0 0.0
  %8380 = vmatprep.subr.mxu0 0.0
  %8381 = vmatpush1.msra.mxu0 0.0
  %8382 = vmatprep.subr.mxu0 0.0
  %8383 = vmatpush1.msra.mxu0 0.0
  %8384 = vmatprep.subr.mxu0 0.0
  %8385 = vmatpush1.msra.mxu0 0.0
  %8386 = vmatprep.subr.mxu0 0.0
  %8387 = vmatpush1.msra.mxu0 0.0
  %8388 = vmatprep.subr.mxu0 0.0
  %8389 = vmatpush1.msra.mxu0 0.0
  %8390 = vmatprep.subr.mxu0 0.0
  %8391 = vmatpush1.msra.mxu0 %v5369
  %8392 = vmatprep.subr.mxu0 0.0
  %8393 = vmatpush2.msra.mxu0 0.0
  %8394 = vmatprep.subr.mxu0 0.0
  %8395 = vmatpush2.msra.mxu0 0.0
  %8396 = vmatprep.subr.mxu0 0.0
  %8397 = vmatpush2.msra.mxu0 0.0
  %8398 = vmatprep.subr.mxu0 0.0
  %8399 = vmatpush2.msra.mxu0 0.0
  %8400 = vmatprep.subr.mxu0 0.0
  %8401 = vmatpush2.msra.mxu0 0.0
  %8402 = vmatprep.subr.mxu0 0.0
  %8403 = vmatpush2.msra.mxu0 0.0
  %8404 = vmatprep.subr.mxu0 0.0
  %8405 = vmatpush2.msra.mxu0 0.0
  %8406 = vmatprep.subr.mxu0 0.0
  %8407 = vmatpush2.msra.mxu0 0.0
  %8408 = vmatprep.subr.mxu0 0.0
  %8409 = vmatpush2.msra.mxu0 0.0
  %8410 = vmatprep.subr.mxu0 0.0
  %8411 = vmatpush2.msra.mxu0 0.0
  %8412 = vmatprep.subr.mxu0 0.0
  %8413 = vmatpush2.msra.mxu0 0.0
  %8414 = vmatprep.subr.mxu0 0.0
  %8415 = vmatpush2.msra.mxu0 0.0
  %8416 = vmatprep.subr.mxu0 0.0
  %8417 = vmatpush2.msra.mxu0 0.0
  %8418 = vmatprep.subr.mxu0 0.0
  %8419 = vmatpush2.msra.mxu0 0.0
  %8420 = vmatprep.subr.mxu0 0.0
  %8421 = vmatpush2.msra.mxu0 0.0
  %8422 = vmatprep.subr.mxu0 0.0
  %8423 = vmatpush2.msra.mxu0 0.0
  %8424 = vmatprep.mubr.f32.mxu0 0.0
  %8425 = vmatmul.mubr.f32.gmra.mxu0 %v7932
  %v8426 = vpop.f32.mrf.mxu0
  %v8427 = vadd.f32 0.0, %v8426
  %v8428 = vpop.f32.mrf.mxu0
  %8429 = vdwg.mxu0
  %8430 = vmatprep.subr.mxu0 0.0
  %8431 = vmatpush1.msra.mxu0 0.0
  %8432 = vmatprep.subr.mxu0 0.0
  %8433 = vmatpush1.msra.mxu0 0.0
  %8434 = vmatprep.subr.mxu0 0.0
  %8435 = vmatpush1.msra.mxu0 0.0
  %8436 = vmatprep.subr.mxu0 0.0
  %8437 = vmatpush1.msra.mxu0 0.0
  %8438 = vmatprep.subr.mxu0 0.0
  %8439 = vmatpush1.msra.mxu0 0.0
  %8440 = vmatprep.subr.mxu0 0.0
  %8441 = vmatpush1.msra.mxu0 0.0
  %8442 = vmatprep.subr.mxu0 0.0
  %8443 = vmatpush1.msra.mxu0 0.0
  %8444 = vmatprep.subr.mxu0 0.0
  %8445 = vmatpush1.msra.mxu0 0.0
  %8446 = vmatprep.subr.mxu0 0.0
  %8447 = vmatpush1.msra.mxu0 0.0
  %8448 = vmatprep.subr.mxu0 0.0
  %8449 = vmatpush1.msra.mxu0 0.0
  %8450 = vmatprep.subr.mxu0 0.0
  %8451 = vmatpush1.msra.mxu0 0.0
  %8452 = vmatprep.subr.mxu0 0.0
  %8453 = vmatpush1.msra.mxu0 0.0
  %8454 = vmatprep.subr.mxu0 0.0
  %8455 = vmatpush1.msra.mxu0 0.0
  %8456 = vmatprep.subr.mxu0 0.0
  %8457 = vmatpush1.msra.mxu0 0.0
  %8458 = vmatprep.subr.mxu0 0.0
  %8459 = vmatpush1.msra.mxu0 0.0
  %8460 = vmatprep.subr.mxu0 0.0
  %8461 = vmatpush1.msra.mxu0 %v5442
  %8462 = vmatprep.subr.mxu0 0.0
  %8463 = vmatpush2.msra.mxu0 0.0
  %8464 = vmatprep.subr.mxu0 0.0
  %8465 = vmatpush2.msra.mxu0 0.0
  %8466 = vmatprep.subr.mxu0 0.0
  %8467 = vmatpush2.msra.mxu0 0.0
  %8468 = vmatprep.subr.mxu0 0.0
  %8469 = vmatpush2.msra.mxu0 0.0
  %8470 = vmatprep.subr.mxu0 0.0
  %8471 = vmatpush2.msra.mxu0 0.0
  %8472 = vmatprep.subr.mxu0 0.0
  %8473 = vmatpush2.msra.mxu0 0.0
  %8474 = vmatprep.subr.mxu0 0.0
  %8475 = vmatpush2.msra.mxu0 0.0
  %8476 = vmatprep.subr.mxu0 0.0
  %8477 = vmatpush2.msra.mxu0 0.0
  %8478 = vmatprep.subr.mxu0 0.0
  %8479 = vmatpush2.msra.mxu0 0.0
  %8480 = vmatprep.subr.mxu0 0.0
  %8481 = vmatpush2.msra.mxu0 0.0
  %8482 = vmatprep.subr.mxu0 0.0
  %8483 = vmatpush2.msra.mxu0 0.0
  %8484 = vmatprep.subr.mxu0 0.0
  %8485 = vmatpush2.msra.mxu0 0.0
  %8486 = vmatprep.subr.mxu0 0.0
  %8487 = vmatpush2.msra.mxu0 0.0
  %8488 = vmatprep.subr.mxu0 0.0
  %8489 = vmatpush2.msra.mxu0 0.0
  %8490 = vmatprep.subr.mxu0 0.0
  %8491 = vmatpush2.msra.mxu0 0.0
  %8492 = vmatprep.subr.mxu0 0.0
  %8493 = vmatpush2.msra.mxu0 0.0
  %8494 = vmatprep.mubr.f32.mxu0 0.0
  %8495 = vmatmul.mubr.f32.gmra.mxu0 %v8005
  %v8496 = vpop.f32.mrf.mxu0
  %v8497 = vadd.f32 %v8427, %v8496
  %v8498 = vpop.f32.mrf.mxu0
  %8499 = vdwg.mxu0
  %v8500 = vadd.f32 %v8497, %v5518
  %v8501 = vsub.f32 0.0, %v8077
  %v8502 = vmul.f32 %v8501, 1.442695
  %v8503 = vpow.pop %v8502
  %v8504 = vadd.f32 %v8503, 1.0
  %v8505 = vrcp.pop %v8504
  %v8506 = vmul.f32 1.0, %v8505
  %v8507 = vsub.f32 0.0, %v8218
  %v8508 = vmul.f32 %v8507, 1.442695
  %v8509 = vpow.pop %v8508
  %v8510 = vadd.f32 %v8509, 1.0
  %v8511 = vrcp.pop %v8510
  %v8512 = vmul.f32 1.0, %v8511
  %v8513 = vtanh.pop %v8359
  %v8514 = vsub.f32 0.0, %v8500
  %v8515 = vmul.f32 %v8514, 1.442695
  %v8516 = vpow.pop %v8515
  %v8517 = vadd.f32 %v8516, 1.0
  %v8518 = vrcp.pop %v8517
  %v8519 = vmul.f32 1.0, %v8518
  %v8520 = vmul.f32 %v8512, %v7926
  %v8521 = vmul.f32 %v8506, %v8513
  %v8522 = vadd.f32 %v8520, %v8521
  %v8523 = vtanh.pop %v8522
  %v8524 = vmul.f32 %v8519, %v8523
  %s8525 = scalar_lea.vmem %s1, 48
  %v8526 = vld [vmem:[%s8525] sm:$0xff]
  %v8528 = vsel %vm66, %v8524, 0
  %8530 = vmatprep.subr.mxu0 0.0
  %8531 = vmatpush1.msra.mxu0 0.0
  %8532 = vmatprep.subr.mxu0 0.0
  %8533 = vmatpush1.msra.mxu0 0.0
  %8534 = vmatprep.subr.mxu0 0.0
  %8535 = vmatpush1.msra.mxu0 0.0
  %8536 = vmatprep.subr.mxu0 0.0
  %8537 = vmatpush1.msra.mxu0 0.0
  %8538 = vmatprep.subr.mxu0 0.0
  %8539 = vmatpush1.msra.mxu0 0.0
  %8540 = vmatprep.subr.mxu0 0.0
  %8541 = vmatpush1.msra.mxu0 0.0
  %8542 = vmatprep.subr.mxu0 0.0
  %8543 = vmatpush1.msra.mxu0 0.0
  %8544 = vmatprep.subr.mxu0 0.0
  %8545 = vmatpush1.msra.mxu0 0.0
  %8546 = vmatprep.subr.mxu0 0.0
  %8547 = vmatpush1.msra.mxu0 0.0
  %8548 = vmatprep.subr.mxu0 0.0
  %8549 = vmatpush1.msra.mxu0 0.0
  %8550 = vmatprep.subr.mxu0 0.0
  %8551 = vmatpush1.msra.mxu0 0.0
  %8552 = vmatprep.subr.mxu0 0.0
  %8553 = vmatpush1.msra.mxu0 0.0
  %8554 = vmatprep.subr.mxu0 0.0
  %8555 = vmatpush1.msra.mxu0 0.0
  %8556 = vmatprep.subr.mxu0 0.0
  %8557 = vmatpush1.msra.mxu0 0.0
  %8558 = vmatprep.subr.mxu0 0.0
  %8559 = vmatpush1.msra.mxu0 0.0
  %8560 = vmatprep.subr.mxu0 0.0
  %8561 = vmatpush1.msra.mxu0 %v4905
  %8562 = vmatprep.subr.mxu0 0.0
  %8563 = vmatpush2.msra.mxu0 0.0
  %8564 = vmatprep.subr.mxu0 0.0
  %8565 = vmatpush2.msra.mxu0 0.0
  %8566 = vmatprep.subr.mxu0 0.0
  %8567 = vmatpush2.msra.mxu0 0.0
  %8568 = vmatprep.subr.mxu0 0.0
  %8569 = vmatpush2.msra.mxu0 0.0
  %8570 = vmatprep.subr.mxu0 0.0
  %8571 = vmatpush2.msra.mxu0 0.0
  %8572 = vmatprep.subr.mxu0 0.0
  %8573 = vmatpush2.msra.mxu0 0.0
  %8574 = vmatprep.subr.mxu0 0.0
  %8575 = vmatpush2.msra.mxu0 0.0
  %8576 = vmatprep.subr.mxu0 0.0
  %8577 = vmatpush2.msra.mxu0 0.0
  %8578 = vmatprep.subr.mxu0 0.0
  %8579 = vmatpush2.msra.mxu0 0.0
  %8580 = vmatprep.subr.mxu0 0.0
  %8581 = vmatpush2.msra.mxu0 0.0
  %8582 = vmatprep.subr.mxu0 0.0
  %8583 = vmatpush2.msra.mxu0 0.0
  %8584 = vmatprep.subr.mxu0 0.0
  %8585 = vmatpush2.msra.mxu0 0.0
  %8586 = vmatprep.subr.mxu0 0.0
  %8587 = vmatpush2.msra.mxu0 0.0
  %8588 = vmatprep.subr.mxu0 0.0
  %8589 = vmatpush2.msra.mxu0 0.0
  %8590 = vmatprep.subr.mxu0 0.0
  %8591 = vmatpush2.msra.mxu0 0.0
  %8592 = vmatprep.subr.mxu0 0.0
  %8593 = vmatpush2.msra.mxu0 0.0
  %8594 = vmatprep.mubr.f32.mxu0 0.0
  %8595 = vmatmul.mubr.f32.gmra.mxu0 %v8528
  %v8596 = vpop.f32.mrf.mxu0
  %v8597 = vadd.f32 0.0, %v8596
  %v8598 = vpop.f32.mrf.mxu0
  %8599 = vdwg.mxu0
  %v8601 = vsel %vm4977, %v8526, 0
  %8603 = vmatprep.subr.mxu0 0.0
  %8604 = vmatpush1.msra.mxu0 0.0
  %8605 = vmatprep.subr.mxu0 0.0
  %8606 = vmatpush1.msra.mxu0 0.0
  %8607 = vmatprep.subr.mxu0 0.0
  %8608 = vmatpush1.msra.mxu0 0.0
  %8609 = vmatprep.subr.mxu0 0.0
  %8610 = vmatpush1.msra.mxu0 0.0
  %8611 = vmatprep.subr.mxu0 0.0
  %8612 = vmatpush1.msra.mxu0 0.0
  %8613 = vmatprep.subr.mxu0 0.0
  %8614 = vmatpush1.msra.mxu0 0.0
  %8615 = vmatprep.subr.mxu0 0.0
  %8616 = vmatpush1.msra.mxu0 0.0
  %8617 = vmatprep.subr.mxu0 0.0
  %8618 = vmatpush1.msra.mxu0 0.0
  %8619 = vmatprep.subr.mxu0 0.0
  %8620 = vmatpush1.msra.mxu0 0.0
  %8621 = vmatprep.subr.mxu0 0.0
  %8622 = vmatpush1.msra.mxu0 0.0
  %8623 = vmatprep.subr.mxu0 0.0
  %8624 = vmatpush1.msra.mxu0 0.0
  %8625 = vmatprep.subr.mxu0 0.0
  %8626 = vmatpush1.msra.mxu0 0.0
  %8627 = vmatprep.subr.mxu0 0.0
  %8628 = vmatpush1.msra.mxu0 0.0
  %8629 = vmatprep.subr.mxu0 0.0
  %8630 = vmatpush1.msra.mxu0 0.0
  %8631 = vmatprep.subr.mxu0 0.0
  %8632 = vmatpush1.msra.mxu0 0.0
  %8633 = vmatprep.subr.mxu0 0.0
  %8634 = vmatpush1.msra.mxu0 %v4983
  %8635 = vmatprep.subr.mxu0 0.0
  %8636 = vmatpush2.msra.mxu0 0.0
  %8637 = vmatprep.subr.mxu0 0.0
  %8638 = vmatpush2.msra.mxu0 0.0
  %8639 = vmatprep.subr.mxu0 0.0
  %8640 = vmatpush2.msra.mxu0 0.0
  %8641 = vmatprep.subr.mxu0 0.0
  %8642 = vmatpush2.msra.mxu0 0.0
  %8643 = vmatprep.subr.mxu0 0.0
  %8644 = vmatpush2.msra.mxu0 0.0
  %8645 = vmatprep.subr.mxu0 0.0
  %8646 = vmatpush2.msra.mxu0 0.0
  %8647 = vmatprep.subr.mxu0 0.0
  %8648 = vmatpush2.msra.mxu0 0.0
  %8649 = vmatprep.subr.mxu0 0.0
  %8650 = vmatpush2.msra.mxu0 0.0
  %8651 = vmatprep.subr.mxu0 0.0
  %8652 = vmatpush2.msra.mxu0 0.0
  %8653 = vmatprep.subr.mxu0 0.0
  %8654 = vmatpush2.msra.mxu0 0.0
  %8655 = vmatprep.subr.mxu0 0.0
  %8656 = vmatpush2.msra.mxu0 0.0
  %8657 = vmatprep.subr.mxu0 0.0
  %8658 = vmatpush2.msra.mxu0 0.0
  %8659 = vmatprep.subr.mxu0 0.0
  %8660 = vmatpush2.msra.mxu0 0.0
  %8661 = vmatprep.subr.mxu0 0.0
  %8662 = vmatpush2.msra.mxu0 0.0
  %8663 = vmatprep.subr.mxu0 0.0
  %8664 = vmatpush2.msra.mxu0 0.0
  %8665 = vmatprep.subr.mxu0 0.0
  %8666 = vmatpush2.msra.mxu0 0.0
  %8667 = vmatprep.mubr.f32.mxu0 0.0
  %8668 = vmatmul.mubr.f32.gmra.mxu0 %v8601
  %v8669 = vpop.f32.mrf.mxu0
  %v8670 = vadd.f32 %v8597, %v8669
  %v8671 = vpop.f32.mrf.mxu0
  %8672 = vdwg.mxu0
  %v8673 = vadd.f32 %v8670, %v5059
  %8674 = vmatprep.subr.mxu0 0.0
  %8675 = vmatpush1.msra.mxu0 0.0
  %8676 = vmatprep.subr.mxu0 0.0
  %8677 = vmatpush1.msra.mxu0 0.0
  %8678 = vmatprep.subr.mxu0 0.0
  %8679 = vmatpush1.msra.mxu0 0.0
  %8680 = vmatprep.subr.mxu0 0.0
  %8681 = vmatpush1.msra.mxu0 0.0
  %8682 = vmatprep.subr.mxu0 0.0
  %8683 = vmatpush1.msra.mxu0 0.0
  %8684 = vmatprep.subr.mxu0 0.0
  %8685 = vmatpush1.msra.mxu0 0.0
  %8686 = vmatprep.subr.mxu0 0.0
  %8687 = vmatpush1.msra.mxu0 0.0
  %8688 = vmatprep.subr.mxu0 0.0
  %8689 = vmatpush1.msra.mxu0 0.0
  %8690 = vmatprep.subr.mxu0 0.0
  %8691 = vmatpush1.msra.mxu0 0.0
  %8692 = vmatprep.subr.mxu0 0.0
  %8693 = vmatpush1.msra.mxu0 0.0
  %8694 = vmatprep.subr.mxu0 0.0
  %8695 = vmatpush1.msra.mxu0 0.0
  %8696 = vmatprep.subr.mxu0 0.0
  %8697 = vmatpush1.msra.mxu0 0.0
  %8698 = vmatprep.subr.mxu0 0.0
  %8699 = vmatpush1.msra.mxu0 0.0
  %8700 = vmatprep.subr.mxu0 0.0
  %8701 = vmatpush1.msra.mxu0 0.0
  %8702 = vmatprep.subr.mxu0 0.0
  %8703 = vmatpush1.msra.mxu0 0.0
  %8704 = vmatprep.subr.mxu0 0.0
  %8705 = vmatpush1.msra.mxu0 %v5063
  %8706 = vmatprep.subr.mxu0 0.0
  %8707 = vmatpush2.msra.mxu0 0.0
  %8708 = vmatprep.subr.mxu0 0.0
  %8709 = vmatpush2.msra.mxu0 0.0
  %8710 = vmatprep.subr.mxu0 0.0
  %8711 = vmatpush2.msra.mxu0 0.0
  %8712 = vmatprep.subr.mxu0 0.0
  %8713 = vmatpush2.msra.mxu0 0.0
  %8714 = vmatprep.subr.mxu0 0.0
  %8715 = vmatpush2.msra.mxu0 0.0
  %8716 = vmatprep.subr.mxu0 0.0
  %8717 = vmatpush2.msra.mxu0 0.0
  %8718 = vmatprep.subr.mxu0 0.0
  %8719 = vmatpush2.msra.mxu0 0.0
  %8720 = vmatprep.subr.mxu0 0.0
  %8721 = vmatpush2.msra.mxu0 0.0
  %8722 = vmatprep.subr.mxu0 0.0
  %8723 = vmatpush2.msra.mxu0 0.0
  %8724 = vmatprep.subr.mxu0 0.0
  %8725 = vmatpush2.msra.mxu0 0.0
  %8726 = vmatprep.subr.mxu0 0.0
  %8727 = vmatpush2.msra.mxu0 0.0
  %8728 = vmatprep.subr.mxu0 0.0
  %8729 = vmatpush2.msra.mxu0 0.0
  %8730 = vmatprep.subr.mxu0 0.0
  %8731 = vmatpush2.msra.mxu0 0.0
  %8732 = vmatprep.subr.mxu0 0.0
  %8733 = vmatpush2.msra.mxu0 0.0
  %8734 = vmatprep.subr.mxu0 0.0
  %8735 = vmatpush2.msra.mxu0 0.0
  %8736 = vmatprep.subr.mxu0 0.0
  %8737 = vmatpush2.msra.mxu0 0.0
  %8738 = vmatprep.mubr.f32.mxu0 0.0
  %8739 = vmatmul.mubr.f32.gmra.mxu0 %v8528
  %v8740 = vpop.f32.mrf.mxu0
  %v8741 = vadd.f32 0.0, %v8740
  %v8742 = vpop.f32.mrf.mxu0
  %8743 = vdwg.mxu0
  %8744 = vmatprep.subr.mxu0 0.0
  %8745 = vmatpush1.msra.mxu0 0.0
  %8746 = vmatprep.subr.mxu0 0.0
  %8747 = vmatpush1.msra.mxu0 0.0
  %8748 = vmatprep.subr.mxu0 0.0
  %8749 = vmatpush1.msra.mxu0 0.0
  %8750 = vmatprep.subr.mxu0 0.0
  %8751 = vmatpush1.msra.mxu0 0.0
  %8752 = vmatprep.subr.mxu0 0.0
  %8753 = vmatpush1.msra.mxu0 0.0
  %8754 = vmatprep.subr.mxu0 0.0
  %8755 = vmatpush1.msra.mxu0 0.0
  %8756 = vmatprep.subr.mxu0 0.0
  %8757 = vmatpush1.msra.mxu0 0.0
  %8758 = vmatprep.subr.mxu0 0.0
  %8759 = vmatpush1.msra.mxu0 0.0
  %8760 = vmatprep.subr.mxu0 0.0
  %8761 = vmatpush1.msra.mxu0 0.0
  %8762 = vmatprep.subr.mxu0 0.0
  %8763 = vmatpush1.msra.mxu0 0.0
  %8764 = vmatprep.subr.mxu0 0.0
  %8765 = vmatpush1.msra.mxu0 0.0
  %8766 = vmatprep.subr.mxu0 0.0
  %8767 = vmatpush1.msra.mxu0 0.0
  %8768 = vmatprep.subr.mxu0 0.0
  %8769 = vmatpush1.msra.mxu0 0.0
  %8770 = vmatprep.subr.mxu0 0.0
  %8771 = vmatpush1.msra.mxu0 0.0
  %8772 = vmatprep.subr.mxu0 0.0
  %8773 = vmatpush1.msra.mxu0 0.0
  %8774 = vmatprep.subr.mxu0 0.0
  %8775 = vmatpush1.msra.mxu0 %v5136
  %8776 = vmatprep.subr.mxu0 0.0
  %8777 = vmatpush2.msra.mxu0 0.0
  %8778 = vmatprep.subr.mxu0 0.0
  %8779 = vmatpush2.msra.mxu0 0.0
  %8780 = vmatprep.subr.mxu0 0.0
  %8781 = vmatpush2.msra.mxu0 0.0
  %8782 = vmatprep.subr.mxu0 0.0
  %8783 = vmatpush2.msra.mxu0 0.0
  %8784 = vmatprep.subr.mxu0 0.0
  %8785 = vmatpush2.msra.mxu0 0.0
  %8786 = vmatprep.subr.mxu0 0.0
  %8787 = vmatpush2.msra.mxu0 0.0
  %8788 = vmatprep.subr.mxu0 0.0
  %8789 = vmatpush2.msra.mxu0 0.0
  %8790 = vmatprep.subr.mxu0 0.0
  %8791 = vmatpush2.msra.mxu0 0.0
  %8792 = vmatprep.subr.mxu0 0.0
  %8793 = vmatpush2.msra.mxu0 0.0
  %8794 = vmatprep.subr.mxu0 0.0
  %8795 = vmatpush2.msra.mxu0 0.0
  %8796 = vmatprep.subr.mxu0 0.0
  %8797 = vmatpush2.msra.mxu0 0.0
  %8798 = vmatprep.subr.mxu0 0.0
  %8799 = vmatpush2.msra.mxu0 0.0
  %8800 = vmatprep.subr.mxu0 0.0
  %8801 = vmatpush2.msra.mxu0 0.0
  %8802 = vmatprep.subr.mxu0 0.0
  %8803 = vmatpush2.msra.mxu0 0.0
  %8804 = vmatprep.subr.mxu0 0.0
  %8805 = vmatpush2.msra.mxu0 0.0
  %8806 = vmatprep.subr.mxu0 0.0
  %8807 = vmatpush2.msra.mxu0 0.0
  %8808 = vmatprep.mubr.f32.mxu0 0.0
  %8809 = vmatmul.mubr.f32.gmra.mxu0 %v8601
  %v8810 = vpop.f32.mrf.mxu0
  %v8811 = vadd.f32 %v8741, %v8810
  %v8812 = vpop.f32.mrf.mxu0
  %8813 = vdwg.mxu0
  %v8814 = vadd.f32 %v8811, %v5212
  %8815 = vmatprep.subr.mxu0 0.0
  %8816 = vmatpush1.msra.mxu0 0.0
  %8817 = vmatprep.subr.mxu0 0.0
  %8818 = vmatpush1.msra.mxu0 0.0
  %8819 = vmatprep.subr.mxu0 0.0
  %8820 = vmatpush1.msra.mxu0 0.0
  %8821 = vmatprep.subr.mxu0 0.0
  %8822 = vmatpush1.msra.mxu0 0.0
  %8823 = vmatprep.subr.mxu0 0.0
  %8824 = vmatpush1.msra.mxu0 0.0
  %8825 = vmatprep.subr.mxu0 0.0
  %8826 = vmatpush1.msra.mxu0 0.0
  %8827 = vmatprep.subr.mxu0 0.0
  %8828 = vmatpush1.msra.mxu0 0.0
  %8829 = vmatprep.subr.mxu0 0.0
  %8830 = vmatpush1.msra.mxu0 0.0
  %8831 = vmatprep.subr.mxu0 0.0
  %8832 = vmatpush1.msra.mxu0 0.0
  %8833 = vmatprep.subr.mxu0 0.0
  %8834 = vmatpush1.msra.mxu0 0.0
  %8835 = vmatprep.subr.mxu0 0.0
  %8836 = vmatpush1.msra.mxu0 0.0
  %8837 = vmatprep.subr.mxu0 0.0
  %8838 = vmatpush1.msra.mxu0 0.0
  %8839 = vmatprep.subr.mxu0 0.0
  %8840 = vmatpush1.msra.mxu0 0.0
  %8841 = vmatprep.subr.mxu0 0.0
  %8842 = vmatpush1.msra.mxu0 0.0
  %8843 = vmatprep.subr.mxu0 0.0
  %8844 = vmatpush1.msra.mxu0 0.0
  %8845 = vmatprep.subr.mxu0 0.0
  %8846 = vmatpush1.msra.mxu0 %v5216
  %8847 = vmatprep.subr.mxu0 0.0
  %8848 = vmatpush2.msra.mxu0 0.0
  %8849 = vmatprep.subr.mxu0 0.0
  %8850 = vmatpush2.msra.mxu0 0.0
  %8851 = vmatprep.subr.mxu0 0.0
  %8852 = vmatpush2.msra.mxu0 0.0
  %8853 = vmatprep.subr.mxu0 0.0
  %8854 = vmatpush2.msra.mxu0 0.0
  %8855 = vmatprep.subr.mxu0 0.0
  %8856 = vmatpush2.msra.mxu0 0.0
  %8857 = vmatprep.subr.mxu0 0.0
  %8858 = vmatpush2.msra.mxu0 0.0
  %8859 = vmatprep.subr.mxu0 0.0
  %8860 = vmatpush2.msra.mxu0 0.0
  %8861 = vmatprep.subr.mxu0 0.0
  %8862 = vmatpush2.msra.mxu0 0.0
  %8863 = vmatprep.subr.mxu0 0.0
  %8864 = vmatpush2.msra.mxu0 0.0
  %8865 = vmatprep.subr.mxu0 0.0
  %8866 = vmatpush2.msra.mxu0 0.0
  %8867 = vmatprep.subr.mxu0 0.0
  %8868 = vmatpush2.msra.mxu0 0.0
  %8869 = vmatprep.subr.mxu0 0.0
  %8870 = vmatpush2.msra.mxu0 0.0
  %8871 = vmatprep.subr.mxu0 0.0
  %8872 = vmatpush2.msra.mxu0 0.0
  %8873 = vmatprep.subr.mxu0 0.0
  %8874 = vmatpush2.msra.mxu0 0.0
  %8875 = vmatprep.subr.mxu0 0.0
  %8876 = vmatpush2.msra.mxu0 0.0
  %8877 = vmatprep.subr.mxu0 0.0
  %8878 = vmatpush2.msra.mxu0 0.0
  %8879 = vmatprep.mubr.f32.mxu0 0.0
  %8880 = vmatmul.mubr.f32.gmra.mxu0 %v8528
  %v8881 = vpop.f32.mrf.mxu0
  %v8882 = vadd.f32 0.0, %v8881
  %v8883 = vpop.f32.mrf.mxu0
  %8884 = vdwg.mxu0
  %8885 = vmatprep.subr.mxu0 0.0
  %8886 = vmatpush1.msra.mxu0 0.0
  %8887 = vmatprep.subr.mxu0 0.0
  %8888 = vmatpush1.msra.mxu0 0.0
  %8889 = vmatprep.subr.mxu0 0.0
  %8890 = vmatpush1.msra.mxu0 0.0
  %8891 = vmatprep.subr.mxu0 0.0
  %8892 = vmatpush1.msra.mxu0 0.0
  %8893 = vmatprep.subr.mxu0 0.0
  %8894 = vmatpush1.msra.mxu0 0.0
  %8895 = vmatprep.subr.mxu0 0.0
  %8896 = vmatpush1.msra.mxu0 0.0
  %8897 = vmatprep.subr.mxu0 0.0
  %8898 = vmatpush1.msra.mxu0 0.0
  %8899 = vmatprep.subr.mxu0 0.0
  %8900 = vmatpush1.msra.mxu0 0.0
  %8901 = vmatprep.subr.mxu0 0.0
  %8902 = vmatpush1.msra.mxu0 0.0
  %8903 = vmatprep.subr.mxu0 0.0
  %8904 = vmatpush1.msra.mxu0 0.0
  %8905 = vmatprep.subr.mxu0 0.0
  %8906 = vmatpush1.msra.mxu0 0.0
  %8907 = vmatprep.subr.mxu0 0.0
  %8908 = vmatpush1.msra.mxu0 0.0
  %8909 = vmatprep.subr.mxu0 0.0
  %8910 = vmatpush1.msra.mxu0 0.0
  %8911 = vmatprep.subr.mxu0 0.0
  %8912 = vmatpush1.msra.mxu0 0.0
  %8913 = vmatprep.subr.mxu0 0.0
  %8914 = vmatpush1.msra.mxu0 0.0
  %8915 = vmatprep.subr.mxu0 0.0
  %8916 = vmatpush1.msra.mxu0 %v5289
  %8917 = vmatprep.subr.mxu0 0.0
  %8918 = vmatpush2.msra.mxu0 0.0
  %8919 = vmatprep.subr.mxu0 0.0
  %8920 = vmatpush2.msra.mxu0 0.0
  %8921 = vmatprep.subr.mxu0 0.0
  %8922 = vmatpush2.msra.mxu0 0.0
  %8923 = vmatprep.subr.mxu0 0.0
  %8924 = vmatpush2.msra.mxu0 0.0
  %8925 = vmatprep.subr.mxu0 0.0
  %8926 = vmatpush2.msra.mxu0 0.0
  %8927 = vmatprep.subr.mxu0 0.0
  %8928 = vmatpush2.msra.mxu0 0.0
  %8929 = vmatprep.subr.mxu0 0.0
  %8930 = vmatpush2.msra.mxu0 0.0
  %8931 = vmatprep.subr.mxu0 0.0
  %8932 = vmatpush2.msra.mxu0 0.0
  %8933 = vmatprep.subr.mxu0 0.0
  %8934 = vmatpush2.msra.mxu0 0.0
  %8935 = vmatprep.subr.mxu0 0.0
  %8936 = vmatpush2.msra.mxu0 0.0
  %8937 = vmatprep.subr.mxu0 0.0
  %8938 = vmatpush2.msra.mxu0 0.0
  %8939 = vmatprep.subr.mxu0 0.0
  %8940 = vmatpush2.msra.mxu0 0.0
  %8941 = vmatprep.subr.mxu0 0.0
  %8942 = vmatpush2.msra.mxu0 0.0
  %8943 = vmatprep.subr.mxu0 0.0
  %8944 = vmatpush2.msra.mxu0 0.0
  %8945 = vmatprep.subr.mxu0 0.0
  %8946 = vmatpush2.msra.mxu0 0.0
  %8947 = vmatprep.subr.mxu0 0.0
  %8948 = vmatpush2.msra.mxu0 0.0
  %8949 = vmatprep.mubr.f32.mxu0 0.0
  %8950 = vmatmul.mubr.f32.gmra.mxu0 %v8601
  %v8951 = vpop.f32.mrf.mxu0
  %v8952 = vadd.f32 %v8882, %v8951
  %v8953 = vpop.f32.mrf.mxu0
  %8954 = vdwg.mxu0
  %v8955 = vadd.f32 %v8952, %v5365
  %8956 = vmatprep.subr.mxu0 0.0
  %8957 = vmatpush1.msra.mxu0 0.0
  %8958 = vmatprep.subr.mxu0 0.0
  %8959 = vmatpush1.msra.mxu0 0.0
  %8960 = vmatprep.subr.mxu0 0.0
  %8961 = vmatpush1.msra.mxu0 0.0
  %8962 = vmatprep.subr.mxu0 0.0
  %8963 = vmatpush1.msra.mxu0 0.0
  %8964 = vmatprep.subr.mxu0 0.0
  %8965 = vmatpush1.msra.mxu0 0.0
  %8966 = vmatprep.subr.mxu0 0.0
  %8967 = vmatpush1.msra.mxu0 0.0
  %8968 = vmatprep.subr.mxu0 0.0
  %8969 = vmatpush1.msra.mxu0 0.0
  %8970 = vmatprep.subr.mxu0 0.0
  %8971 = vmatpush1.msra.mxu0 0.0
  %8972 = vmatprep.subr.mxu0 0.0
  %8973 = vmatpush1.msra.mxu0 0.0
  %8974 = vmatprep.subr.mxu0 0.0
  %8975 = vmatpush1.msra.mxu0 0.0
  %8976 = vmatprep.subr.mxu0 0.0
  %8977 = vmatpush1.msra.mxu0 0.0
  %8978 = vmatprep.subr.mxu0 0.0
  %8979 = vmatpush1.msra.mxu0 0.0
  %8980 = vmatprep.subr.mxu0 0.0
  %8981 = vmatpush1.msra.mxu0 0.0
  %8982 = vmatprep.subr.mxu0 0.0
  %8983 = vmatpush1.msra.mxu0 0.0
  %8984 = vmatprep.subr.mxu0 0.0
  %8985 = vmatpush1.msra.mxu0 0.0
  %8986 = vmatprep.subr.mxu0 0.0
  %8987 = vmatpush1.msra.mxu0 %v5369
  %8988 = vmatprep.subr.mxu0 0.0
  %8989 = vmatpush2.msra.mxu0 0.0
  %8990 = vmatprep.subr.mxu0 0.0
  %8991 = vmatpush2.msra.mxu0 0.0
  %8992 = vmatprep.subr.mxu0 0.0
  %8993 = vmatpush2.msra.mxu0 0.0
  %8994 = vmatprep.subr.mxu0 0.0
  %8995 = vmatpush2.msra.mxu0 0.0
  %8996 = vmatprep.subr.mxu0 0.0
  %8997 = vmatpush2.msra.mxu0 0.0
  %8998 = vmatprep.subr.mxu0 0.0
  %8999 = vmatpush2.msra.mxu0 0.0
  %9000 = vmatprep.subr.mxu0 0.0
  %9001 = vmatpush2.msra.mxu0 0.0
  %9002 = vmatprep.subr.mxu0 0.0
  %9003 = vmatpush2.msra.mxu0 0.0
  %9004 = vmatprep.subr.mxu0 0.0
  %9005 = vmatpush2.msra.mxu0 0.0
  %9006 = vmatprep.subr.mxu0 0.0
  %9007 = vmatpush2.msra.mxu0 0.0
  %9008 = vmatprep.subr.mxu0 0.0
  %9009 = vmatpush2.msra.mxu0 0.0
  %9010 = vmatprep.subr.mxu0 0.0
  %9011 = vmatpush2.msra.mxu0 0.0
  %9012 = vmatprep.subr.mxu0 0.0
  %9013 = vmatpush2.msra.mxu0 0.0
  %9014 = vmatprep.subr.mxu0 0.0
  %9015 = vmatpush2.msra.mxu0 0.0
  %9016 = vmatprep.subr.mxu0 0.0
  %9017 = vmatpush2.msra.mxu0 0.0
  %9018 = vmatprep.subr.mxu0 0.0
  %9019 = vmatpush2.msra.mxu0 0.0
  %9020 = vmatprep.mubr.f32.mxu0 0.0
  %9021 = vmatmul.mubr.f32.gmra.mxu0 %v8528
  %v9022 = vpop.f32.mrf.mxu0
  %v9023 = vadd.f32 0.0, %v9022
  %v9024 = vpop.f32.mrf.mxu0
  %9025 = vdwg.mxu0
  %9026 = vmatprep.subr.mxu0 0.0
  %9027 = vmatpush1.msra.mxu0 0.0
  %9028 = vmatprep.subr.mxu0 0.0
  %9029 = vmatpush1.msra.mxu0 0.0
  %9030 = vmatprep.subr.mxu0 0.0
  %9031 = vmatpush1.msra.mxu0 0.0
  %9032 = vmatprep.subr.mxu0 0.0
  %9033 = vmatpush1.msra.mxu0 0.0
  %9034 = vmatprep.subr.mxu0 0.0
  %9035 = vmatpush1.msra.mxu0 0.0
  %9036 = vmatprep.subr.mxu0 0.0
  %9037 = vmatpush1.msra.mxu0 0.0
  %9038 = vmatprep.subr.mxu0 0.0
  %9039 = vmatpush1.msra.mxu0 0.0
  %9040 = vmatprep.subr.mxu0 0.0
  %9041 = vmatpush1.msra.mxu0 0.0
  %9042 = vmatprep.subr.mxu0 0.0
  %9043 = vmatpush1.msra.mxu0 0.0
  %9044 = vmatprep.subr.mxu0 0.0
  %9045 = vmatpush1.msra.mxu0 0.0
  %9046 = vmatprep.subr.mxu0 0.0
  %9047 = vmatpush1.msra.mxu0 0.0
  %9048 = vmatprep.subr.mxu0 0.0
  %9049 = vmatpush1.msra.mxu0 0.0
  %9050 = vmatprep.subr.mxu0 0.0
  %9051 = vmatpush1.msra.mxu0 0.0
  %9052 = vmatprep.subr.mxu0 0.0
  %9053 = vmatpush1.msra.mxu0 0.0
  %9054 = vmatprep.subr.mxu0 0.0
  %9055 = vmatpush1.msra.mxu0 0.0
  %9056 = vmatprep.subr.mxu0 0.0
  %9057 = vmatpush1.msra.mxu0 %v5442
  %9058 = vmatprep.subr.mxu0 0.0
  %9059 = vmatpush2.msra.mxu0 0.0
  %9060 = vmatprep.subr.mxu0 0.0
  %9061 = vmatpush2.msra.mxu0 0.0
  %9062 = vmatprep.subr.mxu0 0.0
  %9063 = vmatpush2.msra.mxu0 0.0
  %9064 = vmatprep.subr.mxu0 0.0
  %9065 = vmatpush2.msra.mxu0 0.0
  %9066 = vmatprep.subr.mxu0 0.0
  %9067 = vmatpush2.msra.mxu0 0.0
  %9068 = vmatprep.subr.mxu0 0.0
  %9069 = vmatpush2.msra.mxu0 0.0
  %9070 = vmatprep.subr.mxu0 0.0
  %9071 = vmatpush2.msra.mxu0 0.0
  %9072 = vmatprep.subr.mxu0 0.0
  %9073 = vmatpush2.msra.mxu0 0.0
  %9074 = vmatprep.subr.mxu0 0.0
  %9075 = vmatpush2.msra.mxu0 0.0
  %9076 = vmatprep.subr.mxu0 0.0
  %9077 = vmatpush2.msra.mxu0 0.0
  %9078 = vmatprep.subr.mxu0 0.0
  %9079 = vmatpush2.msra.mxu0 0.0
  %9080 = vmatprep.subr.mxu0 0.0
  %9081 = vmatpush2.msra.mxu0 0.0
  %9082 = vmatprep.subr.mxu0 0.0
  %9083 = vmatpush2.msra.mxu0 0.0
  %9084 = vmatprep.subr.mxu0 0.0
  %9085 = vmatpush2.msra.mxu0 0.0
  %9086 = vmatprep.subr.mxu0 0.0
  %9087 = vmatpush2.msra.mxu0 0.0
  %9088 = vmatprep.subr.mxu0 0.0
  %9089 = vmatpush2.msra.mxu0 0.0
  %9090 = vmatprep.mubr.f32.mxu0 0.0
  %9091 = vmatmul.mubr.f32.gmra.mxu0 %v8601
  %v9092 = vpop.f32.mrf.mxu0
  %v9093 = vadd.f32 %v9023, %v9092
  %v9094 = vpop.f32.mrf.mxu0
  %9095 = vdwg.mxu0
  %v9096 = vadd.f32 %v9093, %v5518
  %v9097 = vsub.f32 0.0, %v8673
  %v9098 = vmul.f32 %v9097, 1.442695
  %v9099 = vpow.pop %v9098
  %v9100 = vadd.f32 %v9099, 1.0
  %v9101 = vrcp.pop %v9100
  %v9102 = vmul.f32 1.0, %v9101
  %v9103 = vsub.f32 0.0, %v8814
  %v9104 = vmul.f32 %v9103, 1.442695
  %v9105 = vpow.pop %v9104
  %v9106 = vadd.f32 %v9105, 1.0
  %v9107 = vrcp.pop %v9106
  %v9108 = vmul.f32 1.0, %v9107
  %v9109 = vtanh.pop %v8955
  %v9110 = vsub.f32 0.0, %v9096
  %v9111 = vmul.f32 %v9110, 1.442695
  %v9112 = vpow.pop %v9111
  %v9113 = vadd.f32 %v9112, 1.0
  %v9114 = vrcp.pop %v9113
  %v9115 = vmul.f32 1.0, %v9114
  %v9116 = vmul.f32 %v9108, %v8522
  %v9117 = vmul.f32 %v9102, %v9109
  %v9118 = vadd.f32 %v9116, %v9117
  %v9119 = vtanh.pop %v9118
  %v9120 = vmul.f32 %v9115, %v9119
  %s9121 = scalar_lea.vmem %s1, 56
  %v9122 = vld [vmem:[%s9121] sm:$0xff]
  %v9124 = vsel %vm66, %v9120, 0
  %9126 = vmatprep.subr.mxu0 0.0
  %9127 = vmatpush1.msra.mxu0 0.0
  %9128 = vmatprep.subr.mxu0 0.0
  %9129 = vmatpush1.msra.mxu0 0.0
  %9130 = vmatprep.subr.mxu0 0.0
  %9131 = vmatpush1.msra.mxu0 0.0
  %9132 = vmatprep.subr.mxu0 0.0
  %9133 = vmatpush1.msra.mxu0 0.0
  %9134 = vmatprep.subr.mxu0 0.0
  %9135 = vmatpush1.msra.mxu0 0.0
  %9136 = vmatprep.subr.mxu0 0.0
  %9137 = vmatpush1.msra.mxu0 0.0
  %9138 = vmatprep.subr.mxu0 0.0
  %9139 = vmatpush1.msra.mxu0 0.0
  %9140 = vmatprep.subr.mxu0 0.0
  %9141 = vmatpush1.msra.mxu0 0.0
  %9142 = vmatprep.subr.mxu0 0.0
  %9143 = vmatpush1.msra.mxu0 0.0
  %9144 = vmatprep.subr.mxu0 0.0
  %9145 = vmatpush1.msra.mxu0 0.0
  %9146 = vmatprep.subr.mxu0 0.0
  %9147 = vmatpush1.msra.mxu0 0.0
  %9148 = vmatprep.subr.mxu0 0.0
  %9149 = vmatpush1.msra.mxu0 0.0
  %9150 = vmatprep.subr.mxu0 0.0
  %9151 = vmatpush1.msra.mxu0 0.0
  %9152 = vmatprep.subr.mxu0 0.0
  %9153 = vmatpush1.msra.mxu0 0.0
  %9154 = vmatprep.subr.mxu0 0.0
  %9155 = vmatpush1.msra.mxu0 0.0
  %9156 = vmatprep.subr.mxu0 0.0
  %9157 = vmatpush1.msra.mxu0 %v4905
  %9158 = vmatprep.subr.mxu0 0.0
  %9159 = vmatpush2.msra.mxu0 0.0
  %9160 = vmatprep.subr.mxu0 0.0
  %9161 = vmatpush2.msra.mxu0 0.0
  %9162 = vmatprep.subr.mxu0 0.0
  %9163 = vmatpush2.msra.mxu0 0.0
  %9164 = vmatprep.subr.mxu0 0.0
  %9165 = vmatpush2.msra.mxu0 0.0
  %9166 = vmatprep.subr.mxu0 0.0
  %9167 = vmatpush2.msra.mxu0 0.0
  %9168 = vmatprep.subr.mxu0 0.0
  %9169 = vmatpush2.msra.mxu0 0.0
  %9170 = vmatprep.subr.mxu0 0.0
  %9171 = vmatpush2.msra.mxu0 0.0
  %9172 = vmatprep.subr.mxu0 0.0
  %9173 = vmatpush2.msra.mxu0 0.0
  %9174 = vmatprep.subr.mxu0 0.0
  %9175 = vmatpush2.msra.mxu0 0.0
  %9176 = vmatprep.subr.mxu0 0.0
  %9177 = vmatpush2.msra.mxu0 0.0
  %9178 = vmatprep.subr.mxu0 0.0
  %9179 = vmatpush2.msra.mxu0 0.0
  %9180 = vmatprep.subr.mxu0 0.0
  %9181 = vmatpush2.msra.mxu0 0.0
  %9182 = vmatprep.subr.mxu0 0.0
  %9183 = vmatpush2.msra.mxu0 0.0
  %9184 = vmatprep.subr.mxu0 0.0
  %9185 = vmatpush2.msra.mxu0 0.0
  %9186 = vmatprep.subr.mxu0 0.0
  %9187 = vmatpush2.msra.mxu0 0.0
  %9188 = vmatprep.subr.mxu0 0.0
  %9189 = vmatpush2.msra.mxu0 0.0
  %9190 = vmatprep.mubr.f32.mxu0 0.0
  %9191 = vmatmul.mubr.f32.gmra.mxu0 %v9124
  %v9192 = vpop.f32.mrf.mxu0
  %v9193 = vadd.f32 0.0, %v9192
  %v9194 = vpop.f32.mrf.mxu0
  %9195 = vdwg.mxu0
  %v9197 = vsel %vm4977, %v9122, 0
  %9199 = vmatprep.subr.mxu0 0.0
  %9200 = vmatpush1.msra.mxu0 0.0
  %9201 = vmatprep.subr.mxu0 0.0
  %9202 = vmatpush1.msra.mxu0 0.0
  %9203 = vmatprep.subr.mxu0 0.0
  %9204 = vmatpush1.msra.mxu0 0.0
  %9205 = vmatprep.subr.mxu0 0.0
  %9206 = vmatpush1.msra.mxu0 0.0
  %9207 = vmatprep.subr.mxu0 0.0
  %9208 = vmatpush1.msra.mxu0 0.0
  %9209 = vmatprep.subr.mxu0 0.0
  %9210 = vmatpush1.msra.mxu0 0.0
  %9211 = vmatprep.subr.mxu0 0.0
  %9212 = vmatpush1.msra.mxu0 0.0
  %9213 = vmatprep.subr.mxu0 0.0
  %9214 = vmatpush1.msra.mxu0 0.0
  %9215 = vmatprep.subr.mxu0 0.0
  %9216 = vmatpush1.msra.mxu0 0.0
  %9217 = vmatprep.subr.mxu0 0.0
  %9218 = vmatpush1.msra.mxu0 0.0
  %9219 = vmatprep.subr.mxu0 0.0
  %9220 = vmatpush1.msra.mxu0 0.0
  %9221 = vmatprep.subr.mxu0 0.0
  %9222 = vmatpush1.msra.mxu0 0.0
  %9223 = vmatprep.subr.mxu0 0.0
  %9224 = vmatpush1.msra.mxu0 0.0
  %9225 = vmatprep.subr.mxu0 0.0
  %9226 = vmatpush1.msra.mxu0 0.0
  %9227 = vmatprep.subr.mxu0 0.0
  %9228 = vmatpush1.msra.mxu0 0.0
  %9229 = vmatprep.subr.mxu0 0.0
  %9230 = vmatpush1.msra.mxu0 %v4983
  %9231 = vmatprep.subr.mxu0 0.0
  %9232 = vmatpush2.msra.mxu0 0.0
  %9233 = vmatprep.subr.mxu0 0.0
  %9234 = vmatpush2.msra.mxu0 0.0
  %9235 = vmatprep.subr.mxu0 0.0
  %9236 = vmatpush2.msra.mxu0 0.0
  %9237 = vmatprep.subr.mxu0 0.0
  %9238 = vmatpush2.msra.mxu0 0.0
  %9239 = vmatprep.subr.mxu0 0.0
  %9240 = vmatpush2.msra.mxu0 0.0
  %9241 = vmatprep.subr.mxu0 0.0
  %9242 = vmatpush2.msra.mxu0 0.0
  %9243 = vmatprep.subr.mxu0 0.0
  %9244 = vmatpush2.msra.mxu0 0.0
  %9245 = vmatprep.subr.mxu0 0.0
  %9246 = vmatpush2.msra.mxu0 0.0
  %9247 = vmatprep.subr.mxu0 0.0
  %9248 = vmatpush2.msra.mxu0 0.0
  %9249 = vmatprep.subr.mxu0 0.0
  %9250 = vmatpush2.msra.mxu0 0.0
  %9251 = vmatprep.subr.mxu0 0.0
  %9252 = vmatpush2.msra.mxu0 0.0
  %9253 = vmatprep.subr.mxu0 0.0
  %9254 = vmatpush2.msra.mxu0 0.0
  %9255 = vmatprep.subr.mxu0 0.0
  %9256 = vmatpush2.msra.mxu0 0.0
  %9257 = vmatprep.subr.mxu0 0.0
  %9258 = vmatpush2.msra.mxu0 0.0
  %9259 = vmatprep.subr.mxu0 0.0
  %9260 = vmatpush2.msra.mxu0 0.0
  %9261 = vmatprep.subr.mxu0 0.0
  %9262 = vmatpush2.msra.mxu0 0.0
  %9263 = vmatprep.mubr.f32.mxu0 0.0
  %9264 = vmatmul.mubr.f32.gmra.mxu0 %v9197
  %v9265 = vpop.f32.mrf.mxu0
  %v9266 = vadd.f32 %v9193, %v9265
  %v9267 = vpop.f32.mrf.mxu0
  %9268 = vdwg.mxu0
  %v9269 = vadd.f32 %v9266, %v5059
  %9270 = vmatprep.subr.mxu0 0.0
  %9271 = vmatpush1.msra.mxu0 0.0
  %9272 = vmatprep.subr.mxu0 0.0
  %9273 = vmatpush1.msra.mxu0 0.0
  %9274 = vmatprep.subr.mxu0 0.0
  %9275 = vmatpush1.msra.mxu0 0.0
  %9276 = vmatprep.subr.mxu0 0.0
  %9277 = vmatpush1.msra.mxu0 0.0
  %9278 = vmatprep.subr.mxu0 0.0
  %9279 = vmatpush1.msra.mxu0 0.0
  %9280 = vmatprep.subr.mxu0 0.0
  %9281 = vmatpush1.msra.mxu0 0.0
  %9282 = vmatprep.subr.mxu0 0.0
  %9283 = vmatpush1.msra.mxu0 0.0
  %9284 = vmatprep.subr.mxu0 0.0
  %9285 = vmatpush1.msra.mxu0 0.0
  %9286 = vmatprep.subr.mxu0 0.0
  %9287 = vmatpush1.msra.mxu0 0.0
  %9288 = vmatprep.subr.mxu0 0.0
  %9289 = vmatpush1.msra.mxu0 0.0
  %9290 = vmatprep.subr.mxu0 0.0
  %9291 = vmatpush1.msra.mxu0 0.0
  %9292 = vmatprep.subr.mxu0 0.0
  %9293 = vmatpush1.msra.mxu0 0.0
  %9294 = vmatprep.subr.mxu0 0.0
  %9295 = vmatpush1.msra.mxu0 0.0
  %9296 = vmatprep.subr.mxu0 0.0
  %9297 = vmatpush1.msra.mxu0 0.0
  %9298 = vmatprep.subr.mxu0 0.0
  %9299 = vmatpush1.msra.mxu0 0.0
  %9300 = vmatprep.subr.mxu0 0.0
  %9301 = vmatpush1.msra.mxu0 %v5063
  %9302 = vmatprep.subr.mxu0 0.0
  %9303 = vmatpush2.msra.mxu0 0.0
  %9304 = vmatprep.subr.mxu0 0.0
  %9305 = vmatpush2.msra.mxu0 0.0
  %9306 = vmatprep.subr.mxu0 0.0
  %9307 = vmatpush2.msra.mxu0 0.0
  %9308 = vmatprep.subr.mxu0 0.0
  %9309 = vmatpush2.msra.mxu0 0.0
  %9310 = vmatprep.subr.mxu0 0.0
  %9311 = vmatpush2.msra.mxu0 0.0
  %9312 = vmatprep.subr.mxu0 0.0
  %9313 = vmatpush2.msra.mxu0 0.0
  %9314 = vmatprep.subr.mxu0 0.0
  %9315 = vmatpush2.msra.mxu0 0.0
  %9316 = vmatprep.subr.mxu0 0.0
  %9317 = vmatpush2.msra.mxu0 0.0
  %9318 = vmatprep.subr.mxu0 0.0
  %9319 = vmatpush2.msra.mxu0 0.0
  %9320 = vmatprep.subr.mxu0 0.0
  %9321 = vmatpush2.msra.mxu0 0.0
  %9322 = vmatprep.subr.mxu0 0.0
  %9323 = vmatpush2.msra.mxu0 0.0
  %9324 = vmatprep.subr.mxu0 0.0
  %9325 = vmatpush2.msra.mxu0 0.0
  %9326 = vmatprep.subr.mxu0 0.0
  %9327 = vmatpush2.msra.mxu0 0.0
  %9328 = vmatprep.subr.mxu0 0.0
  %9329 = vmatpush2.msra.mxu0 0.0
  %9330 = vmatprep.subr.mxu0 0.0
  %9331 = vmatpush2.msra.mxu0 0.0
  %9332 = vmatprep.subr.mxu0 0.0
  %9333 = vmatpush2.msra.mxu0 0.0
  %9334 = vmatprep.mubr.f32.mxu0 0.0
  %9335 = vmatmul.mubr.f32.gmra.mxu0 %v9124
  %v9336 = vpop.f32.mrf.mxu0
  %v9337 = vadd.f32 0.0, %v9336
  %v9338 = vpop.f32.mrf.mxu0
  %9339 = vdwg.mxu0
  %9340 = vmatprep.subr.mxu0 0.0
  %9341 = vmatpush1.msra.mxu0 0.0
  %9342 = vmatprep.subr.mxu0 0.0
  %9343 = vmatpush1.msra.mxu0 0.0
  %9344 = vmatprep.subr.mxu0 0.0
  %9345 = vmatpush1.msra.mxu0 0.0
  %9346 = vmatprep.subr.mxu0 0.0
  %9347 = vmatpush1.msra.mxu0 0.0
  %9348 = vmatprep.subr.mxu0 0.0
  %9349 = vmatpush1.msra.mxu0 0.0
  %9350 = vmatprep.subr.mxu0 0.0
  %9351 = vmatpush1.msra.mxu0 0.0
  %9352 = vmatprep.subr.mxu0 0.0
  %9353 = vmatpush1.msra.mxu0 0.0
  %9354 = vmatprep.subr.mxu0 0.0
  %9355 = vmatpush1.msra.mxu0 0.0
  %9356 = vmatprep.subr.mxu0 0.0
  %9357 = vmatpush1.msra.mxu0 0.0
  %9358 = vmatprep.subr.mxu0 0.0
  %9359 = vmatpush1.msra.mxu0 0.0
  %9360 = vmatprep.subr.mxu0 0.0
  %9361 = vmatpush1.msra.mxu0 0.0
  %9362 = vmatprep.subr.mxu0 0.0
  %9363 = vmatpush1.msra.mxu0 0.0
  %9364 = vmatprep.subr.mxu0 0.0
  %9365 = vmatpush1.msra.mxu0 0.0
  %9366 = vmatprep.subr.mxu0 0.0
  %9367 = vmatpush1.msra.mxu0 0.0
  %9368 = vmatprep.subr.mxu0 0.0
  %9369 = vmatpush1.msra.mxu0 0.0
  %9370 = vmatprep.subr.mxu0 0.0
  %9371 = vmatpush1.msra.mxu0 %v5136
  %9372 = vmatprep.subr.mxu0 0.0
  %9373 = vmatpush2.msra.mxu0 0.0
  %9374 = vmatprep.subr.mxu0 0.0
  %9375 = vmatpush2.msra.mxu0 0.0
  %9376 = vmatprep.subr.mxu0 0.0
  %9377 = vmatpush2.msra.mxu0 0.0
  %9378 = vmatprep.subr.mxu0 0.0
  %9379 = vmatpush2.msra.mxu0 0.0
  %9380 = vmatprep.subr.mxu0 0.0
  %9381 = vmatpush2.msra.mxu0 0.0
  %9382 = vmatprep.subr.mxu0 0.0
  %9383 = vmatpush2.msra.mxu0 0.0
  %9384 = vmatprep.subr.mxu0 0.0
  %9385 = vmatpush2.msra.mxu0 0.0
  %9386 = vmatprep.subr.mxu0 0.0
  %9387 = vmatpush2.msra.mxu0 0.0
  %9388 = vmatprep.subr.mxu0 0.0
  %9389 = vmatpush2.msra.mxu0 0.0
  %9390 = vmatprep.subr.mxu0 0.0
  %9391 = vmatpush2.msra.mxu0 0.0
  %9392 = vmatprep.subr.mxu0 0.0
  %9393 = vmatpush2.msra.mxu0 0.0
  %9394 = vmatprep.subr.mxu0 0.0
  %9395 = vmatpush2.msra.mxu0 0.0
  %9396 = vmatprep.subr.mxu0 0.0
  %9397 = vmatpush2.msra.mxu0 0.0
  %9398 = vmatprep.subr.mxu0 0.0
  %9399 = vmatpush2.msra.mxu0 0.0
  %9400 = vmatprep.subr.mxu0 0.0
  %9401 = vmatpush2.msra.mxu0 0.0
  %9402 = vmatprep.subr.mxu0 0.0
  %9403 = vmatpush2.msra.mxu0 0.0
  %9404 = vmatprep.mubr.f32.mxu0 0.0
  %9405 = vmatmul.mubr.f32.gmra.mxu0 %v9197
  %v9406 = vpop.f32.mrf.mxu0
  %v9407 = vadd.f32 %v9337, %v9406
  %v9408 = vpop.f32.mrf.mxu0
  %9409 = vdwg.mxu0
  %v9410 = vadd.f32 %v9407, %v5212
  %9411 = vmatprep.subr.mxu0 0.0
  %9412 = vmatpush1.msra.mxu0 0.0
  %9413 = vmatprep.subr.mxu0 0.0
  %9414 = vmatpush1.msra.mxu0 0.0
  %9415 = vmatprep.subr.mxu0 0.0
  %9416 = vmatpush1.msra.mxu0 0.0
  %9417 = vmatprep.subr.mxu0 0.0
  %9418 = vmatpush1.msra.mxu0 0.0
  %9419 = vmatprep.subr.mxu0 0.0
  %9420 = vmatpush1.msra.mxu0 0.0
  %9421 = vmatprep.subr.mxu0 0.0
  %9422 = vmatpush1.msra.mxu0 0.0
  %9423 = vmatprep.subr.mxu0 0.0
  %9424 = vmatpush1.msra.mxu0 0.0
  %9425 = vmatprep.subr.mxu0 0.0
  %9426 = vmatpush1.msra.mxu0 0.0
  %9427 = vmatprep.subr.mxu0 0.0
  %9428 = vmatpush1.msra.mxu0 0.0
  %9429 = vmatprep.subr.mxu0 0.0
  %9430 = vmatpush1.msra.mxu0 0.0
  %9431 = vmatprep.subr.mxu0 0.0
  %9432 = vmatpush1.msra.mxu0 0.0
  %9433 = vmatprep.subr.mxu0 0.0
  %9434 = vmatpush1.msra.mxu0 0.0
  %9435 = vmatprep.subr.mxu0 0.0
  %9436 = vmatpush1.msra.mxu0 0.0
  %9437 = vmatprep.subr.mxu0 0.0
  %9438 = vmatpush1.msra.mxu0 0.0
  %9439 = vmatprep.subr.mxu0 0.0
  %9440 = vmatpush1.msra.mxu0 0.0
  %9441 = vmatprep.subr.mxu0 0.0
  %9442 = vmatpush1.msra.mxu0 %v5216
  %9443 = vmatprep.subr.mxu0 0.0
  %9444 = vmatpush2.msra.mxu0 0.0
  %9445 = vmatprep.subr.mxu0 0.0
  %9446 = vmatpush2.msra.mxu0 0.0
  %9447 = vmatprep.subr.mxu0 0.0
  %9448 = vmatpush2.msra.mxu0 0.0
  %9449 = vmatprep.subr.mxu0 0.0
  %9450 = vmatpush2.msra.mxu0 0.0
  %9451 = vmatprep.subr.mxu0 0.0
  %9452 = vmatpush2.msra.mxu0 0.0
  %9453 = vmatprep.subr.mxu0 0.0
  %9454 = vmatpush2.msra.mxu0 0.0
  %9455 = vmatprep.subr.mxu0 0.0
  %9456 = vmatpush2.msra.mxu0 0.0
  %9457 = vmatprep.subr.mxu0 0.0
  %9458 = vmatpush2.msra.mxu0 0.0
  %9459 = vmatprep.subr.mxu0 0.0
  %9460 = vmatpush2.msra.mxu0 0.0
  %9461 = vmatprep.subr.mxu0 0.0
  %9462 = vmatpush2.msra.mxu0 0.0
  %9463 = vmatprep.subr.mxu0 0.0
  %9464 = vmatpush2.msra.mxu0 0.0
  %9465 = vmatprep.subr.mxu0 0.0
  %9466 = vmatpush2.msra.mxu0 0.0
  %9467 = vmatprep.subr.mxu0 0.0
  %9468 = vmatpush2.msra.mxu0 0.0
  %9469 = vmatprep.subr.mxu0 0.0
  %9470 = vmatpush2.msra.mxu0 0.0
  %9471 = vmatprep.subr.mxu0 0.0
  %9472 = vmatpush2.msra.mxu0 0.0
  %9473 = vmatprep.subr.mxu0 0.0
  %9474 = vmatpush2.msra.mxu0 0.0
  %9475 = vmatprep.mubr.f32.mxu0 0.0
  %9476 = vmatmul.mubr.f32.gmra.mxu0 %v9124
  %v9477 = vpop.f32.mrf.mxu0
  %v9478 = vadd.f32 0.0, %v9477
  %v9479 = vpop.f32.mrf.mxu0
  %9480 = vdwg.mxu0
  %9481 = vmatprep.subr.mxu0 0.0
  %9482 = vmatpush1.msra.mxu0 0.0
  %9483 = vmatprep.subr.mxu0 0.0
  %9484 = vmatpush1.msra.mxu0 0.0
  %9485 = vmatprep.subr.mxu0 0.0
  %9486 = vmatpush1.msra.mxu0 0.0
  %9487 = vmatprep.subr.mxu0 0.0
  %9488 = vmatpush1.msra.mxu0 0.0
  %9489 = vmatprep.subr.mxu0 0.0
  %9490 = vmatpush1.msra.mxu0 0.0
  %9491 = vmatprep.subr.mxu0 0.0
  %9492 = vmatpush1.msra.mxu0 0.0
  %9493 = vmatprep.subr.mxu0 0.0
  %9494 = vmatpush1.msra.mxu0 0.0
  %9495 = vmatprep.subr.mxu0 0.0
  %9496 = vmatpush1.msra.mxu0 0.0
  %9497 = vmatprep.subr.mxu0 0.0
  %9498 = vmatpush1.msra.mxu0 0.0
  %9499 = vmatprep.subr.mxu0 0.0
  %9500 = vmatpush1.msra.mxu0 0.0
  %9501 = vmatprep.subr.mxu0 0.0
  %9502 = vmatpush1.msra.mxu0 0.0
  %9503 = vmatprep.subr.mxu0 0.0
  %9504 = vmatpush1.msra.mxu0 0.0
  %9505 = vmatprep.subr.mxu0 0.0
  %9506 = vmatpush1.msra.mxu0 0.0
  %9507 = vmatprep.subr.mxu0 0.0
  %9508 = vmatpush1.msra.mxu0 0.0
  %9509 = vmatprep.subr.mxu0 0.0
  %9510 = vmatpush1.msra.mxu0 0.0
  %9511 = vmatprep.subr.mxu0 0.0
  %9512 = vmatpush1.msra.mxu0 %v5289
  %9513 = vmatprep.subr.mxu0 0.0
  %9514 = vmatpush2.msra.mxu0 0.0
  %9515 = vmatprep.subr.mxu0 0.0
  %9516 = vmatpush2.msra.mxu0 0.0
  %9517 = vmatprep.subr.mxu0 0.0
  %9518 = vmatpush2.msra.mxu0 0.0
  %9519 = vmatprep.subr.mxu0 0.0
  %9520 = vmatpush2.msra.mxu0 0.0
  %9521 = vmatprep.subr.mxu0 0.0
  %9522 = vmatpush2.msra.mxu0 0.0
  %9523 = vmatprep.subr.mxu0 0.0
  %9524 = vmatpush2.msra.mxu0 0.0
  %9525 = vmatprep.subr.mxu0 0.0
  %9526 = vmatpush2.msra.mxu0 0.0
  %9527 = vmatprep.subr.mxu0 0.0
  %9528 = vmatpush2.msra.mxu0 0.0
  %9529 = vmatprep.subr.mxu0 0.0
  %9530 = vmatpush2.msra.mxu0 0.0
  %9531 = vmatprep.subr.mxu0 0.0
  %9532 = vmatpush2.msra.mxu0 0.0
  %9533 = vmatprep.subr.mxu0 0.0
  %9534 = vmatpush2.msra.mxu0 0.0
  %9535 = vmatprep.subr.mxu0 0.0
  %9536 = vmatpush2.msra.mxu0 0.0
  %9537 = vmatprep.subr.mxu0 0.0
  %9538 = vmatpush2.msra.mxu0 0.0
  %9539 = vmatprep.subr.mxu0 0.0
  %9540 = vmatpush2.msra.mxu0 0.0
  %9541 = vmatprep.subr.mxu0 0.0
  %9542 = vmatpush2.msra.mxu0 0.0
  %9543 = vmatprep.subr.mxu0 0.0
  %9544 = vmatpush2.msra.mxu0 0.0
  %9545 = vmatprep.mubr.f32.mxu0 0.0
  %9546 = vmatmul.mubr.f32.gmra.mxu0 %v9197
  %v9547 = vpop.f32.mrf.mxu0
  %v9548 = vadd.f32 %v9478, %v9547
  %v9549 = vpop.f32.mrf.mxu0
  %9550 = vdwg.mxu0
  %v9551 = vadd.f32 %v9548, %v5365
  %9552 = vmatprep.subr.mxu0 0.0
  %9553 = vmatpush1.msra.mxu0 0.0
  %9554 = vmatprep.subr.mxu0 0.0
  %9555 = vmatpush1.msra.mxu0 0.0
  %9556 = vmatprep.subr.mxu0 0.0
  %9557 = vmatpush1.msra.mxu0 0.0
  %9558 = vmatprep.subr.mxu0 0.0
  %9559 = vmatpush1.msra.mxu0 0.0
  %9560 = vmatprep.subr.mxu0 0.0
  %9561 = vmatpush1.msra.mxu0 0.0
  %9562 = vmatprep.subr.mxu0 0.0
  %9563 = vmatpush1.msra.mxu0 0.0
  %9564 = vmatprep.subr.mxu0 0.0
  %9565 = vmatpush1.msra.mxu0 0.0
  %9566 = vmatprep.subr.mxu0 0.0
  %9567 = vmatpush1.msra.mxu0 0.0
  %9568 = vmatprep.subr.mxu0 0.0
  %9569 = vmatpush1.msra.mxu0 0.0
  %9570 = vmatprep.subr.mxu0 0.0
  %9571 = vmatpush1.msra.mxu0 0.0
  %9572 = vmatprep.subr.mxu0 0.0
  %9573 = vmatpush1.msra.mxu0 0.0
  %9574 = vmatprep.subr.mxu0 0.0
  %9575 = vmatpush1.msra.mxu0 0.0
  %9576 = vmatprep.subr.mxu0 0.0
  %9577 = vmatpush1.msra.mxu0 0.0
  %9578 = vmatprep.subr.mxu0 0.0
  %9579 = vmatpush1.msra.mxu0 0.0
  %9580 = vmatprep.subr.mxu0 0.0
  %9581 = vmatpush1.msra.mxu0 0.0
  %9582 = vmatprep.subr.mxu0 0.0
  %9583 = vmatpush1.msra.mxu0 %v5369
  %9584 = vmatprep.subr.mxu0 0.0
  %9585 = vmatpush2.msra.mxu0 0.0
  %9586 = vmatprep.subr.mxu0 0.0
  %9587 = vmatpush2.msra.mxu0 0.0
  %9588 = vmatprep.subr.mxu0 0.0
  %9589 = vmatpush2.msra.mxu0 0.0
  %9590 = vmatprep.subr.mxu0 0.0
  %9591 = vmatpush2.msra.mxu0 0.0
  %9592 = vmatprep.subr.mxu0 0.0
  %9593 = vmatpush2.msra.mxu0 0.0
  %9594 = vmatprep.subr.mxu0 0.0
  %9595 = vmatpush2.msra.mxu0 0.0
  %9596 = vmatprep.subr.mxu0 0.0
  %9597 = vmatpush2.msra.mxu0 0.0
  %9598 = vmatprep.subr.mxu0 0.0
  %9599 = vmatpush2.msra.mxu0 0.0
  %9600 = vmatprep.subr.mxu0 0.0
  %9601 = vmatpush2.msra.mxu0 0.0
  %9602 = vmatprep.subr.mxu0 0.0
  %9603 = vmatpush2.msra.mxu0 0.0
  %9604 = vmatprep.subr.mxu0 0.0
  %9605 = vmatpush2.msra.mxu0 0.0
  %9606 = vmatprep.subr.mxu0 0.0
  %9607 = vmatpush2.msra.mxu0 0.0
  %9608 = vmatprep.subr.mxu0 0.0
  %9609 = vmatpush2.msra.mxu0 0.0
  %9610 = vmatprep.subr.mxu0 0.0
  %9611 = vmatpush2.msra.mxu0 0.0
  %9612 = vmatprep.subr.mxu0 0.0
  %9613 = vmatpush2.msra.mxu0 0.0
  %9614 = vmatprep.subr.mxu0 0.0
  %9615 = vmatpush2.msra.mxu0 0.0
  %9616 = vmatprep.mubr.f32.mxu0 0.0
  %9617 = vmatmul.mubr.f32.gmra.mxu0 %v9124
  %v9618 = vpop.f32.mrf.mxu0
  %v9619 = vadd.f32 0.0, %v9618
  %v9620 = vpop.f32.mrf.mxu0
  %9621 = vdwg.mxu0
  %9622 = vmatprep.subr.mxu0 0.0
  %9623 = vmatpush1.msra.mxu0 0.0
  %9624 = vmatprep.subr.mxu0 0.0
  %9625 = vmatpush1.msra.mxu0 0.0
  %9626 = vmatprep.subr.mxu0 0.0
  %9627 = vmatpush1.msra.mxu0 0.0
  %9628 = vmatprep.subr.mxu0 0.0
  %9629 = vmatpush1.msra.mxu0 0.0
  %9630 = vmatprep.subr.mxu0 0.0
  %9631 = vmatpush1.msra.mxu0 0.0
  %9632 = vmatprep.subr.mxu0 0.0
  %9633 = vmatpush1.msra.mxu0 0.0
  %9634 = vmatprep.subr.mxu0 0.0
  %9635 = vmatpush1.msra.mxu0 0.0
  %9636 = vmatprep.subr.mxu0 0.0
  %9637 = vmatpush1.msra.mxu0 0.0
  %9638 = vmatprep.subr.mxu0 0.0
  %9639 = vmatpush1.msra.mxu0 0.0
  %9640 = vmatprep.subr.mxu0 0.0
  %9641 = vmatpush1.msra.mxu0 0.0
  %9642 = vmatprep.subr.mxu0 0.0
  %9643 = vmatpush1.msra.mxu0 0.0
  %9644 = vmatprep.subr.mxu0 0.0
  %9645 = vmatpush1.msra.mxu0 0.0
  %9646 = vmatprep.subr.mxu0 0.0
  %9647 = vmatpush1.msra.mxu0 0.0
  %9648 = vmatprep.subr.mxu0 0.0
  %9649 = vmatpush1.msra.mxu0 0.0
  %9650 = vmatprep.subr.mxu0 0.0
  %9651 = vmatpush1.msra.mxu0 0.0
  %9652 = vmatprep.subr.mxu0 0.0
  %9653 = vmatpush1.msra.mxu0 %v5442
  %9654 = vmatprep.subr.mxu0 0.0
  %9655 = vmatpush2.msra.mxu0 0.0
  %9656 = vmatprep.subr.mxu0 0.0
  %9657 = vmatpush2.msra.mxu0 0.0
  %9658 = vmatprep.subr.mxu0 0.0
  %9659 = vmatpush2.msra.mxu0 0.0
  %9660 = vmatprep.subr.mxu0 0.0
  %9661 = vmatpush2.msra.mxu0 0.0
  %9662 = vmatprep.subr.mxu0 0.0
  %9663 = vmatpush2.msra.mxu0 0.0
  %9664 = vmatprep.subr.mxu0 0.0
  %9665 = vmatpush2.msra.mxu0 0.0
  %9666 = vmatprep.subr.mxu0 0.0
  %9667 = vmatpush2.msra.mxu0 0.0
  %9668 = vmatprep.subr.mxu0 0.0
  %9669 = vmatpush2.msra.mxu0 0.0
  %9670 = vmatprep.subr.mxu0 0.0
  %9671 = vmatpush2.msra.mxu0 0.0
  %9672 = vmatprep.subr.mxu0 0.0
  %9673 = vmatpush2.msra.mxu0 0.0
  %9674 = vmatprep.subr.mxu0 0.0
  %9675 = vmatpush2.msra.mxu0 0.0
  %9676 = vmatprep.subr.mxu0 0.0
  %9677 = vmatpush2.msra.mxu0 0.0
  %9678 = vmatprep.subr.mxu0 0.0
  %9679 = vmatpush2.msra.mxu0 0.0
  %9680 = vmatprep.subr.mxu0 0.0
  %9681 = vmatpush2.msra.mxu0 0.0
  %9682 = vmatprep.subr.mxu0 0.0
  %9683 = vmatpush2.msra.mxu0 0.0
  %9684 = vmatprep.subr.mxu0 0.0
  %9685 = vmatpush2.msra.mxu0 0.0
  %9686 = vmatprep.mubr.f32.mxu0 0.0
  %9687 = vmatmul.mubr.f32.gmra.mxu0 %v9197
  %v9688 = vpop.f32.mrf.mxu0
  %v9689 = vadd.f32 %v9619, %v9688
  %v9690 = vpop.f32.mrf.mxu0
  %9691 = vdwg.mxu0
  %v9692 = vadd.f32 %v9689, %v5518
  %v9693 = vsub.f32 0.0, %v9269
  %v9694 = vmul.f32 %v9693, 1.442695
  %v9695 = vpow.pop %v9694
  %v9696 = vadd.f32 %v9695, 1.0
  %v9697 = vrcp.pop %v9696
  %v9698 = vmul.f32 1.0, %v9697
  %v9699 = vsub.f32 0.0, %v9410
  %v9700 = vmul.f32 %v9699, 1.442695
  %v9701 = vpow.pop %v9700
  %v9702 = vadd.f32 %v9701, 1.0
  %v9703 = vrcp.pop %v9702
  %v9704 = vmul.f32 1.0, %v9703
  %v9705 = vtanh.pop %v9551
  %v9706 = vsub.f32 0.0, %v9692
  %v9707 = vmul.f32 %v9706, 1.442695
  %v9708 = vpow.pop %v9707
  %v9709 = vadd.f32 %v9708, 1.0
  %v9710 = vrcp.pop %v9709
  %v9711 = vmul.f32 1.0, %v9710
  %v9712 = vmul.f32 %v9704, %v9118
  %v9713 = vmul.f32 %v9698, %v9705
  %v9714 = vadd.f32 %v9712, %v9713
  %v9715 = vtanh.pop %v9714
  %v9716 = vmul.f32 %v9711, %v9715
  %v9717 = vld [vmem:[%s8] sm:$0xf]
  %v9718 = vld [vmem:[%s9] sm:$0xf]
  %v9720 = vsel %vm66, %v9716, 0
  %v9723 = vsel %vm70, %v9718, 0
  %9725 = vmatprep.subr.mxu0 0.0
  %9726 = vmatpush1.msra.mxu0 0.0
  %9727 = vmatprep.subr.mxu0 0.0
  %9728 = vmatpush1.msra.mxu0 0.0
  %9729 = vmatprep.subr.mxu0 0.0
  %9730 = vmatpush1.msra.mxu0 0.0
  %9731 = vmatprep.subr.mxu0 0.0
  %9732 = vmatpush1.msra.mxu0 0.0
  %9733 = vmatprep.subr.mxu0 0.0
  %9734 = vmatpush1.msra.mxu0 0.0
  %9735 = vmatprep.subr.mxu0 0.0
  %9736 = vmatpush1.msra.mxu0 0.0
  %9737 = vmatprep.subr.mxu0 0.0
  %9738 = vmatpush1.msra.mxu0 0.0
  %9739 = vmatprep.subr.mxu0 0.0
  %9740 = vmatpush1.msra.mxu0 0.0
  %9741 = vmatprep.subr.mxu0 0.0
  %9742 = vmatpush1.msra.mxu0 0.0
  %9743 = vmatprep.subr.mxu0 0.0
  %9744 = vmatpush1.msra.mxu0 0.0
  %9745 = vmatprep.subr.mxu0 0.0
  %9746 = vmatpush1.msra.mxu0 0.0
  %9747 = vmatprep.subr.mxu0 0.0
  %9748 = vmatpush1.msra.mxu0 0.0
  %9749 = vmatprep.subr.mxu0 0.0
  %9750 = vmatpush1.msra.mxu0 0.0
  %9751 = vmatprep.subr.mxu0 0.0
  %9752 = vmatpush1.msra.mxu0 0.0
  %9753 = vmatprep.subr.mxu0 0.0
  %9754 = vmatpush1.msra.mxu0 0.0
  %9755 = vmatprep.subr.mxu0 0.0
  %9756 = vmatpush1.msra.mxu0 %v9723
  %9757 = vmatprep.subr.mxu0 0.0
  %9758 = vmatpush2.msra.mxu0 0.0
  %9759 = vmatprep.subr.mxu0 0.0
  %9760 = vmatpush2.msra.mxu0 0.0
  %9761 = vmatprep.subr.mxu0 0.0
  %9762 = vmatpush2.msra.mxu0 0.0
  %9763 = vmatprep.subr.mxu0 0.0
  %9764 = vmatpush2.msra.mxu0 0.0
  %9765 = vmatprep.subr.mxu0 0.0
  %9766 = vmatpush2.msra.mxu0 0.0
  %9767 = vmatprep.subr.mxu0 0.0
  %9768 = vmatpush2.msra.mxu0 0.0
  %9769 = vmatprep.subr.mxu0 0.0
  %9770 = vmatpush2.msra.mxu0 0.0
  %9771 = vmatprep.subr.mxu0 0.0
  %9772 = vmatpush2.msra.mxu0 0.0
  %9773 = vmatprep.subr.mxu0 0.0
  %9774 = vmatpush2.msra.mxu0 0.0
  %9775 = vmatprep.subr.mxu0 0.0
  %9776 = vmatpush2.msra.mxu0 0.0
  %9777 = vmatprep.subr.mxu0 0.0
  %9778 = vmatpush2.msra.mxu0 0.0
  %9779 = vmatprep.subr.mxu0 0.0
  %9780 = vmatpush2.msra.mxu0 0.0
  %9781 = vmatprep.subr.mxu0 0.0
  %9782 = vmatpush2.msra.mxu0 0.0
  %9783 = vmatprep.subr.mxu0 0.0
  %9784 = vmatpush2.msra.mxu0 0.0
  %9785 = vmatprep.subr.mxu0 0.0
  %9786 = vmatpush2.msra.mxu0 0.0
  %9787 = vmatprep.subr.mxu0 0.0
  %9788 = vmatpush2.msra.mxu0 0.0
  %9789 = vmatprep.mubr.f32.mxu0 0.0
  %9790 = vmatmul.mubr.f32.gmra.mxu0 %v9720
  %v9791 = vpop.f32.mrf.mxu0
  %v9792 = vadd.f32 0.0, %v9791
  %v9793 = vpop.f32.mrf.mxu0
  %9794 = vdwg.mxu0
  %v9796 = vsel %vm66, %v4881, 0
  %v9799 = vsel %vm70, %v9717, 0
  %9801 = vmatprep.subr.mxu0 0.0
  %9802 = vmatpush1.msra.mxu0 0.0
  %9803 = vmatprep.subr.mxu0 0.0
  %9804 = vmatpush1.msra.mxu0 0.0
  %9805 = vmatprep.subr.mxu0 0.0
  %9806 = vmatpush1.msra.mxu0 0.0
  %9807 = vmatprep.subr.mxu0 0.0
  %9808 = vmatpush1.msra.mxu0 0.0
  %9809 = vmatprep.subr.mxu0 0.0
  %9810 = vmatpush1.msra.mxu0 0.0
  %9811 = vmatprep.subr.mxu0 0.0
  %9812 = vmatpush1.msra.mxu0 0.0
  %9813 = vmatprep.subr.mxu0 0.0
  %9814 = vmatpush1.msra.mxu0 0.0
  %9815 = vmatprep.subr.mxu0 0.0
  %9816 = vmatpush1.msra.mxu0 0.0
  %9817 = vmatprep.subr.mxu0 0.0
  %9818 = vmatpush1.msra.mxu0 0.0
  %9819 = vmatprep.subr.mxu0 0.0
  %9820 = vmatpush1.msra.mxu0 0.0
  %9821 = vmatprep.subr.mxu0 0.0
  %9822 = vmatpush1.msra.mxu0 0.0
  %9823 = vmatprep.subr.mxu0 0.0
  %9824 = vmatpush1.msra.mxu0 0.0
  %9825 = vmatprep.subr.mxu0 0.0
  %9826 = vmatpush1.msra.mxu0 0.0
  %9827 = vmatprep.subr.mxu0 0.0
  %9828 = vmatpush1.msra.mxu0 0.0
  %9829 = vmatprep.subr.mxu0 0.0
  %9830 = vmatpush1.msra.mxu0 0.0
  %9831 = vmatprep.subr.mxu0 0.0
  %9832 = vmatpush1.msra.mxu0 %v9799
  %9833 = vmatprep.subr.mxu0 0.0
  %9834 = vmatpush2.msra.mxu0 0.0
  %9835 = vmatprep.subr.mxu0 0.0
  %9836 = vmatpush2.msra.mxu0 0.0
  %9837 = vmatprep.subr.mxu0 0.0
  %9838 = vmatpush2.msra.mxu0 0.0
  %9839 = vmatprep.subr.mxu0 0.0
  %9840 = vmatpush2.msra.mxu0 0.0
  %9841 = vmatprep.subr.mxu0 0.0
  %9842 = vmatpush2.msra.mxu0 0.0
  %9843 = vmatprep.subr.mxu0 0.0
  %9844 = vmatpush2.msra.mxu0 0.0
  %9845 = vmatprep.subr.mxu0 0.0
  %9846 = vmatpush2.msra.mxu0 0.0
  %9847 = vmatprep.subr.mxu0 0.0
  %9848 = vmatpush2.msra.mxu0 0.0
  %9849 = vmatprep.subr.mxu0 0.0
  %9850 = vmatpush2.msra.mxu0 0.0
  %9851 = vmatprep.subr.mxu0 0.0
  %9852 = vmatpush2.msra.mxu0 0.0
  %9853 = vmatprep.subr.mxu0 0.0
  %9854 = vmatpush2.msra.mxu0 0.0
  %9855 = vmatprep.subr.mxu0 0.0
  %9856 = vmatpush2.msra.mxu0 0.0
  %9857 = vmatprep.subr.mxu0 0.0
  %9858 = vmatpush2.msra.mxu0 0.0
  %9859 = vmatprep.subr.mxu0 0.0
  %9860 = vmatpush2.msra.mxu0 0.0
  %9861 = vmatprep.subr.mxu0 0.0
  %9862 = vmatpush2.msra.mxu0 0.0
  %9863 = vmatprep.subr.mxu0 0.0
  %9864 = vmatpush2.msra.mxu0 0.0
  %9865 = vmatprep.mubr.f32.mxu0 0.0
  %9866 = vmatmul.mubr.f32.gmra.mxu0 %v9796
  %v9867 = vpop.f32.mrf.mxu0
  %v9868 = vadd.f32 %v9792, %v9867
  %v9869 = vpop.f32.mrf.mxu0
  %9870 = vdwg.mxu0
  %v9871 = vld [vmem:[%s10] sm:$0x1]
  %v9873 = vlaneseq
  %v9874 = vshrl.u32 %v9873, 7
  %v9875 = vsub.s32 0, %v9874
  %v9876 = vrot.slane %v9871, %v9875
  %v9878 = vadd.f32 %v9868, %v9876
  %v9879 = vmax.f32 %v9878, 0.0
  %v9880 = vld [vmem:[%s11] sm:$0xff]
  %v9881 = vld [vmem:[%s12] sm:$0x1]
  %v9883 = vlaneseq
  %v9884 = vshrl.u32 %v9883, 7
  %v9885 = vsub.s32 0, %v9884
  %v9886 = vrot.slane %v9881, %v9885
  %vm9888 = vcmask 64512
  %v9890 = vsel %vm9888, %v9879, 0
  %9892 = vmatprep.subr.mxu0 0.0
  %9893 = vmatpush1.msra.mxu0 0.0
  %9894 = vmatprep.subr.mxu0 0.0
  %9895 = vmatpush1.msra.mxu0 0.0
  %9896 = vmatprep.subr.mxu0 0.0
  %9897 = vmatpush1.msra.mxu0 0.0
  %9898 = vmatprep.subr.mxu0 0.0
  %9899 = vmatpush1.msra.mxu0 0.0
  %9900 = vmatprep.subr.mxu0 0.0
  %9901 = vmatpush1.msra.mxu0 0.0
  %9902 = vmatprep.subr.mxu0 0.0
  %9903 = vmatpush1.msra.mxu0 0.0
  %9904 = vmatprep.subr.mxu0 0.0
  %9905 = vmatpush1.msra.mxu0 0.0
  %9906 = vmatprep.subr.mxu0 0.0
  %9907 = vmatpush1.msra.mxu0 0.0
  %9908 = vmatprep.subr.mxu0 0.0
  %9909 = vmatpush1.msra.mxu0 0.0
  %9910 = vmatprep.subr.mxu0 0.0
  %9911 = vmatpush1.msra.mxu0 0.0
  %9912 = vmatprep.subr.mxu0 0.0
  %9913 = vmatpush1.msra.mxu0 0.0
  %9914 = vmatprep.subr.mxu0 0.0
  %9915 = vmatpush1.msra.mxu0 0.0
  %9916 = vmatprep.subr.mxu0 0.0
  %9917 = vmatpush1.msra.mxu0 0.0
  %9918 = vmatprep.subr.mxu0 0.0
  %9919 = vmatpush1.msra.mxu0 0.0
  %9920 = vmatprep.subr.mxu0 0.0
  %9921 = vmatpush1.msra.mxu0 0.0
  %9922 = vmatprep.subr.mxu0 0.0
  %9923 = vmatpush1.msra.mxu0 %v9880
  %9924 = vmatprep.subr.mxu0 0.0
  %9925 = vmatpush2.msra.mxu0 0.0
  %9926 = vmatprep.subr.mxu0 0.0
  %9927 = vmatpush2.msra.mxu0 0.0
  %9928 = vmatprep.subr.mxu0 0.0
  %9929 = vmatpush2.msra.mxu0 0.0
  %9930 = vmatprep.subr.mxu0 0.0
  %9931 = vmatpush2.msra.mxu0 0.0
  %9932 = vmatprep.subr.mxu0 0.0
  %9933 = vmatpush2.msra.mxu0 0.0
  %9934 = vmatprep.subr.mxu0 0.0
  %9935 = vmatpush2.msra.mxu0 0.0
  %9936 = vmatprep.subr.mxu0 0.0
  %9937 = vmatpush2.msra.mxu0 0.0
  %9938 = vmatprep.subr.mxu0 0.0
  %9939 = vmatpush2.msra.mxu0 0.0
  %9940 = vmatprep.subr.mxu0 0.0
  %9941 = vmatpush2.msra.mxu0 0.0
  %9942 = vmatprep.subr.mxu0 0.0
  %9943 = vmatpush2.msra.mxu0 0.0
  %9944 = vmatprep.subr.mxu0 0.0
  %9945 = vmatpush2.msra.mxu0 0.0
  %9946 = vmatprep.subr.mxu0 0.0
  %9947 = vmatpush2.msra.mxu0 0.0
  %9948 = vmatprep.subr.mxu0 0.0
  %9949 = vmatpush2.msra.mxu0 0.0
  %9950 = vmatprep.subr.mxu0 0.0
  %9951 = vmatpush2.msra.mxu0 0.0
  %9952 = vmatprep.subr.mxu0 0.0
  %9953 = vmatpush2.msra.mxu0 0.0
  %9954 = vmatprep.subr.mxu0 0.0
  %9955 = vmatpush2.msra.mxu0 0.0
  %9956 = vmatprep.mubr.f32.mxu0 0.0
  %9957 = vmatmul.mubr.f32.gmra.mxu0 %v9890
  %v9958 = vpop.f32.mrf.mxu0
  %v9959 = vadd.f32 %v9886, %v9958
  %v9960 = vpop.f32.mrf.mxu0
  %9961 = vdwg.mxu0
  %v9962 = vsel %vm4977, %v9959, -inf
  %9963 = vmax.xlane.f32.xlu0 %v9962
  %v9964 = vpop.xlane.xlu0 %9963
  %v9965 = vsub.f32 %v9959, %v9964
  %v9966 = vmul.f32 %v9965, 1.442695
  %v9967 = vpow.pop %v9966
  %v9968 = vsel %vm4977, %v9967, 0.0
  %9969 = vadd.xlane.f32.xlu0 %v9968
  %v9970 = vpop.xlane.xlu0 %9969
  %v9971 = vrcp.pop %v9970
  %v9972 = vmul.f32 %v9967, %v9971
  %9973 = vst.msk [vmem:[%s13] sm:$0xff] %vm4977, %v9972
  // Predicated region
  $region54: #{tpu_custom_call.1} parent=0 // pred_check
    _
  $region55: #{tpu_custom_call.1} parent=0 // pred_check_branch
    %9975 = sbr.rel (0) target = $region57
  $region56: #{tpu_custom_call.1} parent=0 // pred_region
    _
  $region57: #{tpu_custom_call.1} parent=0 // pred_fallthru
    _
  // Predicated region
  $region58: #{tpu_custom_call.1} parent=0 // pred_check
    _
  $region59: #{tpu_custom_call.1} parent=0 // pred_check_branch
    %9977 = sbr.rel (0) target = $region61
  $region60: #{tpu_custom_call.1} parent=0 // pred_region
    _
  $region61: #{tpu_custom_call.1} parent=0 // pred_fallthru
    _

</llo_original>
